<compile_context>
chip_gen: v5e
topology: v5e:2x2
jax: 0.10.0
libtpu: 0.0.40
codegen_flags: <defaults>
</compile_context>

<pallas_src>
import functools

import jax
import jax.numpy as jnp
from jax.experimental import pallas as pl
from jax.experimental.pallas import tpu as pltpu

# ----------------------------- small config ---------------------------------
B = 2                 # batch b
T = 4                 # num_short_term_seq  (== t in forward)
G = 7                 # grids per sample (g+1 <= NUM_GRID)
NUM_GRID = 8
C, H, W = 3, 16, 16
PATCH = 4
NUM_YEAR = 2
NUM_LONG_TERM = 3
CONTEXT_DIM = 9
YS_TOKENS = 4
DIM = 64
DEPTH = 2
HEADS = 2
DIM_HEAD = 32
INNER = HEADS * DIM_HEAD        # 64
SCALE_DIM = 2
FF_DIM = DIM * SCALE_DIM        # 128
OUT_DIM = 2
OUT_PAD = 128                   # lane-dense padded head output (sliced in glue)
LN_EPS = 1e-5
WDT = jnp.bfloat16              # matmul-operand / weight storage dtype
PIX = C * H * W                 # 768


# --------------------------- in-kernel helpers -------------------------------
def _layer_norm(x, gamma, beta):
    """x: (..., D); gamma/beta: (1, D).  All math in f32."""
    xf = x.astype(jnp.float32)
    mu = jnp.mean(xf, axis=-1, keepdims=True)
    var = jnp.mean(jnp.square(xf - mu), axis=-1, keepdims=True)
    return (xf - mu) * jax.lax.rsqrt(var + LN_EPS) * gamma + beta


def _softmax_lastdim(s):
    s = s - jnp.max(s, axis=-1, keepdims=True)
    p = jnp.exp(s)
    return p * pl.reciprocal(jnp.sum(p, axis=-1, keepdims=True), approx=True)


def _mhsa(q, kv, wo, bo, *, heads, dim_head, batched_proj):
    """q: (bb, n, inner) f32; kv: (bb, m, 2*inner) f32; wo: (inner, d) bf16; bo: (1, d).

    TODO(synk): heads are looped (2 iters) with 64-lane q/kv slices instead of a
    head-batched 4-D einsum; at n,m<=8 the relayout cost is in the noise and the
    single-batch-dim dot_general is the safest Mosaic lowering path.
    """
    bb, n, inner = q.shape
    d = wo.shape[1]
    scale = dim_head ** -0.5
    out = None
    for h in range(heads):
        lo, hi = h * dim_head, (h + 1) * dim_head
        qh = q[:, :, lo:hi]
        kh = kv[:, :, lo:hi]
        vh = kv[:, :, inner + lo:inner + hi]
        p = _softmax_lastdim(
            jnp.einsum("bnd,bmd->bnm", qh, kh,
                       preferred_element_type=jnp.float32) * scale)
        oh = jnp.einsum("bnm,bmd->bnd", p, vh,
                        preferred_element_type=jnp.float32)          # (bb, n, dh)
        if batched_proj:
            wo_h = jnp.broadcast_to(wo[lo:hi, :][None], (bb, dim_head, d))
            contrib = jnp.einsum("bnd,bdk->bnk", oh.astype(wo.dtype), wo_h,
                                 preferred_element_type=jnp.float32)
        else:
            contrib = jnp.dot(oh.reshape(bb * n, dim_head).astype(wo.dtype),
                              wo[lo:hi, :],
                              preferred_element_type=jnp.float32).reshape(bb, n, d)
        out = contrib if out is None else out + contrib
    return out + bo


def _ffn(x, w1, b1, w2, b2, *, batched):
    """x: (bb, n, d) f32; w1: (d, f) bf16; w2: (f, d) bf16; b1/b2 f32 row vectors."""
    bb, n, d = x.shape
    f = w1.shape[1]
    # TODO(synk): torch nn.GELU defaults to erf; tanh-approx GELU used here.
    if batched:
        w1b = jnp.broadcast_to(w1[None], (bb, d, f))
        w2b = jnp.broadcast_to(w2[None], (bb, f, d))
        h1 = jax.nn.gelu(jnp.einsum("bnd,bdf->bnf", x.astype(w1.dtype), w1b,
                                    preferred_element_type=jnp.float32) + b1)
        return jnp.einsum("bnf,bfd->bnd", h1.astype(w2.dtype), w2b,
                          preferred_element_type=jnp.float32) + b2
    x2 = x.reshape(bb * n, d)
    h1 = jax.nn.gelu(jnp.dot(x2.astype(w1.dtype), w1,
                             preferred_element_type=jnp.float32) + b1)
    h2 = jnp.dot(h1.astype(w2.dtype), w2,
                 preferred_element_type=jnp.float32) + b2
    return h2.reshape(bb, n, d)


# ----------------------------- fused kernel ----------------------------------
def _mmst_vit_kernel(
        # inputs
        x_ref, ys_ref, yl_ref,
        pw_ref, pb_ref, cw_ref, cb_ref,
        stok_ref, pos_ref,
        s_lnp_ref, s_wqkv_ref, s_wo_ref, s_bo_ref,
        s_w1_ref, s_b1_ref, s_w2_ref, s_b2_ref, s_fln_ref,
        ttok_ref, projw_ref, projb_ref,
        t_lnp_ref, t_wq_ref, t_wkv_ref, t_wo_ref, t_bo_ref,
        t_w1_ref, t_b1_ref, t_w2_ref, t_b2_ref, t_post_ref,
        hw_ref, hb_ref,
        # output
        o_ref,
        # scratch
        xt_sc, yc_sc,
        *, b, t, gp1, depth, heads, dim_head):
    bt = b * t
    inner = heads * dim_head
    dim = pb_ref.shape[1]

    # ---- backbone stand-in: patch-embed with mean-pool folded into the weight ----
    # TODO(synk): the real `pvt_backbone` (external PVT/SimCLR module) is not defined
    # in models_mmst_vit.py; this is a lightweight patch-embed + context stand-in.
    pw = pw_ref[...]                                                  # (PIX, dim) bf16
    tok = jnp.dot(x_ref[...].astype(pw.dtype), pw,
                  preferred_element_type=jnp.float32) + pb_ref[...]   # (bt*gp1, dim)
    ctx = jnp.mean(ys_ref[...].astype(jnp.float32), axis=1)           # (bt*gp1, cdim)
    cw = cw_ref[...]
    ctxp = jnp.dot(ctx.astype(cw.dtype), cw,
                   preferred_element_type=jnp.float32) + cb_ref[...]
    feats = (tok + ctxp).reshape(bt, gp1, dim)                        # 8-row groups: safe

    # ---- assemble spatial sequences: slot 0 <- cls token, add pos embedding ----
    slot = jax.lax.broadcasted_iota(jnp.int32, (bt, gp1, dim), 1)
    cls_sp = jnp.broadcast_to(stok_ref[...].astype(jnp.float32), (bt, gp1, dim))
    pos = pos_ref[...][:, :gp1, :].astype(jnp.float32)                # (t, gp1, dim)
    pos_bt = jnp.broadcast_to(pos[None], (b, t, gp1, dim)).reshape(bt, gp1, dim)
    x = jnp.where(slot == 0, cls_sp, feats) + pos_bt                  # emb dropout p=0

    # ---- spatial transformer: DEPTH pre-norm blocks + final LN (2-D, M=64) ----
    for l in range(depth):                                            # per-layer ref reads
        lnp = s_lnp_ref[l]
        xn = _layer_norm(x, lnp[0:1], lnp[1:2])
        wqkv = s_wqkv_ref[l]
        qkv = jnp.dot(xn.reshape(bt * gp1, dim).astype(wqkv.dtype), wqkv,
                      preferred_element_type=jnp.float32).reshape(bt, gp1, 3 * inner)
        x = x + _mhsa(qkv[:, :, :inner], qkv[:, :, inner:],
                      s_wo_ref[l], s_bo_ref[l],
                      heads=heads, dim_head=dim_head, batched_proj=False)
        xn2 = _layer_norm(x, lnp[2:3], lnp[3:4])
        x = x + _ffn(xn2, s_w1_ref[l], s_b1_ref[l], s_w2_ref[l], s_b2_ref[l],
                     batched=False)
    fln = s_fln_ref[...]
    x = _layer_norm(x, fln[0:1], fln[1:2])                            # spatial final norm

    # ---- build temporal sequence (cls rows) and projected context in scratch ----
    ttok = jnp.broadcast_to(ttok_ref[...].astype(jnp.float32), (b, 1, dim))
    xt_sc[:, 0:1, :] = ttok
    yc_sc[:, 0:1, :] = ttok
    x4 = x.reshape(b, t, gp1, dim)                                    # leading split: safe
    projw = projw_ref[...]                                            # (54, t*dim) bf16
    ylp = jnp.einsum("bnk,bkd->bnd", yl_ref[...].astype(projw.dtype),
                     jnp.broadcast_to(projw[None], (b,) + projw.shape),
                     preferred_element_type=jnp.float32) + projb_ref[...]  # (b, 1, t*dim)
    for tt in range(t):
        xt_sc[:, 1 + tt:2 + tt, :] = x4[:, tt, 0:1, :]                # spatial cls rows
        yc_sc[:, 1 + tt:2 + tt, :] = ylp[:, :, tt * dim:(tt + 1) * dim]

    post = t_post_ref[...]
    xt = xt_sc[...]
    # context: norm1 then additional_norm1 applied to (cls || proj_context), as in ref
    c = _layer_norm(_layer_norm(yc_sc[...], post[0:1], post[1:2]), post[2:3], post[3:4])

    # all layers' KV of the (static) context in one 256-wide matmul
    wkv = t_wkv_ref[...]                                              # (dim, depth*2*inner)
    kv_all = jnp.einsum("bmd,bdk->bmk", c.astype(wkv.dtype),
                        jnp.broadcast_to(wkv[None], (b,) + wkv.shape),
                        preferred_element_type=jnp.float32)           # (b, t+1, depth*2*inner)

    # ---- temporal transformer: DEPTH pre-norm cross-attention blocks ----
    for l in range(depth):
        lnp = t_lnp_ref[l]
        xn = _layer_norm(xt, lnp[0:1], lnp[1:2])
        wq = t_wq_ref[l]
        q = jnp.einsum("bnd,bdk->bnk", xn.astype(wq.dtype),
                       jnp.broadcast_to(wq[None], (b,) + wq.shape),
                       preferred_element_type=jnp.float32)            # (b, t+1, inner)
        kv_l = kv_all[:, :, l * 2 * inner:(l + 1) * 2 * inner]
        xt = xt + _mhsa(q, kv_l, t_wo_ref[l], t_bo_ref[l],
                        heads=heads, dim_head=dim_head, batched_proj=True)
        xn2 = _layer_norm(xt, lnp[2:3], lnp[3:4])
        xt = xt + _ffn(xn2, t_w1_ref[l], t_b1_ref[l], t_w2_ref[l], t_b2_ref[l],
                       batched=True)

    xt = _layer_norm(xt, post[4:5], post[5:6])        # temporal transformer final norm
    xt = _layer_norm(xt, post[6:7], post[7:8])        # additional_norm2
    xt = _layer_norm(xt, post[8:9], post[9:10])       # mlp_head LayerNorm (per-token)
    hw = hw_ref[...]                                  # (dim, OUT_PAD) zero-padded bf16
    head = jnp.einsum("bnd,bdk->bnk", xt.astype(hw.dtype),
                      jnp.broadcast_to(hw[None], (b,) + hw.shape),
                      preferred_element_type=jnp.float32) + hb_ref[...]
    o_ref[...] = head[:, 0:1, :].astype(o_ref.dtype)  # pool='cls', lane-dense 128 store


# ----------------------------- full forward ----------------------------------
def mmst_vit_forward(params, x, ys, yl):
    b, t, g = x.shape[:3]
    gp1 = g + 1
    bt = b * t

    # Only bitcast reshapes + a zero pad remain outside the kernel: slot 0 of every
    # sequence is reserved for the cls token (overwritten in-kernel), so the backbone
    # matmul runs over bt*(g+1) rows and its output reshapes on 8-row boundaries.
    x_r = x.reshape(bt, g, PIX)
    x_slots = jnp.pad(x_r, ((0, 0), (1, 0), (0, 0))).reshape(bt * gp1, PIX)
    ys_r = ys.reshape(bt, g, YS_TOKENS, CONTEXT_DIM)
    ys_slots = jnp.pad(ys_r, ((0, 0), (1, 0), (0, 0), (0, 0))).reshape(
        bt * gp1, YS_TOKENS, CONTEXT_DIM)
    yl3 = yl.reshape(b, 1, -1)

    kern = functools.partial(_mmst_vit_kernel, b=b, t=t, gp1=gp1,
                             depth=DEPTH, heads=HEADS, dim_head=DIM_HEAD)
    bk = params["backbone"]
    sp = params["space"]
    tp = params["temporal"]

    out = pl.pallas_call(
        kern,
        out_shape=jax.ShapeDtypeStruct((b, 1, OUT_PAD), jnp.float32),
        scratch_shapes=[
            pltpu.VMEM((b, t + 1, DIM), jnp.float32),   # temporal sequence
            pltpu.VMEM((b, t + 1, DIM), jnp.float32),   # projected-context sequence
        ],
    )(x_slots, ys_slots, yl3,
      bk["patch_w_eff"], bk["patch_b"], bk["ctx_w"], bk["ctx_b"],
      params["space_token"], params["pos_embedding"],
      sp["lnp"], sp["wqkv"], sp["wo"], sp["bo"],
      sp["w1"], sp["b1"], sp["w2"], sp["b2"], sp["fln"],
      params["temporal_token"], params["proj_w"], params["proj_b"],
      tp["lnp"], tp["wq"], tp["wkv"], tp["wo"], tp["bo"],
      tp["w1"], tp["b1"], tp["w2"], tp["b2"], tp["post"],
      tp["head_w"], tp["head_b"])

    return out.reshape(b, OUT_PAD)[:, :OUT_DIM]


# ----------------------------- parameter init --------------------------------
def init_params(key):
    keys = iter(jax.random.split(key, 32))

    def nrm(shape, std=0.02):
        return jax.random.normal(next(keys), shape, jnp.float32) * std

    ones_d = jnp.ones((DIM,), jnp.float32)
    zeros_d = jnp.zeros((DIM,), jnp.float32)
    lnp = jnp.tile(jnp.stack([ones_d, zeros_d, ones_d, zeros_d])[None],
                   (DEPTH, 1, 1))                                     # (DEPTH, 4, DIM)

    def block_weights():
        return {
            "lnp": lnp,
            "wo": nrm((DEPTH, INNER, DIM)).astype(WDT),
            "bo": jnp.zeros((DEPTH, 1, DIM), jnp.float32),
            "w1": nrm((DEPTH, DIM, FF_DIM)).astype(WDT),
            "b1": jnp.zeros((DEPTH, 1, FF_DIM), jnp.float32),
            "w2": nrm((DEPTH, FF_DIM, DIM)).astype(WDT),
            "b2": jnp.zeros((DEPTH, 1, DIM), jnp.float32),
        }

    space = block_weights()
    space["wqkv"] = nrm((DEPTH, DIM, 3 * INNER)).astype(WDT)          # fused QKV
    space["fln"] = jnp.stack([ones_d, zeros_d])                       # (2, DIM)

    temporal = block_weights()
    temporal["wq"] = nrm((DEPTH, DIM, INNER)).astype(WDT)
    # all layers' KV projections concatenated along N: one 256-wide context matmul.
    temporal["wkv"] = nrm((DIM, DEPTH * 2 * INNER)).astype(WDT)
    # [norm1_g, norm1_b, anorm1_g, anorm1_b, final_g, final_b,
    #  anorm2_g, anorm2_b, headln_g, headln_b]
    temporal["post"] = jnp.stack(
        [ones_d if i % 2 == 0 else zeros_d for i in range(10)])       # (10, DIM)
    head_w = jnp.zeros((DIM, OUT_PAD), jnp.float32)
    head_w = head_w.at[:, :OUT_DIM].set(nrm((DIM, OUT_DIM)))
    temporal["head_w"] = head_w.astype(WDT)                           # zero-padded to 128
    temporal["head_b"] = jnp.zeros((1, OUT_PAD), jnp.float32)

    # Backbone stand-in: fold patchify + patch mean-pool into one (C*H*W, DIM) weight:
    #   mean_over_patches(patchify(x) @ W + b) == x_flat @ W_eff + b,
    #   with W_eff[pix] = W[within_patch_index(pix)] / num_patches.
    patch_w = nrm((C * PATCH * PATCH, DIM))
    cc = jnp.arange(C)[:, None, None]
    hh = jnp.arange(H)[None, :, None]
    ww = jnp.arange(W)[None, None, :]
    within = (cc * PATCH * PATCH + (hh % PATCH) * PATCH + (ww % PATCH)).reshape(-1)
    n_patches = (H // PATCH) * (W // PATCH)
    patch_w_eff = (patch_w[within] / n_patches).astype(WDT)           # (PIX, DIM)

    return {
        "backbone": {
            "patch_w_eff": patch_w_eff,
            "patch_b": jnp.zeros((1, DIM), jnp.float32),
            "ctx_w": nrm((CONTEXT_DIM, DIM)).astype(WDT),
            "ctx_b": jnp.zeros((1, DIM), jnp.float32),
        },
        "space": space,
        "temporal": temporal,
        "pos_embedding": nrm((T, NUM_GRID, DIM), std=1.0),
        "space_token": nrm((1, 1, DIM), std=1.0),
        "temporal_token": nrm((1, 1, DIM), std=1.0),
        "proj_w": nrm((NUM_YEAR * NUM_LONG_TERM * CONTEXT_DIM, T * DIM)).astype(WDT),
        "proj_b": jnp.zeros((1, T * DIM), jnp.float32),
    }


# ----------------------------- main -------------------------------------------
if __name__ == "__main__":
    key = jax.random.PRNGKey(0)
    kx, kys, kyl, kp = jax.random.split(key, 4)

    x = jax.random.normal(kx, (B, T, G, C, H, W), jnp.float32)             # images
    ys = jax.random.normal(kys, (B, T, G, YS_TOKENS, CONTEXT_DIM), jnp.float32)
    yl = jax.random.normal(kyl, (B, NUM_YEAR, NUM_LONG_TERM, CONTEXT_DIM),
                           jnp.float32)
    params = init_params(kp)

    fwd = jax.jit(mmst_vit_forward)
    out = jax.block_until_ready(fwd(params, x, ys, yl))
    assert out.shape == (B, OUT_DIM)
    assert bool(jnp.all(jnp.isfinite(out)))
    print("KERNEL_OK")
</pallas_src>

<mosaic_0001>
module attributes {stable_mosaic.version = 11 : i64} {
  func.func @_mmst_vit_kernel(%arg0: memref<64x768xf32, #tpu.memory_space<vmem>>, %arg1: memref<64x4x9xf32, #tpu.memory_space<vmem>>, %arg2: memref<2x1x54xf32, #tpu.memory_space<vmem>>, %arg3: memref<768x64xbf16, #tpu.memory_space<vmem>>, %arg4: memref<1x64xf32, #tpu.memory_space<vmem>>, %arg5: memref<9x64xbf16, #tpu.memory_space<vmem>>, %arg6: memref<1x64xf32, #tpu.memory_space<vmem>>, %arg7: memref<1x1x64xf32, #tpu.memory_space<vmem>>, %arg8: memref<4x8x64xf32, #tpu.memory_space<vmem>>, %arg9: memref<2x4x64xf32, #tpu.memory_space<vmem>>, %arg10: memref<2x64x192xbf16, #tpu.memory_space<vmem>>, %arg11: memref<2x64x64xbf16, #tpu.memory_space<vmem>>, %arg12: memref<2x1x64xf32, #tpu.memory_space<vmem>>, %arg13: memref<2x64x128xbf16, #tpu.memory_space<vmem>>, %arg14: memref<2x1x128xf32, #tpu.memory_space<vmem>>, %arg15: memref<2x128x64xbf16, #tpu.memory_space<vmem>>, %arg16: memref<2x1x64xf32, #tpu.memory_space<vmem>>, %arg17: memref<2x64xf32, #tpu.memory_space<vmem>>, %arg18: memref<1x1x64xf32, #tpu.memory_space<vmem>>, %arg19: memref<54x256xbf16, #tpu.memory_space<vmem>>, %arg20: memref<1x256xf32, #tpu.memory_space<vmem>>, %arg21: memref<2x4x64xf32, #tpu.memory_space<vmem>>, %arg22: memref<2x64x64xbf16, #tpu.memory_space<vmem>>, %arg23: memref<64x256xbf16, #tpu.memory_space<vmem>>, %arg24: memref<2x64x64xbf16, #tpu.memory_space<vmem>>, %arg25: memref<2x1x64xf32, #tpu.memory_space<vmem>>, %arg26: memref<2x64x128xbf16, #tpu.memory_space<vmem>>, %arg27: memref<2x1x128xf32, #tpu.memory_space<vmem>>, %arg28: memref<2x128x64xbf16, #tpu.memory_space<vmem>>, %arg29: memref<2x1x64xf32, #tpu.memory_space<vmem>>, %arg30: memref<10x64xf32, #tpu.memory_space<vmem>>, %arg31: memref<64x128xbf16, #tpu.memory_space<vmem>>, %arg32: memref<1x128xf32, #tpu.memory_space<vmem>>, %arg33: memref<2x1x128xf32, #tpu.memory_space<vmem>>, %arg34: memref<2x5x64xf32, #tpu.memory_space<vmem>>, %arg35: memref<2x5x64xf32, #tpu.memory_space<vmem>>) attributes {dimension_semantics = [], scalar_prefetch = 0 : i64, scratch_operands = 2 : i64, tpu.core_type = #tpu.core_type<tc>} {
    %c0 = arith.constant 0 : index
    %c0_0 = arith.constant 0 : index
    %0 = vector.load %arg3[%c0, %c0_0] : memref<768x64xbf16, #tpu.memory_space<vmem>>, vector<768x64xbf16>
    %c0_1 = arith.constant 0 : index
    %c0_2 = arith.constant 0 : index
    %1 = vector.load %arg0[%c0_1, %c0_2] : memref<64x768xf32, #tpu.memory_space<vmem>>, vector<64x768xf32>
    %2 = arith.truncf %1 : vector<64x768xf32> to vector<64x768xbf16>
    %cst = arith.constant dense<0.000000e+00> : vector<64x64xf32>
    %3 = tpu.matmul %2, %0, %cst {dimension_numbers = #tpu.dot_dimension_numbers<[1], [0], [0], [1], [0, 0, 1, 1], [], []>} : vector<64x768xbf16>, vector<768x64xbf16>, vector<64x64xf32> -> vector<64x64xf32>
    %c0_3 = arith.constant 0 : index
    %c0_4 = arith.constant 0 : index
    %4 = vector.load %arg4[%c0_3, %c0_4] : memref<1x64xf32, #tpu.memory_space<vmem>>, vector<1x64xf32>
    %5 = vector.broadcast %4 : vector<1x64xf32> to vector<64x64xf32>
    %6 = arith.addf %3, %5 : vector<64x64xf32>
    %c0_5 = arith.constant 0 : index
    %c0_6 = arith.constant 0 : index
    %c0_7 = arith.constant 0 : index
    %7 = vector.load %arg1[%c0_5, %c0_6, %c0_7] : memref<64x4x9xf32, #tpu.memory_space<vmem>>, vector<64x4x9xf32>
    %cst_8 = arith.constant dense<0.000000e+00> : vector<64x9xf32>
    %8 = vector.multi_reduction <add>, %7, %cst_8 [1] : vector<64x4x9xf32> to vector<64x9xf32>
    %cst_9 = arith.constant 4.000000e+00 : f32
    %9 = vector.broadcast %cst_9 : f32 to vector<64x9xf32>
    %10 = arith.divf %8, %9 : vector<64x9xf32>
    %c0_10 = arith.constant 0 : index
    %c0_11 = arith.constant 0 : index
    %11 = vector.load %arg5[%c0_10, %c0_11] : memref<9x64xbf16, #tpu.memory_space<vmem>>, vector<9x64xbf16>
    %12 = arith.truncf %10 : vector<64x9xf32> to vector<64x9xbf16>
    %cst_12 = arith.constant dense<0.000000e+00> : vector<64x64xf32>
    %13 = tpu.matmul %12, %11, %cst_12 {dimension_numbers = #tpu.dot_dimension_numbers<[1], [0], [0], [1], [0, 0, 1, 1], [], []>} : vector<64x9xbf16>, vector<9x64xbf16>, vector<64x64xf32> -> vector<64x64xf32>
    %c0_13 = arith.constant 0 : index
    %c0_14 = arith.constant 0 : index
    %14 = vector.load %arg6[%c0_13, %c0_14] : memref<1x64xf32, #tpu.memory_space<vmem>>, vector<1x64xf32>
    %15 = vector.broadcast %14 : vector<1x64xf32> to vector<64x64xf32>
    %16 = arith.addf %13, %15 : vector<64x64xf32>
    %17 = arith.addf %6, %16 : vector<64x64xf32>
    %18 = vector.shape_cast %17 : vector<64x64xf32> to vector<8x8x64xf32>
    %19 = tpu.iota {dimensions = array<i32: 1>} : vector<8x8x64xi32>
    %c0_15 = arith.constant 0 : index
    %c0_16 = arith.constant 0 : index
    %c0_17 = arith.constant 0 : index
    %20 = vector.load %arg7[%c0_15, %c0_16, %c0_17] : memref<1x1x64xf32, #tpu.memory_space<vmem>>, vector<1x1x64xf32>
    %21 = vector.shape_cast %20 : vector<1x1x64xf32> to vector<1x1x64xf32>
    %22 = vector.broadcast %21 : vector<1x1x64xf32> to vector<8x8x64xf32>
    %c0_18 = arith.constant 0 : index
    %c0_19 = arith.constant 0 : index
    %c0_20 = arith.constant 0 : index
    %23 = vector.load %arg8[%c0_18, %c0_19, %c0_20] : memref<4x8x64xf32, #tpu.memory_space<vmem>>, vector<4x8x64xf32>
    %24 = vector.shape_cast %23 : vector<4x8x64xf32> to vector<1x4x8x64xf32>
    %25 = vector.shape_cast %24 : vector<1x4x8x64xf32> to vector<1x4x8x64xf32>
    %26 = vector.broadcast %25 : vector<1x4x8x64xf32> to vector<2x4x8x64xf32>
    %27 = vector.shape_cast %26 : vector<2x4x8x64xf32> to vector<8x8x64xf32>
    %c0_i32 = arith.constant 0 : i32
    %28 = vector.broadcast %c0_i32 : i32 to vector<8x8x64xi32>
    %29 = arith.cmpi eq, %19, %28 : vector<8x8x64xi32>
    %30 = arith.select %29, %22, %18 : vector<8x8x64xi1>, vector<8x8x64xf32>
    %31 = arith.addf %30, %27 : vector<8x8x64xf32>
    %c0_21 = arith.constant 0 : index
    %c0_22 = arith.constant 0 : index
    %c0_23 = arith.constant 0 : index
    %32 = vector.load %arg9[%c0_21, %c0_22, %c0_23] : memref<2x4x64xf32, #tpu.memory_space<vmem>>, vector<1x4x64xf32>
    %33 = vector.shape_cast %32 : vector<1x4x64xf32> to vector<4x64xf32>
    %34 = vector.extract_strided_slice %33 {offsets = [0, 0], sizes = [1, 64], strides = [1, 1]} : vector<4x64xf32> to vector<1x64xf32>
    %35 = vector.extract_strided_slice %33 {offsets = [1, 0], sizes = [1, 64], strides = [1, 1]} : vector<4x64xf32> to vector<1x64xf32>
    %cst_24 = arith.constant dense<0.000000e+00> : vector<8x8xf32>
    %36 = vector.multi_reduction <add>, %31, %cst_24 [2] : vector<8x8x64xf32> to vector<8x8xf32>
    %37 = vector.shape_cast %36 : vector<8x8xf32> to vector<8x8x1xf32>
    %cst_25 = arith.constant 6.400000e+01 : f32
    %38 = vector.broadcast %cst_25 : f32 to vector<8x8x1xf32>
    %39 = arith.divf %37, %38 : vector<8x8x1xf32>
    %40 = vector.broadcast %39 : vector<8x8x1xf32> to vector<8x8x64xf32>
    %41 = arith.subf %31, %40 : vector<8x8x64xf32>
    %42 = arith.mulf %41, %41 : vector<8x8x64xf32>
    %cst_26 = arith.constant dense<0.000000e+00> : vector<8x8xf32>
    %43 = vector.multi_reduction <add>, %42, %cst_26 [2] : vector<8x8x64xf32> to vector<8x8xf32>
    %44 = vector.shape_cast %43 : vector<8x8xf32> to vector<8x8x1xf32>
    %cst_27 = arith.constant 6.400000e+01 : f32
    %45 = vector.broadcast %cst_27 : f32 to vector<8x8x1xf32>
    %46 = arith.divf %44, %45 : vector<8x8x1xf32>
    %47 = vector.broadcast %39 : vector<8x8x1xf32> to vector<8x8x64xf32>
    %48 = arith.subf %31, %47 : vector<8x8x64xf32>
    %cst_28 = arith.constant 9.99999974E-6 : f32
    %49 = vector.broadcast %cst_28 : f32 to vector<8x8x1xf32>
    %50 = arith.addf %46, %49 : vector<8x8x1xf32>
    %51 = math.rsqrt %50 : vector<8x8x1xf32>
    %52 = vector.broadcast %51 : vector<8x8x1xf32> to vector<8x8x64xf32>
    %53 = arith.mulf %48, %52 : vector<8x8x64xf32>
    %54 = vector.shape_cast %34 : vector<1x64xf32> to vector<1x1x64xf32>
    %55 = vector.broadcast %54 : vector<1x1x64xf32> to vector<8x8x64xf32>
    %56 = arith.mulf %53, %55 : vector<8x8x64xf32>
    %57 = vector.shape_cast %35 : vector<1x64xf32> to vector<1x1x64xf32>
    %58 = vector.broadcast %57 : vector<1x1x64xf32> to vector<8x8x64xf32>
    %59 = arith.addf %56, %58 : vector<8x8x64xf32>
    %c0_29 = arith.constant 0 : index
    %c0_30 = arith.constant 0 : index
    %c0_31 = arith.constant 0 : index
    %60 = vector.load %arg10[%c0_29, %c0_30, %c0_31] : memref<2x64x192xbf16, #tpu.memory_space<vmem>>, vector<1x64x192xbf16>
    %61 = vector.shape_cast %60 : vector<1x64x192xbf16> to vector<64x192xbf16>
    %62 = vector.shape_cast %59 : vector<8x8x64xf32> to vector<64x64xf32>
    %63 = arith.truncf %62 : vector<64x64xf32> to vector<64x64xbf16>
    %cst_32 = arith.constant dense<0.000000e+00> : vector<64x192xf32>
    %64 = tpu.matmul %63, %61, %cst_32 {dimension_numbers = #tpu.dot_dimension_numbers<[1], [0], [0], [1], [0, 0, 1, 1], [], []>} : vector<64x64xbf16>, vector<64x192xbf16>, vector<64x192xf32> -> vector<64x192xf32>
    %65 = vector.shape_cast %64 : vector<64x192xf32> to vector<8x8x192xf32>
    %66 = vector.extract_strided_slice %65 {offsets = [0, 0, 0], sizes = [8, 8, 64], strides = [1, 1, 1]} : vector<8x8x192xf32> to vector<8x8x64xf32>
    %67 = vector.extract_strided_slice %65 {offsets = [0, 0, 64], sizes = [8, 8, 128], strides = [1, 1, 1]} : vector<8x8x192xf32> to vector<8x8x128xf32>
    %c0_33 = arith.constant 0 : index
    %c0_34 = arith.constant 0 : index
    %c0_35 = arith.constant 0 : index
    %68 = vector.load %arg11[%c0_33, %c0_34, %c0_35] : memref<2x64x64xbf16, #tpu.memory_space<vmem>>, vector<1x64x64xbf16>
    %69 = vector.shape_cast %68 : vector<1x64x64xbf16> to vector<64x64xbf16>
    %c0_36 = arith.constant 0 : index
    %c0_37 = arith.constant 0 : index
    %c0_38 = arith.constant 0 : index
    %70 = vector.load %arg12[%c0_36, %c0_37, %c0_38] : memref<2x1x64xf32, #tpu.memory_space<vmem>>, vector<1x1x64xf32>
    %71 = vector.shape_cast %70 : vector<1x1x64xf32> to vector<1x64xf32>
    %72 = vector.extract_strided_slice %66 {offsets = [0, 0, 0], sizes = [8, 8, 32], strides = [1, 1, 1]} : vector<8x8x64xf32> to vector<8x8x32xf32>
    %73 = vector.extract_strided_slice %67 {offsets = [0, 0, 0], sizes = [8, 8, 32], strides = [1, 1, 1]} : vector<8x8x128xf32> to vector<8x8x32xf32>
    %74 = vector.extract_strided_slice %67 {offsets = [0, 0, 64], sizes = [8, 8, 32], strides = [1, 1, 1]} : vector<8x8x128xf32> to vector<8x8x32xf32>
    "tpu.trace_start"() <{level = 10 : i32, message = "bnd,bmd->bnm"}> : () -> ()
    %cst_39 = arith.constant dense<0.000000e+00> : vector<8x8x8xf32>
    %75 = tpu.matmul %72, %73, %cst_39 {dimension_numbers = #tpu.dot_dimension_numbers<[2], [2], [1], [1], [0, 0, 0, 1, 1, 1], [0], [0]>} : vector<8x8x32xf32>, vector<8x8x32xf32>, vector<8x8x8xf32> -> vector<8x8x8xf32>
    "tpu.trace_stop"() : () -> ()
    %cst_40 = arith.constant 0.176776692 : f32
    %76 = vector.broadcast %cst_40 : f32 to vector<8x8x8xf32>
    %77 = arith.mulf %75, %76 : vector<8x8x8xf32>
    %cst_41 = arith.constant dense<0xFF800000> : vector<8x8xf32>
    %78 = vector.multi_reduction <maximumf>, %77, %cst_41 [2] : vector<8x8x8xf32> to vector<8x8xf32>
    %79 = vector.shape_cast %78 : vector<8x8xf32> to vector<8x8x1xf32>
    %80 = vector.broadcast %79 : vector<8x8x1xf32> to vector<8x8x8xf32>
    %81 = arith.subf %77, %80 : vector<8x8x8xf32>
    %82 = math.exp %81 : vector<8x8x8xf32>
    %cst_42 = arith.constant dense<0.000000e+00> : vector<8x8xf32>
    %83 = vector.multi_reduction <add>, %82, %cst_42 [2] : vector<8x8x8xf32> to vector<8x8xf32>
    %84 = vector.shape_cast %83 : vector<8x8xf32> to vector<8x8x1xf32>
    %85 = tpu.reciprocal %84 {approx = true} : vector<8x8x1xf32> -> vector<8x8x1xf32>
    %86 = vector.broadcast %85 : vector<8x8x1xf32> to vector<8x8x8xf32>
    %87 = arith.mulf %82, %86 : vector<8x8x8xf32>
    "tpu.trace_start"() <{level = 10 : i32, message = "bnm,bmd->bnd"}> : () -> ()
    %cst_43 = arith.constant dense<0.000000e+00> : vector<8x8x32xf32>
    %88 = tpu.matmul %87, %74, %cst_43 {dimension_numbers = #tpu.dot_dimension_numbers<[2], [1], [1], [2], [0, 0, 0, 1, 1, 2], [0], [0]>} : vector<8x8x8xf32>, vector<8x8x32xf32>, vector<8x8x32xf32> -> vector<8x8x32xf32>
    "tpu.trace_stop"() : () -> ()
    %89 = vector.shape_cast %88 : vector<8x8x32xf32> to vector<64x32xf32>
    %90 = arith.truncf %89 : vector<64x32xf32> to vector<64x32xbf16>
    %91 = vector.extract_strided_slice %69 {offsets = [0, 0], sizes = [32, 64], strides = [1, 1]} : vector<64x64xbf16> to vector<32x64xbf16>
    %cst_44 = arith.constant dense<0.000000e+00> : vector<64x64xf32>
    %92 = tpu.matmul %90, %91, %cst_44 {dimension_numbers = #tpu.dot_dimension_numbers<[1], [0], [0], [1], [0, 0, 1, 1], [], []>} : vector<64x32xbf16>, vector<32x64xbf16>, vector<64x64xf32> -> vector<64x64xf32>
    %93 = vector.shape_cast %92 : vector<64x64xf32> to vector<8x8x64xf32>
    %94 = vector.extract_strided_slice %66 {offsets = [0, 0, 32], sizes = [8, 8, 32], strides = [1, 1, 1]} : vector<8x8x64xf32> to vector<8x8x32xf32>
    %95 = vector.extract_strided_slice %67 {offsets = [0, 0, 32], sizes = [8, 8, 32], strides = [1, 1, 1]} : vector<8x8x128xf32> to vector<8x8x32xf32>
    %96 = vector.extract_strided_slice %67 {offsets = [0, 0, 96], sizes = [8, 8, 32], strides = [1, 1, 1]} : vector<8x8x128xf32> to vector<8x8x32xf32>
    "tpu.trace_start"() <{level = 10 : i32, message = "bnd,bmd->bnm"}> : () -> ()
    %cst_45 = arith.constant dense<0.000000e+00> : vector<8x8x8xf32>
    %97 = tpu.matmul %94, %95, %cst_45 {dimension_numbers = #tpu.dot_dimension_numbers<[2], [2], [1], [1], [0, 0, 0, 1, 1, 1], [0], [0]>} : vector<8x8x32xf32>, vector<8x8x32xf32>, vector<8x8x8xf32> -> vector<8x8x8xf32>
    "tpu.trace_stop"() : () -> ()
    %cst_46 = arith.constant 0.176776692 : f32
    %98 = vector.broadcast %cst_46 : f32 to vector<8x8x8xf32>
    %99 = arith.mulf %97, %98 : vector<8x8x8xf32>
    %cst_47 = arith.constant dense<0xFF800000> : vector<8x8xf32>
    %100 = vector.multi_reduction <maximumf>, %99, %cst_47 [2] : vector<8x8x8xf32> to vector<8x8xf32>
    %101 = vector.shape_cast %100 : vector<8x8xf32> to vector<8x8x1xf32>
    %102 = vector.broadcast %101 : vector<8x8x1xf32> to vector<8x8x8xf32>
    %103 = arith.subf %99, %102 : vector<8x8x8xf32>
    %104 = math.exp %103 : vector<8x8x8xf32>
    %cst_48 = arith.constant dense<0.000000e+00> : vector<8x8xf32>
    %105 = vector.multi_reduction <add>, %104, %cst_48 [2] : vector<8x8x8xf32> to vector<8x8xf32>
    %106 = vector.shape_cast %105 : vector<8x8xf32> to vector<8x8x1xf32>
    %107 = tpu.reciprocal %106 {approx = true} : vector<8x8x1xf32> -> vector<8x8x1xf32>
    %108 = vector.broadcast %107 : vector<8x8x1xf32> to vector<8x8x8xf32>
    %109 = arith.mulf %104, %108 : vector<8x8x8xf32>
    "tpu.trace_start"() <{level = 10 : i32, message = "bnm,bmd->bnd"}> : () -> ()
    %cst_49 = arith.constant dense<0.000000e+00> : vector<8x8x32xf32>
    %110 = tpu.matmul %109, %96, %cst_49 {dimension_numbers = #tpu.dot_dimension_numbers<[2], [1], [1], [2], [0, 0, 0, 1, 1, 2], [0], [0]>} : vector<8x8x8xf32>, vector<8x8x32xf32>, vector<8x8x32xf32> -> vector<8x8x32xf32>
    "tpu.trace_stop"() : () -> ()
    %111 = vector.shape_cast %110 : vector<8x8x32xf32> to vector<64x32xf32>
    %112 = arith.truncf %111 : vector<64x32xf32> to vector<64x32xbf16>
    %113 = vector.extract_strided_slice %69 {offsets = [32, 0], sizes = [32, 64], strides = [1, 1]} : vector<64x64xbf16> to vector<32x64xbf16>
    %cst_50 = arith.constant dense<0.000000e+00> : vector<64x64xf32>
    %114 = tpu.matmul %112, %113, %cst_50 {dimension_numbers = #tpu.dot_dimension_numbers<[1], [0], [0], [1], [0, 0, 1, 1], [], []>} : vector<64x32xbf16>, vector<32x64xbf16>, vector<64x64xf32> -> vector<64x64xf32>
    %115 = vector.shape_cast %114 : vector<64x64xf32> to vector<8x8x64xf32>
    %116 = arith.addf %93, %115 : vector<8x8x64xf32>
    %117 = vector.shape_cast %71 : vector<1x64xf32> to vector<1x1x64xf32>
    %118 = vector.broadcast %117 : vector<1x1x64xf32> to vector<8x8x64xf32>
    %119 = arith.addf %116, %118 : vector<8x8x64xf32>
    %120 = arith.addf %31, %119 : vector<8x8x64xf32>
    %121 = vector.extract_strided_slice %33 {offsets = [2, 0], sizes = [1, 64], strides = [1, 1]} : vector<4x64xf32> to vector<1x64xf32>
    %122 = vector.extract_strided_slice %33 {offsets = [3, 0], sizes = [1, 64], strides = [1, 1]} : vector<4x64xf32> to vector<1x64xf32>
    %cst_51 = arith.constant dense<0.000000e+00> : vector<8x8xf32>
    %123 = vector.multi_reduction <add>, %120, %cst_51 [2] : vector<8x8x64xf32> to vector<8x8xf32>
    %124 = vector.shape_cast %123 : vector<8x8xf32> to vector<8x8x1xf32>
    %cst_52 = arith.constant 6.400000e+01 : f32
    %125 = vector.broadcast %cst_52 : f32 to vector<8x8x1xf32>
    %126 = arith.divf %124, %125 : vector<8x8x1xf32>
    %127 = vector.broadcast %126 : vector<8x8x1xf32> to vector<8x8x64xf32>
    %128 = arith.subf %120, %127 : vector<8x8x64xf32>
    %129 = arith.mulf %128, %128 : vector<8x8x64xf32>
    %cst_53 = arith.constant dense<0.000000e+00> : vector<8x8xf32>
    %130 = vector.multi_reduction <add>, %129, %cst_53 [2] : vector<8x8x64xf32> to vector<8x8xf32>
    %131 = vector.shape_cast %130 : vector<8x8xf32> to vector<8x8x1xf32>
    %cst_54 = arith.constant 6.400000e+01 : f32
    %132 = vector.broadcast %cst_54 : f32 to vector<8x8x1xf32>
    %133 = arith.divf %131, %132 : vector<8x8x1xf32>
    %134 = vector.broadcast %126 : vector<8x8x1xf32> to vector<8x8x64xf32>
    %135 = arith.subf %120, %134 : vector<8x8x64xf32>
    %cst_55 = arith.constant 9.99999974E-6 : f32
    %136 = vector.broadcast %cst_55 : f32 to vector<8x8x1xf32>
    %137 = arith.addf %133, %136 : vector<8x8x1xf32>
    %138 = math.rsqrt %137 : vector<8x8x1xf32>
    %139 = vector.broadcast %138 : vector<8x8x1xf32> to vector<8x8x64xf32>
    %140 = arith.mulf %135, %139 : vector<8x8x64xf32>
    %141 = vector.shape_cast %121 : vector<1x64xf32> to vector<1x1x64xf32>
    %142 = vector.broadcast %141 : vector<1x1x64xf32> to vector<8x8x64xf32>
    %143 = arith.mulf %140, %142 : vector<8x8x64xf32>
    %144 = vector.shape_cast %122 : vector<1x64xf32> to vector<1x1x64xf32>
    %145 = vector.broadcast %144 : vector<1x1x64xf32> to vector<8x8x64xf32>
    %146 = arith.addf %143, %145 : vector<8x8x64xf32>
    %c0_56 = arith.constant 0 : index
    %c0_57 = arith.constant 0 : index
    %c0_58 = arith.constant 0 : index
    %147 = vector.load %arg13[%c0_56, %c0_57, %c0_58] : memref<2x64x128xbf16, #tpu.memory_space<vmem>>, vector<1x64x128xbf16>
    %148 = vector.shape_cast %147 : vector<1x64x128xbf16> to vector<64x128xbf16>
    %c0_59 = arith.constant 0 : index
    %c0_60 = arith.constant 0 : index
    %c0_61 = arith.constant 0 : index
    %149 = vector.load %arg14[%c0_59, %c0_60, %c0_61] : memref<2x1x128xf32, #tpu.memory_space<vmem>>, vector<1x1x128xf32>
    %150 = vector.shape_cast %149 : vector<1x1x128xf32> to vector<1x128xf32>
    %c0_62 = arith.constant 0 : index
    %c0_63 = arith.constant 0 : index
    %c0_64 = arith.constant 0 : index
    %151 = vector.load %arg15[%c0_62, %c0_63, %c0_64] : memref<2x128x64xbf16, #tpu.memory_space<vmem>>, vector<1x128x64xbf16>
    %152 = vector.shape_cast %151 : vector<1x128x64xbf16> to vector<128x64xbf16>
    %c0_65 = arith.constant 0 : index
    %c0_66 = arith.constant 0 : index
    %c0_67 = arith.constant 0 : index
    %153 = vector.load %arg16[%c0_65, %c0_66, %c0_67] : memref<2x1x64xf32, #tpu.memory_space<vmem>>, vector<1x1x64xf32>
    %154 = vector.shape_cast %153 : vector<1x1x64xf32> to vector<1x64xf32>
    %155 = vector.shape_cast %146 : vector<8x8x64xf32> to vector<64x64xf32>
    %156 = arith.truncf %155 : vector<64x64xf32> to vector<64x64xbf16>
    %cst_68 = arith.constant dense<0.000000e+00> : vector<64x128xf32>
    %157 = tpu.matmul %156, %148, %cst_68 {dimension_numbers = #tpu.dot_dimension_numbers<[1], [0], [0], [1], [0, 0, 1, 1], [], []>} : vector<64x64xbf16>, vector<64x128xbf16>, vector<64x128xf32> -> vector<64x128xf32>
    %158 = vector.broadcast %150 : vector<1x128xf32> to vector<64x128xf32>
    %159 = arith.addf %157, %158 : vector<64x128xf32>
    %160 = arith.mulf %159, %159 : vector<64x128xf32>
    %161 = arith.mulf %159, %160 : vector<64x128xf32>
    %cst_69 = arith.constant 4.471500e-02 : f32
    %162 = vector.broadcast %cst_69 : f32 to vector<64x128xf32>
    %163 = arith.mulf %162, %161 : vector<64x128xf32>
    %164 = arith.addf %159, %163 : vector<64x128xf32>
    %cst_70 = arith.constant 0.797884583 : f32
    %165 = vector.broadcast %cst_70 : f32 to vector<64x128xf32>
    %166 = arith.mulf %165, %164 : vector<64x128xf32>
    %167 = math.tanh %166 : vector<64x128xf32>
    %cst_71 = arith.constant 1.000000e+00 : f32
    %168 = vector.broadcast %cst_71 : f32 to vector<64x128xf32>
    %169 = arith.addf %168, %167 : vector<64x128xf32>
    %cst_72 = arith.constant 5.000000e-01 : f32
    %170 = vector.broadcast %cst_72 : f32 to vector<64x128xf32>
    %171 = arith.mulf %170, %169 : vector<64x128xf32>
    %172 = arith.mulf %159, %171 : vector<64x128xf32>
    %173 = arith.truncf %172 : vector<64x128xf32> to vector<64x128xbf16>
    %cst_73 = arith.constant dense<0.000000e+00> : vector<64x64xf32>
    %174 = tpu.matmul %173, %152, %cst_73 {dimension_numbers = #tpu.dot_dimension_numbers<[1], [0], [0], [1], [0, 0, 1, 1], [], []>} : vector<64x128xbf16>, vector<128x64xbf16>, vector<64x64xf32> -> vector<64x64xf32>
    %175 = vector.broadcast %154 : vector<1x64xf32> to vector<64x64xf32>
    %176 = arith.addf %174, %175 : vector<64x64xf32>
    %177 = vector.shape_cast %176 : vector<64x64xf32> to vector<8x8x64xf32>
    %178 = arith.addf %120, %177 : vector<8x8x64xf32>
    %c1 = arith.constant 1 : index
    %c0_74 = arith.constant 0 : index
    %c0_75 = arith.constant 0 : index
    %179 = vector.load %arg9[%c1, %c0_74, %c0_75] : memref<2x4x64xf32, #tpu.memory_space<vmem>>, vector<1x4x64xf32>
    %180 = vector.shape_cast %179 : vector<1x4x64xf32> to vector<4x64xf32>
    %181 = vector.extract_strided_slice %180 {offsets = [0, 0], sizes = [1, 64], strides = [1, 1]} : vector<4x64xf32> to vector<1x64xf32>
    %182 = vector.extract_strided_slice %180 {offsets = [1, 0], sizes = [1, 64], strides = [1, 1]} : vector<4x64xf32> to vector<1x64xf32>
    %cst_76 = arith.constant dense<0.000000e+00> : vector<8x8xf32>
    %183 = vector.multi_reduction <add>, %178, %cst_76 [2] : vector<8x8x64xf32> to vector<8x8xf32>
    %184 = vector.shape_cast %183 : vector<8x8xf32> to vector<8x8x1xf32>
    %cst_77 = arith.constant 6.400000e+01 : f32
    %185 = vector.broadcast %cst_77 : f32 to vector<8x8x1xf32>
    %186 = arith.divf %184, %185 : vector<8x8x1xf32>
    %187 = vector.broadcast %186 : vector<8x8x1xf32> to vector<8x8x64xf32>
    %188 = arith.subf %178, %187 : vector<8x8x64xf32>
    %189 = arith.mulf %188, %188 : vector<8x8x64xf32>
    %cst_78 = arith.constant dense<0.000000e+00> : vector<8x8xf32>
    %190 = vector.multi_reduction <add>, %189, %cst_78 [2] : vector<8x8x64xf32> to vector<8x8xf32>
    %191 = vector.shape_cast %190 : vector<8x8xf32> to vector<8x8x1xf32>
    %cst_79 = arith.constant 6.400000e+01 : f32
    %192 = vector.broadcast %cst_79 : f32 to vector<8x8x1xf32>
    %193 = arith.divf %191, %192 : vector<8x8x1xf32>
    %194 = vector.broadcast %186 : vector<8x8x1xf32> to vector<8x8x64xf32>
    %195 = arith.subf %178, %194 : vector<8x8x64xf32>
    %cst_80 = arith.constant 9.99999974E-6 : f32
    %196 = vector.broadcast %cst_80 : f32 to vector<8x8x1xf32>
    %197 = arith.addf %193, %196 : vector<8x8x1xf32>
    %198 = math.rsqrt %197 : vector<8x8x1xf32>
    %199 = vector.broadcast %198 : vector<8x8x1xf32> to vector<8x8x64xf32>
    %200 = arith.mulf %195, %199 : vector<8x8x64xf32>
    %201 = vector.shape_cast %181 : vector<1x64xf32> to vector<1x1x64xf32>
    %202 = vector.broadcast %201 : vector<1x1x64xf32> to vector<8x8x64xf32>
    %203 = arith.mulf %200, %202 : vector<8x8x64xf32>
    %204 = vector.shape_cast %182 : vector<1x64xf32> to vector<1x1x64xf32>
    %205 = vector.broadcast %204 : vector<1x1x64xf32> to vector<8x8x64xf32>
    %206 = arith.addf %203, %205 : vector<8x8x64xf32>
    %c1_81 = arith.constant 1 : index
    %c0_82 = arith.constant 0 : index
    %c0_83 = arith.constant 0 : index
    %207 = vector.load %arg10[%c1_81, %c0_82, %c0_83] : memref<2x64x192xbf16, #tpu.memory_space<vmem>>, vector<1x64x192xbf16>
    %208 = vector.shape_cast %207 : vector<1x64x192xbf16> to vector<64x192xbf16>
    %209 = vector.shape_cast %206 : vector<8x8x64xf32> to vector<64x64xf32>
    %210 = arith.truncf %209 : vector<64x64xf32> to vector<64x64xbf16>
    %cst_84 = arith.constant dense<0.000000e+00> : vector<64x192xf32>
    %211 = tpu.matmul %210, %208, %cst_84 {dimension_numbers = #tpu.dot_dimension_numbers<[1], [0], [0], [1], [0, 0, 1, 1], [], []>} : vector<64x64xbf16>, vector<64x192xbf16>, vector<64x192xf32> -> vector<64x192xf32>
    %212 = vector.shape_cast %211 : vector<64x192xf32> to vector<8x8x192xf32>
    %213 = vector.extract_strided_slice %212 {offsets = [0, 0, 0], sizes = [8, 8, 64], strides = [1, 1, 1]} : vector<8x8x192xf32> to vector<8x8x64xf32>
    %214 = vector.extract_strided_slice %212 {offsets = [0, 0, 64], sizes = [8, 8, 128], strides = [1, 1, 1]} : vector<8x8x192xf32> to vector<8x8x128xf32>
    %c1_85 = arith.constant 1 : index
    %c0_86 = arith.constant 0 : index
    %c0_87 = arith.constant 0 : index
    %215 = vector.load %arg11[%c1_85, %c0_86, %c0_87] : memref<2x64x64xbf16, #tpu.memory_space<vmem>>, vector<1x64x64xbf16>
    %216 = vector.shape_cast %215 : vector<1x64x64xbf16> to vector<64x64xbf16>
    %c1_88 = arith.constant 1 : index
    %c0_89 = arith.constant 0 : index
    %c0_90 = arith.constant 0 : index
    %217 = vector.load %arg12[%c1_88, %c0_89, %c0_90] : memref<2x1x64xf32, #tpu.memory_space<vmem>>, vector<1x1x64xf32>
    %218 = vector.shape_cast %217 : vector<1x1x64xf32> to vector<1x64xf32>
    %219 = vector.extract_strided_slice %213 {offsets = [0, 0, 0], sizes = [8, 8, 32], strides = [1, 1, 1]} : vector<8x8x64xf32> to vector<8x8x32xf32>
    %220 = vector.extract_strided_slice %214 {offsets = [0, 0, 0], sizes = [8, 8, 32], strides = [1, 1, 1]} : vector<8x8x128xf32> to vector<8x8x32xf32>
    %221 = vector.extract_strided_slice %214 {offsets = [0, 0, 64], sizes = [8, 8, 32], strides = [1, 1, 1]} : vector<8x8x128xf32> to vector<8x8x32xf32>
    "tpu.trace_start"() <{level = 10 : i32, message = "bnd,bmd->bnm"}> : () -> ()
    %cst_91 = arith.constant dense<0.000000e+00> : vector<8x8x8xf32>
    %222 = tpu.matmul %219, %220, %cst_91 {dimension_numbers = #tpu.dot_dimension_numbers<[2], [2], [1], [1], [0, 0, 0, 1, 1, 1], [0], [0]>} : vector<8x8x32xf32>, vector<8x8x32xf32>, vector<8x8x8xf32> -> vector<8x8x8xf32>
    "tpu.trace_stop"() : () -> ()
    %cst_92 = arith.constant 0.176776692 : f32
    %223 = vector.broadcast %cst_92 : f32 to vector<8x8x8xf32>
    %224 = arith.mulf %222, %223 : vector<8x8x8xf32>
    %cst_93 = arith.constant dense<0xFF800000> : vector<8x8xf32>
    %225 = vector.multi_reduction <maximumf>, %224, %cst_93 [2] : vector<8x8x8xf32> to vector<8x8xf32>
    %226 = vector.shape_cast %225 : vector<8x8xf32> to vector<8x8x1xf32>
    %227 = vector.broadcast %226 : vector<8x8x1xf32> to vector<8x8x8xf32>
    %228 = arith.subf %224, %227 : vector<8x8x8xf32>
    %229 = math.exp %228 : vector<8x8x8xf32>
    %cst_94 = arith.constant dense<0.000000e+00> : vector<8x8xf32>
    %230 = vector.multi_reduction <add>, %229, %cst_94 [2] : vector<8x8x8xf32> to vector<8x8xf32>
    %231 = vector.shape_cast %230 : vector<8x8xf32> to vector<8x8x1xf32>
    %232 = tpu.reciprocal %231 {approx = true} : vector<8x8x1xf32> -> vector<8x8x1xf32>
    %233 = vector.broadcast %232 : vector<8x8x1xf32> to vector<8x8x8xf32>
    %234 = arith.mulf %229, %233 : vector<8x8x8xf32>
    "tpu.trace_start"() <{level = 10 : i32, message = "bnm,bmd->bnd"}> : () -> ()
    %cst_95 = arith.constant dense<0.000000e+00> : vector<8x8x32xf32>
    %235 = tpu.matmul %234, %221, %cst_95 {dimension_numbers = #tpu.dot_dimension_numbers<[2], [1], [1], [2], [0, 0, 0, 1, 1, 2], [0], [0]>} : vector<8x8x8xf32>, vector<8x8x32xf32>, vector<8x8x32xf32> -> vector<8x8x32xf32>
    "tpu.trace_stop"() : () -> ()
    %236 = vector.shape_cast %235 : vector<8x8x32xf32> to vector<64x32xf32>
    %237 = arith.truncf %236 : vector<64x32xf32> to vector<64x32xbf16>
    %238 = vector.extract_strided_slice %216 {offsets = [0, 0], sizes = [32, 64], strides = [1, 1]} : vector<64x64xbf16> to vector<32x64xbf16>
    %cst_96 = arith.constant dense<0.000000e+00> : vector<64x64xf32>
    %239 = tpu.matmul %237, %238, %cst_96 {dimension_numbers = #tpu.dot_dimension_numbers<[1], [0], [0], [1], [0, 0, 1, 1], [], []>} : vector<64x32xbf16>, vector<32x64xbf16>, vector<64x64xf32> -> vector<64x64xf32>
    %240 = vector.shape_cast %239 : vector<64x64xf32> to vector<8x8x64xf32>
    %241 = vector.extract_strided_slice %213 {offsets = [0, 0, 32], sizes = [8, 8, 32], strides = [1, 1, 1]} : vector<8x8x64xf32> to vector<8x8x32xf32>
    %242 = vector.extract_strided_slice %214 {offsets = [0, 0, 32], sizes = [8, 8, 32], strides = [1, 1, 1]} : vector<8x8x128xf32> to vector<8x8x32xf32>
    %243 = vector.extract_strided_slice %214 {offsets = [0, 0, 96], sizes = [8, 8, 32], strides = [1, 1, 1]} : vector<8x8x128xf32> to vector<8x8x32xf32>
    "tpu.trace_start"() <{level = 10 : i32, message = "bnd,bmd->bnm"}> : () -> ()
    %cst_97 = arith.constant dense<0.000000e+00> : vector<8x8x8xf32>
    %244 = tpu.matmul %241, %242, %cst_97 {dimension_numbers = #tpu.dot_dimension_numbers<[2], [2], [1], [1], [0, 0, 0, 1, 1, 1], [0], [0]>} : vector<8x8x32xf32>, vector<8x8x32xf32>, vector<8x8x8xf32> -> vector<8x8x8xf32>
    "tpu.trace_stop"() : () -> ()
    %cst_98 = arith.constant 0.176776692 : f32
    %245 = vector.broadcast %cst_98 : f32 to vector<8x8x8xf32>
    %246 = arith.mulf %244, %245 : vector<8x8x8xf32>
    %cst_99 = arith.constant dense<0xFF800000> : vector<8x8xf32>
    %247 = vector.multi_reduction <maximumf>, %246, %cst_99 [2] : vector<8x8x8xf32> to vector<8x8xf32>
    %248 = vector.shape_cast %247 : vector<8x8xf32> to vector<8x8x1xf32>
    %249 = vector.broadcast %248 : vector<8x8x1xf32> to vector<8x8x8xf32>
    %250 = arith.subf %246, %249 : vector<8x8x8xf32>
    %251 = math.exp %250 : vector<8x8x8xf32>
    %cst_100 = arith.constant dense<0.000000e+00> : vector<8x8xf32>
    %252 = vector.multi_reduction <add>, %251, %cst_100 [2] : vector<8x8x8xf32> to vector<8x8xf32>
    %253 = vector.shape_cast %252 : vector<8x8xf32> to vector<8x8x1xf32>
    %254 = tpu.reciprocal %253 {approx = true} : vector<8x8x1xf32> -> vector<8x8x1xf32>
    %255 = vector.broadcast %254 : vector<8x8x1xf32> to vector<8x8x8xf32>
    %256 = arith.mulf %251, %255 : vector<8x8x8xf32>
    "tpu.trace_start"() <{level = 10 : i32, message = "bnm,bmd->bnd"}> : () -> ()
    %cst_101 = arith.constant dense<0.000000e+00> : vector<8x8x32xf32>
    %257 = tpu.matmul %256, %243, %cst_101 {dimension_numbers = #tpu.dot_dimension_numbers<[2], [1], [1], [2], [0, 0, 0, 1, 1, 2], [0], [0]>} : vector<8x8x8xf32>, vector<8x8x32xf32>, vector<8x8x32xf32> -> vector<8x8x32xf32>
    "tpu.trace_stop"() : () -> ()
    %258 = vector.shape_cast %257 : vector<8x8x32xf32> to vector<64x32xf32>
    %259 = arith.truncf %258 : vector<64x32xf32> to vector<64x32xbf16>
    %260 = vector.extract_strided_slice %216 {offsets = [32, 0], sizes = [32, 64], strides = [1, 1]} : vector<64x64xbf16> to vector<32x64xbf16>
    %cst_102 = arith.constant dense<0.000000e+00> : vector<64x64xf32>
    %261 = tpu.matmul %259, %260, %cst_102 {dimension_numbers = #tpu.dot_dimension_numbers<[1], [0], [0], [1], [0, 0, 1, 1], [], []>} : vector<64x32xbf16>, vector<32x64xbf16>, vector<64x64xf32> -> vector<64x64xf32>
    %262 = vector.shape_cast %261 : vector<64x64xf32> to vector<8x8x64xf32>
    %263 = arith.addf %240, %262 : vector<8x8x64xf32>
    %264 = vector.shape_cast %218 : vector<1x64xf32> to vector<1x1x64xf32>
    %265 = vector.broadcast %264 : vector<1x1x64xf32> to vector<8x8x64xf32>
    %266 = arith.addf %263, %265 : vector<8x8x64xf32>
    %267 = arith.addf %178, %266 : vector<8x8x64xf32>
    %268 = vector.extract_strided_slice %180 {offsets = [2, 0], sizes = [1, 64], strides = [1, 1]} : vector<4x64xf32> to vector<1x64xf32>
    %269 = vector.extract_strided_slice %180 {offsets = [3, 0], sizes = [1, 64], strides = [1, 1]} : vector<4x64xf32> to vector<1x64xf32>
    %cst_103 = arith.constant dense<0.000000e+00> : vector<8x8xf32>
    %270 = vector.multi_reduction <add>, %267, %cst_103 [2] : vector<8x8x64xf32> to vector<8x8xf32>
    %271 = vector.shape_cast %270 : vector<8x8xf32> to vector<8x8x1xf32>
    %cst_104 = arith.constant 6.400000e+01 : f32
    %272 = vector.broadcast %cst_104 : f32 to vector<8x8x1xf32>
    %273 = arith.divf %271, %272 : vector<8x8x1xf32>
    %274 = vector.broadcast %273 : vector<8x8x1xf32> to vector<8x8x64xf32>
    %275 = arith.subf %267, %274 : vector<8x8x64xf32>
    %276 = arith.mulf %275, %275 : vector<8x8x64xf32>
    %cst_105 = arith.constant dense<0.000000e+00> : vector<8x8xf32>
    %277 = vector.multi_reduction <add>, %276, %cst_105 [2] : vector<8x8x64xf32> to vector<8x8xf32>
    %278 = vector.shape_cast %277 : vector<8x8xf32> to vector<8x8x1xf32>
    %cst_106 = arith.constant 6.400000e+01 : f32
    %279 = vector.broadcast %cst_106 : f32 to vector<8x8x1xf32>
    %280 = arith.divf %278, %279 : vector<8x8x1xf32>
    %281 = vector.broadcast %273 : vector<8x8x1xf32> to vector<8x8x64xf32>
    %282 = arith.subf %267, %281 : vector<8x8x64xf32>
    %cst_107 = arith.constant 9.99999974E-6 : f32
    %283 = vector.broadcast %cst_107 : f32 to vector<8x8x1xf32>
    %284 = arith.addf %280, %283 : vector<8x8x1xf32>
    %285 = math.rsqrt %284 : vector<8x8x1xf32>
    %286 = vector.broadcast %285 : vector<8x8x1xf32> to vector<8x8x64xf32>
    %287 = arith.mulf %282, %286 : vector<8x8x64xf32>
    %288 = vector.shape_cast %268 : vector<1x64xf32> to vector<1x1x64xf32>
    %289 = vector.broadcast %288 : vector<1x1x64xf32> to vector<8x8x64xf32>
    %290 = arith.mulf %287, %289 : vector<8x8x64xf32>
    %291 = vector.shape_cast %269 : vector<1x64xf32> to vector<1x1x64xf32>
    %292 = vector.broadcast %291 : vector<1x1x64xf32> to vector<8x8x64xf32>
    %293 = arith.addf %290, %292 : vector<8x8x64xf32>
    %c1_108 = arith.constant 1 : index
    %c0_109 = arith.constant 0 : index
    %c0_110 = arith.constant 0 : index
    %294 = vector.load %arg13[%c1_108, %c0_109, %c0_110] : memref<2x64x128xbf16, #tpu.memory_space<vmem>>, vector<1x64x128xbf16>
    %295 = vector.shape_cast %294 : vector<1x64x128xbf16> to vector<64x128xbf16>
    %c1_111 = arith.constant 1 : index
    %c0_112 = arith.constant 0 : index
    %c0_113 = arith.constant 0 : index
    %296 = vector.load %arg14[%c1_111, %c0_112, %c0_113] : memref<2x1x128xf32, #tpu.memory_space<vmem>>, vector<1x1x128xf32>
    %297 = vector.shape_cast %296 : vector<1x1x128xf32> to vector<1x128xf32>
    %c1_114 = arith.constant 1 : index
    %c0_115 = arith.constant 0 : index
    %c0_116 = arith.constant 0 : index
    %298 = vector.load %arg15[%c1_114, %c0_115, %c0_116] : memref<2x128x64xbf16, #tpu.memory_space<vmem>>, vector<1x128x64xbf16>
    %299 = vector.shape_cast %298 : vector<1x128x64xbf16> to vector<128x64xbf16>
    %c1_117 = arith.constant 1 : index
    %c0_118 = arith.constant 0 : index
    %c0_119 = arith.constant 0 : index
    %300 = vector.load %arg16[%c1_117, %c0_118, %c0_119] : memref<2x1x64xf32, #tpu.memory_space<vmem>>, vector<1x1x64xf32>
    %301 = vector.shape_cast %300 : vector<1x1x64xf32> to vector<1x64xf32>
    %302 = vector.shape_cast %293 : vector<8x8x64xf32> to vector<64x64xf32>
    %303 = arith.truncf %302 : vector<64x64xf32> to vector<64x64xbf16>
    %cst_120 = arith.constant dense<0.000000e+00> : vector<64x128xf32>
    %304 = tpu.matmul %303, %295, %cst_120 {dimension_numbers = #tpu.dot_dimension_numbers<[1], [0], [0], [1], [0, 0, 1, 1], [], []>} : vector<64x64xbf16>, vector<64x128xbf16>, vector<64x128xf32> -> vector<64x128xf32>
    %305 = vector.broadcast %297 : vector<1x128xf32> to vector<64x128xf32>
    %306 = arith.addf %304, %305 : vector<64x128xf32>
    %307 = arith.mulf %306, %306 : vector<64x128xf32>
    %308 = arith.mulf %306, %307 : vector<64x128xf32>
    %cst_121 = arith.constant 4.471500e-02 : f32
    %309 = vector.broadcast %cst_121 : f32 to vector<64x128xf32>
    %310 = arith.mulf %309, %308 : vector<64x128xf32>
    %311 = arith.addf %306, %310 : vector<64x128xf32>
    %cst_122 = arith.constant 0.797884583 : f32
    %312 = vector.broadcast %cst_122 : f32 to vector<64x128xf32>
    %313 = arith.mulf %312, %311 : vector<64x128xf32>
    %314 = math.tanh %313 : vector<64x128xf32>
    %cst_123 = arith.constant 1.000000e+00 : f32
    %315 = vector.broadcast %cst_123 : f32 to vector<64x128xf32>
    %316 = arith.addf %315, %314 : vector<64x128xf32>
    %cst_124 = arith.constant 5.000000e-01 : f32
    %317 = vector.broadcast %cst_124 : f32 to vector<64x128xf32>
    %318 = arith.mulf %317, %316 : vector<64x128xf32>
    %319 = arith.mulf %306, %318 : vector<64x128xf32>
    %320 = arith.truncf %319 : vector<64x128xf32> to vector<64x128xbf16>
    %cst_125 = arith.constant dense<0.000000e+00> : vector<64x64xf32>
    %321 = tpu.matmul %320, %299, %cst_125 {dimension_numbers = #tpu.dot_dimension_numbers<[1], [0], [0], [1], [0, 0, 1, 1], [], []>} : vector<64x128xbf16>, vector<128x64xbf16>, vector<64x64xf32> -> vector<64x64xf32>
    %322 = vector.broadcast %301 : vector<1x64xf32> to vector<64x64xf32>
    %323 = arith.addf %321, %322 : vector<64x64xf32>
    %324 = vector.shape_cast %323 : vector<64x64xf32> to vector<8x8x64xf32>
    %325 = arith.addf %267, %324 : vector<8x8x64xf32>
    %c0_126 = arith.constant 0 : index
    %c0_127 = arith.constant 0 : index
    %326 = vector.load %arg17[%c0_126, %c0_127] : memref<2x64xf32, #tpu.memory_space<vmem>>, vector<2x64xf32>
    %327 = vector.extract_strided_slice %326 {offsets = [0, 0], sizes = [1, 64], strides = [1, 1]} : vector<2x64xf32> to vector<1x64xf32>
    %328 = vector.extract_strided_slice %326 {offsets = [1, 0], sizes = [1, 64], strides = [1, 1]} : vector<2x64xf32> to vector<1x64xf32>
    %cst_128 = arith.constant dense<0.000000e+00> : vector<8x8xf32>
    %329 = vector.multi_reduction <add>, %325, %cst_128 [2] : vector<8x8x64xf32> to vector<8x8xf32>
    %330 = vector.shape_cast %329 : vector<8x8xf32> to vector<8x8x1xf32>
    %cst_129 = arith.constant 6.400000e+01 : f32
    %331 = vector.broadcast %cst_129 : f32 to vector<8x8x1xf32>
    %332 = arith.divf %330, %331 : vector<8x8x1xf32>
    %333 = vector.broadcast %332 : vector<8x8x1xf32> to vector<8x8x64xf32>
    %334 = arith.subf %325, %333 : vector<8x8x64xf32>
    %335 = arith.mulf %334, %334 : vector<8x8x64xf32>
    %cst_130 = arith.constant dense<0.000000e+00> : vector<8x8xf32>
    %336 = vector.multi_reduction <add>, %335, %cst_130 [2] : vector<8x8x64xf32> to vector<8x8xf32>
    %337 = vector.shape_cast %336 : vector<8x8xf32> to vector<8x8x1xf32>
    %cst_131 = arith.constant 6.400000e+01 : f32
    %338 = vector.broadcast %cst_131 : f32 to vector<8x8x1xf32>
    %339 = arith.divf %337, %338 : vector<8x8x1xf32>
    %340 = vector.broadcast %332 : vector<8x8x1xf32> to vector<8x8x64xf32>
    %341 = arith.subf %325, %340 : vector<8x8x64xf32>
    %cst_132 = arith.constant 9.99999974E-6 : f32
    %342 = vector.broadcast %cst_132 : f32 to vector<8x8x1xf32>
    %343 = arith.addf %339, %342 : vector<8x8x1xf32>
    %344 = math.rsqrt %343 : vector<8x8x1xf32>
    %345 = vector.broadcast %344 : vector<8x8x1xf32> to vector<8x8x64xf32>
    %346 = arith.mulf %341, %345 : vector<8x8x64xf32>
    %347 = vector.shape_cast %327 : vector<1x64xf32> to vector<1x1x64xf32>
    %348 = vector.broadcast %347 : vector<1x1x64xf32> to vector<8x8x64xf32>
    %349 = arith.mulf %346, %348 : vector<8x8x64xf32>
    %350 = vector.shape_cast %328 : vector<1x64xf32> to vector<1x1x64xf32>
    %351 = vector.broadcast %350 : vector<1x1x64xf32> to vector<8x8x64xf32>
    %352 = arith.addf %349, %351 : vector<8x8x64xf32>
    %c0_133 = arith.constant 0 : index
    %c0_134 = arith.constant 0 : index
    %c0_135 = arith.constant 0 : index
    %353 = vector.load %arg18[%c0_133, %c0_134, %c0_135] : memref<1x1x64xf32, #tpu.memory_space<vmem>>, vector<1x1x64xf32>
    %354 = vector.shape_cast %353 : vector<1x1x64xf32> to vector<1x1x64xf32>
    %355 = vector.broadcast %354 : vector<1x1x64xf32> to vector<2x1x64xf32>
    %c0_136 = arith.constant 0 : index
    %c0_137 = arith.constant 0 : index
    %c0_138 = arith.constant 0 : index
    %356 = vector.load %arg34[%c0_136, %c0_137, %c0_138] : memref<2x5x64xf32, #tpu.memory_space<vmem>>, vector<2x1x64xf32>
    tpu.vector_store %arg34[%c0_136, %c0_137, %c0_138], %355 {strides = array<i32>} : memref<2x5x64xf32, #tpu.memory_space<vmem>>, vector<2x1x64xf32>,
    %c0_139 = arith.constant 0 : index
    %c0_140 = arith.constant 0 : index
    %c0_141 = arith.constant 0 : index
    %357 = vector.load %arg35[%c0_139, %c0_140, %c0_141] : memref<2x5x64xf32, #tpu.memory_space<vmem>>, vector<2x1x64xf32>
    tpu.vector_store %arg35[%c0_139, %c0_140, %c0_141], %355 {strides = array<i32>} : memref<2x5x64xf32, #tpu.memory_space<vmem>>, vector<2x1x64xf32>,
    %358 = vector.shape_cast %352 : vector<8x8x64xf32> to vector<2x4x8x64xf32>
    %c0_142 = arith.constant 0 : index
    %c0_143 = arith.constant 0 : index
    %359 = vector.load %arg19[%c0_142, %c0_143] : memref<54x256xbf16, #tpu.memory_space<vmem>>, vector<54x256xbf16>
    %c0_144 = arith.constant 0 : index
    %c0_145 = arith.constant 0 : index
    %c0_146 = arith.constant 0 : index
    %360 = vector.load %arg2[%c0_144, %c0_145, %c0_146] : memref<2x1x54xf32, #tpu.memory_space<vmem>>, vector<2x1x54xf32>
    %361 = arith.truncf %360 : vector<2x1x54xf32> to vector<2x1x54xbf16>
    %362 = vector.shape_cast %359 : vector<54x256xbf16> to vector<1x54x256xbf16>
    %363 = vector.shape_cast %362 : vector<1x54x256xbf16> to vector<1x54x256xbf16>
    %364 = vector.broadcast %363 : vector<1x54x256xbf16> to vector<2x54x256xbf16>
    "tpu.trace_start"() <{level = 10 : i32, message = "bnk,bkd->bnd"}> : () -> ()
    %cst_147 = arith.constant dense<0.000000e+00> : vector<2x1x256xf32>
    %365 = tpu.matmul %361, %364, %cst_147 {dimension_numbers = #tpu.dot_dimension_numbers<[2], [1], [1], [2], [0, 0, 0, 1, 1, 2], [0], [0]>} : vector<2x1x54xbf16>, vector<2x54x256xbf16>, vector<2x1x256xf32> -> vector<2x1x256xf32>
    "tpu.trace_stop"() : () -> ()
    %c0_148 = arith.constant 0 : index
    %c0_149 = arith.constant 0 : index
    %366 = vector.load %arg20[%c0_148, %c0_149] : memref<1x256xf32, #tpu.memory_space<vmem>>, vector<1x256xf32>
    %367 = vector.shape_cast %366 : vector<1x256xf32> to vector<1x1x256xf32>
    %368 = vector.broadcast %367 : vector<1x1x256xf32> to vector<2x1x256xf32>
    %369 = arith.addf %365, %368 : vector<2x1x256xf32>
    %370 = vector.extract_strided_slice %358 {offsets = [0, 0, 0, 0], sizes = [2, 1, 1, 64], strides = [1, 1, 1, 1]} : vector<2x4x8x64xf32> to vector<2x1x1x64xf32>
    %371 = vector.shape_cast %370 : vector<2x1x1x64xf32> to vector<2x1x64xf32>
    %c0_150 = arith.constant 0 : index
    %c1_151 = arith.constant 1 : index
    %c0_152 = arith.constant 0 : index
    %372 = vector.load %arg34[%c0_150, %c1_151, %c0_152] : memref<2x5x64xf32, #tpu.memory_space<vmem>>, vector<2x1x64xf32>
    tpu.vector_store %arg34[%c0_150, %c1_151, %c0_152], %371 {strides = array<i32>} : memref<2x5x64xf32, #tpu.memory_space<vmem>>, vector<2x1x64xf32>,
    %373 = vector.extract_strided_slice %369 {offsets = [0, 0, 0], sizes = [2, 1, 64], strides = [1, 1, 1]} : vector<2x1x256xf32> to vector<2x1x64xf32>
    %c0_153 = arith.constant 0 : index
    %c1_154 = arith.constant 1 : index
    %c0_155 = arith.constant 0 : index
    %374 = vector.load %arg35[%c0_153, %c1_154, %c0_155] : memref<2x5x64xf32, #tpu.memory_space<vmem>>, vector<2x1x64xf32>
    tpu.vector_store %arg35[%c0_153, %c1_154, %c0_155], %373 {strides = array<i32>} : memref<2x5x64xf32, #tpu.memory_space<vmem>>, vector<2x1x64xf32>,
    %375 = vector.extract_strided_slice %358 {offsets = [0, 1, 0, 0], sizes = [2, 1, 1, 64], strides = [1, 1, 1, 1]} : vector<2x4x8x64xf32> to vector<2x1x1x64xf32>
    %376 = vector.shape_cast %375 : vector<2x1x1x64xf32> to vector<2x1x64xf32>
    %c0_156 = arith.constant 0 : index
    %c2 = arith.constant 2 : index
    %c0_157 = arith.constant 0 : index
    %377 = vector.load %arg34[%c0_156, %c2, %c0_157] : memref<2x5x64xf32, #tpu.memory_space<vmem>>, vector<2x1x64xf32>
    tpu.vector_store %arg34[%c0_156, %c2, %c0_157], %376 {strides = array<i32>} : memref<2x5x64xf32, #tpu.memory_space<vmem>>, vector<2x1x64xf32>,
    %378 = vector.extract_strided_slice %369 {offsets = [0, 0, 64], sizes = [2, 1, 64], strides = [1, 1, 1]} : vector<2x1x256xf32> to vector<2x1x64xf32>
    %c0_158 = arith.constant 0 : index
    %c2_159 = arith.constant 2 : index
    %c0_160 = arith.constant 0 : index
    %379 = vector.load %arg35[%c0_158, %c2_159, %c0_160] : memref<2x5x64xf32, #tpu.memory_space<vmem>>, vector<2x1x64xf32>
    tpu.vector_store %arg35[%c0_158, %c2_159, %c0_160], %378 {strides = array<i32>} : memref<2x5x64xf32, #tpu.memory_space<vmem>>, vector<2x1x64xf32>,
    %380 = vector.extract_strided_slice %358 {offsets = [0, 2, 0, 0], sizes = [2, 1, 1, 64], strides = [1, 1, 1, 1]} : vector<2x4x8x64xf32> to vector<2x1x1x64xf32>
    %381 = vector.shape_cast %380 : vector<2x1x1x64xf32> to vector<2x1x64xf32>
    %c0_161 = arith.constant 0 : index
    %c3 = arith.constant 3 : index
    %c0_162 = arith.constant 0 : index
    %382 = vector.load %arg34[%c0_161, %c3, %c0_162] : memref<2x5x64xf32, #tpu.memory_space<vmem>>, vector<2x1x64xf32>
    tpu.vector_store %arg34[%c0_161, %c3, %c0_162], %381 {strides = array<i32>} : memref<2x5x64xf32, #tpu.memory_space<vmem>>, vector<2x1x64xf32>,
    %383 = vector.extract_strided_slice %369 {offsets = [0, 0, 128], sizes = [2, 1, 64], strides = [1, 1, 1]} : vector<2x1x256xf32> to vector<2x1x64xf32>
    %c0_163 = arith.constant 0 : index
    %c3_164 = arith.constant 3 : index
    %c0_165 = arith.constant 0 : index
    %384 = vector.load %arg35[%c0_163, %c3_164, %c0_165] : memref<2x5x64xf32, #tpu.memory_space<vmem>>, vector<2x1x64xf32>
    tpu.vector_store %arg35[%c0_163, %c3_164, %c0_165], %383 {strides = array<i32>} : memref<2x5x64xf32, #tpu.memory_space<vmem>>, vector<2x1x64xf32>,
    %385 = vector.extract_strided_slice %358 {offsets = [0, 3, 0, 0], sizes = [2, 1, 1, 64], strides = [1, 1, 1, 1]} : vector<2x4x8x64xf32> to vector<2x1x1x64xf32>
    %386 = vector.shape_cast %385 : vector<2x1x1x64xf32> to vector<2x1x64xf32>
    %c0_166 = arith.constant 0 : index
    %c4 = arith.constant 4 : index
    %c0_167 = arith.constant 0 : index
    %387 = vector.load %arg34[%c0_166, %c4, %c0_167] : memref<2x5x64xf32, #tpu.memory_space<vmem>>, vector<2x1x64xf32>
    tpu.vector_store %arg34[%c0_166, %c4, %c0_167], %386 {strides = array<i32>} : memref<2x5x64xf32, #tpu.memory_space<vmem>>, vector<2x1x64xf32>,
    %388 = vector.extract_strided_slice %369 {offsets = [0, 0, 192], sizes = [2, 1, 64], strides = [1, 1, 1]} : vector<2x1x256xf32> to vector<2x1x64xf32>
    %c0_168 = arith.constant 0 : index
    %c4_169 = arith.constant 4 : index
    %c0_170 = arith.constant 0 : index
    %389 = vector.load %arg35[%c0_168, %c4_169, %c0_170] : memref<2x5x64xf32, #tpu.memory_space<vmem>>, vector<2x1x64xf32>
    tpu.vector_store %arg35[%c0_168, %c4_169, %c0_170], %388 {strides = array<i32>} : memref<2x5x64xf32, #tpu.memory_space<vmem>>, vector<2x1x64xf32>,
    %c0_171 = arith.constant 0 : index
    %c0_172 = arith.constant 0 : index
    %390 = vector.load %arg30[%c0_171, %c0_172] : memref<10x64xf32, #tpu.memory_space<vmem>>, vector<10x64xf32>
    %c0_173 = arith.constant 0 : index
    %c0_174 = arith.constant 0 : index
    %c0_175 = arith.constant 0 : index
    %391 = vector.load %arg34[%c0_173, %c0_174, %c0_175] : memref<2x5x64xf32, #tpu.memory_space<vmem>>, vector<2x5x64xf32>
    %c0_176 = arith.constant 0 : index
    %c0_177 = arith.constant 0 : index
    %c0_178 = arith.constant 0 : index
    %392 = vector.load %arg35[%c0_176, %c0_177, %c0_178] : memref<2x5x64xf32, #tpu.memory_space<vmem>>, vector<2x5x64xf32>
    %393 = vector.extract_strided_slice %390 {offsets = [0, 0], sizes = [1, 64], strides = [1, 1]} : vector<10x64xf32> to vector<1x64xf32>
    %394 = vector.extract_strided_slice %390 {offsets = [1, 0], sizes = [1, 64], strides = [1, 1]} : vector<10x64xf32> to vector<1x64xf32>
    %cst_179 = arith.constant dense<0.000000e+00> : vector<2x5xf32>
    %395 = vector.multi_reduction <add>, %392, %cst_179 [2] : vector<2x5x64xf32> to vector<2x5xf32>
    %396 = vector.shape_cast %395 : vector<2x5xf32> to vector<2x5x1xf32>
    %cst_180 = arith.constant 6.400000e+01 : f32
    %397 = vector.broadcast %cst_180 : f32 to vector<2x5x1xf32>
    %398 = arith.divf %396, %397 : vector<2x5x1xf32>
    %399 = vector.broadcast %398 : vector<2x5x1xf32> to vector<2x5x64xf32>
    %400 = arith.subf %392, %399 : vector<2x5x64xf32>
    %401 = arith.mulf %400, %400 : vector<2x5x64xf32>
    %cst_181 = arith.constant dense<0.000000e+00> : vector<2x5xf32>
    %402 = vector.multi_reduction <add>, %401, %cst_181 [2] : vector<2x5x64xf32> to vector<2x5xf32>
    %403 = vector.shape_cast %402 : vector<2x5xf32> to vector<2x5x1xf32>
    %cst_182 = arith.constant 6.400000e+01 : f32
    %404 = vector.broadcast %cst_182 : f32 to vector<2x5x1xf32>
    %405 = arith.divf %403, %404 : vector<2x5x1xf32>
    %406 = vector.broadcast %398 : vector<2x5x1xf32> to vector<2x5x64xf32>
    %407 = arith.subf %392, %406 : vector<2x5x64xf32>
    %cst_183 = arith.constant 9.99999974E-6 : f32
    %408 = vector.broadcast %cst_183 : f32 to vector<2x5x1xf32>
    %409 = arith.addf %405, %408 : vector<2x5x1xf32>
    %410 = math.rsqrt %409 : vector<2x5x1xf32>
    %411 = vector.broadcast %410 : vector<2x5x1xf32> to vector<2x5x64xf32>
    %412 = arith.mulf %407, %411 : vector<2x5x64xf32>
    %413 = vector.shape_cast %393 : vector<1x64xf32> to vector<1x1x64xf32>
    %414 = vector.broadcast %413 : vector<1x1x64xf32> to vector<2x5x64xf32>
    %415 = arith.mulf %412, %414 : vector<2x5x64xf32>
    %416 = vector.shape_cast %394 : vector<1x64xf32> to vector<1x1x64xf32>
    %417 = vector.broadcast %416 : vector<1x1x64xf32> to vector<2x5x64xf32>
    %418 = arith.addf %415, %417 : vector<2x5x64xf32>
    %419 = vector.extract_strided_slice %390 {offsets = [2, 0], sizes = [1, 64], strides = [1, 1]} : vector<10x64xf32> to vector<1x64xf32>
    %420 = vector.extract_strided_slice %390 {offsets = [3, 0], sizes = [1, 64], strides = [1, 1]} : vector<10x64xf32> to vector<1x64xf32>
    %cst_184 = arith.constant dense<0.000000e+00> : vector<2x5xf32>
    %421 = vector.multi_reduction <add>, %418, %cst_184 [2] : vector<2x5x64xf32> to vector<2x5xf32>
    %422 = vector.shape_cast %421 : vector<2x5xf32> to vector<2x5x1xf32>
    %cst_185 = arith.constant 6.400000e+01 : f32
    %423 = vector.broadcast %cst_185 : f32 to vector<2x5x1xf32>
    %424 = arith.divf %422, %423 : vector<2x5x1xf32>
    %425 = vector.broadcast %424 : vector<2x5x1xf32> to vector<2x5x64xf32>
    %426 = arith.subf %418, %425 : vector<2x5x64xf32>
    %427 = arith.mulf %426, %426 : vector<2x5x64xf32>
    %cst_186 = arith.constant dense<0.000000e+00> : vector<2x5xf32>
    %428 = vector.multi_reduction <add>, %427, %cst_186 [2] : vector<2x5x64xf32> to vector<2x5xf32>
    %429 = vector.shape_cast %428 : vector<2x5xf32> to vector<2x5x1xf32>
    %cst_187 = arith.constant 6.400000e+01 : f32
    %430 = vector.broadcast %cst_187 : f32 to vector<2x5x1xf32>
    %431 = arith.divf %429, %430 : vector<2x5x1xf32>
    %432 = vector.broadcast %424 : vector<2x5x1xf32> to vector<2x5x64xf32>
    %433 = arith.subf %418, %432 : vector<2x5x64xf32>
    %cst_188 = arith.constant 9.99999974E-6 : f32
    %434 = vector.broadcast %cst_188 : f32 to vector<2x5x1xf32>
    %435 = arith.addf %431, %434 : vector<2x5x1xf32>
    %436 = math.rsqrt %435 : vector<2x5x1xf32>
    %437 = vector.broadcast %436 : vector<2x5x1xf32> to vector<2x5x64xf32>
    %438 = arith.mulf %433, %437 : vector<2x5x64xf32>
    %439 = vector.shape_cast %419 : vector<1x64xf32> to vector<1x1x64xf32>
    %440 = vector.broadcast %439 : vector<1x1x64xf32> to vector<2x5x64xf32>
    %441 = arith.mulf %438, %440 : vector<2x5x64xf32>
    %442 = vector.shape_cast %420 : vector<1x64xf32> to vector<1x1x64xf32>
    %443 = vector.broadcast %442 : vector<1x1x64xf32> to vector<2x5x64xf32>
    %444 = arith.addf %441, %443 : vector<2x5x64xf32>
    %c0_189 = arith.constant 0 : index
    %c0_190 = arith.constant 0 : index
    %445 = vector.load %arg23[%c0_189, %c0_190] : memref<64x256xbf16, #tpu.memory_space<vmem>>, vector<64x256xbf16>
    %446 = arith.truncf %444 : vector<2x5x64xf32> to vector<2x5x64xbf16>
    %447 = vector.shape_cast %445 : vector<64x256xbf16> to vector<1x64x256xbf16>
    %448 = vector.shape_cast %447 : vector<1x64x256xbf16> to vector<1x64x256xbf16>
    %449 = vector.broadcast %448 : vector<1x64x256xbf16> to vector<2x64x256xbf16>
    "tpu.trace_start"() <{level = 10 : i32, message = "bmd,bdk->bmk"}> : () -> ()
    %cst_191 = arith.constant dense<0.000000e+00> : vector<2x5x256xf32>
    %450 = tpu.matmul %446, %449, %cst_191 {dimension_numbers = #tpu.dot_dimension_numbers<[2], [1], [1], [2], [0, 0, 0, 1, 1, 2], [0], [0]>} : vector<2x5x64xbf16>, vector<2x64x256xbf16>, vector<2x5x256xf32> -> vector<2x5x256xf32>
    "tpu.trace_stop"() : () -> ()
    %c0_192 = arith.constant 0 : index
    %c0_193 = arith.constant 0 : index
    %c0_194 = arith.constant 0 : index
    %451 = vector.load %arg21[%c0_192, %c0_193, %c0_194] : memref<2x4x64xf32, #tpu.memory_space<vmem>>, vector<1x4x64xf32>
    %452 = vector.shape_cast %451 : vector<1x4x64xf32> to vector<4x64xf32>
    %453 = vector.extract_strided_slice %452 {offsets = [0, 0], sizes = [1, 64], strides = [1, 1]} : vector<4x64xf32> to vector<1x64xf32>
    %454 = vector.extract_strided_slice %452 {offsets = [1, 0], sizes = [1, 64], strides = [1, 1]} : vector<4x64xf32> to vector<1x64xf32>
    %cst_195 = arith.constant dense<0.000000e+00> : vector<2x5xf32>
    %455 = vector.multi_reduction <add>, %391, %cst_195 [2] : vector<2x5x64xf32> to vector<2x5xf32>
    %456 = vector.shape_cast %455 : vector<2x5xf32> to vector<2x5x1xf32>
    %cst_196 = arith.constant 6.400000e+01 : f32
    %457 = vector.broadcast %cst_196 : f32 to vector<2x5x1xf32>
    %458 = arith.divf %456, %457 : vector<2x5x1xf32>
    %459 = vector.broadcast %458 : vector<2x5x1xf32> to vector<2x5x64xf32>
    %460 = arith.subf %391, %459 : vector<2x5x64xf32>
    %461 = arith.mulf %460, %460 : vector<2x5x64xf32>
    %cst_197 = arith.constant dense<0.000000e+00> : vector<2x5xf32>
    %462 = vector.multi_reduction <add>, %461, %cst_197 [2] : vector<2x5x64xf32> to vector<2x5xf32>
    %463 = vector.shape_cast %462 : vector<2x5xf32> to vector<2x5x1xf32>
    %cst_198 = arith.constant 6.400000e+01 : f32
    %464 = vector.broadcast %cst_198 : f32 to vector<2x5x1xf32>
    %465 = arith.divf %463, %464 : vector<2x5x1xf32>
    %466 = vector.broadcast %458 : vector<2x5x1xf32> to vector<2x5x64xf32>
    %467 = arith.subf %391, %466 : vector<2x5x64xf32>
    %cst_199 = arith.constant 9.99999974E-6 : f32
    %468 = vector.broadcast %cst_199 : f32 to vector<2x5x1xf32>
    %469 = arith.addf %465, %468 : vector<2x5x1xf32>
    %470 = math.rsqrt %469 : vector<2x5x1xf32>
    %471 = vector.broadcast %470 : vector<2x5x1xf32> to vector<2x5x64xf32>
    %472 = arith.mulf %467, %471 : vector<2x5x64xf32>
    %473 = vector.shape_cast %453 : vector<1x64xf32> to vector<1x1x64xf32>
    %474 = vector.broadcast %473 : vector<1x1x64xf32> to vector<2x5x64xf32>
    %475 = arith.mulf %472, %474 : vector<2x5x64xf32>
    %476 = vector.shape_cast %454 : vector<1x64xf32> to vector<1x1x64xf32>
    %477 = vector.broadcast %476 : vector<1x1x64xf32> to vector<2x5x64xf32>
    %478 = arith.addf %475, %477 : vector<2x5x64xf32>
    %c0_200 = arith.constant 0 : index
    %c0_201 = arith.constant 0 : index
    %c0_202 = arith.constant 0 : index
    %479 = vector.load %arg22[%c0_200, %c0_201, %c0_202] : memref<2x64x64xbf16, #tpu.memory_space<vmem>>, vector<1x64x64xbf16>
    %480 = vector.shape_cast %479 : vector<1x64x64xbf16> to vector<64x64xbf16>
    %481 = arith.truncf %478 : vector<2x5x64xf32> to vector<2x5x64xbf16>
    %482 = vector.shape_cast %480 : vector<64x64xbf16> to vector<1x64x64xbf16>
    %483 = vector.shape_cast %482 : vector<1x64x64xbf16> to vector<1x64x64xbf16>
    %484 = vector.broadcast %483 : vector<1x64x64xbf16> to vector<2x64x64xbf16>
    "tpu.trace_start"() <{level = 10 : i32, message = "bnd,bdk->bnk"}> : () -> ()
    %cst_203 = arith.constant dense<0.000000e+00> : vector<2x5x64xf32>
    %485 = tpu.matmul %481, %484, %cst_203 {dimension_numbers = #tpu.dot_dimension_numbers<[2], [1], [1], [2], [0, 0, 0, 1, 1, 2], [0], [0]>} : vector<2x5x64xbf16>, vector<2x64x64xbf16>, vector<2x5x64xf32> -> vector<2x5x64xf32>
    "tpu.trace_stop"() : () -> ()
    %486 = vector.extract_strided_slice %450 {offsets = [0, 0, 0], sizes = [2, 5, 128], strides = [1, 1, 1]} : vector<2x5x256xf32> to vector<2x5x128xf32>
    %c0_204 = arith.constant 0 : index
    %c0_205 = arith.constant 0 : index
    %c0_206 = arith.constant 0 : index
    %487 = vector.load %arg24[%c0_204, %c0_205, %c0_206] : memref<2x64x64xbf16, #tpu.memory_space<vmem>>, vector<1x64x64xbf16>
    %488 = vector.shape_cast %487 : vector<1x64x64xbf16> to vector<64x64xbf16>
    %c0_207 = arith.constant 0 : index
    %c0_208 = arith.constant 0 : index
    %c0_209 = arith.constant 0 : index
    %489 = vector.load %arg25[%c0_207, %c0_208, %c0_209] : memref<2x1x64xf32, #tpu.memory_space<vmem>>, vector<1x1x64xf32>
    %490 = vector.shape_cast %489 : vector<1x1x64xf32> to vector<1x64xf32>
    %491 = vector.extract_strided_slice %485 {offsets = [0, 0, 0], sizes = [2, 5, 32], strides = [1, 1, 1]} : vector<2x5x64xf32> to vector<2x5x32xf32>
    %492 = vector.extract_strided_slice %486 {offsets = [0, 0, 0], sizes = [2, 5, 32], strides = [1, 1, 1]} : vector<2x5x128xf32> to vector<2x5x32xf32>
    %493 = vector.extract_strided_slice %486 {offsets = [0, 0, 64], sizes = [2, 5, 32], strides = [1, 1, 1]} : vector<2x5x128xf32> to vector<2x5x32xf32>
    "tpu.trace_start"() <{level = 10 : i32, message = "bnd,bmd->bnm"}> : () -> ()
    %cst_210 = arith.constant dense<0.000000e+00> : vector<2x5x5xf32>
    %494 = tpu.matmul %491, %492, %cst_210 {dimension_numbers = #tpu.dot_dimension_numbers<[2], [2], [1], [1], [0, 0, 0, 1, 1, 1], [0], [0]>} : vector<2x5x32xf32>, vector<2x5x32xf32>, vector<2x5x5xf32> -> vector<2x5x5xf32>
    "tpu.trace_stop"() : () -> ()
    %cst_211 = arith.constant 0.176776692 : f32
    %495 = vector.broadcast %cst_211 : f32 to vector<2x5x5xf32>
    %496 = arith.mulf %494, %495 : vector<2x5x5xf32>
    %cst_212 = arith.constant dense<0xFF800000> : vector<2x5xf32>
    %497 = vector.multi_reduction <maximumf>, %496, %cst_212 [2] : vector<2x5x5xf32> to vector<2x5xf32>
    %498 = vector.shape_cast %497 : vector<2x5xf32> to vector<2x5x1xf32>
    %499 = vector.broadcast %498 : vector<2x5x1xf32> to vector<2x5x5xf32>
    %500 = arith.subf %496, %499 : vector<2x5x5xf32>
    %501 = math.exp %500 : vector<2x5x5xf32>
    %cst_213 = arith.constant dense<0.000000e+00> : vector<2x5xf32>
    %502 = vector.multi_reduction <add>, %501, %cst_213 [2] : vector<2x5x5xf32> to vector<2x5xf32>
    %503 = vector.shape_cast %502 : vector<2x5xf32> to vector<2x5x1xf32>
    %504 = tpu.reciprocal %503 {approx = true} : vector<2x5x1xf32> -> vector<2x5x1xf32>
    %505 = vector.broadcast %504 : vector<2x5x1xf32> to vector<2x5x5xf32>
    %506 = arith.mulf %501, %505 : vector<2x5x5xf32>
    "tpu.trace_start"() <{level = 10 : i32, message = "bnm,bmd->bnd"}> : () -> ()
    %cst_214 = arith.constant dense<0.000000e+00> : vector<2x5x32xf32>
    %507 = tpu.matmul %506, %493, %cst_214 {dimension_numbers = #tpu.dot_dimension_numbers<[2], [1], [1], [2], [0, 0, 0, 1, 1, 2], [0], [0]>} : vector<2x5x5xf32>, vector<2x5x32xf32>, vector<2x5x32xf32> -> vector<2x5x32xf32>
    "tpu.trace_stop"() : () -> ()
    %508 = vector.extract_strided_slice %488 {offsets = [0, 0], sizes = [32, 64], strides = [1, 1]} : vector<64x64xbf16> to vector<32x64xbf16>
    %509 = vector.shape_cast %508 : vector<32x64xbf16> to vector<1x32x64xbf16>
    %510 = vector.shape_cast %509 : vector<1x32x64xbf16> to vector<1x32x64xbf16>
    %511 = vector.broadcast %510 : vector<1x32x64xbf16> to vector<2x32x64xbf16>
    %512 = arith.truncf %507 : vector<2x5x32xf32> to vector<2x5x32xbf16>
    "tpu.trace_start"() <{level = 10 : i32, message = "bnd,bdk->bnk"}> : () -> ()
    %cst_215 = arith.constant dense<0.000000e+00> : vector<2x5x64xf32>
    %513 = tpu.matmul %512, %511, %cst_215 {dimension_numbers = #tpu.dot_dimension_numbers<[2], [1], [1], [2], [0, 0, 0, 1, 1, 2], [0], [0]>} : vector<2x5x32xbf16>, vector<2x32x64xbf16>, vector<2x5x64xf32> -> vector<2x5x64xf32>
    "tpu.trace_stop"() : () -> ()
    %514 = vector.extract_strided_slice %485 {offsets = [0, 0, 32], sizes = [2, 5, 32], strides = [1, 1, 1]} : vector<2x5x64xf32> to vector<2x5x32xf32>
    %515 = vector.extract_strided_slice %486 {offsets = [0, 0, 32], sizes = [2, 5, 32], strides = [1, 1, 1]} : vector<2x5x128xf32> to vector<2x5x32xf32>
    %516 = vector.extract_strided_slice %486 {offsets = [0, 0, 96], sizes = [2, 5, 32], strides = [1, 1, 1]} : vector<2x5x128xf32> to vector<2x5x32xf32>
    "tpu.trace_start"() <{level = 10 : i32, message = "bnd,bmd->bnm"}> : () -> ()
    %cst_216 = arith.constant dense<0.000000e+00> : vector<2x5x5xf32>
    %517 = tpu.matmul %514, %515, %cst_216 {dimension_numbers = #tpu.dot_dimension_numbers<[2], [2], [1], [1], [0, 0, 0, 1, 1, 1], [0], [0]>} : vector<2x5x32xf32>, vector<2x5x32xf32>, vector<2x5x5xf32> -> vector<2x5x5xf32>
    "tpu.trace_stop"() : () -> ()
    %cst_217 = arith.constant 0.176776692 : f32
    %518 = vector.broadcast %cst_217 : f32 to vector<2x5x5xf32>
    %519 = arith.mulf %517, %518 : vector<2x5x5xf32>
    %cst_218 = arith.constant dense<0xFF800000> : vector<2x5xf32>
    %520 = vector.multi_reduction <maximumf>, %519, %cst_218 [2] : vector<2x5x5xf32> to vector<2x5xf32>
    %521 = vector.shape_cast %520 : vector<2x5xf32> to vector<2x5x1xf32>
    %522 = vector.broadcast %521 : vector<2x5x1xf32> to vector<2x5x5xf32>
    %523 = arith.subf %519, %522 : vector<2x5x5xf32>
    %524 = math.exp %523 : vector<2x5x5xf32>
    %cst_219 = arith.constant dense<0.000000e+00> : vector<2x5xf32>
    %525 = vector.multi_reduction <add>, %524, %cst_219 [2] : vector<2x5x5xf32> to vector<2x5xf32>
    %526 = vector.shape_cast %525 : vector<2x5xf32> to vector<2x5x1xf32>
    %527 = tpu.reciprocal %526 {approx = true} : vector<2x5x1xf32> -> vector<2x5x1xf32>
    %528 = vector.broadcast %527 : vector<2x5x1xf32> to vector<2x5x5xf32>
    %529 = arith.mulf %524, %528 : vector<2x5x5xf32>
    "tpu.trace_start"() <{level = 10 : i32, message = "bnm,bmd->bnd"}> : () -> ()
    %cst_220 = arith.constant dense<0.000000e+00> : vector<2x5x32xf32>
    %530 = tpu.matmul %529, %516, %cst_220 {dimension_numbers = #tpu.dot_dimension_numbers<[2], [1], [1], [2], [0, 0, 0, 1, 1, 2], [0], [0]>} : vector<2x5x5xf32>, vector<2x5x32xf32>, vector<2x5x32xf32> -> vector<2x5x32xf32>
    "tpu.trace_stop"() : () -> ()
    %531 = vector.extract_strided_slice %488 {offsets = [32, 0], sizes = [32, 64], strides = [1, 1]} : vector<64x64xbf16> to vector<32x64xbf16>
    %532 = vector.shape_cast %531 : vector<32x64xbf16> to vector<1x32x64xbf16>
    %533 = vector.shape_cast %532 : vector<1x32x64xbf16> to vector<1x32x64xbf16>
    %534 = vector.broadcast %533 : vector<1x32x64xbf16> to vector<2x32x64xbf16>
    %535 = arith.truncf %530 : vector<2x5x32xf32> to vector<2x5x32xbf16>
    "tpu.trace_start"() <{level = 10 : i32, message = "bnd,bdk->bnk"}> : () -> ()
    %cst_221 = arith.constant dense<0.000000e+00> : vector<2x5x64xf32>
    %536 = tpu.matmul %535, %534, %cst_221 {dimension_numbers = #tpu.dot_dimension_numbers<[2], [1], [1], [2], [0, 0, 0, 1, 1, 2], [0], [0]>} : vector<2x5x32xbf16>, vector<2x32x64xbf16>, vector<2x5x64xf32> -> vector<2x5x64xf32>
    "tpu.trace_stop"() : () -> ()
    %537 = arith.addf %513, %536 : vector<2x5x64xf32>
    %538 = vector.shape_cast %490 : vector<1x64xf32> to vector<1x1x64xf32>
    %539 = vector.broadcast %538 : vector<1x1x64xf32> to vector<2x5x64xf32>
    %540 = arith.addf %537, %539 : vector<2x5x64xf32>
    %541 = arith.addf %391, %540 : vector<2x5x64xf32>
    %542 = vector.extract_strided_slice %452 {offsets = [2, 0], sizes = [1, 64], strides = [1, 1]} : vector<4x64xf32> to vector<1x64xf32>
    %543 = vector.extract_strided_slice %452 {offsets = [3, 0], sizes = [1, 64], strides = [1, 1]} : vector<4x64xf32> to vector<1x64xf32>
    %cst_222 = arith.constant dense<0.000000e+00> : vector<2x5xf32>
    %544 = vector.multi_reduction <add>, %541, %cst_222 [2] : vector<2x5x64xf32> to vector<2x5xf32>
    %545 = vector.shape_cast %544 : vector<2x5xf32> to vector<2x5x1xf32>
    %cst_223 = arith.constant 6.400000e+01 : f32
    %546 = vector.broadcast %cst_223 : f32 to vector<2x5x1xf32>
    %547 = arith.divf %545, %546 : vector<2x5x1xf32>
    %548 = vector.broadcast %547 : vector<2x5x1xf32> to vector<2x5x64xf32>
    %549 = arith.subf %541, %548 : vector<2x5x64xf32>
    %550 = arith.mulf %549, %549 : vector<2x5x64xf32>
    %cst_224 = arith.constant dense<0.000000e+00> : vector<2x5xf32>
    %551 = vector.multi_reduction <add>, %550, %cst_224 [2] : vector<2x5x64xf32> to vector<2x5xf32>
    %552 = vector.shape_cast %551 : vector<2x5xf32> to vector<2x5x1xf32>
    %cst_225 = arith.constant 6.400000e+01 : f32
    %553 = vector.broadcast %cst_225 : f32 to vector<2x5x1xf32>
    %554 = arith.divf %552, %553 : vector<2x5x1xf32>
    %555 = vector.broadcast %547 : vector<2x5x1xf32> to vector<2x5x64xf32>
    %556 = arith.subf %541, %555 : vector<2x5x64xf32>
    %cst_226 = arith.constant 9.99999974E-6 : f32
    %557 = vector.broadcast %cst_226 : f32 to vector<2x5x1xf32>
    %558 = arith.addf %554, %557 : vector<2x5x1xf32>
    %559 = math.rsqrt %558 : vector<2x5x1xf32>
    %560 = vector.broadcast %559 : vector<2x5x1xf32> to vector<2x5x64xf32>
    %561 = arith.mulf %556, %560 : vector<2x5x64xf32>
    %562 = vector.shape_cast %542 : vector<1x64xf32> to vector<1x1x64xf32>
    %563 = vector.broadcast %562 : vector<1x1x64xf32> to vector<2x5x64xf32>
    %564 = arith.mulf %561, %563 : vector<2x5x64xf32>
    %565 = vector.shape_cast %543 : vector<1x64xf32> to vector<1x1x64xf32>
    %566 = vector.broadcast %565 : vector<1x1x64xf32> to vector<2x5x64xf32>
    %567 = arith.addf %564, %566 : vector<2x5x64xf32>
    %c0_227 = arith.constant 0 : index
    %c0_228 = arith.constant 0 : index
    %c0_229 = arith.constant 0 : index
    %568 = vector.load %arg26[%c0_227, %c0_228, %c0_229] : memref<2x64x128xbf16, #tpu.memory_space<vmem>>, vector<1x64x128xbf16>
    %569 = vector.shape_cast %568 : vector<1x64x128xbf16> to vector<64x128xbf16>
    %c0_230 = arith.constant 0 : index
    %c0_231 = arith.constant 0 : index
    %c0_232 = arith.constant 0 : index
    %570 = vector.load %arg27[%c0_230, %c0_231, %c0_232] : memref<2x1x128xf32, #tpu.memory_space<vmem>>, vector<1x1x128xf32>
    %571 = vector.shape_cast %570 : vector<1x1x128xf32> to vector<1x128xf32>
    %c0_233 = arith.constant 0 : index
    %c0_234 = arith.constant 0 : index
    %c0_235 = arith.constant 0 : index
    %572 = vector.load %arg28[%c0_233, %c0_234, %c0_235] : memref<2x128x64xbf16, #tpu.memory_space<vmem>>, vector<1x128x64xbf16>
    %573 = vector.shape_cast %572 : vector<1x128x64xbf16> to vector<128x64xbf16>
    %c0_236 = arith.constant 0 : index
    %c0_237 = arith.constant 0 : index
    %c0_238 = arith.constant 0 : index
    %574 = vector.load %arg29[%c0_236, %c0_237, %c0_238] : memref<2x1x64xf32, #tpu.memory_space<vmem>>, vector<1x1x64xf32>
    %575 = vector.shape_cast %574 : vector<1x1x64xf32> to vector<1x64xf32>
    %576 = vector.shape_cast %569 : vector<64x128xbf16> to vector<1x64x128xbf16>
    %577 = vector.shape_cast %576 : vector<1x64x128xbf16> to vector<1x64x128xbf16>
    %578 = vector.broadcast %577 : vector<1x64x128xbf16> to vector<2x64x128xbf16>
    %579 = vector.shape_cast %573 : vector<128x64xbf16> to vector<1x128x64xbf16>
    %580 = vector.shape_cast %579 : vector<1x128x64xbf16> to vector<1x128x64xbf16>
    %581 = vector.broadcast %580 : vector<1x128x64xbf16> to vector<2x128x64xbf16>
    %582 = arith.truncf %567 : vector<2x5x64xf32> to vector<2x5x64xbf16>
    "tpu.trace_start"() <{level = 10 : i32, message = "bnd,bdf->bnf"}> : () -> ()
    %cst_239 = arith.constant dense<0.000000e+00> : vector<2x5x128xf32>
    %583 = tpu.matmul %582, %578, %cst_239 {dimension_numbers = #tpu.dot_dimension_numbers<[2], [1], [1], [2], [0, 0, 0, 1, 1, 2], [0], [0]>} : vector<2x5x64xbf16>, vector<2x64x128xbf16>, vector<2x5x128xf32> -> vector<2x5x128xf32>
    "tpu.trace_stop"() : () -> ()
    %584 = vector.shape_cast %571 : vector<1x128xf32> to vector<1x1x128xf32>
    %585 = vector.broadcast %584 : vector<1x1x128xf32> to vector<2x5x128xf32>
    %586 = arith.addf %583, %585 : vector<2x5x128xf32>
    %587 = arith.mulf %586, %586 : vector<2x5x128xf32>
    %588 = arith.mulf %586, %587 : vector<2x5x128xf32>
    %cst_240 = arith.constant 4.471500e-02 : f32
    %589 = vector.broadcast %cst_240 : f32 to vector<2x5x128xf32>
    %590 = arith.mulf %589, %588 : vector<2x5x128xf32>
    %591 = arith.addf %586, %590 : vector<2x5x128xf32>
    %cst_241 = arith.constant 0.797884583 : f32
    %592 = vector.broadcast %cst_241 : f32 to vector<2x5x128xf32>
    %593 = arith.mulf %592, %591 : vector<2x5x128xf32>
    %594 = math.tanh %593 : vector<2x5x128xf32>
    %cst_242 = arith.constant 1.000000e+00 : f32
    %595 = vector.broadcast %cst_242 : f32 to vector<2x5x128xf32>
    %596 = arith.addf %595, %594 : vector<2x5x128xf32>
    %cst_243 = arith.constant 5.000000e-01 : f32
    %597 = vector.broadcast %cst_243 : f32 to vector<2x5x128xf32>
    %598 = arith.mulf %597, %596 : vector<2x5x128xf32>
    %599 = arith.mulf %586, %598 : vector<2x5x128xf32>
    %600 = arith.truncf %599 : vector<2x5x128xf32> to vector<2x5x128xbf16>
    "tpu.trace_start"() <{level = 10 : i32, message = "bnf,bfd->bnd"}> : () -> ()
    %cst_244 = arith.constant dense<0.000000e+00> : vector<2x5x64xf32>
    %601 = tpu.matmul %600, %581, %cst_244 {dimension_numbers = #tpu.dot_dimension_numbers<[2], [1], [1], [2], [0, 0, 0, 1, 1, 2], [0], [0]>} : vector<2x5x128xbf16>, vector<2x128x64xbf16>, vector<2x5x64xf32> -> vector<2x5x64xf32>
    "tpu.trace_stop"() : () -> ()
    %602 = vector.shape_cast %575 : vector<1x64xf32> to vector<1x1x64xf32>
    %603 = vector.broadcast %602 : vector<1x1x64xf32> to vector<2x5x64xf32>
    %604 = arith.addf %601, %603 : vector<2x5x64xf32>
    %605 = arith.addf %541, %604 : vector<2x5x64xf32>
    %c1_245 = arith.constant 1 : index
    %c0_246 = arith.constant 0 : index
    %c0_247 = arith.constant 0 : index
    %606 = vector.load %arg21[%c1_245, %c0_246, %c0_247] : memref<2x4x64xf32, #tpu.memory_space<vmem>>, vector<1x4x64xf32>
    %607 = vector.shape_cast %606 : vector<1x4x64xf32> to vector<4x64xf32>
    %608 = vector.extract_strided_slice %607 {offsets = [0, 0], sizes = [1, 64], strides = [1, 1]} : vector<4x64xf32> to vector<1x64xf32>
    %609 = vector.extract_strided_slice %607 {offsets = [1, 0], sizes = [1, 64], strides = [1, 1]} : vector<4x64xf32> to vector<1x64xf32>
    %cst_248 = arith.constant dense<0.000000e+00> : vector<2x5xf32>
    %610 = vector.multi_reduction <add>, %605, %cst_248 [2] : vector<2x5x64xf32> to vector<2x5xf32>
    %611 = vector.shape_cast %610 : vector<2x5xf32> to vector<2x5x1xf32>
    %cst_249 = arith.constant 6.400000e+01 : f32
    %612 = vector.broadcast %cst_249 : f32 to vector<2x5x1xf32>
    %613 = arith.divf %611, %612 : vector<2x5x1xf32>
    %614 = vector.broadcast %613 : vector<2x5x1xf32> to vector<2x5x64xf32>
    %615 = arith.subf %605, %614 : vector<2x5x64xf32>
    %616 = arith.mulf %615, %615 : vector<2x5x64xf32>
    %cst_250 = arith.constant dense<0.000000e+00> : vector<2x5xf32>
    %617 = vector.multi_reduction <add>, %616, %cst_250 [2] : vector<2x5x64xf32> to vector<2x5xf32>
    %618 = vector.shape_cast %617 : vector<2x5xf32> to vector<2x5x1xf32>
    %cst_251 = arith.constant 6.400000e+01 : f32
    %619 = vector.broadcast %cst_251 : f32 to vector<2x5x1xf32>
    %620 = arith.divf %618, %619 : vector<2x5x1xf32>
    %621 = vector.broadcast %613 : vector<2x5x1xf32> to vector<2x5x64xf32>
    %622 = arith.subf %605, %621 : vector<2x5x64xf32>
    %cst_252 = arith.constant 9.99999974E-6 : f32
    %623 = vector.broadcast %cst_252 : f32 to vector<2x5x1xf32>
    %624 = arith.addf %620, %623 : vector<2x5x1xf32>
    %625 = math.rsqrt %624 : vector<2x5x1xf32>
    %626 = vector.broadcast %625 : vector<2x5x1xf32> to vector<2x5x64xf32>
    %627 = arith.mulf %622, %626 : vector<2x5x64xf32>
    %628 = vector.shape_cast %608 : vector<1x64xf32> to vector<1x1x64xf32>
    %629 = vector.broadcast %628 : vector<1x1x64xf32> to vector<2x5x64xf32>
    %630 = arith.mulf %627, %629 : vector<2x5x64xf32>
    %631 = vector.shape_cast %609 : vector<1x64xf32> to vector<1x1x64xf32>
    %632 = vector.broadcast %631 : vector<1x1x64xf32> to vector<2x5x64xf32>
    %633 = arith.addf %630, %632 : vector<2x5x64xf32>
    %c1_253 = arith.constant 1 : index
    %c0_254 = arith.constant 0 : index
    %c0_255 = arith.constant 0 : index
    %634 = vector.load %arg22[%c1_253, %c0_254, %c0_255] : memref<2x64x64xbf16, #tpu.memory_space<vmem>>, vector<1x64x64xbf16>
    %635 = vector.shape_cast %634 : vector<1x64x64xbf16> to vector<64x64xbf16>
    %636 = arith.truncf %633 : vector<2x5x64xf32> to vector<2x5x64xbf16>
    %637 = vector.shape_cast %635 : vector<64x64xbf16> to vector<1x64x64xbf16>
    %638 = vector.shape_cast %637 : vector<1x64x64xbf16> to vector<1x64x64xbf16>
    %639 = vector.broadcast %638 : vector<1x64x64xbf16> to vector<2x64x64xbf16>
    "tpu.trace_start"() <{level = 10 : i32, message = "bnd,bdk->bnk"}> : () -> ()
    %cst_256 = arith.constant dense<0.000000e+00> : vector<2x5x64xf32>
    %640 = tpu.matmul %636, %639, %cst_256 {dimension_numbers = #tpu.dot_dimension_numbers<[2], [1], [1], [2], [0, 0, 0, 1, 1, 2], [0], [0]>} : vector<2x5x64xbf16>, vector<2x64x64xbf16>, vector<2x5x64xf32> -> vector<2x5x64xf32>
    "tpu.trace_stop"() : () -> ()
    %641 = vector.extract_strided_slice %450 {offsets = [0, 0, 128], sizes = [2, 5, 128], strides = [1, 1, 1]} : vector<2x5x256xf32> to vector<2x5x128xf32>
    %c1_257 = arith.constant 1 : index
    %c0_258 = arith.constant 0 : index
    %c0_259 = arith.constant 0 : index
    %642 = vector.load %arg24[%c1_257, %c0_258, %c0_259] : memref<2x64x64xbf16, #tpu.memory_space<vmem>>, vector<1x64x64xbf16>
    %643 = vector.shape_cast %642 : vector<1x64x64xbf16> to vector<64x64xbf16>
    %c1_260 = arith.constant 1 : index
    %c0_261 = arith.constant 0 : index
    %c0_262 = arith.constant 0 : index
    %644 = vector.load %arg25[%c1_260, %c0_261, %c0_262] : memref<2x1x64xf32, #tpu.memory_space<vmem>>, vector<1x1x64xf32>
    %645 = vector.shape_cast %644 : vector<1x1x64xf32> to vector<1x64xf32>
    %646 = vector.extract_strided_slice %640 {offsets = [0, 0, 0], sizes = [2, 5, 32], strides = [1, 1, 1]} : vector<2x5x64xf32> to vector<2x5x32xf32>
    %647 = vector.extract_strided_slice %641 {offsets = [0, 0, 0], sizes = [2, 5, 32], strides = [1, 1, 1]} : vector<2x5x128xf32> to vector<2x5x32xf32>
    %648 = vector.extract_strided_slice %641 {offsets = [0, 0, 64], sizes = [2, 5, 32], strides = [1, 1, 1]} : vector<2x5x128xf32> to vector<2x5x32xf32>
    "tpu.trace_start"() <{level = 10 : i32, message = "bnd,bmd->bnm"}> : () -> ()
    %cst_263 = arith.constant dense<0.000000e+00> : vector<2x5x5xf32>
    %649 = tpu.matmul %646, %647, %cst_263 {dimension_numbers = #tpu.dot_dimension_numbers<[2], [2], [1], [1], [0, 0, 0, 1, 1, 1], [0], [0]>} : vector<2x5x32xf32>, vector<2x5x32xf32>, vector<2x5x5xf32> -> vector<2x5x5xf32>
    "tpu.trace_stop"() : () -> ()
    %cst_264 = arith.constant 0.176776692 : f32
    %650 = vector.broadcast %cst_264 : f32 to vector<2x5x5xf32>
    %651 = arith.mulf %649, %650 : vector<2x5x5xf32>
    %cst_265 = arith.constant dense<0xFF800000> : vector<2x5xf32>
    %652 = vector.multi_reduction <maximumf>, %651, %cst_265 [2] : vector<2x5x5xf32> to vector<2x5xf32>
    %653 = vector.shape_cast %652 : vector<2x5xf32> to vector<2x5x1xf32>
    %654 = vector.broadcast %653 : vector<2x5x1xf32> to vector<2x5x5xf32>
    %655 = arith.subf %651, %654 : vector<2x5x5xf32>
    %656 = math.exp %655 : vector<2x5x5xf32>
    %cst_266 = arith.constant dense<0.000000e+00> : vector<2x5xf32>
    %657 = vector.multi_reduction <add>, %656, %cst_266 [2] : vector<2x5x5xf32> to vector<2x5xf32>
    %658 = vector.shape_cast %657 : vector<2x5xf32> to vector<2x5x1xf32>
    %659 = tpu.reciprocal %658 {approx = true} : vector<2x5x1xf32> -> vector<2x5x1xf32>
    %660 = vector.broadcast %659 : vector<2x5x1xf32> to vector<2x5x5xf32>
    %661 = arith.mulf %656, %660 : vector<2x5x5xf32>
    "tpu.trace_start"() <{level = 10 : i32, message = "bnm,bmd->bnd"}> : () -> ()
    %cst_267 = arith.constant dense<0.000000e+00> : vector<2x5x32xf32>
    %662 = tpu.matmul %661, %648, %cst_267 {dimension_numbers = #tpu.dot_dimension_numbers<[2], [1], [1], [2], [0, 0, 0, 1, 1, 2], [0], [0]>} : vector<2x5x5xf32>, vector<2x5x32xf32>, vector<2x5x32xf32> -> vector<2x5x32xf32>
    "tpu.trace_stop"() : () -> ()
    %663 = vector.extract_strided_slice %643 {offsets = [0, 0], sizes = [32, 64], strides = [1, 1]} : vector<64x64xbf16> to vector<32x64xbf16>
    %664 = vector.shape_cast %663 : vector<32x64xbf16> to vector<1x32x64xbf16>
    %665 = vector.shape_cast %664 : vector<1x32x64xbf16> to vector<1x32x64xbf16>
    %666 = vector.broadcast %665 : vector<1x32x64xbf16> to vector<2x32x64xbf16>
    %667 = arith.truncf %662 : vector<2x5x32xf32> to vector<2x5x32xbf16>
    "tpu.trace_start"() <{level = 10 : i32, message = "bnd,bdk->bnk"}> : () -> ()
    %cst_268 = arith.constant dense<0.000000e+00> : vector<2x5x64xf32>
    %668 = tpu.matmul %667, %666, %cst_268 {dimension_numbers = #tpu.dot_dimension_numbers<[2], [1], [1], [2], [0, 0, 0, 1, 1, 2], [0], [0]>} : vector<2x5x32xbf16>, vector<2x32x64xbf16>, vector<2x5x64xf32> -> vector<2x5x64xf32>
    "tpu.trace_stop"() : () -> ()
    %669 = vector.extract_strided_slice %640 {offsets = [0, 0, 32], sizes = [2, 5, 32], strides = [1, 1, 1]} : vector<2x5x64xf32> to vector<2x5x32xf32>
    %670 = vector.extract_strided_slice %641 {offsets = [0, 0, 32], sizes = [2, 5, 32], strides = [1, 1, 1]} : vector<2x5x128xf32> to vector<2x5x32xf32>
    %671 = vector.extract_strided_slice %641 {offsets = [0, 0, 96], sizes = [2, 5, 32], strides = [1, 1, 1]} : vector<2x5x128xf32> to vector<2x5x32xf32>
    "tpu.trace_start"() <{level = 10 : i32, message = "bnd,bmd->bnm"}> : () -> ()
    %cst_269 = arith.constant dense<0.000000e+00> : vector<2x5x5xf32>
    %672 = tpu.matmul %669, %670, %cst_269 {dimension_numbers = #tpu.dot_dimension_numbers<[2], [2], [1], [1], [0, 0, 0, 1, 1, 1], [0], [0]>} : vector<2x5x32xf32>, vector<2x5x32xf32>, vector<2x5x5xf32> -> vector<2x5x5xf32>
    "tpu.trace_stop"() : () -> ()
    %cst_270 = arith.constant 0.176776692 : f32
    %673 = vector.broadcast %cst_270 : f32 to vector<2x5x5xf32>
    %674 = arith.mulf %672, %673 : vector<2x5x5xf32>
    %cst_271 = arith.constant dense<0xFF800000> : vector<2x5xf32>
    %675 = vector.multi_reduction <maximumf>, %674, %cst_271 [2] : vector<2x5x5xf32> to vector<2x5xf32>
    %676 = vector.shape_cast %675 : vector<2x5xf32> to vector<2x5x1xf32>
    %677 = vector.broadcast %676 : vector<2x5x1xf32> to vector<2x5x5xf32>
    %678 = arith.subf %674, %677 : vector<2x5x5xf32>
    %679 = math.exp %678 : vector<2x5x5xf32>
    %cst_272 = arith.constant dense<0.000000e+00> : vector<2x5xf32>
    %680 = vector.multi_reduction <add>, %679, %cst_272 [2] : vector<2x5x5xf32> to vector<2x5xf32>
    %681 = vector.shape_cast %680 : vector<2x5xf32> to vector<2x5x1xf32>
    %682 = tpu.reciprocal %681 {approx = true} : vector<2x5x1xf32> -> vector<2x5x1xf32>
    %683 = vector.broadcast %682 : vector<2x5x1xf32> to vector<2x5x5xf32>
    %684 = arith.mulf %679, %683 : vector<2x5x5xf32>
    "tpu.trace_start"() <{level = 10 : i32, message = "bnm,bmd->bnd"}> : () -> ()
    %cst_273 = arith.constant dense<0.000000e+00> : vector<2x5x32xf32>
    %685 = tpu.matmul %684, %671, %cst_273 {dimension_numbers = #tpu.dot_dimension_numbers<[2], [1], [1], [2], [0, 0, 0, 1, 1, 2], [0], [0]>} : vector<2x5x5xf32>, vector<2x5x32xf32>, vector<2x5x32xf32> -> vector<2x5x32xf32>
    "tpu.trace_stop"() : () -> ()
    %686 = vector.extract_strided_slice %643 {offsets = [32, 0], sizes = [32, 64], strides = [1, 1]} : vector<64x64xbf16> to vector<32x64xbf16>
    %687 = vector.shape_cast %686 : vector<32x64xbf16> to vector<1x32x64xbf16>
    %688 = vector.shape_cast %687 : vector<1x32x64xbf16> to vector<1x32x64xbf16>
    %689 = vector.broadcast %688 : vector<1x32x64xbf16> to vector<2x32x64xbf16>
    %690 = arith.truncf %685 : vector<2x5x32xf32> to vector<2x5x32xbf16>
    "tpu.trace_start"() <{level = 10 : i32, message = "bnd,bdk->bnk"}> : () -> ()
    %cst_274 = arith.constant dense<0.000000e+00> : vector<2x5x64xf32>
    %691 = tpu.matmul %690, %689, %cst_274 {dimension_numbers = #tpu.dot_dimension_numbers<[2], [1], [1], [2], [0, 0, 0, 1, 1, 2], [0], [0]>} : vector<2x5x32xbf16>, vector<2x32x64xbf16>, vector<2x5x64xf32> -> vector<2x5x64xf32>
    "tpu.trace_stop"() : () -> ()
    %692 = arith.addf %668, %691 : vector<2x5x64xf32>
    %693 = vector.shape_cast %645 : vector<1x64xf32> to vector<1x1x64xf32>
    %694 = vector.broadcast %693 : vector<1x1x64xf32> to vector<2x5x64xf32>
    %695 = arith.addf %692, %694 : vector<2x5x64xf32>
    %696 = arith.addf %605, %695 : vector<2x5x64xf32>
    %697 = vector.extract_strided_slice %607 {offsets = [2, 0], sizes = [1, 64], strides = [1, 1]} : vector<4x64xf32> to vector<1x64xf32>
    %698 = vector.extract_strided_slice %607 {offsets = [3, 0], sizes = [1, 64], strides = [1, 1]} : vector<4x64xf32> to vector<1x64xf32>
    %cst_275 = arith.constant dense<0.000000e+00> : vector<2x5xf32>
    %699 = vector.multi_reduction <add>, %696, %cst_275 [2] : vector<2x5x64xf32> to vector<2x5xf32>
    %700 = vector.shape_cast %699 : vector<2x5xf32> to vector<2x5x1xf32>
    %cst_276 = arith.constant 6.400000e+01 : f32
    %701 = vector.broadcast %cst_276 : f32 to vector<2x5x1xf32>
    %702 = arith.divf %700, %701 : vector<2x5x1xf32>
    %703 = vector.broadcast %702 : vector<2x5x1xf32> to vector<2x5x64xf32>
    %704 = arith.subf %696, %703 : vector<2x5x64xf32>
    %705 = arith.mulf %704, %704 : vector<2x5x64xf32>
    %cst_277 = arith.constant dense<0.000000e+00> : vector<2x5xf32>
    %706 = vector.multi_reduction <add>, %705, %cst_277 [2] : vector<2x5x64xf32> to vector<2x5xf32>
    %707 = vector.shape_cast %706 : vector<2x5xf32> to vector<2x5x1xf32>
    %cst_278 = arith.constant 6.400000e+01 : f32
    %708 = vector.broadcast %cst_278 : f32 to vector<2x5x1xf32>
    %709 = arith.divf %707, %708 : vector<2x5x1xf32>
    %710 = vector.broadcast %702 : vector<2x5x1xf32> to vector<2x5x64xf32>
    %711 = arith.subf %696, %710 : vector<2x5x64xf32>
    %cst_279 = arith.constant 9.99999974E-6 : f32
    %712 = vector.broadcast %cst_279 : f32 to vector<2x5x1xf32>
    %713 = arith.addf %709, %712 : vector<2x5x1xf32>
    %714 = math.rsqrt %713 : vector<2x5x1xf32>
    %715 = vector.broadcast %714 : vector<2x5x1xf32> to vector<2x5x64xf32>
    %716 = arith.mulf %711, %715 : vector<2x5x64xf32>
    %717 = vector.shape_cast %697 : vector<1x64xf32> to vector<1x1x64xf32>
    %718 = vector.broadcast %717 : vector<1x1x64xf32> to vector<2x5x64xf32>
    %719 = arith.mulf %716, %718 : vector<2x5x64xf32>
    %720 = vector.shape_cast %698 : vector<1x64xf32> to vector<1x1x64xf32>
    %721 = vector.broadcast %720 : vector<1x1x64xf32> to vector<2x5x64xf32>
    %722 = arith.addf %719, %721 : vector<2x5x64xf32>
    %c1_280 = arith.constant 1 : index
    %c0_281 = arith.constant 0 : index
    %c0_282 = arith.constant 0 : index
    %723 = vector.load %arg26[%c1_280, %c0_281, %c0_282] : memref<2x64x128xbf16, #tpu.memory_space<vmem>>, vector<1x64x128xbf16>
    %724 = vector.shape_cast %723 : vector<1x64x128xbf16> to vector<64x128xbf16>
    %c1_283 = arith.constant 1 : index
    %c0_284 = arith.constant 0 : index
    %c0_285 = arith.constant 0 : index
    %725 = vector.load %arg27[%c1_283, %c0_284, %c0_285] : memref<2x1x128xf32, #tpu.memory_space<vmem>>, vector<1x1x128xf32>
    %726 = vector.shape_cast %725 : vector<1x1x128xf32> to vector<1x128xf32>
    %c1_286 = arith.constant 1 : index
    %c0_287 = arith.constant 0 : index
    %c0_288 = arith.constant 0 : index
    %727 = vector.load %arg28[%c1_286, %c0_287, %c0_288] : memref<2x128x64xbf16, #tpu.memory_space<vmem>>, vector<1x128x64xbf16>
    %728 = vector.shape_cast %727 : vector<1x128x64xbf16> to vector<128x64xbf16>
    %c1_289 = arith.constant 1 : index
    %c0_290 = arith.constant 0 : index
    %c0_291 = arith.constant 0 : index
    %729 = vector.load %arg29[%c1_289, %c0_290, %c0_291] : memref<2x1x64xf32, #tpu.memory_space<vmem>>, vector<1x1x64xf32>
    %730 = vector.shape_cast %729 : vector<1x1x64xf32> to vector<1x64xf32>
    %731 = vector.shape_cast %724 : vector<64x128xbf16> to vector<1x64x128xbf16>
    %732 = vector.shape_cast %731 : vector<1x64x128xbf16> to vector<1x64x128xbf16>
    %733 = vector.broadcast %732 : vector<1x64x128xbf16> to vector<2x64x128xbf16>
    %734 = vector.shape_cast %728 : vector<128x64xbf16> to vector<1x128x64xbf16>
    %735 = vector.shape_cast %734 : vector<1x128x64xbf16> to vector<1x128x64xbf16>
    %736 = vector.broadcast %735 : vector<1x128x64xbf16> to vector<2x128x64xbf16>
    %737 = arith.truncf %722 : vector<2x5x64xf32> to vector<2x5x64xbf16>
    "tpu.trace_start"() <{level = 10 : i32, message = "bnd,bdf->bnf"}> : () -> ()
    %cst_292 = arith.constant dense<0.000000e+00> : vector<2x5x128xf32>
    %738 = tpu.matmul %737, %733, %cst_292 {dimension_numbers = #tpu.dot_dimension_numbers<[2], [1], [1], [2], [0, 0, 0, 1, 1, 2], [0], [0]>} : vector<2x5x64xbf16>, vector<2x64x128xbf16>, vector<2x5x128xf32> -> vector<2x5x128xf32>
    "tpu.trace_stop"() : () -> ()
    %739 = vector.shape_cast %726 : vector<1x128xf32> to vector<1x1x128xf32>
    %740 = vector.broadcast %739 : vector<1x1x128xf32> to vector<2x5x128xf32>
    %741 = arith.addf %738, %740 : vector<2x5x128xf32>
    %742 = arith.mulf %741, %741 : vector<2x5x128xf32>
    %743 = arith.mulf %741, %742 : vector<2x5x128xf32>
    %cst_293 = arith.constant 4.471500e-02 : f32
    %744 = vector.broadcast %cst_293 : f32 to vector<2x5x128xf32>
    %745 = arith.mulf %744, %743 : vector<2x5x128xf32>
    %746 = arith.addf %741, %745 : vector<2x5x128xf32>
    %cst_294 = arith.constant 0.797884583 : f32
    %747 = vector.broadcast %cst_294 : f32 to vector<2x5x128xf32>
    %748 = arith.mulf %747, %746 : vector<2x5x128xf32>
    %749 = math.tanh %748 : vector<2x5x128xf32>
    %cst_295 = arith.constant 1.000000e+00 : f32
    %750 = vector.broadcast %cst_295 : f32 to vector<2x5x128xf32>
    %751 = arith.addf %750, %749 : vector<2x5x128xf32>
    %cst_296 = arith.constant 5.000000e-01 : f32
    %752 = vector.broadcast %cst_296 : f32 to vector<2x5x128xf32>
    %753 = arith.mulf %752, %751 : vector<2x5x128xf32>
    %754 = arith.mulf %741, %753 : vector<2x5x128xf32>
    %755 = arith.truncf %754 : vector<2x5x128xf32> to vector<2x5x128xbf16>
    "tpu.trace_start"() <{level = 10 : i32, message = "bnf,bfd->bnd"}> : () -> ()
    %cst_297 = arith.constant dense<0.000000e+00> : vector<2x5x64xf32>
    %756 = tpu.matmul %755, %736, %cst_297 {dimension_numbers = #tpu.dot_dimension_numbers<[2], [1], [1], [2], [0, 0, 0, 1, 1, 2], [0], [0]>} : vector<2x5x128xbf16>, vector<2x128x64xbf16>, vector<2x5x64xf32> -> vector<2x5x64xf32>
    "tpu.trace_stop"() : () -> ()
    %757 = vector.shape_cast %730 : vector<1x64xf32> to vector<1x1x64xf32>
    %758 = vector.broadcast %757 : vector<1x1x64xf32> to vector<2x5x64xf32>
    %759 = arith.addf %756, %758 : vector<2x5x64xf32>
    %760 = arith.addf %696, %759 : vector<2x5x64xf32>
    %761 = vector.extract_strided_slice %390 {offsets = [4, 0], sizes = [1, 64], strides = [1, 1]} : vector<10x64xf32> to vector<1x64xf32>
    %762 = vector.extract_strided_slice %390 {offsets = [5, 0], sizes = [1, 64], strides = [1, 1]} : vector<10x64xf32> to vector<1x64xf32>
    %cst_298 = arith.constant dense<0.000000e+00> : vector<2x5xf32>
    %763 = vector.multi_reduction <add>, %760, %cst_298 [2] : vector<2x5x64xf32> to vector<2x5xf32>
    %764 = vector.shape_cast %763 : vector<2x5xf32> to vector<2x5x1xf32>
    %cst_299 = arith.constant 6.400000e+01 : f32
    %765 = vector.broadcast %cst_299 : f32 to vector<2x5x1xf32>
    %766 = arith.divf %764, %765 : vector<2x5x1xf32>
    %767 = vector.broadcast %766 : vector<2x5x1xf32> to vector<2x5x64xf32>
    %768 = arith.subf %760, %767 : vector<2x5x64xf32>
    %769 = arith.mulf %768, %768 : vector<2x5x64xf32>
    %cst_300 = arith.constant dense<0.000000e+00> : vector<2x5xf32>
    %770 = vector.multi_reduction <add>, %769, %cst_300 [2] : vector<2x5x64xf32> to vector<2x5xf32>
    %771 = vector.shape_cast %770 : vector<2x5xf32> to vector<2x5x1xf32>
    %cst_301 = arith.constant 6.400000e+01 : f32
    %772 = vector.broadcast %cst_301 : f32 to vector<2x5x1xf32>
    %773 = arith.divf %771, %772 : vector<2x5x1xf32>
    %774 = vector.broadcast %766 : vector<2x5x1xf32> to vector<2x5x64xf32>
    %775 = arith.subf %760, %774 : vector<2x5x64xf32>
    %cst_302 = arith.constant 9.99999974E-6 : f32
    %776 = vector.broadcast %cst_302 : f32 to vector<2x5x1xf32>
    %777 = arith.addf %773, %776 : vector<2x5x1xf32>
    %778 = math.rsqrt %777 : vector<2x5x1xf32>
    %779 = vector.broadcast %778 : vector<2x5x1xf32> to vector<2x5x64xf32>
    %780 = arith.mulf %775, %779 : vector<2x5x64xf32>
    %781 = vector.shape_cast %761 : vector<1x64xf32> to vector<1x1x64xf32>
    %782 = vector.broadcast %781 : vector<1x1x64xf32> to vector<2x5x64xf32>
    %783 = arith.mulf %780, %782 : vector<2x5x64xf32>
    %784 = vector.shape_cast %762 : vector<1x64xf32> to vector<1x1x64xf32>
    %785 = vector.broadcast %784 : vector<1x1x64xf32> to vector<2x5x64xf32>
    %786 = arith.addf %783, %785 : vector<2x5x64xf32>
    %787 = vector.extract_strided_slice %390 {offsets = [6, 0], sizes = [1, 64], strides = [1, 1]} : vector<10x64xf32> to vector<1x64xf32>
    %788 = vector.extract_strided_slice %390 {offsets = [7, 0], sizes = [1, 64], strides = [1, 1]} : vector<10x64xf32> to vector<1x64xf32>
    %cst_303 = arith.constant dense<0.000000e+00> : vector<2x5xf32>
    %789 = vector.multi_reduction <add>, %786, %cst_303 [2] : vector<2x5x64xf32> to vector<2x5xf32>
    %790 = vector.shape_cast %789 : vector<2x5xf32> to vector<2x5x1xf32>
    %cst_304 = arith.constant 6.400000e+01 : f32
    %791 = vector.broadcast %cst_304 : f32 to vector<2x5x1xf32>
    %792 = arith.divf %790, %791 : vector<2x5x1xf32>
    %793 = vector.broadcast %792 : vector<2x5x1xf32> to vector<2x5x64xf32>
    %794 = arith.subf %786, %793 : vector<2x5x64xf32>
    %795 = arith.mulf %794, %794 : vector<2x5x64xf32>
    %cst_305 = arith.constant dense<0.000000e+00> : vector<2x5xf32>
    %796 = vector.multi_reduction <add>, %795, %cst_305 [2] : vector<2x5x64xf32> to vector<2x5xf32>
    %797 = vector.shape_cast %796 : vector<2x5xf32> to vector<2x5x1xf32>
    %cst_306 = arith.constant 6.400000e+01 : f32
    %798 = vector.broadcast %cst_306 : f32 to vector<2x5x1xf32>
    %799 = arith.divf %797, %798 : vector<2x5x1xf32>
    %800 = vector.broadcast %792 : vector<2x5x1xf32> to vector<2x5x64xf32>
    %801 = arith.subf %786, %800 : vector<2x5x64xf32>
    %cst_307 = arith.constant 9.99999974E-6 : f32
    %802 = vector.broadcast %cst_307 : f32 to vector<2x5x1xf32>
    %803 = arith.addf %799, %802 : vector<2x5x1xf32>
    %804 = math.rsqrt %803 : vector<2x5x1xf32>
    %805 = vector.broadcast %804 : vector<2x5x1xf32> to vector<2x5x64xf32>
    %806 = arith.mulf %801, %805 : vector<2x5x64xf32>
    %807 = vector.shape_cast %787 : vector<1x64xf32> to vector<1x1x64xf32>
    %808 = vector.broadcast %807 : vector<1x1x64xf32> to vector<2x5x64xf32>
    %809 = arith.mulf %806, %808 : vector<2x5x64xf32>
    %810 = vector.shape_cast %788 : vector<1x64xf32> to vector<1x1x64xf32>
    %811 = vector.broadcast %810 : vector<1x1x64xf32> to vector<2x5x64xf32>
    %812 = arith.addf %809, %811 : vector<2x5x64xf32>
    %813 = vector.extract_strided_slice %390 {offsets = [8, 0], sizes = [1, 64], strides = [1, 1]} : vector<10x64xf32> to vector<1x64xf32>
    %814 = vector.extract_strided_slice %390 {offsets = [9, 0], sizes = [1, 64], strides = [1, 1]} : vector<10x64xf32> to vector<1x64xf32>
    %cst_308 = arith.constant dense<0.000000e+00> : vector<2x5xf32>
    %815 = vector.multi_reduction <add>, %812, %cst_308 [2] : vector<2x5x64xf32> to vector<2x5xf32>
    %816 = vector.shape_cast %815 : vector<2x5xf32> to vector<2x5x1xf32>
    %cst_309 = arith.constant 6.400000e+01 : f32
    %817 = vector.broadcast %cst_309 : f32 to vector<2x5x1xf32>
    %818 = arith.divf %816, %817 : vector<2x5x1xf32>
    %819 = vector.broadcast %818 : vector<2x5x1xf32> to vector<2x5x64xf32>
    %820 = arith.subf %812, %819 : vector<2x5x64xf32>
    %821 = arith.mulf %820, %820 : vector<2x5x64xf32>
    %cst_310 = arith.constant dense<0.000000e+00> : vector<2x5xf32>
    %822 = vector.multi_reduction <add>, %821, %cst_310 [2] : vector<2x5x64xf32> to vector<2x5xf32>
    %823 = vector.shape_cast %822 : vector<2x5xf32> to vector<2x5x1xf32>
    %cst_311 = arith.constant 6.400000e+01 : f32
    %824 = vector.broadcast %cst_311 : f32 to vector<2x5x1xf32>
    %825 = arith.divf %823, %824 : vector<2x5x1xf32>
    %826 = vector.broadcast %818 : vector<2x5x1xf32> to vector<2x5x64xf32>
    %827 = arith.subf %812, %826 : vector<2x5x64xf32>
    %cst_312 = arith.constant 9.99999974E-6 : f32
    %828 = vector.broadcast %cst_312 : f32 to vector<2x5x1xf32>
    %829 = arith.addf %825, %828 : vector<2x5x1xf32>
    %830 = math.rsqrt %829 : vector<2x5x1xf32>
    %831 = vector.broadcast %830 : vector<2x5x1xf32> to vector<2x5x64xf32>
    %832 = arith.mulf %827, %831 : vector<2x5x64xf32>
    %833 = vector.shape_cast %813 : vector<1x64xf32> to vector<1x1x64xf32>
    %834 = vector.broadcast %833 : vector<1x1x64xf32> to vector<2x5x64xf32>
    %835 = arith.mulf %832, %834 : vector<2x5x64xf32>
    %836 = vector.shape_cast %814 : vector<1x64xf32> to vector<1x1x64xf32>
    %837 = vector.broadcast %836 : vector<1x1x64xf32> to vector<2x5x64xf32>
    %838 = arith.addf %835, %837 : vector<2x5x64xf32>
    %c0_313 = arith.constant 0 : index
    %c0_314 = arith.constant 0 : index
    %839 = vector.load %arg31[%c0_313, %c0_314] : memref<64x128xbf16, #tpu.memory_space<vmem>>, vector<64x128xbf16>
    %840 = arith.truncf %838 : vector<2x5x64xf32> to vector<2x5x64xbf16>
    %841 = vector.shape_cast %839 : vector<64x128xbf16> to vector<1x64x128xbf16>
    %842 = vector.shape_cast %841 : vector<1x64x128xbf16> to vector<1x64x128xbf16>
    %843 = vector.broadcast %842 : vector<1x64x128xbf16> to vector<2x64x128xbf16>
    "tpu.trace_start"() <{level = 10 : i32, message = "bnd,bdk->bnk"}> : () -> ()
    %cst_315 = arith.constant dense<0.000000e+00> : vector<2x5x128xf32>
    %844 = tpu.matmul %840, %843, %cst_315 {dimension_numbers = #tpu.dot_dimension_numbers<[2], [1], [1], [2], [0, 0, 0, 1, 1, 2], [0], [0]>} : vector<2x5x64xbf16>, vector<2x64x128xbf16>, vector<2x5x128xf32> -> vector<2x5x128xf32>
    "tpu.trace_stop"() : () -> ()
    %c0_316 = arith.constant 0 : index
    %c0_317 = arith.constant 0 : index
    %845 = vector.load %arg32[%c0_316, %c0_317] : memref<1x128xf32, #tpu.memory_space<vmem>>, vector<1x128xf32>
    %846 = vector.shape_cast %845 : vector<1x128xf32> to vector<1x1x128xf32>
    %847 = vector.broadcast %846 : vector<1x1x128xf32> to vector<2x5x128xf32>
    %848 = arith.addf %844, %847 : vector<2x5x128xf32>
    %849 = vector.extract_strided_slice %848 {offsets = [0, 0, 0], sizes = [2, 1, 128], strides = [1, 1, 1]} : vector<2x5x128xf32> to vector<2x1x128xf32>
    %c0_318 = arith.constant 0 : index
    %c0_319 = arith.constant 0 : index
    %c0_320 = arith.constant 0 : index
    %850 = vector.load %arg33[%c0_318, %c0_319, %c0_320] : memref<2x1x128xf32, #tpu.memory_space<vmem>>, vector<2x1x128xf32>
    tpu.vector_store %arg33[%c0_318, %c0_319, %c0_320], %849 {strides = array<i32>} : memref<2x1x128xf32, #tpu.memory_space<vmem>>, vector<2x1x128xf32>,
    return
  }
}

</mosaic_0001>

<llo_original>
// kernel: mmst_vit_forward.1
$region0: #{mmst_vit_forward.1}
  #allocation0 [shape = 'u32[]', space=smem, size = 0x4, offset = 0x4, fixed_abs, tag = 'smem constant byte address 0x4 - core index']
  #allocation1 [shape = 'u32[72,128]{1,0:T(1,128)}', space=vmem, size = 0x9000, scoped, tag = 'internal scratch']
  #allocation2 [shape = 'f32[2,5,64]{2,1,0:T(8,128)}', space=vmem, size = 0x2000, scoped, tag = 'scratch operand']
  #allocation3 [shape = 'f32[2,5,64]{2,1,0:T(8,128)}', space=vmem, size = 0x2000, scoped, tag = 'scratch operand']
  %s0 = inlined_call_operand.smem [shape: u32[34], index: -1, kind: input, shape index: {}]
  %s1 = sld [smem:[%s0]]
  %s2 = scalar_lea.smem %s0, 1
  %s3 = sld [smem:[%s2]]
  %s4 = scalar_lea.smem %s0, 2
  %s5 = sld [smem:[%s4]]
  %s6 = scalar_lea.smem %s0, 3
  %s7 = sld [smem:[%s6]]
  %s8 = scalar_lea.smem %s0, 4
  %s9 = sld [smem:[%s8]]
  %s10 = scalar_lea.smem %s0, 5
  %s11 = sld [smem:[%s10]]
  %s12 = scalar_lea.smem %s0, 6
  %s13 = sld [smem:[%s12]]
  %s14 = scalar_lea.smem %s0, 7
  %s15 = sld [smem:[%s14]]
  %s16 = scalar_lea.smem %s0, 8
  %s17 = sld [smem:[%s16]]
  %s18 = scalar_lea.smem %s0, 9
  %s19 = sld [smem:[%s18]]
  %s20 = scalar_lea.smem %s0, 10
  %s21 = sld [smem:[%s20]]
  %s22 = scalar_lea.smem %s0, 11
  %s23 = sld [smem:[%s22]]
  %s24 = scalar_lea.smem %s0, 12
  %s25 = sld [smem:[%s24]]
  %s26 = scalar_lea.smem %s0, 13
  %s27 = sld [smem:[%s26]]
  %s28 = scalar_lea.smem %s0, 14
  %s29 = sld [smem:[%s28]]
  %s30 = scalar_lea.smem %s0, 15
  %s31 = sld [smem:[%s30]]
  %s32 = scalar_lea.smem %s0, 16
  %s33 = sld [smem:[%s32]]
  %s34 = scalar_lea.smem %s0, 17
  %s35 = sld [smem:[%s34]]
  %s36 = scalar_lea.smem %s0, 18
  %s37 = sld [smem:[%s36]]
  %s38 = scalar_lea.smem %s0, 19
  %s39 = sld [smem:[%s38]]
  %s40 = scalar_lea.smem %s0, 20
  %s41 = sld [smem:[%s40]]
  %s42 = scalar_lea.smem %s0, 21
  %s43 = sld [smem:[%s42]]
  %s44 = scalar_lea.smem %s0, 22
  %s45 = sld [smem:[%s44]]
  %s46 = scalar_lea.smem %s0, 23
  %s47 = sld [smem:[%s46]]
  %s48 = scalar_lea.smem %s0, 24
  %s49 = sld [smem:[%s48]]
  %s50 = scalar_lea.smem %s0, 25
  %s51 = sld [smem:[%s50]]
  %s52 = scalar_lea.smem %s0, 26
  %s53 = sld [smem:[%s52]]
  %s54 = scalar_lea.smem %s0, 27
  %s55 = sld [smem:[%s54]]
  %s56 = scalar_lea.smem %s0, 28
  %s57 = sld [smem:[%s56]]
  %s58 = scalar_lea.smem %s0, 29
  %s59 = sld [smem:[%s58]]
  %s60 = scalar_lea.smem %s0, 30
  %s61 = sld [smem:[%s60]]
  %s62 = scalar_lea.smem %s0, 31
  %s63 = sld [smem:[%s62]]
  %s64 = scalar_lea.smem %s0, 32
  %s65 = sld [smem:[%s64]]
  %s66 = scalar_lea.smem %s0, 33
  %s67 = sld [smem:[%s66]]
  %s68 = sld [smem:[#allocation0]]
  $region142: #{mmst_vit_forward.1} parent=0
    _
  %s70 = ssub.s32 1, %s68
  %s71 = scalar_select 0, %s70, %s68
  $region1: #{mmst_vit_forward.1} parent=0
    #allocation4 [shape = 'u8[1024]{0}', space=vmem, size = 0x400, scoped, tag = 'output window, operand 0, single buffered']
    #allocation5 [shape = 's32[1]{0}', space=sflag, size = 0x4, scoped, tag = 'scoped memory for mmst_vit_forward.1']
    %72 = vsyncpa [#allocation5], 0
    // Predicated region
    $region2: #{mmst_vit_forward.1} parent=1 // pred_check
      _
    $region3: #{mmst_vit_forward.1} parent=1 // pred_check_branch
      %74 = sbr.rel (0) target = $region5
    $region4: #{mmst_vit_forward.1} parent=1 // pred_region
      _
    $region5: #{mmst_vit_forward.1} parent=1 // pred_fallthru
      _
    // Predicated region
    $region6: #{mmst_vit_forward.1} parent=1 // pred_check
      _
    $region7: #{mmst_vit_forward.1} parent=1 // pred_check_branch
      %76 = sbr.rel (0) target = $region9
    $region8: #{mmst_vit_forward.1} parent=1 // pred_region
      _
    $region9: #{mmst_vit_forward.1} parent=1 // pred_fallthru
      _
    // Predicated region
    $region10: #{mmst_vit_forward.1} parent=1 // pred_check
      _
    $region11: #{mmst_vit_forward.1} parent=1 // pred_check_branch
      %78 = sbr.rel (0) target = $region13
    $region12: #{mmst_vit_forward.1} parent=1 // pred_region
      _
    $region13: #{mmst_vit_forward.1} parent=1 // pred_fallthru
      _
    // Predicated region
    $region14: #{mmst_vit_forward.1} parent=1 // pred_check
      _
    $region15: #{mmst_vit_forward.1} parent=1 // pred_check_branch
      %80 = sbr.rel (0) target = $region17
    $region16: #{mmst_vit_forward.1} parent=1 // pred_region
      _
    $region17: #{mmst_vit_forward.1} parent=1 // pred_fallthru
      _
    // Predicated region
    $region18: #{mmst_vit_forward.1} parent=1 // pred_check
      _
    $region19: #{mmst_vit_forward.1} parent=1 // pred_check_branch
      %82 = sbr.rel (0) target = $region21
    $region20: #{mmst_vit_forward.1} parent=1 // pred_region
      _
    $region21: #{mmst_vit_forward.1} parent=1 // pred_fallthru
      _
    // Predicated region
    $region22: #{mmst_vit_forward.1} parent=1 // pred_check
      _
    $region23: #{mmst_vit_forward.1} parent=1 // pred_check_branch
      %84 = sbr.rel (0) target = $region25
    $region24: #{mmst_vit_forward.1} parent=1 // pred_region
      _
    $region25: #{mmst_vit_forward.1} parent=1 // pred_fallthru
      _
    // Predicated region
    $region26: #{mmst_vit_forward.1} parent=1 // pred_check
      _
    $region27: #{mmst_vit_forward.1} parent=1 // pred_check_branch
      %86 = sbr.rel (0) target = $region29
    $region28: #{mmst_vit_forward.1} parent=1 // pred_region
      _
    $region29: #{mmst_vit_forward.1} parent=1 // pred_fallthru
      _
    // Predicated region
    $region30: #{mmst_vit_forward.1} parent=1 // pred_check
      _
    $region31: #{mmst_vit_forward.1} parent=1 // pred_check_branch
      %88 = sbr.rel (0) target = $region33
    $region32: #{mmst_vit_forward.1} parent=1 // pred_region
      _
    $region33: #{mmst_vit_forward.1} parent=1 // pred_fallthru
      _
    // Predicated region
    $region34: #{mmst_vit_forward.1} parent=1 // pred_check
      _
    $region35: #{mmst_vit_forward.1} parent=1 // pred_check_branch
      %90 = sbr.rel (0) target = $region37
    $region36: #{mmst_vit_forward.1} parent=1 // pred_region
      _
    $region37: #{mmst_vit_forward.1} parent=1 // pred_fallthru
      _
    // Predicated region
    $region38: #{mmst_vit_forward.1} parent=1 // pred_check
      _
    $region39: #{mmst_vit_forward.1} parent=1 // pred_check_branch
      %92 = sbr.rel (0) target = $region41
    $region40: #{mmst_vit_forward.1} parent=1 // pred_region
      _
    $region41: #{mmst_vit_forward.1} parent=1 // pred_fallthru
      _
    // Predicated region
    $region42: #{mmst_vit_forward.1} parent=1 // pred_check
      _
    $region43: #{mmst_vit_forward.1} parent=1 // pred_check_branch
      %94 = sbr.rel (0) target = $region45
    $region44: #{mmst_vit_forward.1} parent=1 // pred_region
      _
    $region45: #{mmst_vit_forward.1} parent=1 // pred_fallthru
      _
    // Predicated region
    $region46: #{mmst_vit_forward.1} parent=1 // pred_check
      _
    $region47: #{mmst_vit_forward.1} parent=1 // pred_check_branch
      %96 = sbr.rel (0) target = $region49
    $region48: #{mmst_vit_forward.1} parent=1 // pred_region
      _
    $region49: #{mmst_vit_forward.1} parent=1 // pred_fallthru
      _
    // Predicated region
    $region50: #{mmst_vit_forward.1} parent=1 // pred_check
      _
    $region51: #{mmst_vit_forward.1} parent=1 // pred_check_branch
      %98 = sbr.rel (0) target = $region53
    $region52: #{mmst_vit_forward.1} parent=1 // pred_region
      _
    $region53: #{mmst_vit_forward.1} parent=1 // pred_fallthru
      _
    // Predicated region
    $region54: #{mmst_vit_forward.1} parent=1 // pred_check
      _
    $region55: #{mmst_vit_forward.1} parent=1 // pred_check_branch
      %100 = sbr.rel (0) target = $region57
    $region56: #{mmst_vit_forward.1} parent=1 // pred_region
      _
    $region57: #{mmst_vit_forward.1} parent=1 // pred_fallthru
      _
    // Predicated region
    $region58: #{mmst_vit_forward.1} parent=1 // pred_check
      _
    $region59: #{mmst_vit_forward.1} parent=1 // pred_check_branch
      %102 = sbr.rel (0) target = $region61
    $region60: #{mmst_vit_forward.1} parent=1 // pred_region
      _
    $region61: #{mmst_vit_forward.1} parent=1 // pred_fallthru
      _
    // Predicated region
    $region62: #{mmst_vit_forward.1} parent=1 // pred_check
      _
    $region63: #{mmst_vit_forward.1} parent=1 // pred_check_branch
      %104 = sbr.rel (0) target = $region65
    $region64: #{mmst_vit_forward.1} parent=1 // pred_region
      _
    $region65: #{mmst_vit_forward.1} parent=1 // pred_fallthru
      _
    // Predicated region
    $region66: #{mmst_vit_forward.1} parent=1 // pred_check
      _
    $region67: #{mmst_vit_forward.1} parent=1 // pred_check_branch
      %106 = sbr.rel (0) target = $region69
    $region68: #{mmst_vit_forward.1} parent=1 // pred_region
      _
    $region69: #{mmst_vit_forward.1} parent=1 // pred_fallthru
      _
    // Predicated region
    $region70: #{mmst_vit_forward.1} parent=1 // pred_check
      _
    $region71: #{mmst_vit_forward.1} parent=1 // pred_check_branch
      %108 = sbr.rel (0) target = $region73
    $region72: #{mmst_vit_forward.1} parent=1 // pred_region
      _
    $region73: #{mmst_vit_forward.1} parent=1 // pred_fallthru
      _
    // Predicated region
    $region74: #{mmst_vit_forward.1} parent=1 // pred_check
      _
    $region75: #{mmst_vit_forward.1} parent=1 // pred_check_branch
      %110 = sbr.rel (0) target = $region77
    $region76: #{mmst_vit_forward.1} parent=1 // pred_region
      _
    $region77: #{mmst_vit_forward.1} parent=1 // pred_fallthru
      _
    // Predicated region
    $region78: #{mmst_vit_forward.1} parent=1 // pred_check
      _
    $region79: #{mmst_vit_forward.1} parent=1 // pred_check_branch
      %112 = sbr.rel (0) target = $region81
    $region80: #{mmst_vit_forward.1} parent=1 // pred_region
      _
    $region81: #{mmst_vit_forward.1} parent=1 // pred_fallthru
      _
    // Predicated region
    $region82: #{mmst_vit_forward.1} parent=1 // pred_check
      _
    $region83: #{mmst_vit_forward.1} parent=1 // pred_check_branch
      %114 = sbr.rel (0) target = $region85
    $region84: #{mmst_vit_forward.1} parent=1 // pred_region
      _
    $region85: #{mmst_vit_forward.1} parent=1 // pred_fallthru
      _
    // Predicated region
    $region86: #{mmst_vit_forward.1} parent=1 // pred_check
      _
    $region87: #{mmst_vit_forward.1} parent=1 // pred_check_branch
      %116 = sbr.rel (0) target = $region89
    $region88: #{mmst_vit_forward.1} parent=1 // pred_region
      _
    $region89: #{mmst_vit_forward.1} parent=1 // pred_fallthru
      _
    // Predicated region
    $region90: #{mmst_vit_forward.1} parent=1 // pred_check
      _
    $region91: #{mmst_vit_forward.1} parent=1 // pred_check_branch
      %118 = sbr.rel (0) target = $region93
    $region92: #{mmst_vit_forward.1} parent=1 // pred_region
      _
    $region93: #{mmst_vit_forward.1} parent=1 // pred_fallthru
      _
    // Predicated region
    $region94: #{mmst_vit_forward.1} parent=1 // pred_check
      _
    $region95: #{mmst_vit_forward.1} parent=1 // pred_check_branch
      %120 = sbr.rel (0) target = $region97
    $region96: #{mmst_vit_forward.1} parent=1 // pred_region
      _
    $region97: #{mmst_vit_forward.1} parent=1 // pred_fallthru
      _
    // Predicated region
    $region98: #{mmst_vit_forward.1} parent=1 // pred_check
      _
    $region99: #{mmst_vit_forward.1} parent=1 // pred_check_branch
      %122 = sbr.rel (0) target = $region101
    $region100: #{mmst_vit_forward.1} parent=1 // pred_region
      _
    $region101: #{mmst_vit_forward.1} parent=1 // pred_fallthru
      _
    // Predicated region
    $region102: #{mmst_vit_forward.1} parent=1 // pred_check
      _
    $region103: #{mmst_vit_forward.1} parent=1 // pred_check_branch
      %124 = sbr.rel (0) target = $region105
    $region104: #{mmst_vit_forward.1} parent=1 // pred_region
      _
    $region105: #{mmst_vit_forward.1} parent=1 // pred_fallthru
      _
    // Predicated region
    $region106: #{mmst_vit_forward.1} parent=1 // pred_check
      _
    $region107: #{mmst_vit_forward.1} parent=1 // pred_check_branch
      %126 = sbr.rel (0) target = $region109
    $region108: #{mmst_vit_forward.1} parent=1 // pred_region
      _
    $region109: #{mmst_vit_forward.1} parent=1 // pred_fallthru
      _
    // Predicated region
    $region110: #{mmst_vit_forward.1} parent=1 // pred_check
      _
    $region111: #{mmst_vit_forward.1} parent=1 // pred_check_branch
      %128 = sbr.rel (0) target = $region113
    $region112: #{mmst_vit_forward.1} parent=1 // pred_region
      _
    $region113: #{mmst_vit_forward.1} parent=1 // pred_fallthru
      _
    // Predicated region
    $region114: #{mmst_vit_forward.1} parent=1 // pred_check
      _
    $region115: #{mmst_vit_forward.1} parent=1 // pred_check_branch
      %130 = sbr.rel (0) target = $region117
    $region116: #{mmst_vit_forward.1} parent=1 // pred_region
      _
    $region117: #{mmst_vit_forward.1} parent=1 // pred_fallthru
      _
    // Predicated region
    $region118: #{mmst_vit_forward.1} parent=1 // pred_check
      _
    $region119: #{mmst_vit_forward.1} parent=1 // pred_check_branch
      %132 = sbr.rel (0) target = $region121
    $region120: #{mmst_vit_forward.1} parent=1 // pred_region
      _
    $region121: #{mmst_vit_forward.1} parent=1 // pred_fallthru
      _
    // Predicated region
    $region122: #{mmst_vit_forward.1} parent=1 // pred_check
      _
    $region123: #{mmst_vit_forward.1} parent=1 // pred_check_branch
      %134 = sbr.rel (0) target = $region125
    $region124: #{mmst_vit_forward.1} parent=1 // pred_region
      _
    $region125: #{mmst_vit_forward.1} parent=1 // pred_fallthru
      _
    // Predicated region
    $region126: #{mmst_vit_forward.1} parent=1 // pred_check
      _
    $region127: #{mmst_vit_forward.1} parent=1 // pred_check_branch
      %136 = sbr.rel (0) target = $region129
    $region128: #{mmst_vit_forward.1} parent=1 // pred_region
      _
    $region129: #{mmst_vit_forward.1} parent=1 // pred_fallthru
      _
    // Predicated region
    $region130: #{mmst_vit_forward.1} parent=1 // pred_check
      _
    $region131: #{mmst_vit_forward.1} parent=1 // pred_check_branch
      %138 = sbr.rel (0) target = $region133
    $region132: #{mmst_vit_forward.1} parent=1 // pred_region
      _
    $region133: #{mmst_vit_forward.1} parent=1 // pred_fallthru
      _
    %v140 = vld [vmem:[%s7] sm:$0xf]
    %v141 = vld [vmem:[%s7 + $0x4] sm:$0xf]
    %v142 = vld [vmem:[%s7 + $0x8] sm:$0xf]
    %v143 = vld [vmem:[%s7 + $0xc] sm:$0xf]
    %v144 = vld [vmem:[%s7 + $0x10] sm:$0xf]
    %v145 = vld [vmem:[%s7 + $0x14] sm:$0xf]
    %v146 = vld [vmem:[%s7 + $0x18] sm:$0xf]
    %v147 = vld [vmem:[%s7 + $0x1c] sm:$0xf]
    %v148 = vld [vmem:[%s7 + $0x20] sm:$0xf]
    %v149 = vld [vmem:[%s7 + $0x24] sm:$0xf]
    %v150 = vld [vmem:[%s7 + $0x28] sm:$0xf]
    %v151 = vld [vmem:[%s7 + $0x2c] sm:$0xf]
    %v152 = vld [vmem:[%s7 + $0x30] sm:$0xf]
    %v153 = vld [vmem:[%s7 + $0x34] sm:$0xf]
    %v154 = vld [vmem:[%s7 + $0x38] sm:$0xf]
    %v155 = vld [vmem:[%s7 + $0x3c] sm:$0xf]
    %v156 = vld [vmem:[%s7 + $0x40] sm:$0xf]
    %v157 = vld [vmem:[%s7 + $0x44] sm:$0xf]
    %v158 = vld [vmem:[%s7 + $0x48] sm:$0xf]
    %v159 = vld [vmem:[%s7 + $0x4c] sm:$0xf]
    %v160 = vld [vmem:[%s7 + $0x50] sm:$0xf]
    %v161 = vld [vmem:[%s7 + $0x54] sm:$0xf]
    %v162 = vld [vmem:[%s7 + $0x58] sm:$0xf]
    %v163 = vld [vmem:[%s7 + $0x5c] sm:$0xf]
    %v164 = vld [vmem:[%s7 + $0x60] sm:$0xf]
    %v165 = vld [vmem:[%s7 + $0x64] sm:$0xf]
    %v166 = vld [vmem:[%s7 + $0x68] sm:$0xf]
    %v167 = vld [vmem:[%s7 + $0x6c] sm:$0xf]
    %v168 = vld [vmem:[%s7 + $0x70] sm:$0xf]
    %v169 = vld [vmem:[%s7 + $0x74] sm:$0xf]
    %v170 = vld [vmem:[%s7 + $0x78] sm:$0xf]
    %v171 = vld [vmem:[%s7 + $0x7c] sm:$0xf]
    %v172 = vld [vmem:[%s7 + $0x80] sm:$0xf]
    %v173 = vld [vmem:[%s7 + $0x84] sm:$0xf]
    %v174 = vld [vmem:[%s7 + $0x88] sm:$0xf]
    %v175 = vld [vmem:[%s7 + $0x8c] sm:$0xf]
    %v176 = vld [vmem:[%s7 + $0x90] sm:$0xf]
    %v177 = vld [vmem:[%s7 + $0x94] sm:$0xf]
    %v178 = vld [vmem:[%s7 + $0x98] sm:$0xf]
    %v179 = vld [vmem:[%s7 + $0x9c] sm:$0xf]
    %v180 = vld [vmem:[%s7 + $0xa0] sm:$0xf]
    %v181 = vld [vmem:[%s7 + $0xa4] sm:$0xf]
    %v182 = vld [vmem:[%s7 + $0xa8] sm:$0xf]
    %v183 = vld [vmem:[%s7 + $0xac] sm:$0xf]
    %v184 = vld [vmem:[%s7 + $0xb0] sm:$0xf]
    %v185 = vld [vmem:[%s7 + $0xb4] sm:$0xf]
    %v186 = vld [vmem:[%s7 + $0xb8] sm:$0xf]
    %v187 = vld [vmem:[%s7 + $0xbc] sm:$0xf]
    %v188 = vld [vmem:[%s7 + $0xc0] sm:$0xf]
    %v189 = vld [vmem:[%s7 + $0xc4] sm:$0xf]
    %v190 = vld [vmem:[%s7 + $0xc8] sm:$0xf]
    %v191 = vld [vmem:[%s7 + $0xcc] sm:$0xf]
    %v192 = vld [vmem:[%s7 + $0xd0] sm:$0xf]
    %v193 = vld [vmem:[%s7 + $0xd4] sm:$0xf]
    %v194 = vld [vmem:[%s7 + $0xd8] sm:$0xf]
    %v195 = vld [vmem:[%s7 + $0xdc] sm:$0xf]
    %v196 = vld [vmem:[%s7 + $0xe0] sm:$0xf]
    %v197 = vld [vmem:[%s7 + $0xe4] sm:$0xf]
    %v198 = vld [vmem:[%s7 + $0xe8] sm:$0xf]
    %v199 = vld [vmem:[%s7 + $0xec] sm:$0xf]
    %v200 = vld [vmem:[%s7 + $0xf0] sm:$0xf]
    %v201 = vld [vmem:[%s7 + $0xf4] sm:$0xf]
    %v202 = vld [vmem:[%s7 + $0xf8] sm:$0xf]
    %v203 = vld [vmem:[%s7 + $0xfc] sm:$0xf]
    %v204 = vld [vmem:[%s7 + $0x100] sm:$0xf]
    %v205 = vld [vmem:[%s7 + $0x104] sm:$0xf]
    %v206 = vld [vmem:[%s7 + $0x108] sm:$0xf]
    %v207 = vld [vmem:[%s7 + $0x10c] sm:$0xf]
    %v208 = vld [vmem:[%s7 + $0x110] sm:$0xf]
    %v209 = vld [vmem:[%s7 + $0x114] sm:$0xf]
    %v210 = vld [vmem:[%s7 + $0x118] sm:$0xf]
    %v211 = vld [vmem:[%s7 + $0x11c] sm:$0xf]
    %v212 = vld [vmem:[%s7 + $0x120] sm:$0xf]
    %v213 = vld [vmem:[%s7 + $0x124] sm:$0xf]
    %v214 = vld [vmem:[%s7 + $0x128] sm:$0xf]
    %v215 = vld [vmem:[%s7 + $0x12c] sm:$0xf]
    %v216 = vld [vmem:[%s7 + $0x130] sm:$0xf]
    %v217 = vld [vmem:[%s7 + $0x134] sm:$0xf]
    %v218 = vld [vmem:[%s7 + $0x138] sm:$0xf]
    %v219 = vld [vmem:[%s7 + $0x13c] sm:$0xf]
    %v220 = vld [vmem:[%s7 + $0x140] sm:$0xf]
    %v221 = vld [vmem:[%s7 + $0x144] sm:$0xf]
    %v222 = vld [vmem:[%s7 + $0x148] sm:$0xf]
    %v223 = vld [vmem:[%s7 + $0x14c] sm:$0xf]
    %v224 = vld [vmem:[%s7 + $0x150] sm:$0xf]
    %v225 = vld [vmem:[%s7 + $0x154] sm:$0xf]
    %v226 = vld [vmem:[%s7 + $0x158] sm:$0xf]
    %v227 = vld [vmem:[%s7 + $0x15c] sm:$0xf]
    %v228 = vld [vmem:[%s7 + $0x160] sm:$0xf]
    %v229 = vld [vmem:[%s7 + $0x164] sm:$0xf]
    %v230 = vld [vmem:[%s7 + $0x168] sm:$0xf]
    %v231 = vld [vmem:[%s7 + $0x16c] sm:$0xf]
    %v232 = vld [vmem:[%s7 + $0x170] sm:$0xf]
    %v233 = vld [vmem:[%s7 + $0x174] sm:$0xf]
    %v234 = vld [vmem:[%s7 + $0x178] sm:$0xf]
    %v235 = vld [vmem:[%s7 + $0x17c] sm:$0xf]
    %v236 = vld [vmem:[%s1] sm:$0xff]
    %v237 = vld [vmem:[%s1 + $0x8] sm:$0xff]
    %v238 = vld [vmem:[%s1 + $0x10] sm:$0xff]
    %v239 = vld [vmem:[%s1 + $0x18] sm:$0xff]
    %v240 = vld [vmem:[%s1 + $0x20] sm:$0xff]
    %v241 = vld [vmem:[%s1 + $0x28] sm:$0xff]
    %v242 = vld [vmem:[%s1 + $0x30] sm:$0xff]
    %v243 = vld [vmem:[%s1 + $0x38] sm:$0xff]
    %v244 = vld [vmem:[%s1 + $0x40] sm:$0xff]
    %v245 = vld [vmem:[%s1 + $0x48] sm:$0xff]
    %v246 = vld [vmem:[%s1 + $0x50] sm:$0xff]
    %v247 = vld [vmem:[%s1 + $0x58] sm:$0xff]
    %v248 = vld [vmem:[%s1 + $0x60] sm:$0xff]
    %v249 = vld [vmem:[%s1 + $0x68] sm:$0xff]
    %v250 = vld [vmem:[%s1 + $0x70] sm:$0xff]
    %v251 = vld [vmem:[%s1 + $0x78] sm:$0xff]
    %v252 = vld [vmem:[%s1 + $0x80] sm:$0xff]
    %v253 = vld [vmem:[%s1 + $0x88] sm:$0xff]
    %v254 = vld [vmem:[%s1 + $0x90] sm:$0xff]
    %v255 = vld [vmem:[%s1 + $0x98] sm:$0xff]
    %v256 = vld [vmem:[%s1 + $0xa0] sm:$0xff]
    %v257 = vld [vmem:[%s1 + $0xa8] sm:$0xff]
    %v258 = vld [vmem:[%s1 + $0xb0] sm:$0xff]
    %v259 = vld [vmem:[%s1 + $0xb8] sm:$0xff]
    %v260 = vld [vmem:[%s1 + $0xc0] sm:$0xff]
    %v261 = vld [vmem:[%s1 + $0xc8] sm:$0xff]
    %v262 = vld [vmem:[%s1 + $0xd0] sm:$0xff]
    %v263 = vld [vmem:[%s1 + $0xd8] sm:$0xff]
    %v264 = vld [vmem:[%s1 + $0xe0] sm:$0xff]
    %v265 = vld [vmem:[%s1 + $0xe8] sm:$0xff]
    %v266 = vld [vmem:[%s1 + $0xf0] sm:$0xff]
    %v267 = vld [vmem:[%s1 + $0xf8] sm:$0xff]
    %v268 = vld [vmem:[%s1 + $0x100] sm:$0xff]
    %v269 = vld [vmem:[%s1 + $0x108] sm:$0xff]
    %v270 = vld [vmem:[%s1 + $0x110] sm:$0xff]
    %v271 = vld [vmem:[%s1 + $0x118] sm:$0xff]
    %v272 = vld [vmem:[%s1 + $0x120] sm:$0xff]
    %v273 = vld [vmem:[%s1 + $0x128] sm:$0xff]
    %v274 = vld [vmem:[%s1 + $0x130] sm:$0xff]
    %v275 = vld [vmem:[%s1 + $0x138] sm:$0xff]
    %v276 = vld [vmem:[%s1 + $0x140] sm:$0xff]
    %v277 = vld [vmem:[%s1 + $0x148] sm:$0xff]
    %v278 = vld [vmem:[%s1 + $0x150] sm:$0xff]
    %v279 = vld [vmem:[%s1 + $0x158] sm:$0xff]
    %v280 = vld [vmem:[%s1 + $0x160] sm:$0xff]
    %v281 = vld [vmem:[%s1 + $0x168] sm:$0xff]
    %v282 = vld [vmem:[%s1 + $0x170] sm:$0xff]
    %v283 = vld [vmem:[%s1 + $0x178] sm:$0xff]
    %v284 = vpack.c.bf16 %v242, %v236
    %v285 = vpack.c.bf16 %v243, %v237
    %v286 = vpack.c.bf16 %v244, %v238
    %v287 = vpack.c.bf16 %v245, %v239
    %v288 = vpack.c.bf16 %v246, %v240
    %v289 = vpack.c.bf16 %v247, %v241
    %v290 = vpack.c.bf16 %v254, %v248
    %v291 = vpack.c.bf16 %v255, %v249
    %v292 = vpack.c.bf16 %v256, %v250
    %v293 = vpack.c.bf16 %v257, %v251
    %v294 = vpack.c.bf16 %v258, %v252
    %v295 = vpack.c.bf16 %v259, %v253
    %v296 = vpack.c.bf16 %v266, %v260
    %v297 = vpack.c.bf16 %v267, %v261
    %v298 = vpack.c.bf16 %v268, %v262
    %v299 = vpack.c.bf16 %v269, %v263
    %v300 = vpack.c.bf16 %v270, %v264
    %v301 = vpack.c.bf16 %v271, %v265
    %v302 = vpack.c.bf16 %v278, %v272
    %v303 = vpack.c.bf16 %v279, %v273
    %v304 = vpack.c.bf16 %v280, %v274
    %v305 = vpack.c.bf16 %v281, %v275
    %v306 = vpack.c.bf16 %v282, %v276
    %v307 = vpack.c.bf16 %v283, %v277
    %v308 = vld [vmem:[%s9] sm:$0x1]
    %v310 = vperm.slane %v308, 0
    %v408 = vunpack.c.l.b16 %v140
    %v409 = vunpack.c.l.b16 %v141
    %v410 = vunpack.c.l.b16 %v142
    %v411 = vunpack.c.l.b16 %v143
    %v412 = vunpack.c.l.b16 %v144
    %v413 = vunpack.c.l.b16 %v145
    %v414 = vunpack.c.l.b16 %v146
    %v415 = vunpack.c.l.b16 %v147
    %v416 = vunpack.c.l.b16 %v148
    %v417 = vunpack.c.l.b16 %v149
    %v418 = vunpack.c.l.b16 %v150
    %v419 = vunpack.c.l.b16 %v151
    %v420 = vunpack.c.l.b16 %v152
    %v421 = vunpack.c.l.b16 %v153
    %v422 = vunpack.c.l.b16 %v154
    %v423 = vunpack.c.l.b16 %v155
    %v424 = vunpack.c.l.b16 %v156
    %v425 = vunpack.c.l.b16 %v157
    %v426 = vunpack.c.l.b16 %v158
    %v427 = vunpack.c.l.b16 %v159
    %v428 = vunpack.c.l.b16 %v160
    %v429 = vunpack.c.l.b16 %v161
    %v430 = vunpack.c.l.b16 %v162
    %v431 = vunpack.c.l.b16 %v163
    %v432 = vunpack.c.l.b16 %v164
    %v433 = vunpack.c.l.b16 %v165
    %v434 = vunpack.c.l.b16 %v166
    %v435 = vunpack.c.l.b16 %v167
    %v436 = vunpack.c.l.b16 %v168
    %v437 = vunpack.c.l.b16 %v169
    %v438 = vunpack.c.l.b16 %v170
    %v439 = vunpack.c.l.b16 %v171
    %v440 = vunpack.c.l.b16 %v172
    %v441 = vunpack.c.l.b16 %v173
    %v442 = vunpack.c.l.b16 %v174
    %v443 = vunpack.c.l.b16 %v175
    %v444 = vunpack.c.l.b16 %v176
    %v445 = vunpack.c.l.b16 %v177
    %v446 = vunpack.c.l.b16 %v178
    %v447 = vunpack.c.l.b16 %v179
    %v448 = vunpack.c.l.b16 %v180
    %v449 = vunpack.c.l.b16 %v181
    %v450 = vunpack.c.l.b16 %v182
    %v451 = vunpack.c.l.b16 %v183
    %v452 = vunpack.c.l.b16 %v184
    %v453 = vunpack.c.l.b16 %v185
    %v454 = vunpack.c.l.b16 %v186
    %v455 = vunpack.c.l.b16 %v187
    %v456 = vunpack.c.l.b16 %v188
    %v457 = vunpack.c.l.b16 %v189
    %v458 = vunpack.c.l.b16 %v190
    %v459 = vunpack.c.l.b16 %v191
    %v460 = vunpack.c.l.b16 %v192
    %v461 = vunpack.c.l.b16 %v193
    %v462 = vunpack.c.l.b16 %v194
    %v463 = vunpack.c.l.b16 %v195
    %v464 = vunpack.c.l.b16 %v196
    %v465 = vunpack.c.l.b16 %v197
    %v466 = vunpack.c.l.b16 %v198
    %v467 = vunpack.c.l.b16 %v199
    %v468 = vunpack.c.l.b16 %v200
    %v469 = vunpack.c.l.b16 %v201
    %v470 = vunpack.c.l.b16 %v202
    %v471 = vunpack.c.l.b16 %v203
    %v472 = vunpack.c.l.b16 %v204
    %v473 = vunpack.c.l.b16 %v205
    %v474 = vunpack.c.l.b16 %v206
    %v475 = vunpack.c.l.b16 %v207
    %v476 = vunpack.c.l.b16 %v208
    %v477 = vunpack.c.l.b16 %v209
    %v478 = vunpack.c.l.b16 %v210
    %v479 = vunpack.c.l.b16 %v211
    %v480 = vunpack.c.l.b16 %v212
    %v481 = vunpack.c.l.b16 %v213
    %v482 = vunpack.c.l.b16 %v214
    %v483 = vunpack.c.l.b16 %v215
    %v484 = vunpack.c.l.b16 %v216
    %v485 = vunpack.c.l.b16 %v217
    %v486 = vunpack.c.l.b16 %v218
    %v487 = vunpack.c.l.b16 %v219
    %v488 = vunpack.c.l.b16 %v220
    %v489 = vunpack.c.l.b16 %v221
    %v490 = vunpack.c.l.b16 %v222
    %v491 = vunpack.c.l.b16 %v223
    %v492 = vunpack.c.l.b16 %v224
    %v493 = vunpack.c.l.b16 %v225
    %v494 = vunpack.c.l.b16 %v226
    %v495 = vunpack.c.l.b16 %v227
    %v496 = vunpack.c.l.b16 %v228
    %v497 = vunpack.c.l.b16 %v229
    %v498 = vunpack.c.l.b16 %v230
    %v499 = vunpack.c.l.b16 %v231
    %v500 = vunpack.c.l.b16 %v232
    %v501 = vunpack.c.l.b16 %v233
    %v502 = vunpack.c.l.b16 %v234
    %v503 = vunpack.c.l.b16 %v235
    %v504 = vpack.c.b16 %v409, %v408
    %v505 = vpack.c.b16 %v411, %v410
    %v506 = vpack.c.b16 %v413, %v412
    %v507 = vpack.c.b16 %v415, %v414
    %v508 = vpack.c.b16 %v417, %v416
    %v509 = vpack.c.b16 %v419, %v418
    %v510 = vpack.c.b16 %v421, %v420
    %v511 = vpack.c.b16 %v423, %v422
    %v512 = vpack.c.b16 %v425, %v424
    %v513 = vpack.c.b16 %v427, %v426
    %v514 = vpack.c.b16 %v429, %v428
    %v515 = vpack.c.b16 %v431, %v430
    %v516 = vpack.c.b16 %v433, %v432
    %v517 = vpack.c.b16 %v435, %v434
    %v518 = vpack.c.b16 %v437, %v436
    %v519 = vpack.c.b16 %v439, %v438
    %v520 = vpack.c.b16 %v441, %v440
    %v521 = vpack.c.b16 %v443, %v442
    %v522 = vpack.c.b16 %v445, %v444
    %v523 = vpack.c.b16 %v447, %v446
    %v524 = vpack.c.b16 %v449, %v448
    %v525 = vpack.c.b16 %v451, %v450
    %v526 = vpack.c.b16 %v453, %v452
    %v527 = vpack.c.b16 %v455, %v454
    %v528 = vpack.c.b16 %v457, %v456
    %v529 = vpack.c.b16 %v459, %v458
    %v530 = vpack.c.b16 %v461, %v460
    %v531 = vpack.c.b16 %v463, %v462
    %v532 = vpack.c.b16 %v465, %v464
    %v533 = vpack.c.b16 %v467, %v466
    %v534 = vpack.c.b16 %v469, %v468
    %v535 = vpack.c.b16 %v471, %v470
    %v536 = vpack.c.b16 %v473, %v472
    %v537 = vpack.c.b16 %v475, %v474
    %v538 = vpack.c.b16 %v477, %v476
    %v539 = vpack.c.b16 %v479, %v478
    %v540 = vpack.c.b16 %v481, %v480
    %v541 = vpack.c.b16 %v483, %v482
    %v542 = vpack.c.b16 %v485, %v484
    %v543 = vpack.c.b16 %v487, %v486
    %v544 = vpack.c.b16 %v489, %v488
    %v545 = vpack.c.b16 %v491, %v490
    %v546 = vpack.c.b16 %v493, %v492
    %v547 = vpack.c.b16 %v495, %v494
    %v548 = vpack.c.b16 %v497, %v496
    %v549 = vpack.c.b16 %v499, %v498
    %v550 = vpack.c.b16 %v501, %v500
    %v551 = vpack.c.b16 %v503, %v502
    %600 = vmatpush.bf16.msra.mxu0 %v511
    %601 = vmatpush.bf16.msra.mxu0 %v510
    %602 = vmatpush.bf16.msra.mxu0 %v509
    %603 = vmatpush.bf16.msra.mxu0 %v508
    %604 = vmatpush.bf16.msra.mxu0 %v507
    %605 = vmatpush.bf16.msra.mxu0 %v506
    %606 = vmatpush.bf16.msra.mxu0 %v505
    %607 = vmatpush.bf16.msra.mxu0 %v504
    %608 = vmatmul.bf16.gmra.mxu0 %v284
    %v609 = vpop.f32.mrf.mxu0
    %v610 = vadd.f32 %v310, %v609
    %v611 = vpop.f32.mrf.mxu0
    %v612 = vadd.f32 %v310, %v611
    %613 = vmatmul.bf16.gmra.mxu0 %v290
    %v614 = vpop.f32.mrf.mxu0
    %v615 = vadd.f32 %v310, %v614
    %v616 = vpop.f32.mrf.mxu0
    %v617 = vadd.f32 %v310, %v616
    %618 = vmatmul.bf16.gmra.mxu0 %v296
    %v619 = vpop.f32.mrf.mxu0
    %v620 = vadd.f32 %v310, %v619
    %v621 = vpop.f32.mrf.mxu0
    %v622 = vadd.f32 %v310, %v621
    %623 = vmatmul.bf16.gmra.mxu0 %v302
    %v624 = vpop.f32.mrf.mxu0
    %v625 = vadd.f32 %v310, %v624
    %v626 = vpop.f32.mrf.mxu0
    %v627 = vadd.f32 %v310, %v626
    %628 = vdwg.mxu0
    %629 = vmatpush.bf16.msra.mxu0 %v519
    %630 = vmatpush.bf16.msra.mxu0 %v518
    %631 = vmatpush.bf16.msra.mxu0 %v517
    %632 = vmatpush.bf16.msra.mxu0 %v516
    %633 = vmatpush.bf16.msra.mxu0 %v515
    %634 = vmatpush.bf16.msra.mxu0 %v514
    %635 = vmatpush.bf16.msra.mxu0 %v513
    %636 = vmatpush.bf16.msra.mxu0 %v512
    %637 = vmatmul.bf16.gmra.mxu0 %v285
    %v638 = vpop.f32.mrf.mxu0
    %v639 = vadd.f32 %v610, %v638
    %v640 = vpop.f32.mrf.mxu0
    %v641 = vadd.f32 %v612, %v640
    %642 = vmatmul.bf16.gmra.mxu0 %v291
    %v643 = vpop.f32.mrf.mxu0
    %v644 = vadd.f32 %v615, %v643
    %v645 = vpop.f32.mrf.mxu0
    %v646 = vadd.f32 %v617, %v645
    %647 = vmatmul.bf16.gmra.mxu0 %v297
    %v648 = vpop.f32.mrf.mxu0
    %v649 = vadd.f32 %v620, %v648
    %v650 = vpop.f32.mrf.mxu0
    %v651 = vadd.f32 %v622, %v650
    %652 = vmatmul.bf16.gmra.mxu0 %v303
    %v653 = vpop.f32.mrf.mxu0
    %v654 = vadd.f32 %v625, %v653
    %v655 = vpop.f32.mrf.mxu0
    %v656 = vadd.f32 %v627, %v655
    %657 = vdwg.mxu0
    %658 = vmatpush.bf16.msra.mxu0 %v527
    %659 = vmatpush.bf16.msra.mxu0 %v526
    %660 = vmatpush.bf16.msra.mxu0 %v525
    %661 = vmatpush.bf16.msra.mxu0 %v524
    %662 = vmatpush.bf16.msra.mxu0 %v523
    %663 = vmatpush.bf16.msra.mxu0 %v522
    %664 = vmatpush.bf16.msra.mxu0 %v521
    %665 = vmatpush.bf16.msra.mxu0 %v520
    %666 = vmatmul.bf16.gmra.mxu0 %v286
    %v667 = vpop.f32.mrf.mxu0
    %v668 = vadd.f32 %v639, %v667
    %v669 = vpop.f32.mrf.mxu0
    %v670 = vadd.f32 %v641, %v669
    %671 = vmatmul.bf16.gmra.mxu0 %v292
    %v672 = vpop.f32.mrf.mxu0
    %v673 = vadd.f32 %v644, %v672
    %v674 = vpop.f32.mrf.mxu0
    %v675 = vadd.f32 %v646, %v674
    %676 = vmatmul.bf16.gmra.mxu0 %v298
    %v677 = vpop.f32.mrf.mxu0
    %v678 = vadd.f32 %v649, %v677
    %v679 = vpop.f32.mrf.mxu0
    %v680 = vadd.f32 %v651, %v679
    %681 = vmatmul.bf16.gmra.mxu0 %v304
    %v682 = vpop.f32.mrf.mxu0
    %v683 = vadd.f32 %v654, %v682
    %v684 = vpop.f32.mrf.mxu0
    %v685 = vadd.f32 %v656, %v684
    %686 = vdwg.mxu0
    %687 = vmatpush.bf16.msra.mxu0 %v535
    %688 = vmatpush.bf16.msra.mxu0 %v534
    %689 = vmatpush.bf16.msra.mxu0 %v533
    %690 = vmatpush.bf16.msra.mxu0 %v532
    %691 = vmatpush.bf16.msra.mxu0 %v531
    %692 = vmatpush.bf16.msra.mxu0 %v530
    %693 = vmatpush.bf16.msra.mxu0 %v529
    %694 = vmatpush.bf16.msra.mxu0 %v528
    %695 = vmatmul.bf16.gmra.mxu0 %v287
    %v696 = vpop.f32.mrf.mxu0
    %v697 = vadd.f32 %v668, %v696
    %v698 = vpop.f32.mrf.mxu0
    %v699 = vadd.f32 %v670, %v698
    %700 = vmatmul.bf16.gmra.mxu0 %v293
    %v701 = vpop.f32.mrf.mxu0
    %v702 = vadd.f32 %v673, %v701
    %v703 = vpop.f32.mrf.mxu0
    %v704 = vadd.f32 %v675, %v703
    %705 = vmatmul.bf16.gmra.mxu0 %v299
    %v706 = vpop.f32.mrf.mxu0
    %v707 = vadd.f32 %v678, %v706
    %v708 = vpop.f32.mrf.mxu0
    %v709 = vadd.f32 %v680, %v708
    %710 = vmatmul.bf16.gmra.mxu0 %v305
    %v711 = vpop.f32.mrf.mxu0
    %v712 = vadd.f32 %v683, %v711
    %v713 = vpop.f32.mrf.mxu0
    %v714 = vadd.f32 %v685, %v713
    %715 = vdwg.mxu0
    %716 = vmatpush.bf16.msra.mxu0 %v543
    %717 = vmatpush.bf16.msra.mxu0 %v542
    %718 = vmatpush.bf16.msra.mxu0 %v541
    %719 = vmatpush.bf16.msra.mxu0 %v540
    %720 = vmatpush.bf16.msra.mxu0 %v539
    %721 = vmatpush.bf16.msra.mxu0 %v538
    %722 = vmatpush.bf16.msra.mxu0 %v537
    %723 = vmatpush.bf16.msra.mxu0 %v536
    %724 = vmatmul.bf16.gmra.mxu0 %v288
    %v725 = vpop.f32.mrf.mxu0
    %v726 = vadd.f32 %v697, %v725
    %v727 = vpop.f32.mrf.mxu0
    %v728 = vadd.f32 %v699, %v727
    %729 = vmatmul.bf16.gmra.mxu0 %v294
    %v730 = vpop.f32.mrf.mxu0
    %v731 = vadd.f32 %v702, %v730
    %v732 = vpop.f32.mrf.mxu0
    %v733 = vadd.f32 %v704, %v732
    %734 = vmatmul.bf16.gmra.mxu0 %v300
    %v735 = vpop.f32.mrf.mxu0
    %v736 = vadd.f32 %v707, %v735
    %v737 = vpop.f32.mrf.mxu0
    %v738 = vadd.f32 %v709, %v737
    %739 = vmatmul.bf16.gmra.mxu0 %v306
    %v740 = vpop.f32.mrf.mxu0
    %v741 = vadd.f32 %v712, %v740
    %v742 = vpop.f32.mrf.mxu0
    %v743 = vadd.f32 %v714, %v742
    %744 = vdwg.mxu0
    %745 = vmatpush.bf16.msra.mxu0 %v551
    %746 = vmatpush.bf16.msra.mxu0 %v550
    %747 = vmatpush.bf16.msra.mxu0 %v549
    %748 = vmatpush.bf16.msra.mxu0 %v548
    %749 = vmatpush.bf16.msra.mxu0 %v547
    %750 = vmatpush.bf16.msra.mxu0 %v546
    %751 = vmatpush.bf16.msra.mxu0 %v545
    %752 = vmatpush.bf16.msra.mxu0 %v544
    %753 = vmatmul.bf16.gmra.mxu0 %v289
    %v754 = vpop.f32.mrf.mxu0
    %v755 = vadd.f32 %v726, %v754
    %v756 = vpop.f32.mrf.mxu0
    %v757 = vadd.f32 %v728, %v756
    %758 = vmatmul.bf16.gmra.mxu0 %v295
    %v759 = vpop.f32.mrf.mxu0
    %v760 = vadd.f32 %v731, %v759
    %v761 = vpop.f32.mrf.mxu0
    %v762 = vadd.f32 %v733, %v761
    %763 = vmatmul.bf16.gmra.mxu0 %v301
    %v764 = vpop.f32.mrf.mxu0
    %v765 = vadd.f32 %v736, %v764
    %v766 = vpop.f32.mrf.mxu0
    %v767 = vadd.f32 %v738, %v766
    %768 = vmatmul.bf16.gmra.mxu0 %v307
    %v769 = vpop.f32.mrf.mxu0
    %v770 = vadd.f32 %v741, %v769
    %v771 = vpop.f32.mrf.mxu0
    %v772 = vadd.f32 %v743, %v771
    %773 = vdwg.mxu0
    %v774 = vld [vmem:[%s3] sm:$0xf]
    %v775 = vld [vmem:[%s3 + $0x4] sm:$0xf]
    %v776 = vld [vmem:[%s3 + $0x8] sm:$0xf]
    %v777 = vld [vmem:[%s3 + $0xc] sm:$0xf]
    %v778 = vld [vmem:[%s3 + $0x10] sm:$0xf]
    %v779 = vld [vmem:[%s3 + $0x14] sm:$0xf]
    %v780 = vld [vmem:[%s3 + $0x18] sm:$0xf]
    %v781 = vld [vmem:[%s3 + $0x1c] sm:$0xf]
    %v782 = vld [vmem:[%s3 + $0x20] sm:$0xf]
    %v783 = vld [vmem:[%s3 + $0x24] sm:$0xf]
    %v784 = vld [vmem:[%s3 + $0x28] sm:$0xf]
    %v785 = vld [vmem:[%s3 + $0x2c] sm:$0xf]
    %v786 = vld [vmem:[%s3 + $0x30] sm:$0xf]
    %v787 = vld [vmem:[%s3 + $0x34] sm:$0xf]
    %v788 = vld [vmem:[%s3 + $0x38] sm:$0xf]
    %v789 = vld [vmem:[%s3 + $0x3c] sm:$0xf]
    %v790 = vld [vmem:[%s3 + $0x40] sm:$0xf]
    %v791 = vld [vmem:[%s3 + $0x44] sm:$0xf]
    %v792 = vld [vmem:[%s3 + $0x48] sm:$0xf]
    %v793 = vld [vmem:[%s3 + $0x4c] sm:$0xf]
    %v794 = vld [vmem:[%s3 + $0x50] sm:$0xf]
    %v795 = vld [vmem:[%s3 + $0x54] sm:$0xf]
    %v796 = vld [vmem:[%s3 + $0x58] sm:$0xf]
    %v797 = vld [vmem:[%s3 + $0x5c] sm:$0xf]
    %v798 = vld [vmem:[%s3 + $0x60] sm:$0xf]
    %v799 = vld [vmem:[%s3 + $0x64] sm:$0xf]
    %v800 = vld [vmem:[%s3 + $0x68] sm:$0xf]
    %v801 = vld [vmem:[%s3 + $0x6c] sm:$0xf]
    %v802 = vld [vmem:[%s3 + $0x70] sm:$0xf]
    %v803 = vld [vmem:[%s3 + $0x74] sm:$0xf]
    %v804 = vld [vmem:[%s3 + $0x78] sm:$0xf]
    %v805 = vld [vmem:[%s3 + $0x7c] sm:$0xf]
    %v806 = vld [vmem:[%s3 + $0x80] sm:$0xf]
    %v807 = vld [vmem:[%s3 + $0x84] sm:$0xf]
    %v808 = vld [vmem:[%s3 + $0x88] sm:$0xf]
    %v809 = vld [vmem:[%s3 + $0x8c] sm:$0xf]
    %v810 = vld [vmem:[%s3 + $0x90] sm:$0xf]
    %v811 = vld [vmem:[%s3 + $0x94] sm:$0xf]
    %v812 = vld [vmem:[%s3 + $0x98] sm:$0xf]
    %v813 = vld [vmem:[%s3 + $0x9c] sm:$0xf]
    %v814 = vld [vmem:[%s3 + $0xa0] sm:$0xf]
    %v815 = vld [vmem:[%s3 + $0xa4] sm:$0xf]
    %v816 = vld [vmem:[%s3 + $0xa8] sm:$0xf]
    %v817 = vld [vmem:[%s3 + $0xac] sm:$0xf]
    %v818 = vld [vmem:[%s3 + $0xb0] sm:$0xf]
    %v819 = vld [vmem:[%s3 + $0xb4] sm:$0xf]
    %v820 = vld [vmem:[%s3 + $0xb8] sm:$0xf]
    %v821 = vld [vmem:[%s3 + $0xbc] sm:$0xf]
    %v822 = vld [vmem:[%s3 + $0xc0] sm:$0xf]
    %v823 = vld [vmem:[%s3 + $0xc4] sm:$0xf]
    %v824 = vld [vmem:[%s3 + $0xc8] sm:$0xf]
    %v825 = vld [vmem:[%s3 + $0xcc] sm:$0xf]
    %v826 = vld [vmem:[%s3 + $0xd0] sm:$0xf]
    %v827 = vld [vmem:[%s3 + $0xd4] sm:$0xf]
    %v828 = vld [vmem:[%s3 + $0xd8] sm:$0xf]
    %v829 = vld [vmem:[%s3 + $0xdc] sm:$0xf]
    %v830 = vld [vmem:[%s3 + $0xe0] sm:$0xf]
    %v831 = vld [vmem:[%s3 + $0xe4] sm:$0xf]
    %v832 = vld [vmem:[%s3 + $0xe8] sm:$0xf]
    %v833 = vld [vmem:[%s3 + $0xec] sm:$0xf]
    %v834 = vld [vmem:[%s3 + $0xf0] sm:$0xf]
    %v835 = vld [vmem:[%s3 + $0xf4] sm:$0xf]
    %v836 = vld [vmem:[%s3 + $0xf8] sm:$0xf]
    %v837 = vld [vmem:[%s3 + $0xfc] sm:$0xf]
    %vm838 = vcmask 68608
    %v839 = vsel %vm838, %v774, 0.0
    %v840 = vrot.slane %v839, 4
    %v841 = vadd.f32 %v839, %v840
    %v842 = vrot.slane %v841, 2
    %v843 = vadd.f32 %v841, %v842
    %v844 = vrot.slane %v843, 1
    %v845 = vadd.f32 %v843, %v844
    %v846 = vsel %vm838, %v775, 0.0
    %v847 = vrot.slane %v846, 4
    %v848 = vadd.f32 %v846, %v847
    %v849 = vrot.slane %v848, 2
    %v850 = vadd.f32 %v848, %v849
    %v851 = vrot.slane %v850, 1
    %v852 = vadd.f32 %v850, %v851
    %v853 = vsel %vm838, %v776, 0.0
    %v854 = vrot.slane %v853, 4
    %v855 = vadd.f32 %v853, %v854
    %v856 = vrot.slane %v855, 2
    %v857 = vadd.f32 %v855, %v856
    %v858 = vrot.slane %v857, 1
    %v859 = vadd.f32 %v857, %v858
    %v860 = vsel %vm838, %v777, 0.0
    %v861 = vrot.slane %v860, 4
    %v862 = vadd.f32 %v860, %v861
    %v863 = vrot.slane %v862, 2
    %v864 = vadd.f32 %v862, %v863
    %v865 = vrot.slane %v864, 1
    %v866 = vadd.f32 %v864, %v865
    %v867 = vsel %vm838, %v778, 0.0
    %v868 = vrot.slane %v867, 4
    %v869 = vadd.f32 %v867, %v868
    %v870 = vrot.slane %v869, 2
    %v871 = vadd.f32 %v869, %v870
    %v872 = vrot.slane %v871, 1
    %v873 = vadd.f32 %v871, %v872
    %v874 = vsel %vm838, %v779, 0.0
    %v875 = vrot.slane %v874, 4
    %v876 = vadd.f32 %v874, %v875
    %v877 = vrot.slane %v876, 2
    %v878 = vadd.f32 %v876, %v877
    %v879 = vrot.slane %v878, 1
    %v880 = vadd.f32 %v878, %v879
    %v881 = vsel %vm838, %v780, 0.0
    %v882 = vrot.slane %v881, 4
    %v883 = vadd.f32 %v881, %v882
    %v884 = vrot.slane %v883, 2
    %v885 = vadd.f32 %v883, %v884
    %v886 = vrot.slane %v885, 1
    %v887 = vadd.f32 %v885, %v886
    %v888 = vsel %vm838, %v781, 0.0
    %v889 = vrot.slane %v888, 4
    %v890 = vadd.f32 %v888, %v889
    %v891 = vrot.slane %v890, 2
    %v892 = vadd.f32 %v890, %v891
    %v893 = vrot.slane %v892, 1
    %v894 = vadd.f32 %v892, %v893
    %v895 = vsel %vm838, %v782, 0.0
    %v896 = vrot.slane %v895, 4
    %v897 = vadd.f32 %v895, %v896
    %v898 = vrot.slane %v897, 2
    %v899 = vadd.f32 %v897, %v898
    %v900 = vrot.slane %v899, 1
    %v901 = vadd.f32 %v899, %v900
    %v902 = vsel %vm838, %v783, 0.0
    %v903 = vrot.slane %v902, 4
    %v904 = vadd.f32 %v902, %v903
    %v905 = vrot.slane %v904, 2
    %v906 = vadd.f32 %v904, %v905
    %v907 = vrot.slane %v906, 1
    %v908 = vadd.f32 %v906, %v907
    %v909 = vsel %vm838, %v784, 0.0
    %v910 = vrot.slane %v909, 4
    %v911 = vadd.f32 %v909, %v910
    %v912 = vrot.slane %v911, 2
    %v913 = vadd.f32 %v911, %v912
    %v914 = vrot.slane %v913, 1
    %v915 = vadd.f32 %v913, %v914
    %v916 = vsel %vm838, %v785, 0.0
    %v917 = vrot.slane %v916, 4
    %v918 = vadd.f32 %v916, %v917
    %v919 = vrot.slane %v918, 2
    %v920 = vadd.f32 %v918, %v919
    %v921 = vrot.slane %v920, 1
    %v922 = vadd.f32 %v920, %v921
    %v923 = vsel %vm838, %v786, 0.0
    %v924 = vrot.slane %v923, 4
    %v925 = vadd.f32 %v923, %v924
    %v926 = vrot.slane %v925, 2
    %v927 = vadd.f32 %v925, %v926
    %v928 = vrot.slane %v927, 1
    %v929 = vadd.f32 %v927, %v928
    %v930 = vsel %vm838, %v787, 0.0
    %v931 = vrot.slane %v930, 4
    %v932 = vadd.f32 %v930, %v931
    %v933 = vrot.slane %v932, 2
    %v934 = vadd.f32 %v932, %v933
    %v935 = vrot.slane %v934, 1
    %v936 = vadd.f32 %v934, %v935
    %v937 = vsel %vm838, %v788, 0.0
    %v938 = vrot.slane %v937, 4
    %v939 = vadd.f32 %v937, %v938
    %v940 = vrot.slane %v939, 2
    %v941 = vadd.f32 %v939, %v940
    %v942 = vrot.slane %v941, 1
    %v943 = vadd.f32 %v941, %v942
    %v944 = vsel %vm838, %v789, 0.0
    %v945 = vrot.slane %v944, 4
    %v946 = vadd.f32 %v944, %v945
    %v947 = vrot.slane %v946, 2
    %v948 = vadd.f32 %v946, %v947
    %v949 = vrot.slane %v948, 1
    %v950 = vadd.f32 %v948, %v949
    %v951 = vsel %vm838, %v790, 0.0
    %v952 = vrot.slane %v951, 4
    %v953 = vadd.f32 %v951, %v952
    %v954 = vrot.slane %v953, 2
    %v955 = vadd.f32 %v953, %v954
    %v956 = vrot.slane %v955, 1
    %v957 = vadd.f32 %v955, %v956
    %v958 = vsel %vm838, %v791, 0.0
    %v959 = vrot.slane %v958, 4
    %v960 = vadd.f32 %v958, %v959
    %v961 = vrot.slane %v960, 2
    %v962 = vadd.f32 %v960, %v961
    %v963 = vrot.slane %v962, 1
    %v964 = vadd.f32 %v962, %v963
    %v965 = vsel %vm838, %v792, 0.0
    %v966 = vrot.slane %v965, 4
    %v967 = vadd.f32 %v965, %v966
    %v968 = vrot.slane %v967, 2
    %v969 = vadd.f32 %v967, %v968
    %v970 = vrot.slane %v969, 1
    %v971 = vadd.f32 %v969, %v970
    %v972 = vsel %vm838, %v793, 0.0
    %v973 = vrot.slane %v972, 4
    %v974 = vadd.f32 %v972, %v973
    %v975 = vrot.slane %v974, 2
    %v976 = vadd.f32 %v974, %v975
    %v977 = vrot.slane %v976, 1
    %v978 = vadd.f32 %v976, %v977
    %v979 = vsel %vm838, %v794, 0.0
    %v980 = vrot.slane %v979, 4
    %v981 = vadd.f32 %v979, %v980
    %v982 = vrot.slane %v981, 2
    %v983 = vadd.f32 %v981, %v982
    %v984 = vrot.slane %v983, 1
    %v985 = vadd.f32 %v983, %v984
    %v986 = vsel %vm838, %v795, 0.0
    %v987 = vrot.slane %v986, 4
    %v988 = vadd.f32 %v986, %v987
    %v989 = vrot.slane %v988, 2
    %v990 = vadd.f32 %v988, %v989
    %v991 = vrot.slane %v990, 1
    %v992 = vadd.f32 %v990, %v991
    %v993 = vsel %vm838, %v796, 0.0
    %v994 = vrot.slane %v993, 4
    %v995 = vadd.f32 %v993, %v994
    %v996 = vrot.slane %v995, 2
    %v997 = vadd.f32 %v995, %v996
    %v998 = vrot.slane %v997, 1
    %v999 = vadd.f32 %v997, %v998
    %v1000 = vsel %vm838, %v797, 0.0
    %v1001 = vrot.slane %v1000, 4
    %v1002 = vadd.f32 %v1000, %v1001
    %v1003 = vrot.slane %v1002, 2
    %v1004 = vadd.f32 %v1002, %v1003
    %v1005 = vrot.slane %v1004, 1
    %v1006 = vadd.f32 %v1004, %v1005
    %v1007 = vsel %vm838, %v798, 0.0
    %v1008 = vrot.slane %v1007, 4
    %v1009 = vadd.f32 %v1007, %v1008
    %v1010 = vrot.slane %v1009, 2
    %v1011 = vadd.f32 %v1009, %v1010
    %v1012 = vrot.slane %v1011, 1
    %v1013 = vadd.f32 %v1011, %v1012
    %v1014 = vsel %vm838, %v799, 0.0
    %v1015 = vrot.slane %v1014, 4
    %v1016 = vadd.f32 %v1014, %v1015
    %v1017 = vrot.slane %v1016, 2
    %v1018 = vadd.f32 %v1016, %v1017
    %v1019 = vrot.slane %v1018, 1
    %v1020 = vadd.f32 %v1018, %v1019
    %v1021 = vsel %vm838, %v800, 0.0
    %v1022 = vrot.slane %v1021, 4
    %v1023 = vadd.f32 %v1021, %v1022
    %v1024 = vrot.slane %v1023, 2
    %v1025 = vadd.f32 %v1023, %v1024
    %v1026 = vrot.slane %v1025, 1
    %v1027 = vadd.f32 %v1025, %v1026
    %v1028 = vsel %vm838, %v801, 0.0
    %v1029 = vrot.slane %v1028, 4
    %v1030 = vadd.f32 %v1028, %v1029
    %v1031 = vrot.slane %v1030, 2
    %v1032 = vadd.f32 %v1030, %v1031
    %v1033 = vrot.slane %v1032, 1
    %v1034 = vadd.f32 %v1032, %v1033
    %v1035 = vsel %vm838, %v802, 0.0
    %v1036 = vrot.slane %v1035, 4
    %v1037 = vadd.f32 %v1035, %v1036
    %v1038 = vrot.slane %v1037, 2
    %v1039 = vadd.f32 %v1037, %v1038
    %v1040 = vrot.slane %v1039, 1
    %v1041 = vadd.f32 %v1039, %v1040
    %v1042 = vsel %vm838, %v803, 0.0
    %v1043 = vrot.slane %v1042, 4
    %v1044 = vadd.f32 %v1042, %v1043
    %v1045 = vrot.slane %v1044, 2
    %v1046 = vadd.f32 %v1044, %v1045
    %v1047 = vrot.slane %v1046, 1
    %v1048 = vadd.f32 %v1046, %v1047
    %v1049 = vsel %vm838, %v804, 0.0
    %v1050 = vrot.slane %v1049, 4
    %v1051 = vadd.f32 %v1049, %v1050
    %v1052 = vrot.slane %v1051, 2
    %v1053 = vadd.f32 %v1051, %v1052
    %v1054 = vrot.slane %v1053, 1
    %v1055 = vadd.f32 %v1053, %v1054
    %v1056 = vsel %vm838, %v805, 0.0
    %v1057 = vrot.slane %v1056, 4
    %v1058 = vadd.f32 %v1056, %v1057
    %v1059 = vrot.slane %v1058, 2
    %v1060 = vadd.f32 %v1058, %v1059
    %v1061 = vrot.slane %v1060, 1
    %v1062 = vadd.f32 %v1060, %v1061
    %v1063 = vsel %vm838, %v806, 0.0
    %v1064 = vrot.slane %v1063, 4
    %v1065 = vadd.f32 %v1063, %v1064
    %v1066 = vrot.slane %v1065, 2
    %v1067 = vadd.f32 %v1065, %v1066
    %v1068 = vrot.slane %v1067, 1
    %v1069 = vadd.f32 %v1067, %v1068
    %v1070 = vsel %vm838, %v807, 0.0
    %v1071 = vrot.slane %v1070, 4
    %v1072 = vadd.f32 %v1070, %v1071
    %v1073 = vrot.slane %v1072, 2
    %v1074 = vadd.f32 %v1072, %v1073
    %v1075 = vrot.slane %v1074, 1
    %v1076 = vadd.f32 %v1074, %v1075
    %v1077 = vsel %vm838, %v808, 0.0
    %v1078 = vrot.slane %v1077, 4
    %v1079 = vadd.f32 %v1077, %v1078
    %v1080 = vrot.slane %v1079, 2
    %v1081 = vadd.f32 %v1079, %v1080
    %v1082 = vrot.slane %v1081, 1
    %v1083 = vadd.f32 %v1081, %v1082
    %v1084 = vsel %vm838, %v809, 0.0
    %v1085 = vrot.slane %v1084, 4
    %v1086 = vadd.f32 %v1084, %v1085
    %v1087 = vrot.slane %v1086, 2
    %v1088 = vadd.f32 %v1086, %v1087
    %v1089 = vrot.slane %v1088, 1
    %v1090 = vadd.f32 %v1088, %v1089
    %v1091 = vsel %vm838, %v810, 0.0
    %v1092 = vrot.slane %v1091, 4
    %v1093 = vadd.f32 %v1091, %v1092
    %v1094 = vrot.slane %v1093, 2
    %v1095 = vadd.f32 %v1093, %v1094
    %v1096 = vrot.slane %v1095, 1
    %v1097 = vadd.f32 %v1095, %v1096
    %v1098 = vsel %vm838, %v811, 0.0
    %v1099 = vrot.slane %v1098, 4
    %v1100 = vadd.f32 %v1098, %v1099
    %v1101 = vrot.slane %v1100, 2
    %v1102 = vadd.f32 %v1100, %v1101
    %v1103 = vrot.slane %v1102, 1
    %v1104 = vadd.f32 %v1102, %v1103
    %v1105 = vsel %vm838, %v812, 0.0
    %v1106 = vrot.slane %v1105, 4
    %v1107 = vadd.f32 %v1105, %v1106
    %v1108 = vrot.slane %v1107, 2
    %v1109 = vadd.f32 %v1107, %v1108
    %v1110 = vrot.slane %v1109, 1
    %v1111 = vadd.f32 %v1109, %v1110
    %v1112 = vsel %vm838, %v813, 0.0
    %v1113 = vrot.slane %v1112, 4
    %v1114 = vadd.f32 %v1112, %v1113
    %v1115 = vrot.slane %v1114, 2
    %v1116 = vadd.f32 %v1114, %v1115
    %v1117 = vrot.slane %v1116, 1
    %v1118 = vadd.f32 %v1116, %v1117
    %v1119 = vsel %vm838, %v814, 0.0
    %v1120 = vrot.slane %v1119, 4
    %v1121 = vadd.f32 %v1119, %v1120
    %v1122 = vrot.slane %v1121, 2
    %v1123 = vadd.f32 %v1121, %v1122
    %v1124 = vrot.slane %v1123, 1
    %v1125 = vadd.f32 %v1123, %v1124
    %v1126 = vsel %vm838, %v815, 0.0
    %v1127 = vrot.slane %v1126, 4
    %v1128 = vadd.f32 %v1126, %v1127
    %v1129 = vrot.slane %v1128, 2
    %v1130 = vadd.f32 %v1128, %v1129
    %v1131 = vrot.slane %v1130, 1
    %v1132 = vadd.f32 %v1130, %v1131
    %v1133 = vsel %vm838, %v816, 0.0
    %v1134 = vrot.slane %v1133, 4
    %v1135 = vadd.f32 %v1133, %v1134
    %v1136 = vrot.slane %v1135, 2
    %v1137 = vadd.f32 %v1135, %v1136
    %v1138 = vrot.slane %v1137, 1
    %v1139 = vadd.f32 %v1137, %v1138
    %v1140 = vsel %vm838, %v817, 0.0
    %v1141 = vrot.slane %v1140, 4
    %v1142 = vadd.f32 %v1140, %v1141
    %v1143 = vrot.slane %v1142, 2
    %v1144 = vadd.f32 %v1142, %v1143
    %v1145 = vrot.slane %v1144, 1
    %v1146 = vadd.f32 %v1144, %v1145
    %v1147 = vsel %vm838, %v818, 0.0
    %v1148 = vrot.slane %v1147, 4
    %v1149 = vadd.f32 %v1147, %v1148
    %v1150 = vrot.slane %v1149, 2
    %v1151 = vadd.f32 %v1149, %v1150
    %v1152 = vrot.slane %v1151, 1
    %v1153 = vadd.f32 %v1151, %v1152
    %v1154 = vsel %vm838, %v819, 0.0
    %v1155 = vrot.slane %v1154, 4
    %v1156 = vadd.f32 %v1154, %v1155
    %v1157 = vrot.slane %v1156, 2
    %v1158 = vadd.f32 %v1156, %v1157
    %v1159 = vrot.slane %v1158, 1
    %v1160 = vadd.f32 %v1158, %v1159
    %v1161 = vsel %vm838, %v820, 0.0
    %v1162 = vrot.slane %v1161, 4
    %v1163 = vadd.f32 %v1161, %v1162
    %v1164 = vrot.slane %v1163, 2
    %v1165 = vadd.f32 %v1163, %v1164
    %v1166 = vrot.slane %v1165, 1
    %v1167 = vadd.f32 %v1165, %v1166
    %v1168 = vsel %vm838, %v821, 0.0
    %v1169 = vrot.slane %v1168, 4
    %v1170 = vadd.f32 %v1168, %v1169
    %v1171 = vrot.slane %v1170, 2
    %v1172 = vadd.f32 %v1170, %v1171
    %v1173 = vrot.slane %v1172, 1
    %v1174 = vadd.f32 %v1172, %v1173
    %v1175 = vsel %vm838, %v822, 0.0
    %v1176 = vrot.slane %v1175, 4
    %v1177 = vadd.f32 %v1175, %v1176
    %v1178 = vrot.slane %v1177, 2
    %v1179 = vadd.f32 %v1177, %v1178
    %v1180 = vrot.slane %v1179, 1
    %v1181 = vadd.f32 %v1179, %v1180
    %v1182 = vsel %vm838, %v823, 0.0
    %v1183 = vrot.slane %v1182, 4
    %v1184 = vadd.f32 %v1182, %v1183
    %v1185 = vrot.slane %v1184, 2
    %v1186 = vadd.f32 %v1184, %v1185
    %v1187 = vrot.slane %v1186, 1
    %v1188 = vadd.f32 %v1186, %v1187
    %v1189 = vsel %vm838, %v824, 0.0
    %v1190 = vrot.slane %v1189, 4
    %v1191 = vadd.f32 %v1189, %v1190
    %v1192 = vrot.slane %v1191, 2
    %v1193 = vadd.f32 %v1191, %v1192
    %v1194 = vrot.slane %v1193, 1
    %v1195 = vadd.f32 %v1193, %v1194
    %v1196 = vsel %vm838, %v825, 0.0
    %v1197 = vrot.slane %v1196, 4
    %v1198 = vadd.f32 %v1196, %v1197
    %v1199 = vrot.slane %v1198, 2
    %v1200 = vadd.f32 %v1198, %v1199
    %v1201 = vrot.slane %v1200, 1
    %v1202 = vadd.f32 %v1200, %v1201
    %v1203 = vsel %vm838, %v826, 0.0
    %v1204 = vrot.slane %v1203, 4
    %v1205 = vadd.f32 %v1203, %v1204
    %v1206 = vrot.slane %v1205, 2
    %v1207 = vadd.f32 %v1205, %v1206
    %v1208 = vrot.slane %v1207, 1
    %v1209 = vadd.f32 %v1207, %v1208
    %v1210 = vsel %vm838, %v827, 0.0
    %v1211 = vrot.slane %v1210, 4
    %v1212 = vadd.f32 %v1210, %v1211
    %v1213 = vrot.slane %v1212, 2
    %v1214 = vadd.f32 %v1212, %v1213
    %v1215 = vrot.slane %v1214, 1
    %v1216 = vadd.f32 %v1214, %v1215
    %v1217 = vsel %vm838, %v828, 0.0
    %v1218 = vrot.slane %v1217, 4
    %v1219 = vadd.f32 %v1217, %v1218
    %v1220 = vrot.slane %v1219, 2
    %v1221 = vadd.f32 %v1219, %v1220
    %v1222 = vrot.slane %v1221, 1
    %v1223 = vadd.f32 %v1221, %v1222
    %v1224 = vsel %vm838, %v829, 0.0
    %v1225 = vrot.slane %v1224, 4
    %v1226 = vadd.f32 %v1224, %v1225
    %v1227 = vrot.slane %v1226, 2
    %v1228 = vadd.f32 %v1226, %v1227
    %v1229 = vrot.slane %v1228, 1
    %v1230 = vadd.f32 %v1228, %v1229
    %v1231 = vsel %vm838, %v830, 0.0
    %v1232 = vrot.slane %v1231, 4
    %v1233 = vadd.f32 %v1231, %v1232
    %v1234 = vrot.slane %v1233, 2
    %v1235 = vadd.f32 %v1233, %v1234
    %v1236 = vrot.slane %v1235, 1
    %v1237 = vadd.f32 %v1235, %v1236
    %v1238 = vsel %vm838, %v831, 0.0
    %v1239 = vrot.slane %v1238, 4
    %v1240 = vadd.f32 %v1238, %v1239
    %v1241 = vrot.slane %v1240, 2
    %v1242 = vadd.f32 %v1240, %v1241
    %v1243 = vrot.slane %v1242, 1
    %v1244 = vadd.f32 %v1242, %v1243
    %v1245 = vsel %vm838, %v832, 0.0
    %v1246 = vrot.slane %v1245, 4
    %v1247 = vadd.f32 %v1245, %v1246
    %v1248 = vrot.slane %v1247, 2
    %v1249 = vadd.f32 %v1247, %v1248
    %v1250 = vrot.slane %v1249, 1
    %v1251 = vadd.f32 %v1249, %v1250
    %v1252 = vsel %vm838, %v833, 0.0
    %v1253 = vrot.slane %v1252, 4
    %v1254 = vadd.f32 %v1252, %v1253
    %v1255 = vrot.slane %v1254, 2
    %v1256 = vadd.f32 %v1254, %v1255
    %v1257 = vrot.slane %v1256, 1
    %v1258 = vadd.f32 %v1256, %v1257
    %v1259 = vsel %vm838, %v834, 0.0
    %v1260 = vrot.slane %v1259, 4
    %v1261 = vadd.f32 %v1259, %v1260
    %v1262 = vrot.slane %v1261, 2
    %v1263 = vadd.f32 %v1261, %v1262
    %v1264 = vrot.slane %v1263, 1
    %v1265 = vadd.f32 %v1263, %v1264
    %v1266 = vsel %vm838, %v835, 0.0
    %v1267 = vrot.slane %v1266, 4
    %v1268 = vadd.f32 %v1266, %v1267
    %v1269 = vrot.slane %v1268, 2
    %v1270 = vadd.f32 %v1268, %v1269
    %v1271 = vrot.slane %v1270, 1
    %v1272 = vadd.f32 %v1270, %v1271
    %v1273 = vsel %vm838, %v836, 0.0
    %v1274 = vrot.slane %v1273, 4
    %v1275 = vadd.f32 %v1273, %v1274
    %v1276 = vrot.slane %v1275, 2
    %v1277 = vadd.f32 %v1275, %v1276
    %v1278 = vrot.slane %v1277, 1
    %v1279 = vadd.f32 %v1277, %v1278
    %v1280 = vsel %vm838, %v837, 0.0
    %v1281 = vrot.slane %v1280, 4
    %v1282 = vadd.f32 %v1280, %v1281
    %v1283 = vrot.slane %v1282, 2
    %v1284 = vadd.f32 %v1282, %v1283
    %v1285 = vrot.slane %v1284, 1
    %v1286 = vadd.f32 %v1284, %v1285
    %v1287 = vrcp.pop 4.0
    %v1288 = vmul.f32 4.0, %v1287
    %v1289 = vsub.f32 1.0, %v1288
    %v1290 = vmul.f32 %v1287, %v1289
    %v1291 = vadd.f32 %v1287, %v1290
    %vm1292 = vweird.f32 %v1287
    %v1293 = vsel %vm1292, %v1287, %v1291
    %v1294 = vmul.f32 %v845, %v1293
    %v1295 = vmul.f32 %v852, %v1293
    %v1296 = vmul.f32 %v859, %v1293
    %v1297 = vmul.f32 %v866, %v1293
    %v1298 = vmul.f32 %v873, %v1293
    %v1299 = vmul.f32 %v880, %v1293
    %v1300 = vmul.f32 %v887, %v1293
    %v1301 = vmul.f32 %v894, %v1293
    %v1302 = vmul.f32 %v901, %v1293
    %v1303 = vmul.f32 %v908, %v1293
    %v1304 = vmul.f32 %v915, %v1293
    %v1305 = vmul.f32 %v922, %v1293
    %v1306 = vmul.f32 %v929, %v1293
    %v1307 = vmul.f32 %v936, %v1293
    %v1308 = vmul.f32 %v943, %v1293
    %v1309 = vmul.f32 %v950, %v1293
    %v1310 = vmul.f32 %v957, %v1293
    %v1311 = vmul.f32 %v964, %v1293
    %v1312 = vmul.f32 %v971, %v1293
    %v1313 = vmul.f32 %v978, %v1293
    %v1314 = vmul.f32 %v985, %v1293
    %v1315 = vmul.f32 %v992, %v1293
    %v1316 = vmul.f32 %v999, %v1293
    %v1317 = vmul.f32 %v1006, %v1293
    %v1318 = vmul.f32 %v1013, %v1293
    %v1319 = vmul.f32 %v1020, %v1293
    %v1320 = vmul.f32 %v1027, %v1293
    %v1321 = vmul.f32 %v1034, %v1293
    %v1322 = vmul.f32 %v1041, %v1293
    %v1323 = vmul.f32 %v1048, %v1293
    %v1324 = vmul.f32 %v1055, %v1293
    %v1325 = vmul.f32 %v1062, %v1293
    %v1326 = vmul.f32 %v1069, %v1293
    %v1327 = vmul.f32 %v1076, %v1293
    %v1328 = vmul.f32 %v1083, %v1293
    %v1329 = vmul.f32 %v1090, %v1293
    %v1330 = vmul.f32 %v1097, %v1293
    %v1331 = vmul.f32 %v1104, %v1293
    %v1332 = vmul.f32 %v1111, %v1293
    %v1333 = vmul.f32 %v1118, %v1293
    %v1334 = vmul.f32 %v1125, %v1293
    %v1335 = vmul.f32 %v1132, %v1293
    %v1336 = vmul.f32 %v1139, %v1293
    %v1337 = vmul.f32 %v1146, %v1293
    %v1338 = vmul.f32 %v1153, %v1293
    %v1339 = vmul.f32 %v1160, %v1293
    %v1340 = vmul.f32 %v1167, %v1293
    %v1341 = vmul.f32 %v1174, %v1293
    %v1342 = vmul.f32 %v1181, %v1293
    %v1343 = vmul.f32 %v1188, %v1293
    %v1344 = vmul.f32 %v1195, %v1293
    %v1345 = vmul.f32 %v1202, %v1293
    %v1346 = vmul.f32 %v1209, %v1293
    %v1347 = vmul.f32 %v1216, %v1293
    %v1348 = vmul.f32 %v1223, %v1293
    %v1349 = vmul.f32 %v1230, %v1293
    %v1350 = vmul.f32 %v1237, %v1293
    %v1351 = vmul.f32 %v1244, %v1293
    %v1352 = vmul.f32 %v1251, %v1293
    %v1353 = vmul.f32 %v1258, %v1293
    %v1354 = vmul.f32 %v1265, %v1293
    %v1355 = vmul.f32 %v1272, %v1293
    %v1356 = vmul.f32 %v1279, %v1293
    %v1357 = vmul.f32 %v1286, %v1293
    %v1358 = vld [vmem:[%s11] sm:$0xf]
    %v1359 = vld [vmem:[%s11 + $0x4] sm:$0x1]
    %v1360 = vpack.c.bf16 %v1294, %v1294
    %v1361 = vpack.c.bf16 %v1295, %v1295
    %v1362 = vpack.c.bf16 %v1296, %v1296
    %v1363 = vpack.c.bf16 %v1297, %v1297
    %v1364 = vpack.c.bf16 %v1298, %v1298
    %v1365 = vpack.c.bf16 %v1299, %v1299
    %v1366 = vpack.c.bf16 %v1300, %v1300
    %v1367 = vpack.c.bf16 %v1301, %v1301
    %v1368 = vpack.c.bf16 %v1302, %v1302
    %v1369 = vpack.c.bf16 %v1303, %v1303
    %v1370 = vpack.c.bf16 %v1304, %v1304
    %v1371 = vpack.c.bf16 %v1305, %v1305
    %v1372 = vpack.c.bf16 %v1306, %v1306
    %v1373 = vpack.c.bf16 %v1307, %v1307
    %v1374 = vpack.c.bf16 %v1308, %v1308
    %v1375 = vpack.c.bf16 %v1309, %v1309
    %v1376 = vpack.c.bf16 %v1310, %v1310
    %v1377 = vpack.c.bf16 %v1311, %v1311
    %v1378 = vpack.c.bf16 %v1312, %v1312
    %v1379 = vpack.c.bf16 %v1313, %v1313
    %v1380 = vpack.c.bf16 %v1314, %v1314
    %v1381 = vpack.c.bf16 %v1315, %v1315
    %v1382 = vpack.c.bf16 %v1316, %v1316
    %v1383 = vpack.c.bf16 %v1317, %v1317
    %v1384 = vpack.c.bf16 %v1318, %v1318
    %v1385 = vpack.c.bf16 %v1319, %v1319
    %v1386 = vpack.c.bf16 %v1320, %v1320
    %v1387 = vpack.c.bf16 %v1321, %v1321
    %v1388 = vpack.c.bf16 %v1322, %v1322
    %v1389 = vpack.c.bf16 %v1323, %v1323
    %v1390 = vpack.c.bf16 %v1324, %v1324
    %v1391 = vpack.c.bf16 %v1325, %v1325
    %v1392 = vpack.c.bf16 %v1326, %v1326
    %v1393 = vpack.c.bf16 %v1327, %v1327
    %v1394 = vpack.c.bf16 %v1328, %v1328
    %v1395 = vpack.c.bf16 %v1329, %v1329
    %v1396 = vpack.c.bf16 %v1330, %v1330
    %v1397 = vpack.c.bf16 %v1331, %v1331
    %v1398 = vpack.c.bf16 %v1332, %v1332
    %v1399 = vpack.c.bf16 %v1333, %v1333
    %v1400 = vpack.c.bf16 %v1334, %v1334
    %v1401 = vpack.c.bf16 %v1335, %v1335
    %v1402 = vpack.c.bf16 %v1336, %v1336
    %v1403 = vpack.c.bf16 %v1337, %v1337
    %v1404 = vpack.c.bf16 %v1338, %v1338
    %v1405 = vpack.c.bf16 %v1339, %v1339
    %v1406 = vpack.c.bf16 %v1340, %v1340
    %v1407 = vpack.c.bf16 %v1341, %v1341
    %v1408 = vpack.c.bf16 %v1342, %v1342
    %v1409 = vpack.c.bf16 %v1343, %v1343
    %v1410 = vpack.c.bf16 %v1344, %v1344
    %v1411 = vpack.c.bf16 %v1345, %v1345
    %v1412 = vpack.c.bf16 %v1346, %v1346
    %v1413 = vpack.c.bf16 %v1347, %v1347
    %v1414 = vpack.c.bf16 %v1348, %v1348
    %v1415 = vpack.c.bf16 %v1349, %v1349
    %v1416 = vpack.c.bf16 %v1350, %v1350
    %v1417 = vpack.c.bf16 %v1351, %v1351
    %v1418 = vpack.c.bf16 %v1352, %v1352
    %v1419 = vpack.c.bf16 %v1353, %v1353
    %v1420 = vpack.c.bf16 %v1354, %v1354
    %v1421 = vpack.c.bf16 %v1355, %v1355
    %v1422 = vpack.c.bf16 %v1356, %v1356
    %v1423 = vpack.c.bf16 %v1357, %v1357
    %v1424 = vld [vmem:[%s13] sm:$0x1]
    %v1426 = vperm.slane %v1424, 0
    %v1492 = vunpack.c.l.b16 %v1360
    %v1493 = vunpack.c.l.b16 %v1361
    %v1494 = vunpack.c.l.b16 %v1362
    %v1495 = vunpack.c.l.b16 %v1363
    %v1496 = vunpack.c.l.b16 %v1364
    %v1497 = vunpack.c.l.b16 %v1365
    %v1498 = vunpack.c.l.b16 %v1366
    %v1499 = vunpack.c.l.b16 %v1367
    %v1500 = vunpack.c.l.b16 %v1368
    %v1501 = vunpack.c.l.b16 %v1369
    %v1502 = vunpack.c.l.b16 %v1370
    %v1503 = vunpack.c.l.b16 %v1371
    %v1504 = vunpack.c.l.b16 %v1372
    %v1505 = vunpack.c.l.b16 %v1373
    %v1506 = vunpack.c.l.b16 %v1374
    %v1507 = vunpack.c.l.b16 %v1375
    %v1508 = vunpack.c.l.b16 %v1376
    %v1509 = vunpack.c.l.b16 %v1377
    %v1510 = vunpack.c.l.b16 %v1378
    %v1511 = vunpack.c.l.b16 %v1379
    %v1512 = vunpack.c.l.b16 %v1380
    %v1513 = vunpack.c.l.b16 %v1381
    %v1514 = vunpack.c.l.b16 %v1382
    %v1515 = vunpack.c.l.b16 %v1383
    %v1516 = vunpack.c.l.b16 %v1384
    %v1517 = vunpack.c.l.b16 %v1385
    %v1518 = vunpack.c.l.b16 %v1386
    %v1519 = vunpack.c.l.b16 %v1387
    %v1520 = vunpack.c.l.b16 %v1388
    %v1521 = vunpack.c.l.b16 %v1389
    %v1522 = vunpack.c.l.b16 %v1390
    %v1523 = vunpack.c.l.b16 %v1391
    %v1524 = vunpack.c.l.b16 %v1392
    %v1525 = vunpack.c.l.b16 %v1393
    %v1526 = vunpack.c.l.b16 %v1394
    %v1527 = vunpack.c.l.b16 %v1395
    %v1528 = vunpack.c.l.b16 %v1396
    %v1529 = vunpack.c.l.b16 %v1397
    %v1530 = vunpack.c.l.b16 %v1398
    %v1531 = vunpack.c.l.b16 %v1399
    %v1532 = vunpack.c.l.b16 %v1400
    %v1533 = vunpack.c.l.b16 %v1401
    %v1534 = vunpack.c.l.b16 %v1402
    %v1535 = vunpack.c.l.b16 %v1403
    %v1536 = vunpack.c.l.b16 %v1404
    %v1537 = vunpack.c.l.b16 %v1405
    %v1538 = vunpack.c.l.b16 %v1406
    %v1539 = vunpack.c.l.b16 %v1407
    %v1540 = vunpack.c.l.b16 %v1408
    %v1541 = vunpack.c.l.b16 %v1409
    %v1542 = vunpack.c.l.b16 %v1410
    %v1543 = vunpack.c.l.b16 %v1411
    %v1544 = vunpack.c.l.b16 %v1412
    %v1545 = vunpack.c.l.b16 %v1413
    %v1546 = vunpack.c.l.b16 %v1414
    %v1547 = vunpack.c.l.b16 %v1415
    %v1548 = vunpack.c.l.b16 %v1416
    %v1549 = vunpack.c.l.b16 %v1417
    %v1550 = vunpack.c.l.b16 %v1418
    %v1551 = vunpack.c.l.b16 %v1419
    %v1552 = vunpack.c.l.b16 %v1420
    %v1553 = vunpack.c.l.b16 %v1421
    %v1554 = vunpack.c.l.b16 %v1422
    %v1555 = vunpack.c.l.b16 %v1423
    %vm1556 = vcmask 1041409
    %v1557 = vsel %vm1556, %v1493, %v1492
    %vm1558 = vcmask 1042434
    %v1559 = vsel %vm1558, %v1494, %v1557
    %vm1560 = vcmask 1043459
    %v1561 = vsel %vm1560, %v1495, %v1559
    %vm1562 = vcmask 1044484
    %v1563 = vsel %vm1562, %v1496, %v1561
    %vm1564 = vcmask 1045509
    %v1565 = vsel %vm1564, %v1497, %v1563
    %vm1566 = vcmask 1046534
    %v1567 = vsel %vm1566, %v1498, %v1565
    %vm1568 = vcmask 1047559
    %v1569 = vsel %vm1568, %v1499, %v1567
    %v1570 = vsel %vm1556, %v1501, %v1500
    %v1571 = vsel %vm1558, %v1502, %v1570
    %v1572 = vsel %vm1560, %v1503, %v1571
    %v1573 = vsel %vm1562, %v1504, %v1572
    %v1574 = vsel %vm1564, %v1505, %v1573
    %v1575 = vsel %vm1566, %v1506, %v1574
    %v1576 = vsel %vm1568, %v1507, %v1575
    %v1577 = vsel %vm1556, %v1509, %v1508
    %v1578 = vsel %vm1558, %v1510, %v1577
    %v1579 = vsel %vm1560, %v1511, %v1578
    %v1580 = vsel %vm1562, %v1512, %v1579
    %v1581 = vsel %vm1564, %v1513, %v1580
    %v1582 = vsel %vm1566, %v1514, %v1581
    %v1583 = vsel %vm1568, %v1515, %v1582
    %v1584 = vsel %vm1556, %v1517, %v1516
    %v1585 = vsel %vm1558, %v1518, %v1584
    %v1586 = vsel %vm1560, %v1519, %v1585
    %v1587 = vsel %vm1562, %v1520, %v1586
    %v1588 = vsel %vm1564, %v1521, %v1587
    %v1589 = vsel %vm1566, %v1522, %v1588
    %v1590 = vsel %vm1568, %v1523, %v1589
    %v1591 = vsel %vm1556, %v1525, %v1524
    %v1592 = vsel %vm1558, %v1526, %v1591
    %v1593 = vsel %vm1560, %v1527, %v1592
    %v1594 = vsel %vm1562, %v1528, %v1593
    %v1595 = vsel %vm1564, %v1529, %v1594
    %v1596 = vsel %vm1566, %v1530, %v1595
    %v1597 = vsel %vm1568, %v1531, %v1596
    %v1598 = vsel %vm1556, %v1533, %v1532
    %v1599 = vsel %vm1558, %v1534, %v1598
    %v1600 = vsel %vm1560, %v1535, %v1599
    %v1601 = vsel %vm1562, %v1536, %v1600
    %v1602 = vsel %vm1564, %v1537, %v1601
    %v1603 = vsel %vm1566, %v1538, %v1602
    %v1604 = vsel %vm1568, %v1539, %v1603
    %v1605 = vsel %vm1556, %v1541, %v1540
    %v1606 = vsel %vm1558, %v1542, %v1605
    %v1607 = vsel %vm1560, %v1543, %v1606
    %v1608 = vsel %vm1562, %v1544, %v1607
    %v1609 = vsel %vm1564, %v1545, %v1608
    %v1610 = vsel %vm1566, %v1546, %v1609
    %v1611 = vsel %vm1568, %v1547, %v1610
    %v1612 = vsel %vm1556, %v1549, %v1548
    %v1613 = vsel %vm1558, %v1550, %v1612
    %v1614 = vsel %vm1560, %v1551, %v1613
    %v1615 = vsel %vm1562, %v1552, %v1614
    %v1616 = vsel %vm1564, %v1553, %v1615
    %v1617 = vsel %vm1566, %v1554, %v1616
    %v1618 = vsel %vm1568, %v1555, %v1617
    %v1619 = vpack.c.b16 %v1576, %v1569
    %v1620 = vpack.c.b16 %v1590, %v1583
    %v1621 = vpack.c.b16 %v1604, %v1597
    %v1622 = vpack.c.b16 %v1618, %v1611
    %v1625 = vunpack.c.l.b16 %v1358
    %v1626 = vunpack.c.l.b16 %v1359
    %v1627 = vpack.c.b16 %v1626, %v1625
    %vm1628 = vcmask 72704
    %v1630 = vsel %vm1628, %v1619, 0
    %v1633 = vsel %vm1628, %v1620, 0
    %v1636 = vsel %vm1628, %v1621, 0
    %v1639 = vsel %vm1628, %v1622, 0
    %vm1641 = vcmask 1043456
    %vm1642 = vcmask 1044480
    %v1643 = vsel %vm1641, 4294967295, 65535
    %v1644 = vsel %vm1642, %v1643, 0
    %v1646 = vand.u32 %v1627, %v1644
    %1648 = vmatpush.bf16.msra.mxu0 0
    %1649 = vmatpush.bf16.msra.mxu0 0
    %1650 = vmatpush.bf16.msra.mxu0 0
    %1651 = vmatpush.bf16.msra.mxu0 0
    %1652 = vmatpush.bf16.msra.mxu0 0
    %1653 = vmatpush.bf16.msra.mxu0 0
    %1654 = vmatpush.bf16.msra.mxu0 0
    %1655 = vmatpush.bf16.msra.mxu0 %v1646
    %1656 = vmatmul.bf16.gmra.mxu0 %v1630
    %v1657 = vpop.f32.mrf.mxu0
    %v1658 = vadd.f32 %v1426, %v1657
    %v1659 = vpop.f32.mrf.mxu0
    %v1660 = vadd.f32 %v1426, %v1659
    %1661 = vmatmul.bf16.gmra.mxu0 %v1633
    %v1662 = vpop.f32.mrf.mxu0
    %v1663 = vadd.f32 %v1426, %v1662
    %v1664 = vpop.f32.mrf.mxu0
    %v1665 = vadd.f32 %v1426, %v1664
    %1666 = vmatmul.bf16.gmra.mxu0 %v1636
    %v1667 = vpop.f32.mrf.mxu0
    %v1668 = vadd.f32 %v1426, %v1667
    %v1669 = vpop.f32.mrf.mxu0
    %v1670 = vadd.f32 %v1426, %v1669
    %1671 = vmatmul.bf16.gmra.mxu0 %v1639
    %v1672 = vpop.f32.mrf.mxu0
    %v1673 = vadd.f32 %v1426, %v1672
    %v1674 = vpop.f32.mrf.mxu0
    %v1675 = vadd.f32 %v1426, %v1674
    %1676 = vdwg.mxu0
    %v1677 = vadd.f32 %v755, %v1658
    %v1678 = vadd.f32 %v757, %v1660
    %v1679 = vadd.f32 %v760, %v1663
    %v1680 = vadd.f32 %v762, %v1665
    %v1681 = vadd.f32 %v765, %v1668
    %v1682 = vadd.f32 %v767, %v1670
    %v1683 = vadd.f32 %v770, %v1673
    %v1684 = vadd.f32 %v772, %v1675
    %v1685 = vlaneseq
    %v1686 = vshrl.u32 %v1685, 7
    %v1687 = vld [vmem:[%s15] sm:$0x1]
    %v1689 = vperm.slane %v1687, 0
    %v1691 = vld [vmem:[%s17] sm:$0xff]
    %v1692 = vld [vmem:[%s17 + $0x8] sm:$0xff]
    %v1693 = vld [vmem:[%s17 + $0x10] sm:$0xff]
    %v1694 = vld [vmem:[%s17 + $0x18] sm:$0xff]
    %vm1695 = vcmp.eq.s32.totalorder %v1686, 0
    %v1696 = vsel %vm1695, %v1689, %v1677
    %v1697 = vsel %vm1695, %v1689, %v1678
    %v1698 = vsel %vm1695, %v1689, %v1679
    %v1699 = vsel %vm1695, %v1689, %v1680
    %v1700 = vsel %vm1695, %v1689, %v1681
    %v1701 = vsel %vm1695, %v1689, %v1682
    %v1702 = vsel %vm1695, %v1689, %v1683
    %v1703 = vsel %vm1695, %v1689, %v1684
    %v1704 = vadd.f32 %v1696, %v1691
    %v1705 = vadd.f32 %v1697, %v1692
    %v1706 = vadd.f32 %v1698, %v1693
    %v1707 = vadd.f32 %v1699, %v1694
    %v1708 = vadd.f32 %v1700, %v1691
    %v1709 = vadd.f32 %v1701, %v1692
    %v1710 = vadd.f32 %v1702, %v1693
    %v1711 = vadd.f32 %v1703, %v1694
    %v1712 = vld [vmem:[%s19] sm:$0xf]
    %vm1713 = vcmask 523264
    %v1714 = vsel %vm1713, %v1704, 0.0
    %1715 = vadd.xlane.f32.xlu0 %v1714
    %v1716 = vpop.xlane.xlu0 %1715
    %v1717 = vsel %vm1713, %v1705, 0.0
    %1718 = vadd.xlane.f32.xlu0 %v1717
    %v1719 = vpop.xlane.xlu0 %1718
    %v1720 = vsel %vm1713, %v1706, 0.0
    %1721 = vadd.xlane.f32.xlu0 %v1720
    %v1722 = vpop.xlane.xlu0 %1721
    %v1723 = vsel %vm1713, %v1707, 0.0
    %1724 = vadd.xlane.f32.xlu0 %v1723
    %v1725 = vpop.xlane.xlu0 %1724
    %v1726 = vsel %vm1713, %v1708, 0.0
    %1727 = vadd.xlane.f32.xlu0 %v1726
    %v1728 = vpop.xlane.xlu0 %1727
    %v1729 = vsel %vm1713, %v1709, 0.0
    %1730 = vadd.xlane.f32.xlu0 %v1729
    %v1731 = vpop.xlane.xlu0 %1730
    %v1732 = vsel %vm1713, %v1710, 0.0
    %1733 = vadd.xlane.f32.xlu0 %v1732
    %v1734 = vpop.xlane.xlu0 %1733
    %v1735 = vsel %vm1713, %v1711, 0.0
    %1736 = vadd.xlane.f32.xlu0 %v1735
    %v1737 = vpop.xlane.xlu0 %1736
    %v1738 = vrcp.pop 64.0
    %v1739 = vmul.f32 64.0, %v1738
    %v1740 = vsub.f32 1.0, %v1739
    %v1741 = vmul.f32 %v1738, %v1740
    %v1742 = vadd.f32 %v1738, %v1741
    %vm1743 = vweird.f32 %v1738
    %v1744 = vsel %vm1743, %v1738, %v1742
    %v1745 = vmul.f32 %v1716, %v1744
    %v1746 = vmul.f32 %v1719, %v1744
    %v1747 = vmul.f32 %v1722, %v1744
    %v1748 = vmul.f32 %v1725, %v1744
    %v1749 = vmul.f32 %v1728, %v1744
    %v1750 = vmul.f32 %v1731, %v1744
    %v1751 = vmul.f32 %v1734, %v1744
    %v1752 = vmul.f32 %v1737, %v1744
    %v1753 = vsub.f32 %v1704, %v1745
    %v1754 = vsub.f32 %v1705, %v1746
    %v1755 = vsub.f32 %v1706, %v1747
    %v1756 = vsub.f32 %v1707, %v1748
    %v1757 = vsub.f32 %v1708, %v1749
    %v1758 = vsub.f32 %v1709, %v1750
    %v1759 = vsub.f32 %v1710, %v1751
    %v1760 = vsub.f32 %v1711, %v1752
    %v1761 = vmul.f32 %v1753, %v1753
    %v1762 = vmul.f32 %v1754, %v1754
    %v1763 = vmul.f32 %v1755, %v1755
    %v1764 = vmul.f32 %v1756, %v1756
    %v1765 = vmul.f32 %v1757, %v1757
    %v1766 = vmul.f32 %v1758, %v1758
    %v1767 = vmul.f32 %v1759, %v1759
    %v1768 = vmul.f32 %v1760, %v1760
    %v1769 = vsel %vm1713, %v1761, 0.0
    %1770 = vadd.xlane.f32.xlu0 %v1769
    %v1771 = vpop.xlane.xlu0 %1770
    %v1772 = vsel %vm1713, %v1762, 0.0
    %1773 = vadd.xlane.f32.xlu0 %v1772
    %v1774 = vpop.xlane.xlu0 %1773
    %v1775 = vsel %vm1713, %v1763, 0.0
    %1776 = vadd.xlane.f32.xlu0 %v1775
    %v1777 = vpop.xlane.xlu0 %1776
    %v1778 = vsel %vm1713, %v1764, 0.0
    %1779 = vadd.xlane.f32.xlu0 %v1778
    %v1780 = vpop.xlane.xlu0 %1779
    %v1781 = vsel %vm1713, %v1765, 0.0
    %1782 = vadd.xlane.f32.xlu0 %v1781
    %v1783 = vpop.xlane.xlu0 %1782
    %v1784 = vsel %vm1713, %v1766, 0.0
    %1785 = vadd.xlane.f32.xlu0 %v1784
    %v1786 = vpop.xlane.xlu0 %1785
    %v1787 = vsel %vm1713, %v1767, 0.0
    %1788 = vadd.xlane.f32.xlu0 %v1787
    %v1789 = vpop.xlane.xlu0 %1788
    %v1790 = vsel %vm1713, %v1768, 0.0
    %1791 = vadd.xlane.f32.xlu0 %v1790
    %v1792 = vpop.xlane.xlu0 %1791
    %v1793 = vmul.f32 %v1771, %v1744
    %v1794 = vmul.f32 %v1774, %v1744
    %v1795 = vmul.f32 %v1777, %v1744
    %v1796 = vmul.f32 %v1780, %v1744
    %v1797 = vmul.f32 %v1783, %v1744
    %v1798 = vmul.f32 %v1786, %v1744
    %v1799 = vmul.f32 %v1789, %v1744
    %v1800 = vmul.f32 %v1792, %v1744
    %v1801 = vadd.f32 %v1793, 1e-05
    %v1802 = vadd.f32 %v1794, 1e-05
    %v1803 = vadd.f32 %v1795, 1e-05
    %v1804 = vadd.f32 %v1796, 1e-05
    %v1805 = vadd.f32 %v1797, 1e-05
    %v1806 = vadd.f32 %v1798, 1e-05
    %v1807 = vadd.f32 %v1799, 1e-05
    %v1808 = vadd.f32 %v1800, 1e-05
    %v1809 = vrsqrt.pop %v1801
    %v1810 = vmul.f32 %v1809, %v1801
    %v1811 = vmul.f32 %v1810, %v1809
    %v1812 = vmul.f32 0.5, %v1811
    %v1813 = vsub.f32 1.5, %v1812
    %v1814 = vmul.f32 %v1809, %v1813
    %vm1815 = vweird.f32 %v1801
    %vm1816 = vweird.f32 %v1809
    %vm1817 = vmor %vm1815, %vm1816
    %v1818 = vsel %vm1817, %v1809, %v1814
    %v1819 = vrsqrt.pop %v1802
    %v1820 = vmul.f32 %v1819, %v1802
    %v1821 = vmul.f32 %v1820, %v1819
    %v1822 = vmul.f32 0.5, %v1821
    %v1823 = vsub.f32 1.5, %v1822
    %v1824 = vmul.f32 %v1819, %v1823
    %vm1825 = vweird.f32 %v1802
    %vm1826 = vweird.f32 %v1819
    %vm1827 = vmor %vm1825, %vm1826
    %v1828 = vsel %vm1827, %v1819, %v1824
    %v1829 = vrsqrt.pop %v1803
    %v1830 = vmul.f32 %v1829, %v1803
    %v1831 = vmul.f32 %v1830, %v1829
    %v1832 = vmul.f32 0.5, %v1831
    %v1833 = vsub.f32 1.5, %v1832
    %v1834 = vmul.f32 %v1829, %v1833
    %vm1835 = vweird.f32 %v1803
    %vm1836 = vweird.f32 %v1829
    %vm1837 = vmor %vm1835, %vm1836
    %v1838 = vsel %vm1837, %v1829, %v1834
    %v1839 = vrsqrt.pop %v1804
    %v1840 = vmul.f32 %v1839, %v1804
    %v1841 = vmul.f32 %v1840, %v1839
    %v1842 = vmul.f32 0.5, %v1841
    %v1843 = vsub.f32 1.5, %v1842
    %v1844 = vmul.f32 %v1839, %v1843
    %vm1845 = vweird.f32 %v1804
    %vm1846 = vweird.f32 %v1839
    %vm1847 = vmor %vm1845, %vm1846
    %v1848 = vsel %vm1847, %v1839, %v1844
    %v1849 = vrsqrt.pop %v1805
    %v1850 = vmul.f32 %v1849, %v1805
    %v1851 = vmul.f32 %v1850, %v1849
    %v1852 = vmul.f32 0.5, %v1851
    %v1853 = vsub.f32 1.5, %v1852
    %v1854 = vmul.f32 %v1849, %v1853
    %vm1855 = vweird.f32 %v1805
    %vm1856 = vweird.f32 %v1849
    %vm1857 = vmor %vm1855, %vm1856
    %v1858 = vsel %vm1857, %v1849, %v1854
    %v1859 = vrsqrt.pop %v1806
    %v1860 = vmul.f32 %v1859, %v1806
    %v1861 = vmul.f32 %v1860, %v1859
    %v1862 = vmul.f32 0.5, %v1861
    %v1863 = vsub.f32 1.5, %v1862
    %v1864 = vmul.f32 %v1859, %v1863
    %vm1865 = vweird.f32 %v1806
    %vm1866 = vweird.f32 %v1859
    %vm1867 = vmor %vm1865, %vm1866
    %v1868 = vsel %vm1867, %v1859, %v1864
    %v1869 = vrsqrt.pop %v1807
    %v1870 = vmul.f32 %v1869, %v1807
    %v1871 = vmul.f32 %v1870, %v1869
    %v1872 = vmul.f32 0.5, %v1871
    %v1873 = vsub.f32 1.5, %v1872
    %v1874 = vmul.f32 %v1869, %v1873
    %vm1875 = vweird.f32 %v1807
    %vm1876 = vweird.f32 %v1869
    %vm1877 = vmor %vm1875, %vm1876
    %v1878 = vsel %vm1877, %v1869, %v1874
    %v1879 = vrsqrt.pop %v1808
    %v1880 = vmul.f32 %v1879, %v1808
    %v1881 = vmul.f32 %v1880, %v1879
    %v1882 = vmul.f32 0.5, %v1881
    %v1883 = vsub.f32 1.5, %v1882
    %v1884 = vmul.f32 %v1879, %v1883
    %vm1885 = vweird.f32 %v1808
    %vm1886 = vweird.f32 %v1879
    %vm1887 = vmor %vm1885, %vm1886
    %v1888 = vsel %vm1887, %v1879, %v1884
    %v1889 = vmul.f32 %v1753, %v1818
    %v1890 = vmul.f32 %v1754, %v1828
    %v1891 = vmul.f32 %v1755, %v1838
    %v1892 = vmul.f32 %v1756, %v1848
    %v1893 = vmul.f32 %v1757, %v1858
    %v1894 = vmul.f32 %v1758, %v1868
    %v1895 = vmul.f32 %v1759, %v1878
    %v1896 = vmul.f32 %v1760, %v1888
    %v1897 = vperm.slane %v1712, 0
    %v1898 = vmul.f32 %v1889, %v1897
    %v1899 = vmul.f32 %v1890, %v1897
    %v1900 = vmul.f32 %v1891, %v1897
    %v1901 = vmul.f32 %v1892, %v1897
    %v1902 = vmul.f32 %v1893, %v1897
    %v1903 = vmul.f32 %v1894, %v1897
    %v1904 = vmul.f32 %v1895, %v1897
    %v1905 = vmul.f32 %v1896, %v1897
    %v1906 = vperm.slane %v1712, 1
    %v1907 = vadd.f32 %v1898, %v1906
    %v1908 = vadd.f32 %v1899, %v1906
    %v1909 = vadd.f32 %v1900, %v1906
    %v1910 = vadd.f32 %v1901, %v1906
    %v1911 = vadd.f32 %v1902, %v1906
    %v1912 = vadd.f32 %v1903, %v1906
    %v1913 = vadd.f32 %v1904, %v1906
    %v1914 = vadd.f32 %v1905, %v1906
    %v1915 = vld [vmem:[%s21] sm:$0xff]
    %v1916 = vld [vmem:[%s21 + $0x8] sm:$0xff]
    %v1917 = vld [vmem:[%s21 + $0x10] sm:$0xff]
    %v1918 = vld [vmem:[%s21 + $0x18] sm:$0xff]
    %v1919 = vld [vmem:[%s21 + $0x20] sm:$0xff]
    %v1920 = vld [vmem:[%s21 + $0x28] sm:$0xff]
    %v1921 = vld [vmem:[%s21 + $0x30] sm:$0xff]
    %v1922 = vld [vmem:[%s21 + $0x38] sm:$0xff]
    %v1923 = vpack.c.bf16 %v1908, %v1907
    %v1924 = vpack.c.bf16 %v1910, %v1909
    %v1925 = vpack.c.bf16 %v1912, %v1911
    %v1926 = vpack.c.bf16 %v1914, %v1913
    %v1935 = vunpack.c.l.b16 %v1915
    %v1936 = vunpack.c.h.b16 %v1915
    %v1937 = vunpack.c.l.b16 %v1916
    %v1938 = vunpack.c.h.b16 %v1916
    %v1939 = vunpack.c.l.b16 %v1917
    %v1940 = vunpack.c.h.b16 %v1917
    %v1941 = vunpack.c.l.b16 %v1918
    %v1942 = vunpack.c.h.b16 %v1918
    %v1943 = vunpack.c.l.b16 %v1919
    %v1944 = vunpack.c.h.b16 %v1919
    %v1945 = vunpack.c.l.b16 %v1920
    %v1946 = vunpack.c.h.b16 %v1920
    %v1947 = vunpack.c.l.b16 %v1921
    %v1948 = vunpack.c.h.b16 %v1921
    %v1949 = vunpack.c.l.b16 %v1922
    %v1950 = vunpack.c.h.b16 %v1922
    %v1951 = vpack.c.b16 %v1937, %v1935
    %v1952 = vpack.c.b16 %v1938, %v1936
    %v1953 = vpack.c.b16 %v1941, %v1939
    %v1954 = vpack.c.b16 %v1942, %v1940
    %v1955 = vpack.c.b16 %v1945, %v1943
    %v1956 = vpack.c.b16 %v1946, %v1944
    %v1957 = vpack.c.b16 %v1949, %v1947
    %v1958 = vpack.c.b16 %v1950, %v1948
    %v1968 = vsel %vm1713, %v1923, 0
    %v1971 = vsel %vm1713, %v1924, 0
    %v1974 = vsel %vm1713, %v1925, 0
    %v1977 = vsel %vm1713, %v1926, 0
    %1979 = vmatpush.bf16.msra.mxu0 0
    %1980 = vmatpush.bf16.msra.mxu0 0
    %1981 = vmatpush.bf16.msra.mxu0 0
    %1982 = vmatpush.bf16.msra.mxu0 0
    %1983 = vmatpush.bf16.msra.mxu0 %v1957
    %1984 = vmatpush.bf16.msra.mxu0 %v1955
    %1985 = vmatpush.bf16.msra.mxu0 %v1953
    %1986 = vmatpush.bf16.msra.mxu0 %v1951
    %1987 = vmatmul.bf16.gmra.mxu0 %v1968
    %v1988 = vpop.f32.mrf.mxu0
    %v1989 = vadd.f32 0.0, %v1988
    %v1990 = vpop.f32.mrf.mxu0
    %v1991 = vadd.f32 0.0, %v1990
    %1992 = vmatmul.bf16.gmra.mxu0 %v1971
    %v1993 = vpop.f32.mrf.mxu0
    %v1994 = vadd.f32 0.0, %v1993
    %v1995 = vpop.f32.mrf.mxu0
    %v1996 = vadd.f32 0.0, %v1995
    %1997 = vmatmul.bf16.gmra.mxu0 %v1974
    %v1998 = vpop.f32.mrf.mxu0
    %v1999 = vadd.f32 0.0, %v1998
    %v2000 = vpop.f32.mrf.mxu0
    %v2001 = vadd.f32 0.0, %v2000
    %2002 = vmatmul.bf16.gmra.mxu0 %v1977
    %v2003 = vpop.f32.mrf.mxu0
    %v2004 = vadd.f32 0.0, %v2003
    %v2005 = vpop.f32.mrf.mxu0
    %v2006 = vadd.f32 0.0, %v2005
    %2007 = vdwg.mxu0
    %2008 = vmatpush.bf16.msra.mxu0 0
    %2009 = vmatpush.bf16.msra.mxu0 0
    %2010 = vmatpush.bf16.msra.mxu0 0
    %2011 = vmatpush.bf16.msra.mxu0 0
    %2012 = vmatpush.bf16.msra.mxu0 %v1958
    %2013 = vmatpush.bf16.msra.mxu0 %v1956
    %2014 = vmatpush.bf16.msra.mxu0 %v1954
    %2015 = vmatpush.bf16.msra.mxu0 %v1952
    %2016 = vmatmul.bf16.gmra.mxu0 %v1968
    %v2017 = vpop.f32.mrf.mxu0
    %v2018 = vadd.f32 0.0, %v2017
    %v2019 = vpop.f32.mrf.mxu0
    %v2020 = vadd.f32 0.0, %v2019
    %2021 = vmatmul.bf16.gmra.mxu0 %v1971
    %v2022 = vpop.f32.mrf.mxu0
    %v2023 = vadd.f32 0.0, %v2022
    %v2024 = vpop.f32.mrf.mxu0
    %v2025 = vadd.f32 0.0, %v2024
    %2026 = vmatmul.bf16.gmra.mxu0 %v1974
    %v2027 = vpop.f32.mrf.mxu0
    %v2028 = vadd.f32 0.0, %v2027
    %v2029 = vpop.f32.mrf.mxu0
    %v2030 = vadd.f32 0.0, %v2029
    %2031 = vmatmul.bf16.gmra.mxu0 %v1977
    %v2032 = vpop.f32.mrf.mxu0
    %v2033 = vadd.f32 0.0, %v2032
    %v2034 = vpop.f32.mrf.mxu0
    %v2035 = vadd.f32 0.0, %v2034
    %2036 = vdwg.mxu0
    %v2037 = vld [vmem:[%s23] sm:$0xf]
    %v2038 = vld [vmem:[%s23 + $0x4] sm:$0xf]
    %v2039 = vld [vmem:[%s23 + $0x8] sm:$0xf]
    %v2040 = vld [vmem:[%s23 + $0xc] sm:$0xf]
    %v2041 = vld [vmem:[%s23 + $0x10] sm:$0xf]
    %v2042 = vld [vmem:[%s23 + $0x14] sm:$0xf]
    %v2043 = vld [vmem:[%s23 + $0x18] sm:$0xf]
    %v2044 = vld [vmem:[%s23 + $0x1c] sm:$0xf]
    %v2045 = vld [vmem:[%s25] sm:$0x1]
    %2047 = vrot.lane.b32.xlu0 %v1989, 64
    %v2048 = vpop.permute.xlu0 %2047
    %vm2049 = vcmask 261120
    %v2050 = vsel %vm2049, %v1989, 0
    %v2052 = vsel %vm2049, %v2048, 0
    %2054 = vmatpush.xpose.msra.mxu0 0.0
    %2055 = vmatpush.xpose.msra.mxu0 0.0
    %2056 = vmatpush.xpose.msra.mxu0 0.0
    %2057 = vmatpush.xpose.msra.mxu0 0.0
    %2058 = vmatpush.xpose.msra.mxu0 0.0
    %2059 = vmatpush.xpose.msra.mxu0 0.0
    %2060 = vmatpush.xpose.msra.mxu0 0.0
    %2061 = vmatpush.xpose.msra.mxu0 0.0
    %2062 = vmatpush.xpose.msra.mxu0 0.0
    %2063 = vmatpush.xpose.msra.mxu0 0.0
    %2064 = vmatpush.xpose.msra.mxu0 0.0
    %2065 = vmatpush.xpose.msra.mxu0 0.0
    %2066 = vmatpush.xpose.msra.mxu0 0.0
    %2067 = vmatpush.xpose.msra.mxu0 0.0
    %2068 = vmatpush.xpose.msra.mxu0 0.0
    %2069 = vmatpush.xpose.msra.mxu0 %v2052
    %2070 = vmatmul.f32.gmra.mxu0 %v2050
    %v2071 = vpop.f32.mrf.mxu0
    %v2072 = vadd.f32 0.0, %v2071
    %2073 = vdwg.mxu0
    %2075 = vrot.lane.b32.xlu0 %v1991, 64
    %v2076 = vpop.permute.xlu0 %2075
    %v2077 = vsel %vm2049, %v1991, 0
    %v2079 = vsel %vm2049, %v2076, 0
    %2081 = vmatpush.xpose.msra.mxu0 0.0
    %2082 = vmatpush.xpose.msra.mxu0 0.0
    %2083 = vmatpush.xpose.msra.mxu0 0.0
    %2084 = vmatpush.xpose.msra.mxu0 0.0
    %2085 = vmatpush.xpose.msra.mxu0 0.0
    %2086 = vmatpush.xpose.msra.mxu0 0.0
    %2087 = vmatpush.xpose.msra.mxu0 0.0
    %2088 = vmatpush.xpose.msra.mxu0 0.0
    %2089 = vmatpush.xpose.msra.mxu0 0.0
    %2090 = vmatpush.xpose.msra.mxu0 0.0
    %2091 = vmatpush.xpose.msra.mxu0 0.0
    %2092 = vmatpush.xpose.msra.mxu0 0.0
    %2093 = vmatpush.xpose.msra.mxu0 0.0
    %2094 = vmatpush.xpose.msra.mxu0 0.0
    %2095 = vmatpush.xpose.msra.mxu0 0.0
    %2096 = vmatpush.xpose.msra.mxu0 %v2079
    %2097 = vmatmul.f32.gmra.mxu0 %v2077
    %v2098 = vpop.f32.mrf.mxu0
    %v2099 = vadd.f32 0.0, %v2098
    %2100 = vdwg.mxu0
    %2102 = vrot.lane.b32.xlu0 %v1994, 64
    %v2103 = vpop.permute.xlu0 %2102
    %v2104 = vsel %vm2049, %v1994, 0
    %v2106 = vsel %vm2049, %v2103, 0
    %2108 = vmatpush.xpose.msra.mxu0 0.0
    %2109 = vmatpush.xpose.msra.mxu0 0.0
    %2110 = vmatpush.xpose.msra.mxu0 0.0
    %2111 = vmatpush.xpose.msra.mxu0 0.0
    %2112 = vmatpush.xpose.msra.mxu0 0.0
    %2113 = vmatpush.xpose.msra.mxu0 0.0
    %2114 = vmatpush.xpose.msra.mxu0 0.0
    %2115 = vmatpush.xpose.msra.mxu0 0.0
    %2116 = vmatpush.xpose.msra.mxu0 0.0
    %2117 = vmatpush.xpose.msra.mxu0 0.0
    %2118 = vmatpush.xpose.msra.mxu0 0.0
    %2119 = vmatpush.xpose.msra.mxu0 0.0
    %2120 = vmatpush.xpose.msra.mxu0 0.0
    %2121 = vmatpush.xpose.msra.mxu0 0.0
    %2122 = vmatpush.xpose.msra.mxu0 0.0
    %2123 = vmatpush.xpose.msra.mxu0 %v2106
    %2124 = vmatmul.f32.gmra.mxu0 %v2104
    %v2125 = vpop.f32.mrf.mxu0
    %v2126 = vadd.f32 0.0, %v2125
    %2127 = vdwg.mxu0
    %2129 = vrot.lane.b32.xlu0 %v1996, 64
    %v2130 = vpop.permute.xlu0 %2129
    %v2131 = vsel %vm2049, %v1996, 0
    %v2133 = vsel %vm2049, %v2130, 0
    %2135 = vmatpush.xpose.msra.mxu0 0.0
    %2136 = vmatpush.xpose.msra.mxu0 0.0
    %2137 = vmatpush.xpose.msra.mxu0 0.0
    %2138 = vmatpush.xpose.msra.mxu0 0.0
    %2139 = vmatpush.xpose.msra.mxu0 0.0
    %2140 = vmatpush.xpose.msra.mxu0 0.0
    %2141 = vmatpush.xpose.msra.mxu0 0.0
    %2142 = vmatpush.xpose.msra.mxu0 0.0
    %2143 = vmatpush.xpose.msra.mxu0 0.0
    %2144 = vmatpush.xpose.msra.mxu0 0.0
    %2145 = vmatpush.xpose.msra.mxu0 0.0
    %2146 = vmatpush.xpose.msra.mxu0 0.0
    %2147 = vmatpush.xpose.msra.mxu0 0.0
    %2148 = vmatpush.xpose.msra.mxu0 0.0
    %2149 = vmatpush.xpose.msra.mxu0 0.0
    %2150 = vmatpush.xpose.msra.mxu0 %v2133
    %2151 = vmatmul.f32.gmra.mxu0 %v2131
    %v2152 = vpop.f32.mrf.mxu0
    %v2153 = vadd.f32 0.0, %v2152
    %2154 = vdwg.mxu0
    %2156 = vrot.lane.b32.xlu0 %v1999, 64
    %v2157 = vpop.permute.xlu0 %2156
    %v2158 = vsel %vm2049, %v1999, 0
    %v2160 = vsel %vm2049, %v2157, 0
    %2162 = vmatpush.xpose.msra.mxu0 0.0
    %2163 = vmatpush.xpose.msra.mxu0 0.0
    %2164 = vmatpush.xpose.msra.mxu0 0.0
    %2165 = vmatpush.xpose.msra.mxu0 0.0
    %2166 = vmatpush.xpose.msra.mxu0 0.0
    %2167 = vmatpush.xpose.msra.mxu0 0.0
    %2168 = vmatpush.xpose.msra.mxu0 0.0
    %2169 = vmatpush.xpose.msra.mxu0 0.0
    %2170 = vmatpush.xpose.msra.mxu0 0.0
    %2171 = vmatpush.xpose.msra.mxu0 0.0
    %2172 = vmatpush.xpose.msra.mxu0 0.0
    %2173 = vmatpush.xpose.msra.mxu0 0.0
    %2174 = vmatpush.xpose.msra.mxu0 0.0
    %2175 = vmatpush.xpose.msra.mxu0 0.0
    %2176 = vmatpush.xpose.msra.mxu0 0.0
    %2177 = vmatpush.xpose.msra.mxu0 %v2160
    %2178 = vmatmul.f32.gmra.mxu0 %v2158
    %v2179 = vpop.f32.mrf.mxu0
    %v2180 = vadd.f32 0.0, %v2179
    %2181 = vdwg.mxu0
    %2183 = vrot.lane.b32.xlu0 %v2001, 64
    %v2184 = vpop.permute.xlu0 %2183
    %v2185 = vsel %vm2049, %v2001, 0
    %v2187 = vsel %vm2049, %v2184, 0
    %2189 = vmatpush.xpose.msra.mxu0 0.0
    %2190 = vmatpush.xpose.msra.mxu0 0.0
    %2191 = vmatpush.xpose.msra.mxu0 0.0
    %2192 = vmatpush.xpose.msra.mxu0 0.0
    %2193 = vmatpush.xpose.msra.mxu0 0.0
    %2194 = vmatpush.xpose.msra.mxu0 0.0
    %2195 = vmatpush.xpose.msra.mxu0 0.0
    %2196 = vmatpush.xpose.msra.mxu0 0.0
    %2197 = vmatpush.xpose.msra.mxu0 0.0
    %2198 = vmatpush.xpose.msra.mxu0 0.0
    %2199 = vmatpush.xpose.msra.mxu0 0.0
    %2200 = vmatpush.xpose.msra.mxu0 0.0
    %2201 = vmatpush.xpose.msra.mxu0 0.0
    %2202 = vmatpush.xpose.msra.mxu0 0.0
    %2203 = vmatpush.xpose.msra.mxu0 0.0
    %2204 = vmatpush.xpose.msra.mxu0 %v2187
    %2205 = vmatmul.f32.gmra.mxu0 %v2185
    %v2206 = vpop.f32.mrf.mxu0
    %v2207 = vadd.f32 0.0, %v2206
    %2208 = vdwg.mxu0
    %2210 = vrot.lane.b32.xlu0 %v2004, 64
    %v2211 = vpop.permute.xlu0 %2210
    %v2212 = vsel %vm2049, %v2004, 0
    %v2214 = vsel %vm2049, %v2211, 0
    %2216 = vmatpush.xpose.msra.mxu0 0.0
    %2217 = vmatpush.xpose.msra.mxu0 0.0
    %2218 = vmatpush.xpose.msra.mxu0 0.0
    %2219 = vmatpush.xpose.msra.mxu0 0.0
    %2220 = vmatpush.xpose.msra.mxu0 0.0
    %2221 = vmatpush.xpose.msra.mxu0 0.0
    %2222 = vmatpush.xpose.msra.mxu0 0.0
    %2223 = vmatpush.xpose.msra.mxu0 0.0
    %2224 = vmatpush.xpose.msra.mxu0 0.0
    %2225 = vmatpush.xpose.msra.mxu0 0.0
    %2226 = vmatpush.xpose.msra.mxu0 0.0
    %2227 = vmatpush.xpose.msra.mxu0 0.0
    %2228 = vmatpush.xpose.msra.mxu0 0.0
    %2229 = vmatpush.xpose.msra.mxu0 0.0
    %2230 = vmatpush.xpose.msra.mxu0 0.0
    %2231 = vmatpush.xpose.msra.mxu0 %v2214
    %2232 = vmatmul.f32.gmra.mxu0 %v2212
    %v2233 = vpop.f32.mrf.mxu0
    %v2234 = vadd.f32 0.0, %v2233
    %2235 = vdwg.mxu0
    %2237 = vrot.lane.b32.xlu0 %v2006, 64
    %v2238 = vpop.permute.xlu0 %2237
    %v2239 = vsel %vm2049, %v2006, 0
    %v2241 = vsel %vm2049, %v2238, 0
    %2243 = vmatpush.xpose.msra.mxu0 0.0
    %2244 = vmatpush.xpose.msra.mxu0 0.0
    %2245 = vmatpush.xpose.msra.mxu0 0.0
    %2246 = vmatpush.xpose.msra.mxu0 0.0
    %2247 = vmatpush.xpose.msra.mxu0 0.0
    %2248 = vmatpush.xpose.msra.mxu0 0.0
    %2249 = vmatpush.xpose.msra.mxu0 0.0
    %2250 = vmatpush.xpose.msra.mxu0 0.0
    %2251 = vmatpush.xpose.msra.mxu0 0.0
    %2252 = vmatpush.xpose.msra.mxu0 0.0
    %2253 = vmatpush.xpose.msra.mxu0 0.0
    %2254 = vmatpush.xpose.msra.mxu0 0.0
    %2255 = vmatpush.xpose.msra.mxu0 0.0
    %2256 = vmatpush.xpose.msra.mxu0 0.0
    %2257 = vmatpush.xpose.msra.mxu0 0.0
    %2258 = vmatpush.xpose.msra.mxu0 %v2241
    %2259 = vmatmul.f32.gmra.mxu0 %v2239
    %v2260 = vpop.f32.mrf.mxu0
    %v2261 = vadd.f32 0.0, %v2260
    %2262 = vdwg.mxu0
    %v2263 = vmul.f32 %v2072, 0.17677669
    %v2264 = vmul.f32 %v2099, 0.17677669
    %v2265 = vmul.f32 %v2126, 0.17677669
    %v2266 = vmul.f32 %v2153, 0.17677669
    %v2267 = vmul.f32 %v2180, 0.17677669
    %v2268 = vmul.f32 %v2207, 0.17677669
    %v2269 = vmul.f32 %v2234, 0.17677669
    %v2270 = vmul.f32 %v2261, 0.17677669
    %vm2271 = vcmask 64512
    %v2272 = vsel %vm2271, %v2263, -inf
    %2273 = vmax.xlane.f32.xlu0 %v2272
    %v2274 = vpop.xlane.xlu0 %2273
    %v2275 = vsel %vm2271, %v2264, -inf
    %2276 = vmax.xlane.f32.xlu0 %v2275
    %v2277 = vpop.xlane.xlu0 %2276
    %v2278 = vsel %vm2271, %v2265, -inf
    %2279 = vmax.xlane.f32.xlu0 %v2278
    %v2280 = vpop.xlane.xlu0 %2279
    %v2281 = vsel %vm2271, %v2266, -inf
    %2282 = vmax.xlane.f32.xlu0 %v2281
    %v2283 = vpop.xlane.xlu0 %2282
    %v2284 = vsel %vm2271, %v2267, -inf
    %2285 = vmax.xlane.f32.xlu0 %v2284
    %v2286 = vpop.xlane.xlu0 %2285
    %v2287 = vsel %vm2271, %v2268, -inf
    %2288 = vmax.xlane.f32.xlu0 %v2287
    %v2289 = vpop.xlane.xlu0 %2288
    %v2290 = vsel %vm2271, %v2269, -inf
    %2291 = vmax.xlane.f32.xlu0 %v2290
    %v2292 = vpop.xlane.xlu0 %2291
    %v2293 = vsel %vm2271, %v2270, -inf
    %2294 = vmax.xlane.f32.xlu0 %v2293
    %v2295 = vpop.xlane.xlu0 %2294
    %v2296 = vsub.f32 %v2263, %v2274
    %v2297 = vsub.f32 %v2264, %v2277
    %v2298 = vsub.f32 %v2265, %v2280
    %v2299 = vsub.f32 %v2266, %v2283
    %v2300 = vsub.f32 %v2267, %v2286
    %v2301 = vsub.f32 %v2268, %v2289
    %v2302 = vsub.f32 %v2269, %v2292
    %v2303 = vsub.f32 %v2270, %v2295
    %v2304 = vmul.f32 %v2296, 1.442695
    %v2305 = vpow.pop %v2304
    %v2306 = vmul.f32 %v2297, 1.442695
    %v2307 = vpow.pop %v2306
    %v2308 = vmul.f32 %v2298, 1.442695
    %v2309 = vpow.pop %v2308
    %v2310 = vmul.f32 %v2299, 1.442695
    %v2311 = vpow.pop %v2310
    %v2312 = vmul.f32 %v2300, 1.442695
    %v2313 = vpow.pop %v2312
    %v2314 = vmul.f32 %v2301, 1.442695
    %v2315 = vpow.pop %v2314
    %v2316 = vmul.f32 %v2302, 1.442695
    %v2317 = vpow.pop %v2316
    %v2318 = vmul.f32 %v2303, 1.442695
    %v2319 = vpow.pop %v2318
    %v2320 = vsel %vm2271, %v2305, 0.0
    %2321 = vadd.xlane.f32.xlu0 %v2320
    %v2322 = vpop.xlane.xlu0 %2321
    %v2323 = vsel %vm2271, %v2307, 0.0
    %2324 = vadd.xlane.f32.xlu0 %v2323
    %v2325 = vpop.xlane.xlu0 %2324
    %v2326 = vsel %vm2271, %v2309, 0.0
    %2327 = vadd.xlane.f32.xlu0 %v2326
    %v2328 = vpop.xlane.xlu0 %2327
    %v2329 = vsel %vm2271, %v2311, 0.0
    %2330 = vadd.xlane.f32.xlu0 %v2329
    %v2331 = vpop.xlane.xlu0 %2330
    %v2332 = vsel %vm2271, %v2313, 0.0
    %2333 = vadd.xlane.f32.xlu0 %v2332
    %v2334 = vpop.xlane.xlu0 %2333
    %v2335 = vsel %vm2271, %v2315, 0.0
    %2336 = vadd.xlane.f32.xlu0 %v2335
    %v2337 = vpop.xlane.xlu0 %2336
    %v2338 = vsel %vm2271, %v2317, 0.0
    %2339 = vadd.xlane.f32.xlu0 %v2338
    %v2340 = vpop.xlane.xlu0 %2339
    %v2341 = vsel %vm2271, %v2319, 0.0
    %2342 = vadd.xlane.f32.xlu0 %v2341
    %v2343 = vpop.xlane.xlu0 %2342
    %v2344 = vrcp.pop %v2322
    %v2345 = vrcp.pop %v2325
    %v2346 = vrcp.pop %v2328
    %v2347 = vrcp.pop %v2331
    %v2348 = vrcp.pop %v2334
    %v2349 = vrcp.pop %v2337
    %v2350 = vrcp.pop %v2340
    %v2351 = vrcp.pop %v2343
    %v2352 = vmul.f32 %v2305, %v2344
    %v2353 = vmul.f32 %v2307, %v2345
    %v2354 = vmul.f32 %v2309, %v2346
    %v2355 = vmul.f32 %v2311, %v2347
    %v2356 = vmul.f32 %v2313, %v2348
    %v2357 = vmul.f32 %v2315, %v2349
    %v2358 = vmul.f32 %v2317, %v2350
    %v2359 = vmul.f32 %v2319, %v2351
    %v2361 = vsel %vm2271, %v2352, 0
    %2363 = vmatpush.msra.mxu0 0.0
    %2364 = vmatpush.msra.mxu0 0.0
    %2365 = vmatpush.msra.mxu0 0.0
    %2366 = vmatpush.msra.mxu0 0.0
    %2367 = vmatpush.msra.mxu0 0.0
    %2368 = vmatpush.msra.mxu0 0.0
    %2369 = vmatpush.msra.mxu0 0.0
    %2370 = vmatpush.msra.mxu0 0.0
    %2371 = vmatpush.msra.mxu0 0.0
    %2372 = vmatpush.msra.mxu0 0.0
    %2373 = vmatpush.msra.mxu0 0.0
    %2374 = vmatpush.msra.mxu0 0.0
    %2375 = vmatpush.msra.mxu0 0.0
    %2376 = vmatpush.msra.mxu0 0.0
    %2377 = vmatpush.msra.mxu0 0.0
    %2378 = vmatpush.msra.mxu0 %v2018
    %2379 = vmatmul.f32.gmra.mxu0 %v2361
    %v2380 = vpop.f32.mrf.mxu0
    %v2381 = vadd.f32 0.0, %v2380
    %2382 = vdwg.mxu0
    %v2384 = vsel %vm2271, %v2353, 0
    %2386 = vmatpush.msra.mxu0 0.0
    %2387 = vmatpush.msra.mxu0 0.0
    %2388 = vmatpush.msra.mxu0 0.0
    %2389 = vmatpush.msra.mxu0 0.0
    %2390 = vmatpush.msra.mxu0 0.0
    %2391 = vmatpush.msra.mxu0 0.0
    %2392 = vmatpush.msra.mxu0 0.0
    %2393 = vmatpush.msra.mxu0 0.0
    %2394 = vmatpush.msra.mxu0 0.0
    %2395 = vmatpush.msra.mxu0 0.0
    %2396 = vmatpush.msra.mxu0 0.0
    %2397 = vmatpush.msra.mxu0 0.0
    %2398 = vmatpush.msra.mxu0 0.0
    %2399 = vmatpush.msra.mxu0 0.0
    %2400 = vmatpush.msra.mxu0 0.0
    %2401 = vmatpush.msra.mxu0 %v2020
    %2402 = vmatmul.f32.gmra.mxu0 %v2384
    %v2403 = vpop.f32.mrf.mxu0
    %v2404 = vadd.f32 0.0, %v2403
    %2405 = vdwg.mxu0
    %v2407 = vsel %vm2271, %v2354, 0
    %2409 = vmatpush.msra.mxu0 0.0
    %2410 = vmatpush.msra.mxu0 0.0
    %2411 = vmatpush.msra.mxu0 0.0
    %2412 = vmatpush.msra.mxu0 0.0
    %2413 = vmatpush.msra.mxu0 0.0
    %2414 = vmatpush.msra.mxu0 0.0
    %2415 = vmatpush.msra.mxu0 0.0
    %2416 = vmatpush.msra.mxu0 0.0
    %2417 = vmatpush.msra.mxu0 0.0
    %2418 = vmatpush.msra.mxu0 0.0
    %2419 = vmatpush.msra.mxu0 0.0
    %2420 = vmatpush.msra.mxu0 0.0
    %2421 = vmatpush.msra.mxu0 0.0
    %2422 = vmatpush.msra.mxu0 0.0
    %2423 = vmatpush.msra.mxu0 0.0
    %2424 = vmatpush.msra.mxu0 %v2023
    %2425 = vmatmul.f32.gmra.mxu0 %v2407
    %v2426 = vpop.f32.mrf.mxu0
    %v2427 = vadd.f32 0.0, %v2426
    %2428 = vdwg.mxu0
    %v2430 = vsel %vm2271, %v2355, 0
    %2432 = vmatpush.msra.mxu0 0.0
    %2433 = vmatpush.msra.mxu0 0.0
    %2434 = vmatpush.msra.mxu0 0.0
    %2435 = vmatpush.msra.mxu0 0.0
    %2436 = vmatpush.msra.mxu0 0.0
    %2437 = vmatpush.msra.mxu0 0.0
    %2438 = vmatpush.msra.mxu0 0.0
    %2439 = vmatpush.msra.mxu0 0.0
    %2440 = vmatpush.msra.mxu0 0.0
    %2441 = vmatpush.msra.mxu0 0.0
    %2442 = vmatpush.msra.mxu0 0.0
    %2443 = vmatpush.msra.mxu0 0.0
    %2444 = vmatpush.msra.mxu0 0.0
    %2445 = vmatpush.msra.mxu0 0.0
    %2446 = vmatpush.msra.mxu0 0.0
    %2447 = vmatpush.msra.mxu0 %v2025
    %2448 = vmatmul.f32.gmra.mxu0 %v2430
    %v2449 = vpop.f32.mrf.mxu0
    %v2450 = vadd.f32 0.0, %v2449
    %2451 = vdwg.mxu0
    %v2453 = vsel %vm2271, %v2356, 0
    %2455 = vmatpush.msra.mxu0 0.0
    %2456 = vmatpush.msra.mxu0 0.0
    %2457 = vmatpush.msra.mxu0 0.0
    %2458 = vmatpush.msra.mxu0 0.0
    %2459 = vmatpush.msra.mxu0 0.0
    %2460 = vmatpush.msra.mxu0 0.0
    %2461 = vmatpush.msra.mxu0 0.0
    %2462 = vmatpush.msra.mxu0 0.0
    %2463 = vmatpush.msra.mxu0 0.0
    %2464 = vmatpush.msra.mxu0 0.0
    %2465 = vmatpush.msra.mxu0 0.0
    %2466 = vmatpush.msra.mxu0 0.0
    %2467 = vmatpush.msra.mxu0 0.0
    %2468 = vmatpush.msra.mxu0 0.0
    %2469 = vmatpush.msra.mxu0 0.0
    %2470 = vmatpush.msra.mxu0 %v2028
    %2471 = vmatmul.f32.gmra.mxu0 %v2453
    %v2472 = vpop.f32.mrf.mxu0
    %v2473 = vadd.f32 0.0, %v2472
    %2474 = vdwg.mxu0
    %v2476 = vsel %vm2271, %v2357, 0
    %2478 = vmatpush.msra.mxu0 0.0
    %2479 = vmatpush.msra.mxu0 0.0
    %2480 = vmatpush.msra.mxu0 0.0
    %2481 = vmatpush.msra.mxu0 0.0
    %2482 = vmatpush.msra.mxu0 0.0
    %2483 = vmatpush.msra.mxu0 0.0
    %2484 = vmatpush.msra.mxu0 0.0
    %2485 = vmatpush.msra.mxu0 0.0
    %2486 = vmatpush.msra.mxu0 0.0
    %2487 = vmatpush.msra.mxu0 0.0
    %2488 = vmatpush.msra.mxu0 0.0
    %2489 = vmatpush.msra.mxu0 0.0
    %2490 = vmatpush.msra.mxu0 0.0
    %2491 = vmatpush.msra.mxu0 0.0
    %2492 = vmatpush.msra.mxu0 0.0
    %2493 = vmatpush.msra.mxu0 %v2030
    %2494 = vmatmul.f32.gmra.mxu0 %v2476
    %v2495 = vpop.f32.mrf.mxu0
    %v2496 = vadd.f32 0.0, %v2495
    %2497 = vdwg.mxu0
    %v2499 = vsel %vm2271, %v2358, 0
    %2501 = vmatpush.msra.mxu0 0.0
    %2502 = vmatpush.msra.mxu0 0.0
    %2503 = vmatpush.msra.mxu0 0.0
    %2504 = vmatpush.msra.mxu0 0.0
    %2505 = vmatpush.msra.mxu0 0.0
    %2506 = vmatpush.msra.mxu0 0.0
    %2507 = vmatpush.msra.mxu0 0.0
    %2508 = vmatpush.msra.mxu0 0.0
    %2509 = vmatpush.msra.mxu0 0.0
    %2510 = vmatpush.msra.mxu0 0.0
    %2511 = vmatpush.msra.mxu0 0.0
    %2512 = vmatpush.msra.mxu0 0.0
    %2513 = vmatpush.msra.mxu0 0.0
    %2514 = vmatpush.msra.mxu0 0.0
    %2515 = vmatpush.msra.mxu0 0.0
    %2516 = vmatpush.msra.mxu0 %v2033
    %2517 = vmatmul.f32.gmra.mxu0 %v2499
    %v2518 = vpop.f32.mrf.mxu0
    %v2519 = vadd.f32 0.0, %v2518
    %2520 = vdwg.mxu0
    %v2522 = vsel %vm2271, %v2359, 0
    %2524 = vmatpush.msra.mxu0 0.0
    %2525 = vmatpush.msra.mxu0 0.0
    %2526 = vmatpush.msra.mxu0 0.0
    %2527 = vmatpush.msra.mxu0 0.0
    %2528 = vmatpush.msra.mxu0 0.0
    %2529 = vmatpush.msra.mxu0 0.0
    %2530 = vmatpush.msra.mxu0 0.0
    %2531 = vmatpush.msra.mxu0 0.0
    %2532 = vmatpush.msra.mxu0 0.0
    %2533 = vmatpush.msra.mxu0 0.0
    %2534 = vmatpush.msra.mxu0 0.0
    %2535 = vmatpush.msra.mxu0 0.0
    %2536 = vmatpush.msra.mxu0 0.0
    %2537 = vmatpush.msra.mxu0 0.0
    %2538 = vmatpush.msra.mxu0 0.0
    %2539 = vmatpush.msra.mxu0 %v2035
    %2540 = vmatmul.f32.gmra.mxu0 %v2522
    %v2541 = vpop.f32.mrf.mxu0
    %v2542 = vadd.f32 0.0, %v2541
    %2543 = vdwg.mxu0
    %v2544 = vpack.c.bf16 %v2404, %v2381
    %v2545 = vpack.c.bf16 %v2450, %v2427
    %v2546 = vpack.c.bf16 %v2496, %v2473
    %v2547 = vpack.c.bf16 %v2542, %v2519
    %v2552 = vunpack.c.l.b16 %v2037
    %v2553 = vunpack.c.l.b16 %v2038
    %v2554 = vunpack.c.l.b16 %v2039
    %v2555 = vunpack.c.l.b16 %v2040
    %v2556 = vpack.c.b16 %v2553, %v2552
    %v2557 = vpack.c.b16 %v2555, %v2554
    %v2561 = vsel %vm2049, %v2544, 0
    %v2564 = vsel %vm2049, %v2545, 0
    %v2567 = vsel %vm2049, %v2546, 0
    %v2570 = vsel %vm2049, %v2547, 0
    %2572 = vmatpush.bf16.msra.mxu0 0
    %2573 = vmatpush.bf16.msra.mxu0 0
    %2574 = vmatpush.bf16.msra.mxu0 0
    %2575 = vmatpush.bf16.msra.mxu0 0
    %2576 = vmatpush.bf16.msra.mxu0 0
    %2577 = vmatpush.bf16.msra.mxu0 0
    %2578 = vmatpush.bf16.msra.mxu0 %v2557
    %2579 = vmatpush.bf16.msra.mxu0 %v2556
    %2580 = vmatmul.bf16.gmra.mxu0 %v2561
    %v2581 = vpop.f32.mrf.mxu0
    %v2582 = vadd.f32 0.0, %v2581
    %v2583 = vpop.f32.mrf.mxu0
    %v2584 = vadd.f32 0.0, %v2583
    %2585 = vmatmul.bf16.gmra.mxu0 %v2564
    %v2586 = vpop.f32.mrf.mxu0
    %v2587 = vadd.f32 0.0, %v2586
    %v2588 = vpop.f32.mrf.mxu0
    %v2589 = vadd.f32 0.0, %v2588
    %2590 = vmatmul.bf16.gmra.mxu0 %v2567
    %v2591 = vpop.f32.mrf.mxu0
    %v2592 = vadd.f32 0.0, %v2591
    %v2593 = vpop.f32.mrf.mxu0
    %v2594 = vadd.f32 0.0, %v2593
    %2595 = vmatmul.bf16.gmra.mxu0 %v2570
    %v2596 = vpop.f32.mrf.mxu0
    %v2597 = vadd.f32 0.0, %v2596
    %v2598 = vpop.f32.mrf.mxu0
    %v2599 = vadd.f32 0.0, %v2598
    %2600 = vdwg.mxu0
    %2601 = vrot.lane.b32.xlu0 %v1989, 96
    %v2602 = vpop.permute.xlu0 %2601
    %2603 = vrot.lane.b32.xlu0 %v1989, 32
    %v2604 = vpop.permute.xlu0 %2603
    %v2605 = vsel %vm2049, %v2602, 0
    %v2607 = vsel %vm2049, %v2604, 0
    %2609 = vmatpush.xpose.msra.mxu0 0.0
    %2610 = vmatpush.xpose.msra.mxu0 0.0
    %2611 = vmatpush.xpose.msra.mxu0 0.0
    %2612 = vmatpush.xpose.msra.mxu0 0.0
    %2613 = vmatpush.xpose.msra.mxu0 0.0
    %2614 = vmatpush.xpose.msra.mxu0 0.0
    %2615 = vmatpush.xpose.msra.mxu0 0.0
    %2616 = vmatpush.xpose.msra.mxu0 0.0
    %2617 = vmatpush.xpose.msra.mxu0 0.0
    %2618 = vmatpush.xpose.msra.mxu0 0.0
    %2619 = vmatpush.xpose.msra.mxu0 0.0
    %2620 = vmatpush.xpose.msra.mxu0 0.0
    %2621 = vmatpush.xpose.msra.mxu0 0.0
    %2622 = vmatpush.xpose.msra.mxu0 0.0
    %2623 = vmatpush.xpose.msra.mxu0 0.0
    %2624 = vmatpush.xpose.msra.mxu0 %v2607
    %2625 = vmatmul.f32.gmra.mxu0 %v2605
    %v2626 = vpop.f32.mrf.mxu0
    %v2627 = vadd.f32 0.0, %v2626
    %2628 = vdwg.mxu0
    %2629 = vrot.lane.b32.xlu0 %v1991, 96
    %v2630 = vpop.permute.xlu0 %2629
    %2631 = vrot.lane.b32.xlu0 %v1991, 32
    %v2632 = vpop.permute.xlu0 %2631
    %v2633 = vsel %vm2049, %v2630, 0
    %v2635 = vsel %vm2049, %v2632, 0
    %2637 = vmatpush.xpose.msra.mxu0 0.0
    %2638 = vmatpush.xpose.msra.mxu0 0.0
    %2639 = vmatpush.xpose.msra.mxu0 0.0
    %2640 = vmatpush.xpose.msra.mxu0 0.0
    %2641 = vmatpush.xpose.msra.mxu0 0.0
    %2642 = vmatpush.xpose.msra.mxu0 0.0
    %2643 = vmatpush.xpose.msra.mxu0 0.0
    %2644 = vmatpush.xpose.msra.mxu0 0.0
    %2645 = vmatpush.xpose.msra.mxu0 0.0
    %2646 = vmatpush.xpose.msra.mxu0 0.0
    %2647 = vmatpush.xpose.msra.mxu0 0.0
    %2648 = vmatpush.xpose.msra.mxu0 0.0
    %2649 = vmatpush.xpose.msra.mxu0 0.0
    %2650 = vmatpush.xpose.msra.mxu0 0.0
    %2651 = vmatpush.xpose.msra.mxu0 0.0
    %2652 = vmatpush.xpose.msra.mxu0 %v2635
    %2653 = vmatmul.f32.gmra.mxu0 %v2633
    %v2654 = vpop.f32.mrf.mxu0
    %v2655 = vadd.f32 0.0, %v2654
    %2656 = vdwg.mxu0
    %2657 = vrot.lane.b32.xlu0 %v1994, 96
    %v2658 = vpop.permute.xlu0 %2657
    %2659 = vrot.lane.b32.xlu0 %v1994, 32
    %v2660 = vpop.permute.xlu0 %2659
    %v2661 = vsel %vm2049, %v2658, 0
    %v2663 = vsel %vm2049, %v2660, 0
    %2665 = vmatpush.xpose.msra.mxu0 0.0
    %2666 = vmatpush.xpose.msra.mxu0 0.0
    %2667 = vmatpush.xpose.msra.mxu0 0.0
    %2668 = vmatpush.xpose.msra.mxu0 0.0
    %2669 = vmatpush.xpose.msra.mxu0 0.0
    %2670 = vmatpush.xpose.msra.mxu0 0.0
    %2671 = vmatpush.xpose.msra.mxu0 0.0
    %2672 = vmatpush.xpose.msra.mxu0 0.0
    %2673 = vmatpush.xpose.msra.mxu0 0.0
    %2674 = vmatpush.xpose.msra.mxu0 0.0
    %2675 = vmatpush.xpose.msra.mxu0 0.0
    %2676 = vmatpush.xpose.msra.mxu0 0.0
    %2677 = vmatpush.xpose.msra.mxu0 0.0
    %2678 = vmatpush.xpose.msra.mxu0 0.0
    %2679 = vmatpush.xpose.msra.mxu0 0.0
    %2680 = vmatpush.xpose.msra.mxu0 %v2663
    %2681 = vmatmul.f32.gmra.mxu0 %v2661
    %v2682 = vpop.f32.mrf.mxu0
    %v2683 = vadd.f32 0.0, %v2682
    %2684 = vdwg.mxu0
    %2685 = vrot.lane.b32.xlu0 %v1996, 96
    %v2686 = vpop.permute.xlu0 %2685
    %2687 = vrot.lane.b32.xlu0 %v1996, 32
    %v2688 = vpop.permute.xlu0 %2687
    %v2689 = vsel %vm2049, %v2686, 0
    %v2691 = vsel %vm2049, %v2688, 0
    %2693 = vmatpush.xpose.msra.mxu0 0.0
    %2694 = vmatpush.xpose.msra.mxu0 0.0
    %2695 = vmatpush.xpose.msra.mxu0 0.0
    %2696 = vmatpush.xpose.msra.mxu0 0.0
    %2697 = vmatpush.xpose.msra.mxu0 0.0
    %2698 = vmatpush.xpose.msra.mxu0 0.0
    %2699 = vmatpush.xpose.msra.mxu0 0.0
    %2700 = vmatpush.xpose.msra.mxu0 0.0
    %2701 = vmatpush.xpose.msra.mxu0 0.0
    %2702 = vmatpush.xpose.msra.mxu0 0.0
    %2703 = vmatpush.xpose.msra.mxu0 0.0
    %2704 = vmatpush.xpose.msra.mxu0 0.0
    %2705 = vmatpush.xpose.msra.mxu0 0.0
    %2706 = vmatpush.xpose.msra.mxu0 0.0
    %2707 = vmatpush.xpose.msra.mxu0 0.0
    %2708 = vmatpush.xpose.msra.mxu0 %v2691
    %2709 = vmatmul.f32.gmra.mxu0 %v2689
    %v2710 = vpop.f32.mrf.mxu0
    %v2711 = vadd.f32 0.0, %v2710
    %2712 = vdwg.mxu0
    %2713 = vrot.lane.b32.xlu0 %v1999, 96
    %v2714 = vpop.permute.xlu0 %2713
    %2715 = vrot.lane.b32.xlu0 %v1999, 32
    %v2716 = vpop.permute.xlu0 %2715
    %v2717 = vsel %vm2049, %v2714, 0
    %v2719 = vsel %vm2049, %v2716, 0
    %2721 = vmatpush.xpose.msra.mxu0 0.0
    %2722 = vmatpush.xpose.msra.mxu0 0.0
    %2723 = vmatpush.xpose.msra.mxu0 0.0
    %2724 = vmatpush.xpose.msra.mxu0 0.0
    %2725 = vmatpush.xpose.msra.mxu0 0.0
    %2726 = vmatpush.xpose.msra.mxu0 0.0
    %2727 = vmatpush.xpose.msra.mxu0 0.0
    %2728 = vmatpush.xpose.msra.mxu0 0.0
    %2729 = vmatpush.xpose.msra.mxu0 0.0
    %2730 = vmatpush.xpose.msra.mxu0 0.0
    %2731 = vmatpush.xpose.msra.mxu0 0.0
    %2732 = vmatpush.xpose.msra.mxu0 0.0
    %2733 = vmatpush.xpose.msra.mxu0 0.0
    %2734 = vmatpush.xpose.msra.mxu0 0.0
    %2735 = vmatpush.xpose.msra.mxu0 0.0
    %2736 = vmatpush.xpose.msra.mxu0 %v2719
    %2737 = vmatmul.f32.gmra.mxu0 %v2717
    %v2738 = vpop.f32.mrf.mxu0
    %v2739 = vadd.f32 0.0, %v2738
    %2740 = vdwg.mxu0
    %2741 = vrot.lane.b32.xlu0 %v2001, 96
    %v2742 = vpop.permute.xlu0 %2741
    %2743 = vrot.lane.b32.xlu0 %v2001, 32
    %v2744 = vpop.permute.xlu0 %2743
    %v2745 = vsel %vm2049, %v2742, 0
    %v2747 = vsel %vm2049, %v2744, 0
    %2749 = vmatpush.xpose.msra.mxu0 0.0
    %2750 = vmatpush.xpose.msra.mxu0 0.0
    %2751 = vmatpush.xpose.msra.mxu0 0.0
    %2752 = vmatpush.xpose.msra.mxu0 0.0
    %2753 = vmatpush.xpose.msra.mxu0 0.0
    %2754 = vmatpush.xpose.msra.mxu0 0.0
    %2755 = vmatpush.xpose.msra.mxu0 0.0
    %2756 = vmatpush.xpose.msra.mxu0 0.0
    %2757 = vmatpush.xpose.msra.mxu0 0.0
    %2758 = vmatpush.xpose.msra.mxu0 0.0
    %2759 = vmatpush.xpose.msra.mxu0 0.0
    %2760 = vmatpush.xpose.msra.mxu0 0.0
    %2761 = vmatpush.xpose.msra.mxu0 0.0
    %2762 = vmatpush.xpose.msra.mxu0 0.0
    %2763 = vmatpush.xpose.msra.mxu0 0.0
    %2764 = vmatpush.xpose.msra.mxu0 %v2747
    %2765 = vmatmul.f32.gmra.mxu0 %v2745
    %v2766 = vpop.f32.mrf.mxu0
    %v2767 = vadd.f32 0.0, %v2766
    %2768 = vdwg.mxu0
    %2769 = vrot.lane.b32.xlu0 %v2004, 96
    %v2770 = vpop.permute.xlu0 %2769
    %2771 = vrot.lane.b32.xlu0 %v2004, 32
    %v2772 = vpop.permute.xlu0 %2771
    %v2773 = vsel %vm2049, %v2770, 0
    %v2775 = vsel %vm2049, %v2772, 0
    %2777 = vmatpush.xpose.msra.mxu0 0.0
    %2778 = vmatpush.xpose.msra.mxu0 0.0
    %2779 = vmatpush.xpose.msra.mxu0 0.0
    %2780 = vmatpush.xpose.msra.mxu0 0.0
    %2781 = vmatpush.xpose.msra.mxu0 0.0
    %2782 = vmatpush.xpose.msra.mxu0 0.0
    %2783 = vmatpush.xpose.msra.mxu0 0.0
    %2784 = vmatpush.xpose.msra.mxu0 0.0
    %2785 = vmatpush.xpose.msra.mxu0 0.0
    %2786 = vmatpush.xpose.msra.mxu0 0.0
    %2787 = vmatpush.xpose.msra.mxu0 0.0
    %2788 = vmatpush.xpose.msra.mxu0 0.0
    %2789 = vmatpush.xpose.msra.mxu0 0.0
    %2790 = vmatpush.xpose.msra.mxu0 0.0
    %2791 = vmatpush.xpose.msra.mxu0 0.0
    %2792 = vmatpush.xpose.msra.mxu0 %v2775
    %2793 = vmatmul.f32.gmra.mxu0 %v2773
    %v2794 = vpop.f32.mrf.mxu0
    %v2795 = vadd.f32 0.0, %v2794
    %2796 = vdwg.mxu0
    %2797 = vrot.lane.b32.xlu0 %v2006, 96
    %v2798 = vpop.permute.xlu0 %2797
    %2799 = vrot.lane.b32.xlu0 %v2006, 32
    %v2800 = vpop.permute.xlu0 %2799
    %v2801 = vsel %vm2049, %v2798, 0
    %v2803 = vsel %vm2049, %v2800, 0
    %2805 = vmatpush.xpose.msra.mxu0 0.0
    %2806 = vmatpush.xpose.msra.mxu0 0.0
    %2807 = vmatpush.xpose.msra.mxu0 0.0
    %2808 = vmatpush.xpose.msra.mxu0 0.0
    %2809 = vmatpush.xpose.msra.mxu0 0.0
    %2810 = vmatpush.xpose.msra.mxu0 0.0
    %2811 = vmatpush.xpose.msra.mxu0 0.0
    %2812 = vmatpush.xpose.msra.mxu0 0.0
    %2813 = vmatpush.xpose.msra.mxu0 0.0
    %2814 = vmatpush.xpose.msra.mxu0 0.0
    %2815 = vmatpush.xpose.msra.mxu0 0.0
    %2816 = vmatpush.xpose.msra.mxu0 0.0
    %2817 = vmatpush.xpose.msra.mxu0 0.0
    %2818 = vmatpush.xpose.msra.mxu0 0.0
    %2819 = vmatpush.xpose.msra.mxu0 0.0
    %2820 = vmatpush.xpose.msra.mxu0 %v2803
    %2821 = vmatmul.f32.gmra.mxu0 %v2801
    %v2822 = vpop.f32.mrf.mxu0
    %v2823 = vadd.f32 0.0, %v2822
    %2824 = vdwg.mxu0
    %v2825 = vmul.f32 %v2627, 0.17677669
    %v2826 = vmul.f32 %v2655, 0.17677669
    %v2827 = vmul.f32 %v2683, 0.17677669
    %v2828 = vmul.f32 %v2711, 0.17677669
    %v2829 = vmul.f32 %v2739, 0.17677669
    %v2830 = vmul.f32 %v2767, 0.17677669
    %v2831 = vmul.f32 %v2795, 0.17677669
    %v2832 = vmul.f32 %v2823, 0.17677669
    %v2833 = vsel %vm2271, %v2825, -inf
    %2834 = vmax.xlane.f32.xlu0 %v2833
    %v2835 = vpop.xlane.xlu0 %2834
    %v2836 = vsel %vm2271, %v2826, -inf
    %2837 = vmax.xlane.f32.xlu0 %v2836
    %v2838 = vpop.xlane.xlu0 %2837
    %v2839 = vsel %vm2271, %v2827, -inf
    %2840 = vmax.xlane.f32.xlu0 %v2839
    %v2841 = vpop.xlane.xlu0 %2840
    %v2842 = vsel %vm2271, %v2828, -inf
    %2843 = vmax.xlane.f32.xlu0 %v2842
    %v2844 = vpop.xlane.xlu0 %2843
    %v2845 = vsel %vm2271, %v2829, -inf
    %2846 = vmax.xlane.f32.xlu0 %v2845
    %v2847 = vpop.xlane.xlu0 %2846
    %v2848 = vsel %vm2271, %v2830, -inf
    %2849 = vmax.xlane.f32.xlu0 %v2848
    %v2850 = vpop.xlane.xlu0 %2849
    %v2851 = vsel %vm2271, %v2831, -inf
    %2852 = vmax.xlane.f32.xlu0 %v2851
    %v2853 = vpop.xlane.xlu0 %2852
    %v2854 = vsel %vm2271, %v2832, -inf
    %2855 = vmax.xlane.f32.xlu0 %v2854
    %v2856 = vpop.xlane.xlu0 %2855
    %v2857 = vsub.f32 %v2825, %v2835
    %v2858 = vsub.f32 %v2826, %v2838
    %v2859 = vsub.f32 %v2827, %v2841
    %v2860 = vsub.f32 %v2828, %v2844
    %v2861 = vsub.f32 %v2829, %v2847
    %v2862 = vsub.f32 %v2830, %v2850
    %v2863 = vsub.f32 %v2831, %v2853
    %v2864 = vsub.f32 %v2832, %v2856
    %v2865 = vmul.f32 %v2857, 1.442695
    %v2866 = vpow.pop %v2865
    %v2867 = vmul.f32 %v2858, 1.442695
    %v2868 = vpow.pop %v2867
    %v2869 = vmul.f32 %v2859, 1.442695
    %v2870 = vpow.pop %v2869
    %v2871 = vmul.f32 %v2860, 1.442695
    %v2872 = vpow.pop %v2871
    %v2873 = vmul.f32 %v2861, 1.442695
    %v2874 = vpow.pop %v2873
    %v2875 = vmul.f32 %v2862, 1.442695
    %v2876 = vpow.pop %v2875
    %v2877 = vmul.f32 %v2863, 1.442695
    %v2878 = vpow.pop %v2877
    %v2879 = vmul.f32 %v2864, 1.442695
    %v2880 = vpow.pop %v2879
    %v2881 = vsel %vm2271, %v2866, 0.0
    %2882 = vadd.xlane.f32.xlu0 %v2881
    %v2883 = vpop.xlane.xlu0 %2882
    %v2884 = vsel %vm2271, %v2868, 0.0
    %2885 = vadd.xlane.f32.xlu0 %v2884
    %v2886 = vpop.xlane.xlu0 %2885
    %v2887 = vsel %vm2271, %v2870, 0.0
    %2888 = vadd.xlane.f32.xlu0 %v2887
    %v2889 = vpop.xlane.xlu0 %2888
    %v2890 = vsel %vm2271, %v2872, 0.0
    %2891 = vadd.xlane.f32.xlu0 %v2890
    %v2892 = vpop.xlane.xlu0 %2891
    %v2893 = vsel %vm2271, %v2874, 0.0
    %2894 = vadd.xlane.f32.xlu0 %v2893
    %v2895 = vpop.xlane.xlu0 %2894
    %v2896 = vsel %vm2271, %v2876, 0.0
    %2897 = vadd.xlane.f32.xlu0 %v2896
    %v2898 = vpop.xlane.xlu0 %2897
    %v2899 = vsel %vm2271, %v2878, 0.0
    %2900 = vadd.xlane.f32.xlu0 %v2899
    %v2901 = vpop.xlane.xlu0 %2900
    %v2902 = vsel %vm2271, %v2880, 0.0
    %2903 = vadd.xlane.f32.xlu0 %v2902
    %v2904 = vpop.xlane.xlu0 %2903
    %v2905 = vrcp.pop %v2883
    %v2906 = vrcp.pop %v2886
    %v2907 = vrcp.pop %v2889
    %v2908 = vrcp.pop %v2892
    %v2909 = vrcp.pop %v2895
    %v2910 = vrcp.pop %v2898
    %v2911 = vrcp.pop %v2901
    %v2912 = vrcp.pop %v2904
    %v2913 = vmul.f32 %v2866, %v2905
    %v2914 = vmul.f32 %v2868, %v2906
    %v2915 = vmul.f32 %v2870, %v2907
    %v2916 = vmul.f32 %v2872, %v2908
    %v2917 = vmul.f32 %v2874, %v2909
    %v2918 = vmul.f32 %v2876, %v2910
    %v2919 = vmul.f32 %v2878, %v2911
    %v2920 = vmul.f32 %v2880, %v2912
    %2922 = vrot.lane.b32.xlu0 %v2018, 96
    %v2923 = vpop.permute.xlu0 %2922
    %v2926 = vsel %vm2271, %v2913, 0
    %2928 = vmatpush.msra.mxu0 0.0
    %2929 = vmatpush.msra.mxu0 0.0
    %2930 = vmatpush.msra.mxu0 0.0
    %2931 = vmatpush.msra.mxu0 0.0
    %2932 = vmatpush.msra.mxu0 0.0
    %2933 = vmatpush.msra.mxu0 0.0
    %2934 = vmatpush.msra.mxu0 0.0
    %2935 = vmatpush.msra.mxu0 0.0
    %2936 = vmatpush.msra.mxu0 0.0
    %2937 = vmatpush.msra.mxu0 0.0
    %2938 = vmatpush.msra.mxu0 0.0
    %2939 = vmatpush.msra.mxu0 0.0
    %2940 = vmatpush.msra.mxu0 0.0
    %2941 = vmatpush.msra.mxu0 0.0
    %2942 = vmatpush.msra.mxu0 0.0
    %2943 = vmatpush.msra.mxu0 %v2923
    %2944 = vmatmul.f32.gmra.mxu0 %v2926
    %v2945 = vpop.f32.mrf.mxu0
    %v2946 = vadd.f32 0.0, %v2945
    %2947 = vdwg.mxu0
    %2949 = vrot.lane.b32.xlu0 %v2020, 96
    %v2950 = vpop.permute.xlu0 %2949
    %v2953 = vsel %vm2271, %v2914, 0
    %2955 = vmatpush.msra.mxu0 0.0
    %2956 = vmatpush.msra.mxu0 0.0
    %2957 = vmatpush.msra.mxu0 0.0
    %2958 = vmatpush.msra.mxu0 0.0
    %2959 = vmatpush.msra.mxu0 0.0
    %2960 = vmatpush.msra.mxu0 0.0
    %2961 = vmatpush.msra.mxu0 0.0
    %2962 = vmatpush.msra.mxu0 0.0
    %2963 = vmatpush.msra.mxu0 0.0
    %2964 = vmatpush.msra.mxu0 0.0
    %2965 = vmatpush.msra.mxu0 0.0
    %2966 = vmatpush.msra.mxu0 0.0
    %2967 = vmatpush.msra.mxu0 0.0
    %2968 = vmatpush.msra.mxu0 0.0
    %2969 = vmatpush.msra.mxu0 0.0
    %2970 = vmatpush.msra.mxu0 %v2950
    %2971 = vmatmul.f32.gmra.mxu0 %v2953
    %v2972 = vpop.f32.mrf.mxu0
    %v2973 = vadd.f32 0.0, %v2972
    %2974 = vdwg.mxu0
    %2976 = vrot.lane.b32.xlu0 %v2023, 96
    %v2977 = vpop.permute.xlu0 %2976
    %v2980 = vsel %vm2271, %v2915, 0
    %2982 = vmatpush.msra.mxu0 0.0
    %2983 = vmatpush.msra.mxu0 0.0
    %2984 = vmatpush.msra.mxu0 0.0
    %2985 = vmatpush.msra.mxu0 0.0
    %2986 = vmatpush.msra.mxu0 0.0
    %2987 = vmatpush.msra.mxu0 0.0
    %2988 = vmatpush.msra.mxu0 0.0
    %2989 = vmatpush.msra.mxu0 0.0
    %2990 = vmatpush.msra.mxu0 0.0
    %2991 = vmatpush.msra.mxu0 0.0
    %2992 = vmatpush.msra.mxu0 0.0
    %2993 = vmatpush.msra.mxu0 0.0
    %2994 = vmatpush.msra.mxu0 0.0
    %2995 = vmatpush.msra.mxu0 0.0
    %2996 = vmatpush.msra.mxu0 0.0
    %2997 = vmatpush.msra.mxu0 %v2977
    %2998 = vmatmul.f32.gmra.mxu0 %v2980
    %v2999 = vpop.f32.mrf.mxu0
    %v3000 = vadd.f32 0.0, %v2999
    %3001 = vdwg.mxu0
    %3003 = vrot.lane.b32.xlu0 %v2025, 96
    %v3004 = vpop.permute.xlu0 %3003
    %v3007 = vsel %vm2271, %v2916, 0
    %3009 = vmatpush.msra.mxu0 0.0
    %3010 = vmatpush.msra.mxu0 0.0
    %3011 = vmatpush.msra.mxu0 0.0
    %3012 = vmatpush.msra.mxu0 0.0
    %3013 = vmatpush.msra.mxu0 0.0
    %3014 = vmatpush.msra.mxu0 0.0
    %3015 = vmatpush.msra.mxu0 0.0
    %3016 = vmatpush.msra.mxu0 0.0
    %3017 = vmatpush.msra.mxu0 0.0
    %3018 = vmatpush.msra.mxu0 0.0
    %3019 = vmatpush.msra.mxu0 0.0
    %3020 = vmatpush.msra.mxu0 0.0
    %3021 = vmatpush.msra.mxu0 0.0
    %3022 = vmatpush.msra.mxu0 0.0
    %3023 = vmatpush.msra.mxu0 0.0
    %3024 = vmatpush.msra.mxu0 %v3004
    %3025 = vmatmul.f32.gmra.mxu0 %v3007
    %v3026 = vpop.f32.mrf.mxu0
    %v3027 = vadd.f32 0.0, %v3026
    %3028 = vdwg.mxu0
    %3030 = vrot.lane.b32.xlu0 %v2028, 96
    %v3031 = vpop.permute.xlu0 %3030
    %v3034 = vsel %vm2271, %v2917, 0
    %3036 = vmatpush.msra.mxu0 0.0
    %3037 = vmatpush.msra.mxu0 0.0
    %3038 = vmatpush.msra.mxu0 0.0
    %3039 = vmatpush.msra.mxu0 0.0
    %3040 = vmatpush.msra.mxu0 0.0
    %3041 = vmatpush.msra.mxu0 0.0
    %3042 = vmatpush.msra.mxu0 0.0
    %3043 = vmatpush.msra.mxu0 0.0
    %3044 = vmatpush.msra.mxu0 0.0
    %3045 = vmatpush.msra.mxu0 0.0
    %3046 = vmatpush.msra.mxu0 0.0
    %3047 = vmatpush.msra.mxu0 0.0
    %3048 = vmatpush.msra.mxu0 0.0
    %3049 = vmatpush.msra.mxu0 0.0
    %3050 = vmatpush.msra.mxu0 0.0
    %3051 = vmatpush.msra.mxu0 %v3031
    %3052 = vmatmul.f32.gmra.mxu0 %v3034
    %v3053 = vpop.f32.mrf.mxu0
    %v3054 = vadd.f32 0.0, %v3053
    %3055 = vdwg.mxu0
    %3057 = vrot.lane.b32.xlu0 %v2030, 96
    %v3058 = vpop.permute.xlu0 %3057
    %v3061 = vsel %vm2271, %v2918, 0
    %3063 = vmatpush.msra.mxu0 0.0
    %3064 = vmatpush.msra.mxu0 0.0
    %3065 = vmatpush.msra.mxu0 0.0
    %3066 = vmatpush.msra.mxu0 0.0
    %3067 = vmatpush.msra.mxu0 0.0
    %3068 = vmatpush.msra.mxu0 0.0
    %3069 = vmatpush.msra.mxu0 0.0
    %3070 = vmatpush.msra.mxu0 0.0
    %3071 = vmatpush.msra.mxu0 0.0
    %3072 = vmatpush.msra.mxu0 0.0
    %3073 = vmatpush.msra.mxu0 0.0
    %3074 = vmatpush.msra.mxu0 0.0
    %3075 = vmatpush.msra.mxu0 0.0
    %3076 = vmatpush.msra.mxu0 0.0
    %3077 = vmatpush.msra.mxu0 0.0
    %3078 = vmatpush.msra.mxu0 %v3058
    %3079 = vmatmul.f32.gmra.mxu0 %v3061
    %v3080 = vpop.f32.mrf.mxu0
    %v3081 = vadd.f32 0.0, %v3080
    %3082 = vdwg.mxu0
    %3084 = vrot.lane.b32.xlu0 %v2033, 96
    %v3085 = vpop.permute.xlu0 %3084
    %v3088 = vsel %vm2271, %v2919, 0
    %3090 = vmatpush.msra.mxu0 0.0
    %3091 = vmatpush.msra.mxu0 0.0
    %3092 = vmatpush.msra.mxu0 0.0
    %3093 = vmatpush.msra.mxu0 0.0
    %3094 = vmatpush.msra.mxu0 0.0
    %3095 = vmatpush.msra.mxu0 0.0
    %3096 = vmatpush.msra.mxu0 0.0
    %3097 = vmatpush.msra.mxu0 0.0
    %3098 = vmatpush.msra.mxu0 0.0
    %3099 = vmatpush.msra.mxu0 0.0
    %3100 = vmatpush.msra.mxu0 0.0
    %3101 = vmatpush.msra.mxu0 0.0
    %3102 = vmatpush.msra.mxu0 0.0
    %3103 = vmatpush.msra.mxu0 0.0
    %3104 = vmatpush.msra.mxu0 0.0
    %3105 = vmatpush.msra.mxu0 %v3085
    %3106 = vmatmul.f32.gmra.mxu0 %v3088
    %v3107 = vpop.f32.mrf.mxu0
    %v3108 = vadd.f32 0.0, %v3107
    %3109 = vdwg.mxu0
    %3111 = vrot.lane.b32.xlu0 %v2035, 96
    %v3112 = vpop.permute.xlu0 %3111
    %v3115 = vsel %vm2271, %v2920, 0
    %3117 = vmatpush.msra.mxu0 0.0
    %3118 = vmatpush.msra.mxu0 0.0
    %3119 = vmatpush.msra.mxu0 0.0
    %3120 = vmatpush.msra.mxu0 0.0
    %3121 = vmatpush.msra.mxu0 0.0
    %3122 = vmatpush.msra.mxu0 0.0
    %3123 = vmatpush.msra.mxu0 0.0
    %3124 = vmatpush.msra.mxu0 0.0
    %3125 = vmatpush.msra.mxu0 0.0
    %3126 = vmatpush.msra.mxu0 0.0
    %3127 = vmatpush.msra.mxu0 0.0
    %3128 = vmatpush.msra.mxu0 0.0
    %3129 = vmatpush.msra.mxu0 0.0
    %3130 = vmatpush.msra.mxu0 0.0
    %3131 = vmatpush.msra.mxu0 0.0
    %3132 = vmatpush.msra.mxu0 %v3112
    %3133 = vmatmul.f32.gmra.mxu0 %v3115
    %v3134 = vpop.f32.mrf.mxu0
    %v3135 = vadd.f32 0.0, %v3134
    %3136 = vdwg.mxu0
    %v3137 = vpack.c.bf16 %v2973, %v2946
    %v3138 = vpack.c.bf16 %v3027, %v3000
    %v3139 = vpack.c.bf16 %v3081, %v3054
    %v3140 = vpack.c.bf16 %v3135, %v3108
    %v3145 = vunpack.c.l.b16 %v2041
    %v3146 = vunpack.c.l.b16 %v2042
    %v3147 = vunpack.c.l.b16 %v2043
    %v3148 = vunpack.c.l.b16 %v2044
    %v3149 = vpack.c.b16 %v3146, %v3145
    %v3150 = vpack.c.b16 %v3148, %v3147
    %v3154 = vsel %vm2049, %v3137, 0
    %v3157 = vsel %vm2049, %v3138, 0
    %v3160 = vsel %vm2049, %v3139, 0
    %v3163 = vsel %vm2049, %v3140, 0
    %3165 = vmatpush.bf16.msra.mxu0 0
    %3166 = vmatpush.bf16.msra.mxu0 0
    %3167 = vmatpush.bf16.msra.mxu0 0
    %3168 = vmatpush.bf16.msra.mxu0 0
    %3169 = vmatpush.bf16.msra.mxu0 0
    %3170 = vmatpush.bf16.msra.mxu0 0
    %3171 = vmatpush.bf16.msra.mxu0 %v3150
    %3172 = vmatpush.bf16.msra.mxu0 %v3149
    %3173 = vmatmul.bf16.gmra.mxu0 %v3154
    %v3174 = vpop.f32.mrf.mxu0
    %v3175 = vadd.f32 0.0, %v3174
    %v3176 = vpop.f32.mrf.mxu0
    %v3177 = vadd.f32 0.0, %v3176
    %3178 = vmatmul.bf16.gmra.mxu0 %v3157
    %v3179 = vpop.f32.mrf.mxu0
    %v3180 = vadd.f32 0.0, %v3179
    %v3181 = vpop.f32.mrf.mxu0
    %v3182 = vadd.f32 0.0, %v3181
    %3183 = vmatmul.bf16.gmra.mxu0 %v3160
    %v3184 = vpop.f32.mrf.mxu0
    %v3185 = vadd.f32 0.0, %v3184
    %v3186 = vpop.f32.mrf.mxu0
    %v3187 = vadd.f32 0.0, %v3186
    %3188 = vmatmul.bf16.gmra.mxu0 %v3163
    %v3189 = vpop.f32.mrf.mxu0
    %v3190 = vadd.f32 0.0, %v3189
    %v3191 = vpop.f32.mrf.mxu0
    %v3192 = vadd.f32 0.0, %v3191
    %3193 = vdwg.mxu0
    %v3194 = vadd.f32 %v2582, %v3175
    %v3195 = vadd.f32 %v2584, %v3177
    %v3196 = vadd.f32 %v2587, %v3180
    %v3197 = vadd.f32 %v2589, %v3182
    %v3198 = vadd.f32 %v2592, %v3185
    %v3199 = vadd.f32 %v2594, %v3187
    %v3200 = vadd.f32 %v2597, %v3190
    %v3201 = vadd.f32 %v2599, %v3192
    %v3203 = vperm.slane %v2045, 0
    %v3205 = vadd.f32 %v3194, %v3203
    %v3206 = vadd.f32 %v3195, %v3203
    %v3207 = vadd.f32 %v3196, %v3203
    %v3208 = vadd.f32 %v3197, %v3203
    %v3209 = vadd.f32 %v3198, %v3203
    %v3210 = vadd.f32 %v3199, %v3203
    %v3211 = vadd.f32 %v3200, %v3203
    %v3212 = vadd.f32 %v3201, %v3203
    %v3213 = vadd.f32 %v1704, %v3205
    %v3214 = vadd.f32 %v1705, %v3206
    %v3215 = vadd.f32 %v1706, %v3207
    %v3216 = vadd.f32 %v1707, %v3208
    %v3217 = vadd.f32 %v1708, %v3209
    %v3218 = vadd.f32 %v1709, %v3210
    %v3219 = vadd.f32 %v1710, %v3211
    %v3220 = vadd.f32 %v1711, %v3212
    %v3221 = vsel %vm1713, %v3213, 0.0
    %3222 = vadd.xlane.f32.xlu0 %v3221
    %v3223 = vpop.xlane.xlu0 %3222
    %v3224 = vsel %vm1713, %v3214, 0.0
    %3225 = vadd.xlane.f32.xlu0 %v3224
    %v3226 = vpop.xlane.xlu0 %3225
    %v3227 = vsel %vm1713, %v3215, 0.0
    %3228 = vadd.xlane.f32.xlu0 %v3227
    %v3229 = vpop.xlane.xlu0 %3228
    %v3230 = vsel %vm1713, %v3216, 0.0
    %3231 = vadd.xlane.f32.xlu0 %v3230
    %v3232 = vpop.xlane.xlu0 %3231
    %v3233 = vsel %vm1713, %v3217, 0.0
    %3234 = vadd.xlane.f32.xlu0 %v3233
    %v3235 = vpop.xlane.xlu0 %3234
    %v3236 = vsel %vm1713, %v3218, 0.0
    %3237 = vadd.xlane.f32.xlu0 %v3236
    %v3238 = vpop.xlane.xlu0 %3237
    %v3239 = vsel %vm1713, %v3219, 0.0
    %3240 = vadd.xlane.f32.xlu0 %v3239
    %v3241 = vpop.xlane.xlu0 %3240
    %v3242 = vsel %vm1713, %v3220, 0.0
    %3243 = vadd.xlane.f32.xlu0 %v3242
    %v3244 = vpop.xlane.xlu0 %3243
    %v3245 = vmul.f32 %v3223, %v1744
    %v3246 = vmul.f32 %v3226, %v1744
    %v3247 = vmul.f32 %v3229, %v1744
    %v3248 = vmul.f32 %v3232, %v1744
    %v3249 = vmul.f32 %v3235, %v1744
    %v3250 = vmul.f32 %v3238, %v1744
    %v3251 = vmul.f32 %v3241, %v1744
    %v3252 = vmul.f32 %v3244, %v1744
    %v3253 = vsub.f32 %v3213, %v3245
    %v3254 = vsub.f32 %v3214, %v3246
    %v3255 = vsub.f32 %v3215, %v3247
    %v3256 = vsub.f32 %v3216, %v3248
    %v3257 = vsub.f32 %v3217, %v3249
    %v3258 = vsub.f32 %v3218, %v3250
    %v3259 = vsub.f32 %v3219, %v3251
    %v3260 = vsub.f32 %v3220, %v3252
    %v3261 = vmul.f32 %v3253, %v3253
    %v3262 = vmul.f32 %v3254, %v3254
    %v3263 = vmul.f32 %v3255, %v3255
    %v3264 = vmul.f32 %v3256, %v3256
    %v3265 = vmul.f32 %v3257, %v3257
    %v3266 = vmul.f32 %v3258, %v3258
    %v3267 = vmul.f32 %v3259, %v3259
    %v3268 = vmul.f32 %v3260, %v3260
    %v3269 = vsel %vm1713, %v3261, 0.0
    %3270 = vadd.xlane.f32.xlu0 %v3269
    %v3271 = vpop.xlane.xlu0 %3270
    %v3272 = vsel %vm1713, %v3262, 0.0
    %3273 = vadd.xlane.f32.xlu0 %v3272
    %v3274 = vpop.xlane.xlu0 %3273
    %v3275 = vsel %vm1713, %v3263, 0.0
    %3276 = vadd.xlane.f32.xlu0 %v3275
    %v3277 = vpop.xlane.xlu0 %3276
    %v3278 = vsel %vm1713, %v3264, 0.0
    %3279 = vadd.xlane.f32.xlu0 %v3278
    %v3280 = vpop.xlane.xlu0 %3279
    %v3281 = vsel %vm1713, %v3265, 0.0
    %3282 = vadd.xlane.f32.xlu0 %v3281
    %v3283 = vpop.xlane.xlu0 %3282
    %v3284 = vsel %vm1713, %v3266, 0.0
    %3285 = vadd.xlane.f32.xlu0 %v3284
    %v3286 = vpop.xlane.xlu0 %3285
    %v3287 = vsel %vm1713, %v3267, 0.0
    %3288 = vadd.xlane.f32.xlu0 %v3287
    %v3289 = vpop.xlane.xlu0 %3288
    %v3290 = vsel %vm1713, %v3268, 0.0
    %3291 = vadd.xlane.f32.xlu0 %v3290
    %v3292 = vpop.xlane.xlu0 %3291
    %v3293 = vmul.f32 %v3271, %v1744
    %v3294 = vmul.f32 %v3274, %v1744
    %v3295 = vmul.f32 %v3277, %v1744
    %v3296 = vmul.f32 %v3280, %v1744
    %v3297 = vmul.f32 %v3283, %v1744
    %v3298 = vmul.f32 %v3286, %v1744
    %v3299 = vmul.f32 %v3289, %v1744
    %v3300 = vmul.f32 %v3292, %v1744
    %v3301 = vadd.f32 %v3293, 1e-05
    %v3302 = vadd.f32 %v3294, 1e-05
    %v3303 = vadd.f32 %v3295, 1e-05
    %v3304 = vadd.f32 %v3296, 1e-05
    %v3305 = vadd.f32 %v3297, 1e-05
    %v3306 = vadd.f32 %v3298, 1e-05
    %v3307 = vadd.f32 %v3299, 1e-05
    %v3308 = vadd.f32 %v3300, 1e-05
    %v3309 = vrsqrt.pop %v3301
    %v3310 = vmul.f32 %v3309, %v3301
    %v3311 = vmul.f32 %v3310, %v3309
    %v3312 = vmul.f32 0.5, %v3311
    %v3313 = vsub.f32 1.5, %v3312
    %v3314 = vmul.f32 %v3309, %v3313
    %vm3315 = vweird.f32 %v3301
    %vm3316 = vweird.f32 %v3309
    %vm3317 = vmor %vm3315, %vm3316
    %v3318 = vsel %vm3317, %v3309, %v3314
    %v3319 = vrsqrt.pop %v3302
    %v3320 = vmul.f32 %v3319, %v3302
    %v3321 = vmul.f32 %v3320, %v3319
    %v3322 = vmul.f32 0.5, %v3321
    %v3323 = vsub.f32 1.5, %v3322
    %v3324 = vmul.f32 %v3319, %v3323
    %vm3325 = vweird.f32 %v3302
    %vm3326 = vweird.f32 %v3319
    %vm3327 = vmor %vm3325, %vm3326
    %v3328 = vsel %vm3327, %v3319, %v3324
    %v3329 = vrsqrt.pop %v3303
    %v3330 = vmul.f32 %v3329, %v3303
    %v3331 = vmul.f32 %v3330, %v3329
    %v3332 = vmul.f32 0.5, %v3331
    %v3333 = vsub.f32 1.5, %v3332
    %v3334 = vmul.f32 %v3329, %v3333
    %vm3335 = vweird.f32 %v3303
    %vm3336 = vweird.f32 %v3329
    %vm3337 = vmor %vm3335, %vm3336
    %v3338 = vsel %vm3337, %v3329, %v3334
    %v3339 = vrsqrt.pop %v3304
    %v3340 = vmul.f32 %v3339, %v3304
    %v3341 = vmul.f32 %v3340, %v3339
    %v3342 = vmul.f32 0.5, %v3341
    %v3343 = vsub.f32 1.5, %v3342
    %v3344 = vmul.f32 %v3339, %v3343
    %vm3345 = vweird.f32 %v3304
    %vm3346 = vweird.f32 %v3339
    %vm3347 = vmor %vm3345, %vm3346
    %v3348 = vsel %vm3347, %v3339, %v3344
    %v3349 = vrsqrt.pop %v3305
    %v3350 = vmul.f32 %v3349, %v3305
    %v3351 = vmul.f32 %v3350, %v3349
    %v3352 = vmul.f32 0.5, %v3351
    %v3353 = vsub.f32 1.5, %v3352
    %v3354 = vmul.f32 %v3349, %v3353
    %vm3355 = vweird.f32 %v3305
    %vm3356 = vweird.f32 %v3349
    %vm3357 = vmor %vm3355, %vm3356
    %v3358 = vsel %vm3357, %v3349, %v3354
    %v3359 = vrsqrt.pop %v3306
    %v3360 = vmul.f32 %v3359, %v3306
    %v3361 = vmul.f32 %v3360, %v3359
    %v3362 = vmul.f32 0.5, %v3361
    %v3363 = vsub.f32 1.5, %v3362
    %v3364 = vmul.f32 %v3359, %v3363
    %vm3365 = vweird.f32 %v3306
    %vm3366 = vweird.f32 %v3359
    %vm3367 = vmor %vm3365, %vm3366
    %v3368 = vsel %vm3367, %v3359, %v3364
    %v3369 = vrsqrt.pop %v3307
    %v3370 = vmul.f32 %v3369, %v3307
    %v3371 = vmul.f32 %v3370, %v3369
    %v3372 = vmul.f32 0.5, %v3371
    %v3373 = vsub.f32 1.5, %v3372
    %v3374 = vmul.f32 %v3369, %v3373
    %vm3375 = vweird.f32 %v3307
    %vm3376 = vweird.f32 %v3369
    %vm3377 = vmor %vm3375, %vm3376
    %v3378 = vsel %vm3377, %v3369, %v3374
    %v3379 = vrsqrt.pop %v3308
    %v3380 = vmul.f32 %v3379, %v3308
    %v3381 = vmul.f32 %v3380, %v3379
    %v3382 = vmul.f32 0.5, %v3381
    %v3383 = vsub.f32 1.5, %v3382
    %v3384 = vmul.f32 %v3379, %v3383
    %vm3385 = vweird.f32 %v3308
    %vm3386 = vweird.f32 %v3379
    %vm3387 = vmor %vm3385, %vm3386
    %v3388 = vsel %vm3387, %v3379, %v3384
    %v3389 = vmul.f32 %v3253, %v3318
    %v3390 = vmul.f32 %v3254, %v3328
    %v3391 = vmul.f32 %v3255, %v3338
    %v3392 = vmul.f32 %v3256, %v3348
    %v3393 = vmul.f32 %v3257, %v3358
    %v3394 = vmul.f32 %v3258, %v3368
    %v3395 = vmul.f32 %v3259, %v3378
    %v3396 = vmul.f32 %v3260, %v3388
    %v3397 = vperm.slane %v1712, 2
    %v3398 = vmul.f32 %v3389, %v3397
    %v3399 = vmul.f32 %v3390, %v3397
    %v3400 = vmul.f32 %v3391, %v3397
    %v3401 = vmul.f32 %v3392, %v3397
    %v3402 = vmul.f32 %v3393, %v3397
    %v3403 = vmul.f32 %v3394, %v3397
    %v3404 = vmul.f32 %v3395, %v3397
    %v3405 = vmul.f32 %v3396, %v3397
    %v3406 = vperm.slane %v1712, 3
    %v3407 = vadd.f32 %v3398, %v3406
    %v3408 = vadd.f32 %v3399, %v3406
    %v3409 = vadd.f32 %v3400, %v3406
    %v3410 = vadd.f32 %v3401, %v3406
    %v3411 = vadd.f32 %v3402, %v3406
    %v3412 = vadd.f32 %v3403, %v3406
    %v3413 = vadd.f32 %v3404, %v3406
    %v3414 = vadd.f32 %v3405, %v3406
    %v3415 = vld [vmem:[%s27] sm:$0xf]
    %v3416 = vld [vmem:[%s27 + $0x4] sm:$0xf]
    %v3417 = vld [vmem:[%s27 + $0x8] sm:$0xf]
    %v3418 = vld [vmem:[%s27 + $0xc] sm:$0xf]
    %v3419 = vld [vmem:[%s27 + $0x10] sm:$0xf]
    %v3420 = vld [vmem:[%s27 + $0x14] sm:$0xf]
    %v3421 = vld [vmem:[%s27 + $0x18] sm:$0xf]
    %v3422 = vld [vmem:[%s27 + $0x1c] sm:$0xf]
    %v3423 = vld [vmem:[%s29] sm:$0x1]
    %v3424 = vld [vmem:[%s31] sm:$0xf]
    %v3425 = vld [vmem:[%s31 + $0x4] sm:$0xf]
    %v3426 = vld [vmem:[%s31 + $0x8] sm:$0xf]
    %v3427 = vld [vmem:[%s31 + $0xc] sm:$0xf]
    %v3428 = vld [vmem:[%s31 + $0x10] sm:$0xf]
    %v3429 = vld [vmem:[%s31 + $0x14] sm:$0xf]
    %v3430 = vld [vmem:[%s31 + $0x18] sm:$0xf]
    %v3431 = vld [vmem:[%s31 + $0x1c] sm:$0xf]
    %v3432 = vld [vmem:[%s31 + $0x20] sm:$0xf]
    %v3433 = vld [vmem:[%s31 + $0x24] sm:$0xf]
    %v3434 = vld [vmem:[%s31 + $0x28] sm:$0xf]
    %v3435 = vld [vmem:[%s31 + $0x2c] sm:$0xf]
    %v3436 = vld [vmem:[%s31 + $0x30] sm:$0xf]
    %v3437 = vld [vmem:[%s31 + $0x34] sm:$0xf]
    %v3438 = vld [vmem:[%s31 + $0x38] sm:$0xf]
    %v3439 = vld [vmem:[%s31 + $0x3c] sm:$0xf]
    %v3440 = vld [vmem:[%s33] sm:$0x1]
    %v3441 = vpack.c.bf16 %v3408, %v3407
    %v3442 = vpack.c.bf16 %v3410, %v3409
    %v3443 = vpack.c.bf16 %v3412, %v3411
    %v3444 = vpack.c.bf16 %v3414, %v3413
    %v3446 = vperm.slane %v3423, 0
    %v3456 = vunpack.c.l.b16 %v3415
    %v3457 = vunpack.c.l.b16 %v3416
    %v3458 = vunpack.c.l.b16 %v3417
    %v3459 = vunpack.c.l.b16 %v3418
    %v3460 = vunpack.c.l.b16 %v3419
    %v3461 = vunpack.c.l.b16 %v3420
    %v3462 = vunpack.c.l.b16 %v3421
    %v3463 = vunpack.c.l.b16 %v3422
    %v3464 = vpack.c.b16 %v3457, %v3456
    %v3465 = vpack.c.b16 %v3459, %v3458
    %v3466 = vpack.c.b16 %v3461, %v3460
    %v3467 = vpack.c.b16 %v3463, %v3462
    %v3473 = vsel %vm1713, %v3441, 0
    %v3476 = vsel %vm1713, %v3442, 0
    %v3479 = vsel %vm1713, %v3443, 0
    %v3482 = vsel %vm1713, %v3444, 0
    %3484 = vmatpush.bf16.msra.mxu0 0
    %3485 = vmatpush.bf16.msra.mxu0 0
    %3486 = vmatpush.bf16.msra.mxu0 0
    %3487 = vmatpush.bf16.msra.mxu0 0
    %3488 = vmatpush.bf16.msra.mxu0 %v3467
    %3489 = vmatpush.bf16.msra.mxu0 %v3466
    %3490 = vmatpush.bf16.msra.mxu0 %v3465
    %3491 = vmatpush.bf16.msra.mxu0 %v3464
    %3492 = vmatmul.bf16.gmra.mxu0 %v3473
    %v3493 = vpop.f32.mrf.mxu0
    %v3494 = vadd.f32 %v3446, %v3493
    %v3495 = vpop.f32.mrf.mxu0
    %v3496 = vadd.f32 %v3446, %v3495
    %3497 = vmatmul.bf16.gmra.mxu0 %v3476
    %v3498 = vpop.f32.mrf.mxu0
    %v3499 = vadd.f32 %v3446, %v3498
    %v3500 = vpop.f32.mrf.mxu0
    %v3501 = vadd.f32 %v3446, %v3500
    %3502 = vmatmul.bf16.gmra.mxu0 %v3479
    %v3503 = vpop.f32.mrf.mxu0
    %v3504 = vadd.f32 %v3446, %v3503
    %v3505 = vpop.f32.mrf.mxu0
    %v3506 = vadd.f32 %v3446, %v3505
    %3507 = vmatmul.bf16.gmra.mxu0 %v3482
    %v3508 = vpop.f32.mrf.mxu0
    %v3509 = vadd.f32 %v3446, %v3508
    %v3510 = vpop.f32.mrf.mxu0
    %v3511 = vadd.f32 %v3446, %v3510
    %3512 = vdwg.mxu0
    %v3513 = vmul.f32 %v3494, %v3494
    %v3514 = vmul.f32 %v3496, %v3496
    %v3515 = vmul.f32 %v3499, %v3499
    %v3516 = vmul.f32 %v3501, %v3501
    %v3517 = vmul.f32 %v3504, %v3504
    %v3518 = vmul.f32 %v3506, %v3506
    %v3519 = vmul.f32 %v3509, %v3509
    %v3520 = vmul.f32 %v3511, %v3511
    %v3521 = vmul.f32 %v3494, %v3513
    %v3522 = vmul.f32 %v3496, %v3514
    %v3523 = vmul.f32 %v3499, %v3515
    %v3524 = vmul.f32 %v3501, %v3516
    %v3525 = vmul.f32 %v3504, %v3517
    %v3526 = vmul.f32 %v3506, %v3518
    %v3527 = vmul.f32 %v3509, %v3519
    %v3528 = vmul.f32 %v3511, %v3520
    %v3529 = vmul.f32 %v3521, 0.044715
    %v3530 = vmul.f32 %v3522, 0.044715
    %v3531 = vmul.f32 %v3523, 0.044715
    %v3532 = vmul.f32 %v3524, 0.044715
    %v3533 = vmul.f32 %v3525, 0.044715
    %v3534 = vmul.f32 %v3526, 0.044715
    %v3535 = vmul.f32 %v3527, 0.044715
    %v3536 = vmul.f32 %v3528, 0.044715
    %v3537 = vadd.f32 %v3494, %v3529
    %v3538 = vadd.f32 %v3496, %v3530
    %v3539 = vadd.f32 %v3499, %v3531
    %v3540 = vadd.f32 %v3501, %v3532
    %v3541 = vadd.f32 %v3504, %v3533
    %v3542 = vadd.f32 %v3506, %v3534
    %v3543 = vadd.f32 %v3509, %v3535
    %v3544 = vadd.f32 %v3511, %v3536
    %v3545 = vmul.f32 %v3537, 0.7978846
    %v3546 = vmul.f32 %v3538, 0.7978846
    %v3547 = vmul.f32 %v3539, 0.7978846
    %v3548 = vmul.f32 %v3540, 0.7978846
    %v3549 = vmul.f32 %v3541, 0.7978846
    %v3550 = vmul.f32 %v3542, 0.7978846
    %v3551 = vmul.f32 %v3543, 0.7978846
    %v3552 = vmul.f32 %v3544, 0.7978846
    %v3553 = vtanh.pop %v3545
    %v3554 = vtanh.pop %v3546
    %v3555 = vtanh.pop %v3547
    %v3556 = vtanh.pop %v3548
    %v3557 = vtanh.pop %v3549
    %v3558 = vtanh.pop %v3550
    %v3559 = vtanh.pop %v3551
    %v3560 = vtanh.pop %v3552
    %v3561 = vadd.f32 %v3553, 1.0
    %v3562 = vadd.f32 %v3554, 1.0
    %v3563 = vadd.f32 %v3555, 1.0
    %v3564 = vadd.f32 %v3556, 1.0
    %v3565 = vadd.f32 %v3557, 1.0
    %v3566 = vadd.f32 %v3558, 1.0
    %v3567 = vadd.f32 %v3559, 1.0
    %v3568 = vadd.f32 %v3560, 1.0
    %v3569 = vmul.f32 %v3561, 0.5
    %v3570 = vmul.f32 %v3562, 0.5
    %v3571 = vmul.f32 %v3563, 0.5
    %v3572 = vmul.f32 %v3564, 0.5
    %v3573 = vmul.f32 %v3565, 0.5
    %v3574 = vmul.f32 %v3566, 0.5
    %v3575 = vmul.f32 %v3567, 0.5
    %v3576 = vmul.f32 %v3568, 0.5
    %v3577 = vmul.f32 %v3494, %v3569
    %v3578 = vmul.f32 %v3496, %v3570
    %v3579 = vmul.f32 %v3499, %v3571
    %v3580 = vmul.f32 %v3501, %v3572
    %v3581 = vmul.f32 %v3504, %v3573
    %v3582 = vmul.f32 %v3506, %v3574
    %v3583 = vmul.f32 %v3509, %v3575
    %v3584 = vmul.f32 %v3511, %v3576
    %v3585 = vpack.c.bf16 %v3578, %v3577
    %v3586 = vpack.c.bf16 %v3580, %v3579
    %v3587 = vpack.c.bf16 %v3582, %v3581
    %v3588 = vpack.c.bf16 %v3584, %v3583
    %v3590 = vperm.slane %v3440, 0
    %v3608 = vunpack.c.l.b16 %v3424
    %v3609 = vunpack.c.l.b16 %v3425
    %v3610 = vunpack.c.l.b16 %v3426
    %v3611 = vunpack.c.l.b16 %v3427
    %v3612 = vunpack.c.l.b16 %v3428
    %v3613 = vunpack.c.l.b16 %v3429
    %v3614 = vunpack.c.l.b16 %v3430
    %v3615 = vunpack.c.l.b16 %v3431
    %v3616 = vunpack.c.l.b16 %v3432
    %v3617 = vunpack.c.l.b16 %v3433
    %v3618 = vunpack.c.l.b16 %v3434
    %v3619 = vunpack.c.l.b16 %v3435
    %v3620 = vunpack.c.l.b16 %v3436
    %v3621 = vunpack.c.l.b16 %v3437
    %v3622 = vunpack.c.l.b16 %v3438
    %v3623 = vunpack.c.l.b16 %v3439
    %v3624 = vpack.c.b16 %v3609, %v3608
    %v3625 = vpack.c.b16 %v3611, %v3610
    %v3626 = vpack.c.b16 %v3613, %v3612
    %v3627 = vpack.c.b16 %v3615, %v3614
    %v3628 = vpack.c.b16 %v3617, %v3616
    %v3629 = vpack.c.b16 %v3619, %v3618
    %v3630 = vpack.c.b16 %v3621, %v3620
    %v3631 = vpack.c.b16 %v3623, %v3622
    %3640 = vmatpush.bf16.msra.mxu0 %v3631
    %3641 = vmatpush.bf16.msra.mxu0 %v3630
    %3642 = vmatpush.bf16.msra.mxu0 %v3629
    %3643 = vmatpush.bf16.msra.mxu0 %v3628
    %3644 = vmatpush.bf16.msra.mxu0 %v3627
    %3645 = vmatpush.bf16.msra.mxu0 %v3626
    %3646 = vmatpush.bf16.msra.mxu0 %v3625
    %3647 = vmatpush.bf16.msra.mxu0 %v3624
    %3648 = vmatmul.bf16.gmra.mxu0 %v3585
    %v3649 = vpop.f32.mrf.mxu0
    %v3650 = vadd.f32 %v3590, %v3649
    %v3651 = vpop.f32.mrf.mxu0
    %v3652 = vadd.f32 %v3590, %v3651
    %3653 = vmatmul.bf16.gmra.mxu0 %v3586
    %v3654 = vpop.f32.mrf.mxu0
    %v3655 = vadd.f32 %v3590, %v3654
    %v3656 = vpop.f32.mrf.mxu0
    %v3657 = vadd.f32 %v3590, %v3656
    %3658 = vmatmul.bf16.gmra.mxu0 %v3587
    %v3659 = vpop.f32.mrf.mxu0
    %v3660 = vadd.f32 %v3590, %v3659
    %v3661 = vpop.f32.mrf.mxu0
    %v3662 = vadd.f32 %v3590, %v3661
    %3663 = vmatmul.bf16.gmra.mxu0 %v3588
    %v3664 = vpop.f32.mrf.mxu0
    %v3665 = vadd.f32 %v3590, %v3664
    %v3666 = vpop.f32.mrf.mxu0
    %v3667 = vadd.f32 %v3590, %v3666
    %3668 = vdwg.mxu0
    %v3669 = vadd.f32 %v3213, %v3650
    %v3670 = vadd.f32 %v3214, %v3652
    %v3671 = vadd.f32 %v3215, %v3655
    %v3672 = vadd.f32 %v3216, %v3657
    %v3673 = vadd.f32 %v3217, %v3660
    %v3674 = vadd.f32 %v3218, %v3662
    %v3675 = vadd.f32 %v3219, %v3665
    %v3676 = vadd.f32 %v3220, %v3667
    %s3677 = scalar_lea.vmem %s19, 4
    %v3678 = vld [vmem:[%s3677] sm:$0xf]
    %v3679 = vsel %vm1713, %v3669, 0.0
    %3680 = vadd.xlane.f32.xlu0 %v3679
    %v3681 = vpop.xlane.xlu0 %3680
    %v3682 = vsel %vm1713, %v3670, 0.0
    %3683 = vadd.xlane.f32.xlu0 %v3682
    %v3684 = vpop.xlane.xlu0 %3683
    %v3685 = vsel %vm1713, %v3671, 0.0
    %3686 = vadd.xlane.f32.xlu0 %v3685
    %v3687 = vpop.xlane.xlu0 %3686
    %v3688 = vsel %vm1713, %v3672, 0.0
    %3689 = vadd.xlane.f32.xlu0 %v3688
    %v3690 = vpop.xlane.xlu0 %3689
    %v3691 = vsel %vm1713, %v3673, 0.0
    %3692 = vadd.xlane.f32.xlu0 %v3691
    %v3693 = vpop.xlane.xlu0 %3692
    %v3694 = vsel %vm1713, %v3674, 0.0
    %3695 = vadd.xlane.f32.xlu0 %v3694
    %v3696 = vpop.xlane.xlu0 %3695
    %v3697 = vsel %vm1713, %v3675, 0.0
    %3698 = vadd.xlane.f32.xlu0 %v3697
    %v3699 = vpop.xlane.xlu0 %3698
    %v3700 = vsel %vm1713, %v3676, 0.0
    %3701 = vadd.xlane.f32.xlu0 %v3700
    %v3702 = vpop.xlane.xlu0 %3701
    %v3703 = vmul.f32 %v3681, %v1744
    %v3704 = vmul.f32 %v3684, %v1744
    %v3705 = vmul.f32 %v3687, %v1744
    %v3706 = vmul.f32 %v3690, %v1744
    %v3707 = vmul.f32 %v3693, %v1744
    %v3708 = vmul.f32 %v3696, %v1744
    %v3709 = vmul.f32 %v3699, %v1744
    %v3710 = vmul.f32 %v3702, %v1744
    %v3711 = vsub.f32 %v3669, %v3703
    %v3712 = vsub.f32 %v3670, %v3704
    %v3713 = vsub.f32 %v3671, %v3705
    %v3714 = vsub.f32 %v3672, %v3706
    %v3715 = vsub.f32 %v3673, %v3707
    %v3716 = vsub.f32 %v3674, %v3708
    %v3717 = vsub.f32 %v3675, %v3709
    %v3718 = vsub.f32 %v3676, %v3710
    %v3719 = vmul.f32 %v3711, %v3711
    %v3720 = vmul.f32 %v3712, %v3712
    %v3721 = vmul.f32 %v3713, %v3713
    %v3722 = vmul.f32 %v3714, %v3714
    %v3723 = vmul.f32 %v3715, %v3715
    %v3724 = vmul.f32 %v3716, %v3716
    %v3725 = vmul.f32 %v3717, %v3717
    %v3726 = vmul.f32 %v3718, %v3718
    %v3727 = vsel %vm1713, %v3719, 0.0
    %3728 = vadd.xlane.f32.xlu0 %v3727
    %v3729 = vpop.xlane.xlu0 %3728
    %v3730 = vsel %vm1713, %v3720, 0.0
    %3731 = vadd.xlane.f32.xlu0 %v3730
    %v3732 = vpop.xlane.xlu0 %3731
    %v3733 = vsel %vm1713, %v3721, 0.0
    %3734 = vadd.xlane.f32.xlu0 %v3733
    %v3735 = vpop.xlane.xlu0 %3734
    %v3736 = vsel %vm1713, %v3722, 0.0
    %3737 = vadd.xlane.f32.xlu0 %v3736
    %v3738 = vpop.xlane.xlu0 %3737
    %v3739 = vsel %vm1713, %v3723, 0.0
    %3740 = vadd.xlane.f32.xlu0 %v3739
    %v3741 = vpop.xlane.xlu0 %3740
    %v3742 = vsel %vm1713, %v3724, 0.0
    %3743 = vadd.xlane.f32.xlu0 %v3742
    %v3744 = vpop.xlane.xlu0 %3743
    %v3745 = vsel %vm1713, %v3725, 0.0
    %3746 = vadd.xlane.f32.xlu0 %v3745
    %v3747 = vpop.xlane.xlu0 %3746
    %v3748 = vsel %vm1713, %v3726, 0.0
    %3749 = vadd.xlane.f32.xlu0 %v3748
    %v3750 = vpop.xlane.xlu0 %3749
    %v3751 = vmul.f32 %v3729, %v1744
    %v3752 = vmul.f32 %v3732, %v1744
    %v3753 = vmul.f32 %v3735, %v1744
    %v3754 = vmul.f32 %v3738, %v1744
    %v3755 = vmul.f32 %v3741, %v1744
    %v3756 = vmul.f32 %v3744, %v1744
    %v3757 = vmul.f32 %v3747, %v1744
    %v3758 = vmul.f32 %v3750, %v1744
    %v3759 = vadd.f32 %v3751, 1e-05
    %v3760 = vadd.f32 %v3752, 1e-05
    %v3761 = vadd.f32 %v3753, 1e-05
    %v3762 = vadd.f32 %v3754, 1e-05
    %v3763 = vadd.f32 %v3755, 1e-05
    %v3764 = vadd.f32 %v3756, 1e-05
    %v3765 = vadd.f32 %v3757, 1e-05
    %v3766 = vadd.f32 %v3758, 1e-05
    %v3767 = vrsqrt.pop %v3759
    %v3768 = vmul.f32 %v3767, %v3759
    %v3769 = vmul.f32 %v3768, %v3767
    %v3770 = vmul.f32 0.5, %v3769
    %v3771 = vsub.f32 1.5, %v3770
    %v3772 = vmul.f32 %v3767, %v3771
    %vm3773 = vweird.f32 %v3759
    %vm3774 = vweird.f32 %v3767
    %vm3775 = vmor %vm3773, %vm3774
    %v3776 = vsel %vm3775, %v3767, %v3772
    %v3777 = vrsqrt.pop %v3760
    %v3778 = vmul.f32 %v3777, %v3760
    %v3779 = vmul.f32 %v3778, %v3777
    %v3780 = vmul.f32 0.5, %v3779
    %v3781 = vsub.f32 1.5, %v3780
    %v3782 = vmul.f32 %v3777, %v3781
    %vm3783 = vweird.f32 %v3760
    %vm3784 = vweird.f32 %v3777
    %vm3785 = vmor %vm3783, %vm3784
    %v3786 = vsel %vm3785, %v3777, %v3782
    %v3787 = vrsqrt.pop %v3761
    %v3788 = vmul.f32 %v3787, %v3761
    %v3789 = vmul.f32 %v3788, %v3787
    %v3790 = vmul.f32 0.5, %v3789
    %v3791 = vsub.f32 1.5, %v3790
    %v3792 = vmul.f32 %v3787, %v3791
    %vm3793 = vweird.f32 %v3761
    %vm3794 = vweird.f32 %v3787
    %vm3795 = vmor %vm3793, %vm3794
    %v3796 = vsel %vm3795, %v3787, %v3792
    %v3797 = vrsqrt.pop %v3762
    %v3798 = vmul.f32 %v3797, %v3762
    %v3799 = vmul.f32 %v3798, %v3797
    %v3800 = vmul.f32 0.5, %v3799
    %v3801 = vsub.f32 1.5, %v3800
    %v3802 = vmul.f32 %v3797, %v3801
    %vm3803 = vweird.f32 %v3762
    %vm3804 = vweird.f32 %v3797
    %vm3805 = vmor %vm3803, %vm3804
    %v3806 = vsel %vm3805, %v3797, %v3802
    %v3807 = vrsqrt.pop %v3763
    %v3808 = vmul.f32 %v3807, %v3763
    %v3809 = vmul.f32 %v3808, %v3807
    %v3810 = vmul.f32 0.5, %v3809
    %v3811 = vsub.f32 1.5, %v3810
    %v3812 = vmul.f32 %v3807, %v3811
    %vm3813 = vweird.f32 %v3763
    %vm3814 = vweird.f32 %v3807
    %vm3815 = vmor %vm3813, %vm3814
    %v3816 = vsel %vm3815, %v3807, %v3812
    %v3817 = vrsqrt.pop %v3764
    %v3818 = vmul.f32 %v3817, %v3764
    %v3819 = vmul.f32 %v3818, %v3817
    %v3820 = vmul.f32 0.5, %v3819
    %v3821 = vsub.f32 1.5, %v3820
    %v3822 = vmul.f32 %v3817, %v3821
    %vm3823 = vweird.f32 %v3764
    %vm3824 = vweird.f32 %v3817
    %vm3825 = vmor %vm3823, %vm3824
    %v3826 = vsel %vm3825, %v3817, %v3822
    %v3827 = vrsqrt.pop %v3765
    %v3828 = vmul.f32 %v3827, %v3765
    %v3829 = vmul.f32 %v3828, %v3827
    %v3830 = vmul.f32 0.5, %v3829
    %v3831 = vsub.f32 1.5, %v3830
    %v3832 = vmul.f32 %v3827, %v3831
    %vm3833 = vweird.f32 %v3765
    %vm3834 = vweird.f32 %v3827
    %vm3835 = vmor %vm3833, %vm3834
    %v3836 = vsel %vm3835, %v3827, %v3832
    %v3837 = vrsqrt.pop %v3766
    %v3838 = vmul.f32 %v3837, %v3766
    %v3839 = vmul.f32 %v3838, %v3837
    %v3840 = vmul.f32 0.5, %v3839
    %v3841 = vsub.f32 1.5, %v3840
    %v3842 = vmul.f32 %v3837, %v3841
    %vm3843 = vweird.f32 %v3766
    %vm3844 = vweird.f32 %v3837
    %vm3845 = vmor %vm3843, %vm3844
    %v3846 = vsel %vm3845, %v3837, %v3842
    %v3847 = vmul.f32 %v3711, %v3776
    %v3848 = vmul.f32 %v3712, %v3786
    %v3849 = vmul.f32 %v3713, %v3796
    %v3850 = vmul.f32 %v3714, %v3806
    %v3851 = vmul.f32 %v3715, %v3816
    %v3852 = vmul.f32 %v3716, %v3826
    %v3853 = vmul.f32 %v3717, %v3836
    %v3854 = vmul.f32 %v3718, %v3846
    %v3855 = vperm.slane %v3678, 0
    %v3856 = vmul.f32 %v3847, %v3855
    %v3857 = vmul.f32 %v3848, %v3855
    %v3858 = vmul.f32 %v3849, %v3855
    %v3859 = vmul.f32 %v3850, %v3855
    %v3860 = vmul.f32 %v3851, %v3855
    %v3861 = vmul.f32 %v3852, %v3855
    %v3862 = vmul.f32 %v3853, %v3855
    %v3863 = vmul.f32 %v3854, %v3855
    %v3864 = vperm.slane %v3678, 1
    %v3865 = vadd.f32 %v3856, %v3864
    %v3866 = vadd.f32 %v3857, %v3864
    %v3867 = vadd.f32 %v3858, %v3864
    %v3868 = vadd.f32 %v3859, %v3864
    %v3869 = vadd.f32 %v3860, %v3864
    %v3870 = vadd.f32 %v3861, %v3864
    %v3871 = vadd.f32 %v3862, %v3864
    %v3872 = vadd.f32 %v3863, %v3864
    %s3873 = scalar_lea.vmem %s21, 64
    %v3874 = vld [vmem:[%s3873] sm:$0xff]
    %v3875 = vld [vmem:[%s3873 + $0x8] sm:$0xff]
    %v3876 = vld [vmem:[%s3873 + $0x10] sm:$0xff]
    %v3877 = vld [vmem:[%s3873 + $0x18] sm:$0xff]
    %v3878 = vld [vmem:[%s3873 + $0x20] sm:$0xff]
    %v3879 = vld [vmem:[%s3873 + $0x28] sm:$0xff]
    %v3880 = vld [vmem:[%s3873 + $0x30] sm:$0xff]
    %v3881 = vld [vmem:[%s3873 + $0x38] sm:$0xff]
    %v3882 = vpack.c.bf16 %v3866, %v3865
    %v3883 = vpack.c.bf16 %v3868, %v3867
    %v3884 = vpack.c.bf16 %v3870, %v3869
    %v3885 = vpack.c.bf16 %v3872, %v3871
    %v3894 = vunpack.c.l.b16 %v3874
    %v3895 = vunpack.c.h.b16 %v3874
    %v3896 = vunpack.c.l.b16 %v3875
    %v3897 = vunpack.c.h.b16 %v3875
    %v3898 = vunpack.c.l.b16 %v3876
    %v3899 = vunpack.c.h.b16 %v3876
    %v3900 = vunpack.c.l.b16 %v3877
    %v3901 = vunpack.c.h.b16 %v3877
    %v3902 = vunpack.c.l.b16 %v3878
    %v3903 = vunpack.c.h.b16 %v3878
    %v3904 = vunpack.c.l.b16 %v3879
    %v3905 = vunpack.c.h.b16 %v3879
    %v3906 = vunpack.c.l.b16 %v3880
    %v3907 = vunpack.c.h.b16 %v3880
    %v3908 = vunpack.c.l.b16 %v3881
    %v3909 = vunpack.c.h.b16 %v3881
    %v3910 = vpack.c.b16 %v3896, %v3894
    %v3911 = vpack.c.b16 %v3897, %v3895
    %v3912 = vpack.c.b16 %v3900, %v3898
    %v3913 = vpack.c.b16 %v3901, %v3899
    %v3914 = vpack.c.b16 %v3904, %v3902
    %v3915 = vpack.c.b16 %v3905, %v3903
    %v3916 = vpack.c.b16 %v3908, %v3906
    %v3917 = vpack.c.b16 %v3909, %v3907
    %v3927 = vsel %vm1713, %v3882, 0
    %v3930 = vsel %vm1713, %v3883, 0
    %v3933 = vsel %vm1713, %v3884, 0
    %v3936 = vsel %vm1713, %v3885, 0
    %3938 = vmatpush.bf16.msra.mxu0 0
    %3939 = vmatpush.bf16.msra.mxu0 0
    %3940 = vmatpush.bf16.msra.mxu0 0
    %3941 = vmatpush.bf16.msra.mxu0 0
    %3942 = vmatpush.bf16.msra.mxu0 %v3916
    %3943 = vmatpush.bf16.msra.mxu0 %v3914
    %3944 = vmatpush.bf16.msra.mxu0 %v3912
    %3945 = vmatpush.bf16.msra.mxu0 %v3910
    %3946 = vmatmul.bf16.gmra.mxu0 %v3927
    %v3947 = vpop.f32.mrf.mxu0
    %v3948 = vadd.f32 0.0, %v3947
    %v3949 = vpop.f32.mrf.mxu0
    %v3950 = vadd.f32 0.0, %v3949
    %3951 = vmatmul.bf16.gmra.mxu0 %v3930
    %v3952 = vpop.f32.mrf.mxu0
    %v3953 = vadd.f32 0.0, %v3952
    %v3954 = vpop.f32.mrf.mxu0
    %v3955 = vadd.f32 0.0, %v3954
    %3956 = vmatmul.bf16.gmra.mxu0 %v3933
    %v3957 = vpop.f32.mrf.mxu0
    %v3958 = vadd.f32 0.0, %v3957
    %v3959 = vpop.f32.mrf.mxu0
    %v3960 = vadd.f32 0.0, %v3959
    %3961 = vmatmul.bf16.gmra.mxu0 %v3936
    %v3962 = vpop.f32.mrf.mxu0
    %v3963 = vadd.f32 0.0, %v3962
    %v3964 = vpop.f32.mrf.mxu0
    %v3965 = vadd.f32 0.0, %v3964
    %3966 = vdwg.mxu0
    %3967 = vmatpush.bf16.msra.mxu0 0
    %3968 = vmatpush.bf16.msra.mxu0 0
    %3969 = vmatpush.bf16.msra.mxu0 0
    %3970 = vmatpush.bf16.msra.mxu0 0
    %3971 = vmatpush.bf16.msra.mxu0 %v3917
    %3972 = vmatpush.bf16.msra.mxu0 %v3915
    %3973 = vmatpush.bf16.msra.mxu0 %v3913
    %3974 = vmatpush.bf16.msra.mxu0 %v3911
    %3975 = vmatmul.bf16.gmra.mxu0 %v3927
    %v3976 = vpop.f32.mrf.mxu0
    %v3977 = vadd.f32 0.0, %v3976
    %v3978 = vpop.f32.mrf.mxu0
    %v3979 = vadd.f32 0.0, %v3978
    %3980 = vmatmul.bf16.gmra.mxu0 %v3930
    %v3981 = vpop.f32.mrf.mxu0
    %v3982 = vadd.f32 0.0, %v3981
    %v3983 = vpop.f32.mrf.mxu0
    %v3984 = vadd.f32 0.0, %v3983
    %3985 = vmatmul.bf16.gmra.mxu0 %v3933
    %v3986 = vpop.f32.mrf.mxu0
    %v3987 = vadd.f32 0.0, %v3986
    %v3988 = vpop.f32.mrf.mxu0
    %v3989 = vadd.f32 0.0, %v3988
    %3990 = vmatmul.bf16.gmra.mxu0 %v3936
    %v3991 = vpop.f32.mrf.mxu0
    %v3992 = vadd.f32 0.0, %v3991
    %v3993 = vpop.f32.mrf.mxu0
    %v3994 = vadd.f32 0.0, %v3993
    %3995 = vdwg.mxu0
    %s3996 = scalar_lea.vmem %s23, 32
    %v3997 = vld [vmem:[%s3996] sm:$0xf]
    %v3998 = vld [vmem:[%s3996 + $0x4] sm:$0xf]
    %v3999 = vld [vmem:[%s3996 + $0x8] sm:$0xf]
    %v4000 = vld [vmem:[%s3996 + $0xc] sm:$0xf]
    %v4001 = vld [vmem:[%s3996 + $0x10] sm:$0xf]
    %v4002 = vld [vmem:[%s3996 + $0x14] sm:$0xf]
    %v4003 = vld [vmem:[%s3996 + $0x18] sm:$0xf]
    %v4004 = vld [vmem:[%s3996 + $0x1c] sm:$0xf]
    %s4005 = scalar_lea.vmem %s25, 1
    %v4006 = vld [vmem:[%s4005] sm:$0x1]
    %4008 = vrot.lane.b32.xlu0 %v3948, 64
    %v4009 = vpop.permute.xlu0 %4008
    %v4010 = vsel %vm2049, %v3948, 0
    %v4012 = vsel %vm2049, %v4009, 0
    %4014 = vmatpush.xpose.msra.mxu0 0.0
    %4015 = vmatpush.xpose.msra.mxu0 0.0
    %4016 = vmatpush.xpose.msra.mxu0 0.0
    %4017 = vmatpush.xpose.msra.mxu0 0.0
    %4018 = vmatpush.xpose.msra.mxu0 0.0
    %4019 = vmatpush.xpose.msra.mxu0 0.0
    %4020 = vmatpush.xpose.msra.mxu0 0.0
    %4021 = vmatpush.xpose.msra.mxu0 0.0
    %4022 = vmatpush.xpose.msra.mxu0 0.0
    %4023 = vmatpush.xpose.msra.mxu0 0.0
    %4024 = vmatpush.xpose.msra.mxu0 0.0
    %4025 = vmatpush.xpose.msra.mxu0 0.0
    %4026 = vmatpush.xpose.msra.mxu0 0.0
    %4027 = vmatpush.xpose.msra.mxu0 0.0
    %4028 = vmatpush.xpose.msra.mxu0 0.0
    %4029 = vmatpush.xpose.msra.mxu0 %v4012
    %4030 = vmatmul.f32.gmra.mxu0 %v4010
    %v4031 = vpop.f32.mrf.mxu0
    %v4032 = vadd.f32 0.0, %v4031
    %4033 = vdwg.mxu0
    %4035 = vrot.lane.b32.xlu0 %v3950, 64
    %v4036 = vpop.permute.xlu0 %4035
    %v4037 = vsel %vm2049, %v3950, 0
    %v4039 = vsel %vm2049, %v4036, 0
    %4041 = vmatpush.xpose.msra.mxu0 0.0
    %4042 = vmatpush.xpose.msra.mxu0 0.0
    %4043 = vmatpush.xpose.msra.mxu0 0.0
    %4044 = vmatpush.xpose.msra.mxu0 0.0
    %4045 = vmatpush.xpose.msra.mxu0 0.0
    %4046 = vmatpush.xpose.msra.mxu0 0.0
    %4047 = vmatpush.xpose.msra.mxu0 0.0
    %4048 = vmatpush.xpose.msra.mxu0 0.0
    %4049 = vmatpush.xpose.msra.mxu0 0.0
    %4050 = vmatpush.xpose.msra.mxu0 0.0
    %4051 = vmatpush.xpose.msra.mxu0 0.0
    %4052 = vmatpush.xpose.msra.mxu0 0.0
    %4053 = vmatpush.xpose.msra.mxu0 0.0
    %4054 = vmatpush.xpose.msra.mxu0 0.0
    %4055 = vmatpush.xpose.msra.mxu0 0.0
    %4056 = vmatpush.xpose.msra.mxu0 %v4039
    %4057 = vmatmul.f32.gmra.mxu0 %v4037
    %v4058 = vpop.f32.mrf.mxu0
    %v4059 = vadd.f32 0.0, %v4058
    %4060 = vdwg.mxu0
    %4062 = vrot.lane.b32.xlu0 %v3953, 64
    %v4063 = vpop.permute.xlu0 %4062
    %v4064 = vsel %vm2049, %v3953, 0
    %v4066 = vsel %vm2049, %v4063, 0
    %4068 = vmatpush.xpose.msra.mxu0 0.0
    %4069 = vmatpush.xpose.msra.mxu0 0.0
    %4070 = vmatpush.xpose.msra.mxu0 0.0
    %4071 = vmatpush.xpose.msra.mxu0 0.0
    %4072 = vmatpush.xpose.msra.mxu0 0.0
    %4073 = vmatpush.xpose.msra.mxu0 0.0
    %4074 = vmatpush.xpose.msra.mxu0 0.0
    %4075 = vmatpush.xpose.msra.mxu0 0.0
    %4076 = vmatpush.xpose.msra.mxu0 0.0
    %4077 = vmatpush.xpose.msra.mxu0 0.0
    %4078 = vmatpush.xpose.msra.mxu0 0.0
    %4079 = vmatpush.xpose.msra.mxu0 0.0
    %4080 = vmatpush.xpose.msra.mxu0 0.0
    %4081 = vmatpush.xpose.msra.mxu0 0.0
    %4082 = vmatpush.xpose.msra.mxu0 0.0
    %4083 = vmatpush.xpose.msra.mxu0 %v4066
    %4084 = vmatmul.f32.gmra.mxu0 %v4064
    %v4085 = vpop.f32.mrf.mxu0
    %v4086 = vadd.f32 0.0, %v4085
    %4087 = vdwg.mxu0
    %4089 = vrot.lane.b32.xlu0 %v3955, 64
    %v4090 = vpop.permute.xlu0 %4089
    %v4091 = vsel %vm2049, %v3955, 0
    %v4093 = vsel %vm2049, %v4090, 0
    %4095 = vmatpush.xpose.msra.mxu0 0.0
    %4096 = vmatpush.xpose.msra.mxu0 0.0
    %4097 = vmatpush.xpose.msra.mxu0 0.0
    %4098 = vmatpush.xpose.msra.mxu0 0.0
    %4099 = vmatpush.xpose.msra.mxu0 0.0
    %4100 = vmatpush.xpose.msra.mxu0 0.0
    %4101 = vmatpush.xpose.msra.mxu0 0.0
    %4102 = vmatpush.xpose.msra.mxu0 0.0
    %4103 = vmatpush.xpose.msra.mxu0 0.0
    %4104 = vmatpush.xpose.msra.mxu0 0.0
    %4105 = vmatpush.xpose.msra.mxu0 0.0
    %4106 = vmatpush.xpose.msra.mxu0 0.0
    %4107 = vmatpush.xpose.msra.mxu0 0.0
    %4108 = vmatpush.xpose.msra.mxu0 0.0
    %4109 = vmatpush.xpose.msra.mxu0 0.0
    %4110 = vmatpush.xpose.msra.mxu0 %v4093
    %4111 = vmatmul.f32.gmra.mxu0 %v4091
    %v4112 = vpop.f32.mrf.mxu0
    %v4113 = vadd.f32 0.0, %v4112
    %4114 = vdwg.mxu0
    %4116 = vrot.lane.b32.xlu0 %v3958, 64
    %v4117 = vpop.permute.xlu0 %4116
    %v4118 = vsel %vm2049, %v3958, 0
    %v4120 = vsel %vm2049, %v4117, 0
    %4122 = vmatpush.xpose.msra.mxu0 0.0
    %4123 = vmatpush.xpose.msra.mxu0 0.0
    %4124 = vmatpush.xpose.msra.mxu0 0.0
    %4125 = vmatpush.xpose.msra.mxu0 0.0
    %4126 = vmatpush.xpose.msra.mxu0 0.0
    %4127 = vmatpush.xpose.msra.mxu0 0.0
    %4128 = vmatpush.xpose.msra.mxu0 0.0
    %4129 = vmatpush.xpose.msra.mxu0 0.0
    %4130 = vmatpush.xpose.msra.mxu0 0.0
    %4131 = vmatpush.xpose.msra.mxu0 0.0
    %4132 = vmatpush.xpose.msra.mxu0 0.0
    %4133 = vmatpush.xpose.msra.mxu0 0.0
    %4134 = vmatpush.xpose.msra.mxu0 0.0
    %4135 = vmatpush.xpose.msra.mxu0 0.0
    %4136 = vmatpush.xpose.msra.mxu0 0.0
    %4137 = vmatpush.xpose.msra.mxu0 %v4120
    %4138 = vmatmul.f32.gmra.mxu0 %v4118
    %v4139 = vpop.f32.mrf.mxu0
    %v4140 = vadd.f32 0.0, %v4139
    %4141 = vdwg.mxu0
    %4143 = vrot.lane.b32.xlu0 %v3960, 64
    %v4144 = vpop.permute.xlu0 %4143
    %v4145 = vsel %vm2049, %v3960, 0
    %v4147 = vsel %vm2049, %v4144, 0
    %4149 = vmatpush.xpose.msra.mxu0 0.0
    %4150 = vmatpush.xpose.msra.mxu0 0.0
    %4151 = vmatpush.xpose.msra.mxu0 0.0
    %4152 = vmatpush.xpose.msra.mxu0 0.0
    %4153 = vmatpush.xpose.msra.mxu0 0.0
    %4154 = vmatpush.xpose.msra.mxu0 0.0
    %4155 = vmatpush.xpose.msra.mxu0 0.0
    %4156 = vmatpush.xpose.msra.mxu0 0.0
    %4157 = vmatpush.xpose.msra.mxu0 0.0
    %4158 = vmatpush.xpose.msra.mxu0 0.0
    %4159 = vmatpush.xpose.msra.mxu0 0.0
    %4160 = vmatpush.xpose.msra.mxu0 0.0
    %4161 = vmatpush.xpose.msra.mxu0 0.0
    %4162 = vmatpush.xpose.msra.mxu0 0.0
    %4163 = vmatpush.xpose.msra.mxu0 0.0
    %4164 = vmatpush.xpose.msra.mxu0 %v4147
    %4165 = vmatmul.f32.gmra.mxu0 %v4145
    %v4166 = vpop.f32.mrf.mxu0
    %v4167 = vadd.f32 0.0, %v4166
    %4168 = vdwg.mxu0
    %4170 = vrot.lane.b32.xlu0 %v3963, 64
    %v4171 = vpop.permute.xlu0 %4170
    %v4172 = vsel %vm2049, %v3963, 0
    %v4174 = vsel %vm2049, %v4171, 0
    %4176 = vmatpush.xpose.msra.mxu0 0.0
    %4177 = vmatpush.xpose.msra.mxu0 0.0
    %4178 = vmatpush.xpose.msra.mxu0 0.0
    %4179 = vmatpush.xpose.msra.mxu0 0.0
    %4180 = vmatpush.xpose.msra.mxu0 0.0
    %4181 = vmatpush.xpose.msra.mxu0 0.0
    %4182 = vmatpush.xpose.msra.mxu0 0.0
    %4183 = vmatpush.xpose.msra.mxu0 0.0
    %4184 = vmatpush.xpose.msra.mxu0 0.0
    %4185 = vmatpush.xpose.msra.mxu0 0.0
    %4186 = vmatpush.xpose.msra.mxu0 0.0
    %4187 = vmatpush.xpose.msra.mxu0 0.0
    %4188 = vmatpush.xpose.msra.mxu0 0.0
    %4189 = vmatpush.xpose.msra.mxu0 0.0
    %4190 = vmatpush.xpose.msra.mxu0 0.0
    %4191 = vmatpush.xpose.msra.mxu0 %v4174
    %4192 = vmatmul.f32.gmra.mxu0 %v4172
    %v4193 = vpop.f32.mrf.mxu0
    %v4194 = vadd.f32 0.0, %v4193
    %4195 = vdwg.mxu0
    %4197 = vrot.lane.b32.xlu0 %v3965, 64
    %v4198 = vpop.permute.xlu0 %4197
    %v4199 = vsel %vm2049, %v3965, 0
    %v4201 = vsel %vm2049, %v4198, 0
    %4203 = vmatpush.xpose.msra.mxu0 0.0
    %4204 = vmatpush.xpose.msra.mxu0 0.0
    %4205 = vmatpush.xpose.msra.mxu0 0.0
    %4206 = vmatpush.xpose.msra.mxu0 0.0
    %4207 = vmatpush.xpose.msra.mxu0 0.0
    %4208 = vmatpush.xpose.msra.mxu0 0.0
    %4209 = vmatpush.xpose.msra.mxu0 0.0
    %4210 = vmatpush.xpose.msra.mxu0 0.0
    %4211 = vmatpush.xpose.msra.mxu0 0.0
    %4212 = vmatpush.xpose.msra.mxu0 0.0
    %4213 = vmatpush.xpose.msra.mxu0 0.0
    %4214 = vmatpush.xpose.msra.mxu0 0.0
    %4215 = vmatpush.xpose.msra.mxu0 0.0
    %4216 = vmatpush.xpose.msra.mxu0 0.0
    %4217 = vmatpush.xpose.msra.mxu0 0.0
    %4218 = vmatpush.xpose.msra.mxu0 %v4201
    %4219 = vmatmul.f32.gmra.mxu0 %v4199
    %v4220 = vpop.f32.mrf.mxu0
    %v4221 = vadd.f32 0.0, %v4220
    %4222 = vdwg.mxu0
    %v4223 = vmul.f32 %v4032, 0.17677669
    %v4224 = vmul.f32 %v4059, 0.17677669
    %v4225 = vmul.f32 %v4086, 0.17677669
    %v4226 = vmul.f32 %v4113, 0.17677669
    %v4227 = vmul.f32 %v4140, 0.17677669
    %v4228 = vmul.f32 %v4167, 0.17677669
    %v4229 = vmul.f32 %v4194, 0.17677669
    %v4230 = vmul.f32 %v4221, 0.17677669
    %v4231 = vsel %vm2271, %v4223, -inf
    %4232 = vmax.xlane.f32.xlu0 %v4231
    %v4233 = vpop.xlane.xlu0 %4232
    %v4234 = vsel %vm2271, %v4224, -inf
    %4235 = vmax.xlane.f32.xlu0 %v4234
    %v4236 = vpop.xlane.xlu0 %4235
    %v4237 = vsel %vm2271, %v4225, -inf
    %4238 = vmax.xlane.f32.xlu0 %v4237
    %v4239 = vpop.xlane.xlu0 %4238
    %v4240 = vsel %vm2271, %v4226, -inf
    %4241 = vmax.xlane.f32.xlu0 %v4240
    %v4242 = vpop.xlane.xlu0 %4241
    %v4243 = vsel %vm2271, %v4227, -inf
    %4244 = vmax.xlane.f32.xlu0 %v4243
    %v4245 = vpop.xlane.xlu0 %4244
    %v4246 = vsel %vm2271, %v4228, -inf
    %4247 = vmax.xlane.f32.xlu0 %v4246
    %v4248 = vpop.xlane.xlu0 %4247
    %v4249 = vsel %vm2271, %v4229, -inf
    %4250 = vmax.xlane.f32.xlu0 %v4249
    %v4251 = vpop.xlane.xlu0 %4250
    %v4252 = vsel %vm2271, %v4230, -inf
    %4253 = vmax.xlane.f32.xlu0 %v4252
    %v4254 = vpop.xlane.xlu0 %4253
    %v4255 = vsub.f32 %v4223, %v4233
    %v4256 = vsub.f32 %v4224, %v4236
    %v4257 = vsub.f32 %v4225, %v4239
    %v4258 = vsub.f32 %v4226, %v4242
    %v4259 = vsub.f32 %v4227, %v4245
    %v4260 = vsub.f32 %v4228, %v4248
    %v4261 = vsub.f32 %v4229, %v4251
    %v4262 = vsub.f32 %v4230, %v4254
    %v4263 = vmul.f32 %v4255, 1.442695
    %v4264 = vpow.pop %v4263
    %v4265 = vmul.f32 %v4256, 1.442695
    %v4266 = vpow.pop %v4265
    %v4267 = vmul.f32 %v4257, 1.442695
    %v4268 = vpow.pop %v4267
    %v4269 = vmul.f32 %v4258, 1.442695
    %v4270 = vpow.pop %v4269
    %v4271 = vmul.f32 %v4259, 1.442695
    %v4272 = vpow.pop %v4271
    %v4273 = vmul.f32 %v4260, 1.442695
    %v4274 = vpow.pop %v4273
    %v4275 = vmul.f32 %v4261, 1.442695
    %v4276 = vpow.pop %v4275
    %v4277 = vmul.f32 %v4262, 1.442695
    %v4278 = vpow.pop %v4277
    %v4279 = vsel %vm2271, %v4264, 0.0
    %4280 = vadd.xlane.f32.xlu0 %v4279
    %v4281 = vpop.xlane.xlu0 %4280
    %v4282 = vsel %vm2271, %v4266, 0.0
    %4283 = vadd.xlane.f32.xlu0 %v4282
    %v4284 = vpop.xlane.xlu0 %4283
    %v4285 = vsel %vm2271, %v4268, 0.0
    %4286 = vadd.xlane.f32.xlu0 %v4285
    %v4287 = vpop.xlane.xlu0 %4286
    %v4288 = vsel %vm2271, %v4270, 0.0
    %4289 = vadd.xlane.f32.xlu0 %v4288
    %v4290 = vpop.xlane.xlu0 %4289
    %v4291 = vsel %vm2271, %v4272, 0.0
    %4292 = vadd.xlane.f32.xlu0 %v4291
    %v4293 = vpop.xlane.xlu0 %4292
    %v4294 = vsel %vm2271, %v4274, 0.0
    %4295 = vadd.xlane.f32.xlu0 %v4294
    %v4296 = vpop.xlane.xlu0 %4295
    %v4297 = vsel %vm2271, %v4276, 0.0
    %4298 = vadd.xlane.f32.xlu0 %v4297
    %v4299 = vpop.xlane.xlu0 %4298
    %v4300 = vsel %vm2271, %v4278, 0.0
    %4301 = vadd.xlane.f32.xlu0 %v4300
    %v4302 = vpop.xlane.xlu0 %4301
    %v4303 = vrcp.pop %v4281
    %v4304 = vrcp.pop %v4284
    %v4305 = vrcp.pop %v4287
    %v4306 = vrcp.pop %v4290
    %v4307 = vrcp.pop %v4293
    %v4308 = vrcp.pop %v4296
    %v4309 = vrcp.pop %v4299
    %v4310 = vrcp.pop %v4302
    %v4311 = vmul.f32 %v4264, %v4303
    %v4312 = vmul.f32 %v4266, %v4304
    %v4313 = vmul.f32 %v4268, %v4305
    %v4314 = vmul.f32 %v4270, %v4306
    %v4315 = vmul.f32 %v4272, %v4307
    %v4316 = vmul.f32 %v4274, %v4308
    %v4317 = vmul.f32 %v4276, %v4309
    %v4318 = vmul.f32 %v4278, %v4310
    %v4320 = vsel %vm2271, %v4311, 0
    %4322 = vmatpush.msra.mxu0 0.0
    %4323 = vmatpush.msra.mxu0 0.0
    %4324 = vmatpush.msra.mxu0 0.0
    %4325 = vmatpush.msra.mxu0 0.0
    %4326 = vmatpush.msra.mxu0 0.0
    %4327 = vmatpush.msra.mxu0 0.0
    %4328 = vmatpush.msra.mxu0 0.0
    %4329 = vmatpush.msra.mxu0 0.0
    %4330 = vmatpush.msra.mxu0 0.0
    %4331 = vmatpush.msra.mxu0 0.0
    %4332 = vmatpush.msra.mxu0 0.0
    %4333 = vmatpush.msra.mxu0 0.0
    %4334 = vmatpush.msra.mxu0 0.0
    %4335 = vmatpush.msra.mxu0 0.0
    %4336 = vmatpush.msra.mxu0 0.0
    %4337 = vmatpush.msra.mxu0 %v3977
    %4338 = vmatmul.f32.gmra.mxu0 %v4320
    %v4339 = vpop.f32.mrf.mxu0
    %v4340 = vadd.f32 0.0, %v4339
    %4341 = vdwg.mxu0
    %v4343 = vsel %vm2271, %v4312, 0
    %4345 = vmatpush.msra.mxu0 0.0
    %4346 = vmatpush.msra.mxu0 0.0
    %4347 = vmatpush.msra.mxu0 0.0
    %4348 = vmatpush.msra.mxu0 0.0
    %4349 = vmatpush.msra.mxu0 0.0
    %4350 = vmatpush.msra.mxu0 0.0
    %4351 = vmatpush.msra.mxu0 0.0
    %4352 = vmatpush.msra.mxu0 0.0
    %4353 = vmatpush.msra.mxu0 0.0
    %4354 = vmatpush.msra.mxu0 0.0
    %4355 = vmatpush.msra.mxu0 0.0
    %4356 = vmatpush.msra.mxu0 0.0
    %4357 = vmatpush.msra.mxu0 0.0
    %4358 = vmatpush.msra.mxu0 0.0
    %4359 = vmatpush.msra.mxu0 0.0
    %4360 = vmatpush.msra.mxu0 %v3979
    %4361 = vmatmul.f32.gmra.mxu0 %v4343
    %v4362 = vpop.f32.mrf.mxu0
    %v4363 = vadd.f32 0.0, %v4362
    %4364 = vdwg.mxu0
    %v4366 = vsel %vm2271, %v4313, 0
    %4368 = vmatpush.msra.mxu0 0.0
    %4369 = vmatpush.msra.mxu0 0.0
    %4370 = vmatpush.msra.mxu0 0.0
    %4371 = vmatpush.msra.mxu0 0.0
    %4372 = vmatpush.msra.mxu0 0.0
    %4373 = vmatpush.msra.mxu0 0.0
    %4374 = vmatpush.msra.mxu0 0.0
    %4375 = vmatpush.msra.mxu0 0.0
    %4376 = vmatpush.msra.mxu0 0.0
    %4377 = vmatpush.msra.mxu0 0.0
    %4378 = vmatpush.msra.mxu0 0.0
    %4379 = vmatpush.msra.mxu0 0.0
    %4380 = vmatpush.msra.mxu0 0.0
    %4381 = vmatpush.msra.mxu0 0.0
    %4382 = vmatpush.msra.mxu0 0.0
    %4383 = vmatpush.msra.mxu0 %v3982
    %4384 = vmatmul.f32.gmra.mxu0 %v4366
    %v4385 = vpop.f32.mrf.mxu0
    %v4386 = vadd.f32 0.0, %v4385
    %4387 = vdwg.mxu0
    %v4389 = vsel %vm2271, %v4314, 0
    %4391 = vmatpush.msra.mxu0 0.0
    %4392 = vmatpush.msra.mxu0 0.0
    %4393 = vmatpush.msra.mxu0 0.0
    %4394 = vmatpush.msra.mxu0 0.0
    %4395 = vmatpush.msra.mxu0 0.0
    %4396 = vmatpush.msra.mxu0 0.0
    %4397 = vmatpush.msra.mxu0 0.0
    %4398 = vmatpush.msra.mxu0 0.0
    %4399 = vmatpush.msra.mxu0 0.0
    %4400 = vmatpush.msra.mxu0 0.0
    %4401 = vmatpush.msra.mxu0 0.0
    %4402 = vmatpush.msra.mxu0 0.0
    %4403 = vmatpush.msra.mxu0 0.0
    %4404 = vmatpush.msra.mxu0 0.0
    %4405 = vmatpush.msra.mxu0 0.0
    %4406 = vmatpush.msra.mxu0 %v3984
    %4407 = vmatmul.f32.gmra.mxu0 %v4389
    %v4408 = vpop.f32.mrf.mxu0
    %v4409 = vadd.f32 0.0, %v4408
    %4410 = vdwg.mxu0
    %v4412 = vsel %vm2271, %v4315, 0
    %4414 = vmatpush.msra.mxu0 0.0
    %4415 = vmatpush.msra.mxu0 0.0
    %4416 = vmatpush.msra.mxu0 0.0
    %4417 = vmatpush.msra.mxu0 0.0
    %4418 = vmatpush.msra.mxu0 0.0
    %4419 = vmatpush.msra.mxu0 0.0
    %4420 = vmatpush.msra.mxu0 0.0
    %4421 = vmatpush.msra.mxu0 0.0
    %4422 = vmatpush.msra.mxu0 0.0
    %4423 = vmatpush.msra.mxu0 0.0
    %4424 = vmatpush.msra.mxu0 0.0
    %4425 = vmatpush.msra.mxu0 0.0
    %4426 = vmatpush.msra.mxu0 0.0
    %4427 = vmatpush.msra.mxu0 0.0
    %4428 = vmatpush.msra.mxu0 0.0
    %4429 = vmatpush.msra.mxu0 %v3987
    %4430 = vmatmul.f32.gmra.mxu0 %v4412
    %v4431 = vpop.f32.mrf.mxu0
    %v4432 = vadd.f32 0.0, %v4431
    %4433 = vdwg.mxu0
    %v4435 = vsel %vm2271, %v4316, 0
    %4437 = vmatpush.msra.mxu0 0.0
    %4438 = vmatpush.msra.mxu0 0.0
    %4439 = vmatpush.msra.mxu0 0.0
    %4440 = vmatpush.msra.mxu0 0.0
    %4441 = vmatpush.msra.mxu0 0.0
    %4442 = vmatpush.msra.mxu0 0.0
    %4443 = vmatpush.msra.mxu0 0.0
    %4444 = vmatpush.msra.mxu0 0.0
    %4445 = vmatpush.msra.mxu0 0.0
    %4446 = vmatpush.msra.mxu0 0.0
    %4447 = vmatpush.msra.mxu0 0.0
    %4448 = vmatpush.msra.mxu0 0.0
    %4449 = vmatpush.msra.mxu0 0.0
    %4450 = vmatpush.msra.mxu0 0.0
    %4451 = vmatpush.msra.mxu0 0.0
    %4452 = vmatpush.msra.mxu0 %v3989
    %4453 = vmatmul.f32.gmra.mxu0 %v4435
    %v4454 = vpop.f32.mrf.mxu0
    %v4455 = vadd.f32 0.0, %v4454
    %4456 = vdwg.mxu0
    %v4458 = vsel %vm2271, %v4317, 0
    %4460 = vmatpush.msra.mxu0 0.0
    %4461 = vmatpush.msra.mxu0 0.0
    %4462 = vmatpush.msra.mxu0 0.0
    %4463 = vmatpush.msra.mxu0 0.0
    %4464 = vmatpush.msra.mxu0 0.0
    %4465 = vmatpush.msra.mxu0 0.0
    %4466 = vmatpush.msra.mxu0 0.0
    %4467 = vmatpush.msra.mxu0 0.0
    %4468 = vmatpush.msra.mxu0 0.0
    %4469 = vmatpush.msra.mxu0 0.0
    %4470 = vmatpush.msra.mxu0 0.0
    %4471 = vmatpush.msra.mxu0 0.0
    %4472 = vmatpush.msra.mxu0 0.0
    %4473 = vmatpush.msra.mxu0 0.0
    %4474 = vmatpush.msra.mxu0 0.0
    %4475 = vmatpush.msra.mxu0 %v3992
    %4476 = vmatmul.f32.gmra.mxu0 %v4458
    %v4477 = vpop.f32.mrf.mxu0
    %v4478 = vadd.f32 0.0, %v4477
    %4479 = vdwg.mxu0
    %v4481 = vsel %vm2271, %v4318, 0
    %4483 = vmatpush.msra.mxu0 0.0
    %4484 = vmatpush.msra.mxu0 0.0
    %4485 = vmatpush.msra.mxu0 0.0
    %4486 = vmatpush.msra.mxu0 0.0
    %4487 = vmatpush.msra.mxu0 0.0
    %4488 = vmatpush.msra.mxu0 0.0
    %4489 = vmatpush.msra.mxu0 0.0
    %4490 = vmatpush.msra.mxu0 0.0
    %4491 = vmatpush.msra.mxu0 0.0
    %4492 = vmatpush.msra.mxu0 0.0
    %4493 = vmatpush.msra.mxu0 0.0
    %4494 = vmatpush.msra.mxu0 0.0
    %4495 = vmatpush.msra.mxu0 0.0
    %4496 = vmatpush.msra.mxu0 0.0
    %4497 = vmatpush.msra.mxu0 0.0
    %4498 = vmatpush.msra.mxu0 %v3994
    %4499 = vmatmul.f32.gmra.mxu0 %v4481
    %v4500 = vpop.f32.mrf.mxu0
    %v4501 = vadd.f32 0.0, %v4500
    %4502 = vdwg.mxu0
    %v4503 = vpack.c.bf16 %v4363, %v4340
    %v4504 = vpack.c.bf16 %v4409, %v4386
    %v4505 = vpack.c.bf16 %v4455, %v4432
    %v4506 = vpack.c.bf16 %v4501, %v4478
    %v4511 = vunpack.c.l.b16 %v3997
    %v4512 = vunpack.c.l.b16 %v3998
    %v4513 = vunpack.c.l.b16 %v3999
    %v4514 = vunpack.c.l.b16 %v4000
    %v4515 = vpack.c.b16 %v4512, %v4511
    %v4516 = vpack.c.b16 %v4514, %v4513
    %v4520 = vsel %vm2049, %v4503, 0
    %v4523 = vsel %vm2049, %v4504, 0
    %v4526 = vsel %vm2049, %v4505, 0
    %v4529 = vsel %vm2049, %v4506, 0
    %4531 = vmatpush.bf16.msra.mxu0 0
    %4532 = vmatpush.bf16.msra.mxu0 0
    %4533 = vmatpush.bf16.msra.mxu0 0
    %4534 = vmatpush.bf16.msra.mxu0 0
    %4535 = vmatpush.bf16.msra.mxu0 0
    %4536 = vmatpush.bf16.msra.mxu0 0
    %4537 = vmatpush.bf16.msra.mxu0 %v4516
    %4538 = vmatpush.bf16.msra.mxu0 %v4515
    %4539 = vmatmul.bf16.gmra.mxu0 %v4520
    %v4540 = vpop.f32.mrf.mxu0
    %v4541 = vadd.f32 0.0, %v4540
    %v4542 = vpop.f32.mrf.mxu0
    %v4543 = vadd.f32 0.0, %v4542
    %4544 = vmatmul.bf16.gmra.mxu0 %v4523
    %v4545 = vpop.f32.mrf.mxu0
    %v4546 = vadd.f32 0.0, %v4545
    %v4547 = vpop.f32.mrf.mxu0
    %v4548 = vadd.f32 0.0, %v4547
    %4549 = vmatmul.bf16.gmra.mxu0 %v4526
    %v4550 = vpop.f32.mrf.mxu0
    %v4551 = vadd.f32 0.0, %v4550
    %v4552 = vpop.f32.mrf.mxu0
    %v4553 = vadd.f32 0.0, %v4552
    %4554 = vmatmul.bf16.gmra.mxu0 %v4529
    %v4555 = vpop.f32.mrf.mxu0
    %v4556 = vadd.f32 0.0, %v4555
    %v4557 = vpop.f32.mrf.mxu0
    %v4558 = vadd.f32 0.0, %v4557
    %4559 = vdwg.mxu0
    %4560 = vrot.lane.b32.xlu0 %v3948, 96
    %v4561 = vpop.permute.xlu0 %4560
    %4562 = vrot.lane.b32.xlu0 %v3948, 32
    %v4563 = vpop.permute.xlu0 %4562
    %v4564 = vsel %vm2049, %v4561, 0
    %v4566 = vsel %vm2049, %v4563, 0
    %4568 = vmatpush.xpose.msra.mxu0 0.0
    %4569 = vmatpush.xpose.msra.mxu0 0.0
    %4570 = vmatpush.xpose.msra.mxu0 0.0
    %4571 = vmatpush.xpose.msra.mxu0 0.0
    %4572 = vmatpush.xpose.msra.mxu0 0.0
    %4573 = vmatpush.xpose.msra.mxu0 0.0
    %4574 = vmatpush.xpose.msra.mxu0 0.0
    %4575 = vmatpush.xpose.msra.mxu0 0.0
    %4576 = vmatpush.xpose.msra.mxu0 0.0
    %4577 = vmatpush.xpose.msra.mxu0 0.0
    %4578 = vmatpush.xpose.msra.mxu0 0.0
    %4579 = vmatpush.xpose.msra.mxu0 0.0
    %4580 = vmatpush.xpose.msra.mxu0 0.0
    %4581 = vmatpush.xpose.msra.mxu0 0.0
    %4582 = vmatpush.xpose.msra.mxu0 0.0
    %4583 = vmatpush.xpose.msra.mxu0 %v4566
    %4584 = vmatmul.f32.gmra.mxu0 %v4564
    %v4585 = vpop.f32.mrf.mxu0
    %v4586 = vadd.f32 0.0, %v4585
    %4587 = vdwg.mxu0
    %4588 = vrot.lane.b32.xlu0 %v3950, 96
    %v4589 = vpop.permute.xlu0 %4588
    %4590 = vrot.lane.b32.xlu0 %v3950, 32
    %v4591 = vpop.permute.xlu0 %4590
    %v4592 = vsel %vm2049, %v4589, 0
    %v4594 = vsel %vm2049, %v4591, 0
    %4596 = vmatpush.xpose.msra.mxu0 0.0
    %4597 = vmatpush.xpose.msra.mxu0 0.0
    %4598 = vmatpush.xpose.msra.mxu0 0.0
    %4599 = vmatpush.xpose.msra.mxu0 0.0
    %4600 = vmatpush.xpose.msra.mxu0 0.0
    %4601 = vmatpush.xpose.msra.mxu0 0.0
    %4602 = vmatpush.xpose.msra.mxu0 0.0
    %4603 = vmatpush.xpose.msra.mxu0 0.0
    %4604 = vmatpush.xpose.msra.mxu0 0.0
    %4605 = vmatpush.xpose.msra.mxu0 0.0
    %4606 = vmatpush.xpose.msra.mxu0 0.0
    %4607 = vmatpush.xpose.msra.mxu0 0.0
    %4608 = vmatpush.xpose.msra.mxu0 0.0
    %4609 = vmatpush.xpose.msra.mxu0 0.0
    %4610 = vmatpush.xpose.msra.mxu0 0.0
    %4611 = vmatpush.xpose.msra.mxu0 %v4594
    %4612 = vmatmul.f32.gmra.mxu0 %v4592
    %v4613 = vpop.f32.mrf.mxu0
    %v4614 = vadd.f32 0.0, %v4613
    %4615 = vdwg.mxu0
    %4616 = vrot.lane.b32.xlu0 %v3953, 96
    %v4617 = vpop.permute.xlu0 %4616
    %4618 = vrot.lane.b32.xlu0 %v3953, 32
    %v4619 = vpop.permute.xlu0 %4618
    %v4620 = vsel %vm2049, %v4617, 0
    %v4622 = vsel %vm2049, %v4619, 0
    %4624 = vmatpush.xpose.msra.mxu0 0.0
    %4625 = vmatpush.xpose.msra.mxu0 0.0
    %4626 = vmatpush.xpose.msra.mxu0 0.0
    %4627 = vmatpush.xpose.msra.mxu0 0.0
    %4628 = vmatpush.xpose.msra.mxu0 0.0
    %4629 = vmatpush.xpose.msra.mxu0 0.0
    %4630 = vmatpush.xpose.msra.mxu0 0.0
    %4631 = vmatpush.xpose.msra.mxu0 0.0
    %4632 = vmatpush.xpose.msra.mxu0 0.0
    %4633 = vmatpush.xpose.msra.mxu0 0.0
    %4634 = vmatpush.xpose.msra.mxu0 0.0
    %4635 = vmatpush.xpose.msra.mxu0 0.0
    %4636 = vmatpush.xpose.msra.mxu0 0.0
    %4637 = vmatpush.xpose.msra.mxu0 0.0
    %4638 = vmatpush.xpose.msra.mxu0 0.0
    %4639 = vmatpush.xpose.msra.mxu0 %v4622
    %4640 = vmatmul.f32.gmra.mxu0 %v4620
    %v4641 = vpop.f32.mrf.mxu0
    %v4642 = vadd.f32 0.0, %v4641
    %4643 = vdwg.mxu0
    %4644 = vrot.lane.b32.xlu0 %v3955, 96
    %v4645 = vpop.permute.xlu0 %4644
    %4646 = vrot.lane.b32.xlu0 %v3955, 32
    %v4647 = vpop.permute.xlu0 %4646
    %v4648 = vsel %vm2049, %v4645, 0
    %v4650 = vsel %vm2049, %v4647, 0
    %4652 = vmatpush.xpose.msra.mxu0 0.0
    %4653 = vmatpush.xpose.msra.mxu0 0.0
    %4654 = vmatpush.xpose.msra.mxu0 0.0
    %4655 = vmatpush.xpose.msra.mxu0 0.0
    %4656 = vmatpush.xpose.msra.mxu0 0.0
    %4657 = vmatpush.xpose.msra.mxu0 0.0
    %4658 = vmatpush.xpose.msra.mxu0 0.0
    %4659 = vmatpush.xpose.msra.mxu0 0.0
    %4660 = vmatpush.xpose.msra.mxu0 0.0
    %4661 = vmatpush.xpose.msra.mxu0 0.0
    %4662 = vmatpush.xpose.msra.mxu0 0.0
    %4663 = vmatpush.xpose.msra.mxu0 0.0
    %4664 = vmatpush.xpose.msra.mxu0 0.0
    %4665 = vmatpush.xpose.msra.mxu0 0.0
    %4666 = vmatpush.xpose.msra.mxu0 0.0
    %4667 = vmatpush.xpose.msra.mxu0 %v4650
    %4668 = vmatmul.f32.gmra.mxu0 %v4648
    %v4669 = vpop.f32.mrf.mxu0
    %v4670 = vadd.f32 0.0, %v4669
    %4671 = vdwg.mxu0
    %4672 = vrot.lane.b32.xlu0 %v3958, 96
    %v4673 = vpop.permute.xlu0 %4672
    %4674 = vrot.lane.b32.xlu0 %v3958, 32
    %v4675 = vpop.permute.xlu0 %4674
    %v4676 = vsel %vm2049, %v4673, 0
    %v4678 = vsel %vm2049, %v4675, 0
    %4680 = vmatpush.xpose.msra.mxu0 0.0
    %4681 = vmatpush.xpose.msra.mxu0 0.0
    %4682 = vmatpush.xpose.msra.mxu0 0.0
    %4683 = vmatpush.xpose.msra.mxu0 0.0
    %4684 = vmatpush.xpose.msra.mxu0 0.0
    %4685 = vmatpush.xpose.msra.mxu0 0.0
    %4686 = vmatpush.xpose.msra.mxu0 0.0
    %4687 = vmatpush.xpose.msra.mxu0 0.0
    %4688 = vmatpush.xpose.msra.mxu0 0.0
    %4689 = vmatpush.xpose.msra.mxu0 0.0
    %4690 = vmatpush.xpose.msra.mxu0 0.0
    %4691 = vmatpush.xpose.msra.mxu0 0.0
    %4692 = vmatpush.xpose.msra.mxu0 0.0
    %4693 = vmatpush.xpose.msra.mxu0 0.0
    %4694 = vmatpush.xpose.msra.mxu0 0.0
    %4695 = vmatpush.xpose.msra.mxu0 %v4678
    %4696 = vmatmul.f32.gmra.mxu0 %v4676
    %v4697 = vpop.f32.mrf.mxu0
    %v4698 = vadd.f32 0.0, %v4697
    %4699 = vdwg.mxu0
    %4700 = vrot.lane.b32.xlu0 %v3960, 96
    %v4701 = vpop.permute.xlu0 %4700
    %4702 = vrot.lane.b32.xlu0 %v3960, 32
    %v4703 = vpop.permute.xlu0 %4702
    %v4704 = vsel %vm2049, %v4701, 0
    %v4706 = vsel %vm2049, %v4703, 0
    %4708 = vmatpush.xpose.msra.mxu0 0.0
    %4709 = vmatpush.xpose.msra.mxu0 0.0
    %4710 = vmatpush.xpose.msra.mxu0 0.0
    %4711 = vmatpush.xpose.msra.mxu0 0.0
    %4712 = vmatpush.xpose.msra.mxu0 0.0
    %4713 = vmatpush.xpose.msra.mxu0 0.0
    %4714 = vmatpush.xpose.msra.mxu0 0.0
    %4715 = vmatpush.xpose.msra.mxu0 0.0
    %4716 = vmatpush.xpose.msra.mxu0 0.0
    %4717 = vmatpush.xpose.msra.mxu0 0.0
    %4718 = vmatpush.xpose.msra.mxu0 0.0
    %4719 = vmatpush.xpose.msra.mxu0 0.0
    %4720 = vmatpush.xpose.msra.mxu0 0.0
    %4721 = vmatpush.xpose.msra.mxu0 0.0
    %4722 = vmatpush.xpose.msra.mxu0 0.0
    %4723 = vmatpush.xpose.msra.mxu0 %v4706
    %4724 = vmatmul.f32.gmra.mxu0 %v4704
    %v4725 = vpop.f32.mrf.mxu0
    %v4726 = vadd.f32 0.0, %v4725
    %4727 = vdwg.mxu0
    %4728 = vrot.lane.b32.xlu0 %v3963, 96
    %v4729 = vpop.permute.xlu0 %4728
    %4730 = vrot.lane.b32.xlu0 %v3963, 32
    %v4731 = vpop.permute.xlu0 %4730
    %v4732 = vsel %vm2049, %v4729, 0
    %v4734 = vsel %vm2049, %v4731, 0
    %4736 = vmatpush.xpose.msra.mxu0 0.0
    %4737 = vmatpush.xpose.msra.mxu0 0.0
    %4738 = vmatpush.xpose.msra.mxu0 0.0
    %4739 = vmatpush.xpose.msra.mxu0 0.0
    %4740 = vmatpush.xpose.msra.mxu0 0.0
    %4741 = vmatpush.xpose.msra.mxu0 0.0
    %4742 = vmatpush.xpose.msra.mxu0 0.0
    %4743 = vmatpush.xpose.msra.mxu0 0.0
    %4744 = vmatpush.xpose.msra.mxu0 0.0
    %4745 = vmatpush.xpose.msra.mxu0 0.0
    %4746 = vmatpush.xpose.msra.mxu0 0.0
    %4747 = vmatpush.xpose.msra.mxu0 0.0
    %4748 = vmatpush.xpose.msra.mxu0 0.0
    %4749 = vmatpush.xpose.msra.mxu0 0.0
    %4750 = vmatpush.xpose.msra.mxu0 0.0
    %4751 = vmatpush.xpose.msra.mxu0 %v4734
    %4752 = vmatmul.f32.gmra.mxu0 %v4732
    %v4753 = vpop.f32.mrf.mxu0
    %v4754 = vadd.f32 0.0, %v4753
    %4755 = vdwg.mxu0
    %4756 = vrot.lane.b32.xlu0 %v3965, 96
    %v4757 = vpop.permute.xlu0 %4756
    %4758 = vrot.lane.b32.xlu0 %v3965, 32
    %v4759 = vpop.permute.xlu0 %4758
    %v4760 = vsel %vm2049, %v4757, 0
    %v4762 = vsel %vm2049, %v4759, 0
    %4764 = vmatpush.xpose.msra.mxu0 0.0
    %4765 = vmatpush.xpose.msra.mxu0 0.0
    %4766 = vmatpush.xpose.msra.mxu0 0.0
    %4767 = vmatpush.xpose.msra.mxu0 0.0
    %4768 = vmatpush.xpose.msra.mxu0 0.0
    %4769 = vmatpush.xpose.msra.mxu0 0.0
    %4770 = vmatpush.xpose.msra.mxu0 0.0
    %4771 = vmatpush.xpose.msra.mxu0 0.0
    %4772 = vmatpush.xpose.msra.mxu0 0.0
    %4773 = vmatpush.xpose.msra.mxu0 0.0
    %4774 = vmatpush.xpose.msra.mxu0 0.0
    %4775 = vmatpush.xpose.msra.mxu0 0.0
    %4776 = vmatpush.xpose.msra.mxu0 0.0
    %4777 = vmatpush.xpose.msra.mxu0 0.0
    %4778 = vmatpush.xpose.msra.mxu0 0.0
    %4779 = vmatpush.xpose.msra.mxu0 %v4762
    %4780 = vmatmul.f32.gmra.mxu0 %v4760
    %v4781 = vpop.f32.mrf.mxu0
    %v4782 = vadd.f32 0.0, %v4781
    %4783 = vdwg.mxu0
    %v4784 = vmul.f32 %v4586, 0.17677669
    %v4785 = vmul.f32 %v4614, 0.17677669
    %v4786 = vmul.f32 %v4642, 0.17677669
    %v4787 = vmul.f32 %v4670, 0.17677669
    %v4788 = vmul.f32 %v4698, 0.17677669
    %v4789 = vmul.f32 %v4726, 0.17677669
    %v4790 = vmul.f32 %v4754, 0.17677669
    %v4791 = vmul.f32 %v4782, 0.17677669
    %v4792 = vsel %vm2271, %v4784, -inf
    %4793 = vmax.xlane.f32.xlu0 %v4792
    %v4794 = vpop.xlane.xlu0 %4793
    %v4795 = vsel %vm2271, %v4785, -inf
    %4796 = vmax.xlane.f32.xlu0 %v4795
    %v4797 = vpop.xlane.xlu0 %4796
    %v4798 = vsel %vm2271, %v4786, -inf
    %4799 = vmax.xlane.f32.xlu0 %v4798
    %v4800 = vpop.xlane.xlu0 %4799
    %v4801 = vsel %vm2271, %v4787, -inf
    %4802 = vmax.xlane.f32.xlu0 %v4801
    %v4803 = vpop.xlane.xlu0 %4802
    %v4804 = vsel %vm2271, %v4788, -inf
    %4805 = vmax.xlane.f32.xlu0 %v4804
    %v4806 = vpop.xlane.xlu0 %4805
    %v4807 = vsel %vm2271, %v4789, -inf
    %4808 = vmax.xlane.f32.xlu0 %v4807
    %v4809 = vpop.xlane.xlu0 %4808
    %v4810 = vsel %vm2271, %v4790, -inf
    %4811 = vmax.xlane.f32.xlu0 %v4810
    %v4812 = vpop.xlane.xlu0 %4811
    %v4813 = vsel %vm2271, %v4791, -inf
    %4814 = vmax.xlane.f32.xlu0 %v4813
    %v4815 = vpop.xlane.xlu0 %4814
    %v4816 = vsub.f32 %v4784, %v4794
    %v4817 = vsub.f32 %v4785, %v4797
    %v4818 = vsub.f32 %v4786, %v4800
    %v4819 = vsub.f32 %v4787, %v4803
    %v4820 = vsub.f32 %v4788, %v4806
    %v4821 = vsub.f32 %v4789, %v4809
    %v4822 = vsub.f32 %v4790, %v4812
    %v4823 = vsub.f32 %v4791, %v4815
    %v4824 = vmul.f32 %v4816, 1.442695
    %v4825 = vpow.pop %v4824
    %v4826 = vmul.f32 %v4817, 1.442695
    %v4827 = vpow.pop %v4826
    %v4828 = vmul.f32 %v4818, 1.442695
    %v4829 = vpow.pop %v4828
    %v4830 = vmul.f32 %v4819, 1.442695
    %v4831 = vpow.pop %v4830
    %v4832 = vmul.f32 %v4820, 1.442695
    %v4833 = vpow.pop %v4832
    %v4834 = vmul.f32 %v4821, 1.442695
    %v4835 = vpow.pop %v4834
    %v4836 = vmul.f32 %v4822, 1.442695
    %v4837 = vpow.pop %v4836
    %v4838 = vmul.f32 %v4823, 1.442695
    %v4839 = vpow.pop %v4838
    %v4840 = vsel %vm2271, %v4825, 0.0
    %4841 = vadd.xlane.f32.xlu0 %v4840
    %v4842 = vpop.xlane.xlu0 %4841
    %v4843 = vsel %vm2271, %v4827, 0.0
    %4844 = vadd.xlane.f32.xlu0 %v4843
    %v4845 = vpop.xlane.xlu0 %4844
    %v4846 = vsel %vm2271, %v4829, 0.0
    %4847 = vadd.xlane.f32.xlu0 %v4846
    %v4848 = vpop.xlane.xlu0 %4847
    %v4849 = vsel %vm2271, %v4831, 0.0
    %4850 = vadd.xlane.f32.xlu0 %v4849
    %v4851 = vpop.xlane.xlu0 %4850
    %v4852 = vsel %vm2271, %v4833, 0.0
    %4853 = vadd.xlane.f32.xlu0 %v4852
    %v4854 = vpop.xlane.xlu0 %4853
    %v4855 = vsel %vm2271, %v4835, 0.0
    %4856 = vadd.xlane.f32.xlu0 %v4855
    %v4857 = vpop.xlane.xlu0 %4856
    %v4858 = vsel %vm2271, %v4837, 0.0
    %4859 = vadd.xlane.f32.xlu0 %v4858
    %v4860 = vpop.xlane.xlu0 %4859
    %v4861 = vsel %vm2271, %v4839, 0.0
    %4862 = vadd.xlane.f32.xlu0 %v4861
    %v4863 = vpop.xlane.xlu0 %4862
    %v4864 = vrcp.pop %v4842
    %v4865 = vrcp.pop %v4845
    %v4866 = vrcp.pop %v4848
    %v4867 = vrcp.pop %v4851
    %v4868 = vrcp.pop %v4854
    %v4869 = vrcp.pop %v4857
    %v4870 = vrcp.pop %v4860
    %v4871 = vrcp.pop %v4863
    %v4872 = vmul.f32 %v4825, %v4864
    %v4873 = vmul.f32 %v4827, %v4865
    %v4874 = vmul.f32 %v4829, %v4866
    %v4875 = vmul.f32 %v4831, %v4867
    %v4876 = vmul.f32 %v4833, %v4868
    %v4877 = vmul.f32 %v4835, %v4869
    %v4878 = vmul.f32 %v4837, %v4870
    %v4879 = vmul.f32 %v4839, %v4871
    %4881 = vrot.lane.b32.xlu0 %v3977, 96
    %v4882 = vpop.permute.xlu0 %4881
    %v4885 = vsel %vm2271, %v4872, 0
    %4887 = vmatpush.msra.mxu0 0.0
    %4888 = vmatpush.msra.mxu0 0.0
    %4889 = vmatpush.msra.mxu0 0.0
    %4890 = vmatpush.msra.mxu0 0.0
    %4891 = vmatpush.msra.mxu0 0.0
    %4892 = vmatpush.msra.mxu0 0.0
    %4893 = vmatpush.msra.mxu0 0.0
    %4894 = vmatpush.msra.mxu0 0.0
    %4895 = vmatpush.msra.mxu0 0.0
    %4896 = vmatpush.msra.mxu0 0.0
    %4897 = vmatpush.msra.mxu0 0.0
    %4898 = vmatpush.msra.mxu0 0.0
    %4899 = vmatpush.msra.mxu0 0.0
    %4900 = vmatpush.msra.mxu0 0.0
    %4901 = vmatpush.msra.mxu0 0.0
    %4902 = vmatpush.msra.mxu0 %v4882
    %4903 = vmatmul.f32.gmra.mxu0 %v4885
    %v4904 = vpop.f32.mrf.mxu0
    %v4905 = vadd.f32 0.0, %v4904
    %4906 = vdwg.mxu0
    %4908 = vrot.lane.b32.xlu0 %v3979, 96
    %v4909 = vpop.permute.xlu0 %4908
    %v4912 = vsel %vm2271, %v4873, 0
    %4914 = vmatpush.msra.mxu0 0.0
    %4915 = vmatpush.msra.mxu0 0.0
    %4916 = vmatpush.msra.mxu0 0.0
    %4917 = vmatpush.msra.mxu0 0.0
    %4918 = vmatpush.msra.mxu0 0.0
    %4919 = vmatpush.msra.mxu0 0.0
    %4920 = vmatpush.msra.mxu0 0.0
    %4921 = vmatpush.msra.mxu0 0.0
    %4922 = vmatpush.msra.mxu0 0.0
    %4923 = vmatpush.msra.mxu0 0.0
    %4924 = vmatpush.msra.mxu0 0.0
    %4925 = vmatpush.msra.mxu0 0.0
    %4926 = vmatpush.msra.mxu0 0.0
    %4927 = vmatpush.msra.mxu0 0.0
    %4928 = vmatpush.msra.mxu0 0.0
    %4929 = vmatpush.msra.mxu0 %v4909
    %4930 = vmatmul.f32.gmra.mxu0 %v4912
    %v4931 = vpop.f32.mrf.mxu0
    %v4932 = vadd.f32 0.0, %v4931
    %4933 = vdwg.mxu0
    %4935 = vrot.lane.b32.xlu0 %v3982, 96
    %v4936 = vpop.permute.xlu0 %4935
    %v4939 = vsel %vm2271, %v4874, 0
    %4941 = vmatpush.msra.mxu0 0.0
    %4942 = vmatpush.msra.mxu0 0.0
    %4943 = vmatpush.msra.mxu0 0.0
    %4944 = vmatpush.msra.mxu0 0.0
    %4945 = vmatpush.msra.mxu0 0.0
    %4946 = vmatpush.msra.mxu0 0.0
    %4947 = vmatpush.msra.mxu0 0.0
    %4948 = vmatpush.msra.mxu0 0.0
    %4949 = vmatpush.msra.mxu0 0.0
    %4950 = vmatpush.msra.mxu0 0.0
    %4951 = vmatpush.msra.mxu0 0.0
    %4952 = vmatpush.msra.mxu0 0.0
    %4953 = vmatpush.msra.mxu0 0.0
    %4954 = vmatpush.msra.mxu0 0.0
    %4955 = vmatpush.msra.mxu0 0.0
    %4956 = vmatpush.msra.mxu0 %v4936
    %4957 = vmatmul.f32.gmra.mxu0 %v4939
    %v4958 = vpop.f32.mrf.mxu0
    %v4959 = vadd.f32 0.0, %v4958
    %4960 = vdwg.mxu0
    %4962 = vrot.lane.b32.xlu0 %v3984, 96
    %v4963 = vpop.permute.xlu0 %4962
    %v4966 = vsel %vm2271, %v4875, 0
    %4968 = vmatpush.msra.mxu0 0.0
    %4969 = vmatpush.msra.mxu0 0.0
    %4970 = vmatpush.msra.mxu0 0.0
    %4971 = vmatpush.msra.mxu0 0.0
    %4972 = vmatpush.msra.mxu0 0.0
    %4973 = vmatpush.msra.mxu0 0.0
    %4974 = vmatpush.msra.mxu0 0.0
    %4975 = vmatpush.msra.mxu0 0.0
    %4976 = vmatpush.msra.mxu0 0.0
    %4977 = vmatpush.msra.mxu0 0.0
    %4978 = vmatpush.msra.mxu0 0.0
    %4979 = vmatpush.msra.mxu0 0.0
    %4980 = vmatpush.msra.mxu0 0.0
    %4981 = vmatpush.msra.mxu0 0.0
    %4982 = vmatpush.msra.mxu0 0.0
    %4983 = vmatpush.msra.mxu0 %v4963
    %4984 = vmatmul.f32.gmra.mxu0 %v4966
    %v4985 = vpop.f32.mrf.mxu0
    %v4986 = vadd.f32 0.0, %v4985
    %4987 = vdwg.mxu0
    %4989 = vrot.lane.b32.xlu0 %v3987, 96
    %v4990 = vpop.permute.xlu0 %4989
    %v4993 = vsel %vm2271, %v4876, 0
    %4995 = vmatpush.msra.mxu0 0.0
    %4996 = vmatpush.msra.mxu0 0.0
    %4997 = vmatpush.msra.mxu0 0.0
    %4998 = vmatpush.msra.mxu0 0.0
    %4999 = vmatpush.msra.mxu0 0.0
    %5000 = vmatpush.msra.mxu0 0.0
    %5001 = vmatpush.msra.mxu0 0.0
    %5002 = vmatpush.msra.mxu0 0.0
    %5003 = vmatpush.msra.mxu0 0.0
    %5004 = vmatpush.msra.mxu0 0.0
    %5005 = vmatpush.msra.mxu0 0.0
    %5006 = vmatpush.msra.mxu0 0.0
    %5007 = vmatpush.msra.mxu0 0.0
    %5008 = vmatpush.msra.mxu0 0.0
    %5009 = vmatpush.msra.mxu0 0.0
    %5010 = vmatpush.msra.mxu0 %v4990
    %5011 = vmatmul.f32.gmra.mxu0 %v4993
    %v5012 = vpop.f32.mrf.mxu0
    %v5013 = vadd.f32 0.0, %v5012
    %5014 = vdwg.mxu0
    %5016 = vrot.lane.b32.xlu0 %v3989, 96
    %v5017 = vpop.permute.xlu0 %5016
    %v5020 = vsel %vm2271, %v4877, 0
    %5022 = vmatpush.msra.mxu0 0.0
    %5023 = vmatpush.msra.mxu0 0.0
    %5024 = vmatpush.msra.mxu0 0.0
    %5025 = vmatpush.msra.mxu0 0.0
    %5026 = vmatpush.msra.mxu0 0.0
    %5027 = vmatpush.msra.mxu0 0.0
    %5028 = vmatpush.msra.mxu0 0.0
    %5029 = vmatpush.msra.mxu0 0.0
    %5030 = vmatpush.msra.mxu0 0.0
    %5031 = vmatpush.msra.mxu0 0.0
    %5032 = vmatpush.msra.mxu0 0.0
    %5033 = vmatpush.msra.mxu0 0.0
    %5034 = vmatpush.msra.mxu0 0.0
    %5035 = vmatpush.msra.mxu0 0.0
    %5036 = vmatpush.msra.mxu0 0.0
    %5037 = vmatpush.msra.mxu0 %v5017
    %5038 = vmatmul.f32.gmra.mxu0 %v5020
    %v5039 = vpop.f32.mrf.mxu0
    %v5040 = vadd.f32 0.0, %v5039
    %5041 = vdwg.mxu0
    %5043 = vrot.lane.b32.xlu0 %v3992, 96
    %v5044 = vpop.permute.xlu0 %5043
    %v5047 = vsel %vm2271, %v4878, 0
    %5049 = vmatpush.msra.mxu0 0.0
    %5050 = vmatpush.msra.mxu0 0.0
    %5051 = vmatpush.msra.mxu0 0.0
    %5052 = vmatpush.msra.mxu0 0.0
    %5053 = vmatpush.msra.mxu0 0.0
    %5054 = vmatpush.msra.mxu0 0.0
    %5055 = vmatpush.msra.mxu0 0.0
    %5056 = vmatpush.msra.mxu0 0.0
    %5057 = vmatpush.msra.mxu0 0.0
    %5058 = vmatpush.msra.mxu0 0.0
    %5059 = vmatpush.msra.mxu0 0.0
    %5060 = vmatpush.msra.mxu0 0.0
    %5061 = vmatpush.msra.mxu0 0.0
    %5062 = vmatpush.msra.mxu0 0.0
    %5063 = vmatpush.msra.mxu0 0.0
    %5064 = vmatpush.msra.mxu0 %v5044
    %5065 = vmatmul.f32.gmra.mxu0 %v5047
    %v5066 = vpop.f32.mrf.mxu0
    %v5067 = vadd.f32 0.0, %v5066
    %5068 = vdwg.mxu0
    %5070 = vrot.lane.b32.xlu0 %v3994, 96
    %v5071 = vpop.permute.xlu0 %5070
    %v5074 = vsel %vm2271, %v4879, 0
    %5076 = vmatpush.msra.mxu0 0.0
    %5077 = vmatpush.msra.mxu0 0.0
    %5078 = vmatpush.msra.mxu0 0.0
    %5079 = vmatpush.msra.mxu0 0.0
    %5080 = vmatpush.msra.mxu0 0.0
    %5081 = vmatpush.msra.mxu0 0.0
    %5082 = vmatpush.msra.mxu0 0.0
    %5083 = vmatpush.msra.mxu0 0.0
    %5084 = vmatpush.msra.mxu0 0.0
    %5085 = vmatpush.msra.mxu0 0.0
    %5086 = vmatpush.msra.mxu0 0.0
    %5087 = vmatpush.msra.mxu0 0.0
    %5088 = vmatpush.msra.mxu0 0.0
    %5089 = vmatpush.msra.mxu0 0.0
    %5090 = vmatpush.msra.mxu0 0.0
    %5091 = vmatpush.msra.mxu0 %v5071
    %5092 = vmatmul.f32.gmra.mxu0 %v5074
    %v5093 = vpop.f32.mrf.mxu0
    %v5094 = vadd.f32 0.0, %v5093
    %5095 = vdwg.mxu0
    %v5096 = vpack.c.bf16 %v4932, %v4905
    %v5097 = vpack.c.bf16 %v4986, %v4959
    %v5098 = vpack.c.bf16 %v5040, %v5013
    %v5099 = vpack.c.bf16 %v5094, %v5067
    %v5104 = vunpack.c.l.b16 %v4001
    %v5105 = vunpack.c.l.b16 %v4002
    %v5106 = vunpack.c.l.b16 %v4003
    %v5107 = vunpack.c.l.b16 %v4004
    %v5108 = vpack.c.b16 %v5105, %v5104
    %v5109 = vpack.c.b16 %v5107, %v5106
    %v5113 = vsel %vm2049, %v5096, 0
    %v5116 = vsel %vm2049, %v5097, 0
    %v5119 = vsel %vm2049, %v5098, 0
    %v5122 = vsel %vm2049, %v5099, 0
    %5124 = vmatpush.bf16.msra.mxu0 0
    %5125 = vmatpush.bf16.msra.mxu0 0
    %5126 = vmatpush.bf16.msra.mxu0 0
    %5127 = vmatpush.bf16.msra.mxu0 0
    %5128 = vmatpush.bf16.msra.mxu0 0
    %5129 = vmatpush.bf16.msra.mxu0 0
    %5130 = vmatpush.bf16.msra.mxu0 %v5109
    %5131 = vmatpush.bf16.msra.mxu0 %v5108
    %5132 = vmatmul.bf16.gmra.mxu0 %v5113
    %v5133 = vpop.f32.mrf.mxu0
    %v5134 = vadd.f32 0.0, %v5133
    %v5135 = vpop.f32.mrf.mxu0
    %v5136 = vadd.f32 0.0, %v5135
    %5137 = vmatmul.bf16.gmra.mxu0 %v5116
    %v5138 = vpop.f32.mrf.mxu0
    %v5139 = vadd.f32 0.0, %v5138
    %v5140 = vpop.f32.mrf.mxu0
    %v5141 = vadd.f32 0.0, %v5140
    %5142 = vmatmul.bf16.gmra.mxu0 %v5119
    %v5143 = vpop.f32.mrf.mxu0
    %v5144 = vadd.f32 0.0, %v5143
    %v5145 = vpop.f32.mrf.mxu0
    %v5146 = vadd.f32 0.0, %v5145
    %5147 = vmatmul.bf16.gmra.mxu0 %v5122
    %v5148 = vpop.f32.mrf.mxu0
    %v5149 = vadd.f32 0.0, %v5148
    %v5150 = vpop.f32.mrf.mxu0
    %v5151 = vadd.f32 0.0, %v5150
    %5152 = vdwg.mxu0
    %v5153 = vadd.f32 %v4541, %v5134
    %v5154 = vadd.f32 %v4543, %v5136
    %v5155 = vadd.f32 %v4546, %v5139
    %v5156 = vadd.f32 %v4548, %v5141
    %v5157 = vadd.f32 %v4551, %v5144
    %v5158 = vadd.f32 %v4553, %v5146
    %v5159 = vadd.f32 %v4556, %v5149
    %v5160 = vadd.f32 %v4558, %v5151
    %v5162 = vperm.slane %v4006, 0
    %v5164 = vadd.f32 %v5153, %v5162
    %v5165 = vadd.f32 %v5154, %v5162
    %v5166 = vadd.f32 %v5155, %v5162
    %v5167 = vadd.f32 %v5156, %v5162
    %v5168 = vadd.f32 %v5157, %v5162
    %v5169 = vadd.f32 %v5158, %v5162
    %v5170 = vadd.f32 %v5159, %v5162
    %v5171 = vadd.f32 %v5160, %v5162
    %v5172 = vadd.f32 %v3669, %v5164
    %v5173 = vadd.f32 %v3670, %v5165
    %v5174 = vadd.f32 %v3671, %v5166
    %v5175 = vadd.f32 %v3672, %v5167
    %v5176 = vadd.f32 %v3673, %v5168
    %v5177 = vadd.f32 %v3674, %v5169
    %v5178 = vadd.f32 %v3675, %v5170
    %v5179 = vadd.f32 %v3676, %v5171
    %v5180 = vsel %vm1713, %v5172, 0.0
    %5181 = vadd.xlane.f32.xlu0 %v5180
    %v5182 = vpop.xlane.xlu0 %5181
    %v5183 = vsel %vm1713, %v5173, 0.0
    %5184 = vadd.xlane.f32.xlu0 %v5183
    %v5185 = vpop.xlane.xlu0 %5184
    %v5186 = vsel %vm1713, %v5174, 0.0
    %5187 = vadd.xlane.f32.xlu0 %v5186
    %v5188 = vpop.xlane.xlu0 %5187
    %v5189 = vsel %vm1713, %v5175, 0.0
    %5190 = vadd.xlane.f32.xlu0 %v5189
    %v5191 = vpop.xlane.xlu0 %5190
    %v5192 = vsel %vm1713, %v5176, 0.0
    %5193 = vadd.xlane.f32.xlu0 %v5192
    %v5194 = vpop.xlane.xlu0 %5193
    %v5195 = vsel %vm1713, %v5177, 0.0
    %5196 = vadd.xlane.f32.xlu0 %v5195
    %v5197 = vpop.xlane.xlu0 %5196
    %v5198 = vsel %vm1713, %v5178, 0.0
    %5199 = vadd.xlane.f32.xlu0 %v5198
    %v5200 = vpop.xlane.xlu0 %5199
    %v5201 = vsel %vm1713, %v5179, 0.0
    %5202 = vadd.xlane.f32.xlu0 %v5201
    %v5203 = vpop.xlane.xlu0 %5202
    %v5204 = vmul.f32 %v5182, %v1744
    %v5205 = vmul.f32 %v5185, %v1744
    %v5206 = vmul.f32 %v5188, %v1744
    %v5207 = vmul.f32 %v5191, %v1744
    %v5208 = vmul.f32 %v5194, %v1744
    %v5209 = vmul.f32 %v5197, %v1744
    %v5210 = vmul.f32 %v5200, %v1744
    %v5211 = vmul.f32 %v5203, %v1744
    %v5212 = vsub.f32 %v5172, %v5204
    %v5213 = vsub.f32 %v5173, %v5205
    %v5214 = vsub.f32 %v5174, %v5206
    %v5215 = vsub.f32 %v5175, %v5207
    %v5216 = vsub.f32 %v5176, %v5208
    %v5217 = vsub.f32 %v5177, %v5209
    %v5218 = vsub.f32 %v5178, %v5210
    %v5219 = vsub.f32 %v5179, %v5211
    %v5220 = vmul.f32 %v5212, %v5212
    %v5221 = vmul.f32 %v5213, %v5213
    %v5222 = vmul.f32 %v5214, %v5214
    %v5223 = vmul.f32 %v5215, %v5215
    %v5224 = vmul.f32 %v5216, %v5216
    %v5225 = vmul.f32 %v5217, %v5217
    %v5226 = vmul.f32 %v5218, %v5218
    %v5227 = vmul.f32 %v5219, %v5219
    %v5228 = vsel %vm1713, %v5220, 0.0
    %5229 = vadd.xlane.f32.xlu0 %v5228
    %v5230 = vpop.xlane.xlu0 %5229
    %v5231 = vsel %vm1713, %v5221, 0.0
    %5232 = vadd.xlane.f32.xlu0 %v5231
    %v5233 = vpop.xlane.xlu0 %5232
    %v5234 = vsel %vm1713, %v5222, 0.0
    %5235 = vadd.xlane.f32.xlu0 %v5234
    %v5236 = vpop.xlane.xlu0 %5235
    %v5237 = vsel %vm1713, %v5223, 0.0
    %5238 = vadd.xlane.f32.xlu0 %v5237
    %v5239 = vpop.xlane.xlu0 %5238
    %v5240 = vsel %vm1713, %v5224, 0.0
    %5241 = vadd.xlane.f32.xlu0 %v5240
    %v5242 = vpop.xlane.xlu0 %5241
    %v5243 = vsel %vm1713, %v5225, 0.0
    %5244 = vadd.xlane.f32.xlu0 %v5243
    %v5245 = vpop.xlane.xlu0 %5244
    %v5246 = vsel %vm1713, %v5226, 0.0
    %5247 = vadd.xlane.f32.xlu0 %v5246
    %v5248 = vpop.xlane.xlu0 %5247
    %v5249 = vsel %vm1713, %v5227, 0.0
    %5250 = vadd.xlane.f32.xlu0 %v5249
    %v5251 = vpop.xlane.xlu0 %5250
    %v5252 = vmul.f32 %v5230, %v1744
    %v5253 = vmul.f32 %v5233, %v1744
    %v5254 = vmul.f32 %v5236, %v1744
    %v5255 = vmul.f32 %v5239, %v1744
    %v5256 = vmul.f32 %v5242, %v1744
    %v5257 = vmul.f32 %v5245, %v1744
    %v5258 = vmul.f32 %v5248, %v1744
    %v5259 = vmul.f32 %v5251, %v1744
    %v5260 = vadd.f32 %v5252, 1e-05
    %v5261 = vadd.f32 %v5253, 1e-05
    %v5262 = vadd.f32 %v5254, 1e-05
    %v5263 = vadd.f32 %v5255, 1e-05
    %v5264 = vadd.f32 %v5256, 1e-05
    %v5265 = vadd.f32 %v5257, 1e-05
    %v5266 = vadd.f32 %v5258, 1e-05
    %v5267 = vadd.f32 %v5259, 1e-05
    %v5268 = vrsqrt.pop %v5260
    %v5269 = vmul.f32 %v5268, %v5260
    %v5270 = vmul.f32 %v5269, %v5268
    %v5271 = vmul.f32 0.5, %v5270
    %v5272 = vsub.f32 1.5, %v5271
    %v5273 = vmul.f32 %v5268, %v5272
    %vm5274 = vweird.f32 %v5260
    %vm5275 = vweird.f32 %v5268
    %vm5276 = vmor %vm5274, %vm5275
    %v5277 = vsel %vm5276, %v5268, %v5273
    %v5278 = vrsqrt.pop %v5261
    %v5279 = vmul.f32 %v5278, %v5261
    %v5280 = vmul.f32 %v5279, %v5278
    %v5281 = vmul.f32 0.5, %v5280
    %v5282 = vsub.f32 1.5, %v5281
    %v5283 = vmul.f32 %v5278, %v5282
    %vm5284 = vweird.f32 %v5261
    %vm5285 = vweird.f32 %v5278
    %vm5286 = vmor %vm5284, %vm5285
    %v5287 = vsel %vm5286, %v5278, %v5283
    %v5288 = vrsqrt.pop %v5262
    %v5289 = vmul.f32 %v5288, %v5262
    %v5290 = vmul.f32 %v5289, %v5288
    %v5291 = vmul.f32 0.5, %v5290
    %v5292 = vsub.f32 1.5, %v5291
    %v5293 = vmul.f32 %v5288, %v5292
    %vm5294 = vweird.f32 %v5262
    %vm5295 = vweird.f32 %v5288
    %vm5296 = vmor %vm5294, %vm5295
    %v5297 = vsel %vm5296, %v5288, %v5293
    %v5298 = vrsqrt.pop %v5263
    %v5299 = vmul.f32 %v5298, %v5263
    %v5300 = vmul.f32 %v5299, %v5298
    %v5301 = vmul.f32 0.5, %v5300
    %v5302 = vsub.f32 1.5, %v5301
    %v5303 = vmul.f32 %v5298, %v5302
    %vm5304 = vweird.f32 %v5263
    %vm5305 = vweird.f32 %v5298
    %vm5306 = vmor %vm5304, %vm5305
    %v5307 = vsel %vm5306, %v5298, %v5303
    %v5308 = vrsqrt.pop %v5264
    %v5309 = vmul.f32 %v5308, %v5264
    %v5310 = vmul.f32 %v5309, %v5308
    %v5311 = vmul.f32 0.5, %v5310
    %v5312 = vsub.f32 1.5, %v5311
    %v5313 = vmul.f32 %v5308, %v5312
    %vm5314 = vweird.f32 %v5264
    %vm5315 = vweird.f32 %v5308
    %vm5316 = vmor %vm5314, %vm5315
    %v5317 = vsel %vm5316, %v5308, %v5313
    %v5318 = vrsqrt.pop %v5265
    %v5319 = vmul.f32 %v5318, %v5265
    %v5320 = vmul.f32 %v5319, %v5318
    %v5321 = vmul.f32 0.5, %v5320
    %v5322 = vsub.f32 1.5, %v5321
    %v5323 = vmul.f32 %v5318, %v5322
    %vm5324 = vweird.f32 %v5265
    %vm5325 = vweird.f32 %v5318
    %vm5326 = vmor %vm5324, %vm5325
    %v5327 = vsel %vm5326, %v5318, %v5323
    %v5328 = vrsqrt.pop %v5266
    %v5329 = vmul.f32 %v5328, %v5266
    %v5330 = vmul.f32 %v5329, %v5328
    %v5331 = vmul.f32 0.5, %v5330
    %v5332 = vsub.f32 1.5, %v5331
    %v5333 = vmul.f32 %v5328, %v5332
    %vm5334 = vweird.f32 %v5266
    %vm5335 = vweird.f32 %v5328
    %vm5336 = vmor %vm5334, %vm5335
    %v5337 = vsel %vm5336, %v5328, %v5333
    %v5338 = vrsqrt.pop %v5267
    %v5339 = vmul.f32 %v5338, %v5267
    %v5340 = vmul.f32 %v5339, %v5338
    %v5341 = vmul.f32 0.5, %v5340
    %v5342 = vsub.f32 1.5, %v5341
    %v5343 = vmul.f32 %v5338, %v5342
    %vm5344 = vweird.f32 %v5267
    %vm5345 = vweird.f32 %v5338
    %vm5346 = vmor %vm5344, %vm5345
    %v5347 = vsel %vm5346, %v5338, %v5343
    %v5348 = vmul.f32 %v5212, %v5277
    %v5349 = vmul.f32 %v5213, %v5287
    %v5350 = vmul.f32 %v5214, %v5297
    %v5351 = vmul.f32 %v5215, %v5307
    %v5352 = vmul.f32 %v5216, %v5317
    %v5353 = vmul.f32 %v5217, %v5327
    %v5354 = vmul.f32 %v5218, %v5337
    %v5355 = vmul.f32 %v5219, %v5347
    %v5356 = vperm.slane %v3678, 2
    %v5357 = vmul.f32 %v5348, %v5356
    %v5358 = vmul.f32 %v5349, %v5356
    %v5359 = vmul.f32 %v5350, %v5356
    %v5360 = vmul.f32 %v5351, %v5356
    %v5361 = vmul.f32 %v5352, %v5356
    %v5362 = vmul.f32 %v5353, %v5356
    %v5363 = vmul.f32 %v5354, %v5356
    %v5364 = vmul.f32 %v5355, %v5356
    %v5365 = vperm.slane %v3678, 3
    %v5366 = vadd.f32 %v5357, %v5365
    %v5367 = vadd.f32 %v5358, %v5365
    %v5368 = vadd.f32 %v5359, %v5365
    %v5369 = vadd.f32 %v5360, %v5365
    %v5370 = vadd.f32 %v5361, %v5365
    %v5371 = vadd.f32 %v5362, %v5365
    %v5372 = vadd.f32 %v5363, %v5365
    %v5373 = vadd.f32 %v5364, %v5365
    %s5374 = scalar_lea.vmem %s27, 32
    %v5375 = vld [vmem:[%s5374] sm:$0xf]
    %v5376 = vld [vmem:[%s5374 + $0x4] sm:$0xf]
    %v5377 = vld [vmem:[%s5374 + $0x8] sm:$0xf]
    %v5378 = vld [vmem:[%s5374 + $0xc] sm:$0xf]
    %v5379 = vld [vmem:[%s5374 + $0x10] sm:$0xf]
    %v5380 = vld [vmem:[%s5374 + $0x14] sm:$0xf]
    %v5381 = vld [vmem:[%s5374 + $0x18] sm:$0xf]
    %v5382 = vld [vmem:[%s5374 + $0x1c] sm:$0xf]
    %s5383 = scalar_lea.vmem %s29, 1
    %v5384 = vld [vmem:[%s5383] sm:$0x1]
    %s5385 = scalar_lea.vmem %s31, 64
    %v5386 = vld [vmem:[%s5385] sm:$0xf]
    %v5387 = vld [vmem:[%s5385 + $0x4] sm:$0xf]
    %v5388 = vld [vmem:[%s5385 + $0x8] sm:$0xf]
    %v5389 = vld [vmem:[%s5385 + $0xc] sm:$0xf]
    %v5390 = vld [vmem:[%s5385 + $0x10] sm:$0xf]
    %v5391 = vld [vmem:[%s5385 + $0x14] sm:$0xf]
    %v5392 = vld [vmem:[%s5385 + $0x18] sm:$0xf]
    %v5393 = vld [vmem:[%s5385 + $0x1c] sm:$0xf]
    %v5394 = vld [vmem:[%s5385 + $0x20] sm:$0xf]
    %v5395 = vld [vmem:[%s5385 + $0x24] sm:$0xf]
    %v5396 = vld [vmem:[%s5385 + $0x28] sm:$0xf]
    %v5397 = vld [vmem:[%s5385 + $0x2c] sm:$0xf]
    %v5398 = vld [vmem:[%s5385 + $0x30] sm:$0xf]
    %v5399 = vld [vmem:[%s5385 + $0x34] sm:$0xf]
    %v5400 = vld [vmem:[%s5385 + $0x38] sm:$0xf]
    %v5401 = vld [vmem:[%s5385 + $0x3c] sm:$0xf]
    %s5402 = scalar_lea.vmem %s33, 1
    %v5403 = vld [vmem:[%s5402] sm:$0x1]
    %v5404 = vpack.c.bf16 %v5367, %v5366
    %v5405 = vpack.c.bf16 %v5369, %v5368
    %v5406 = vpack.c.bf16 %v5371, %v5370
    %v5407 = vpack.c.bf16 %v5373, %v5372
    %v5409 = vperm.slane %v5384, 0
    %v5419 = vunpack.c.l.b16 %v5375
    %v5420 = vunpack.c.l.b16 %v5376
    %v5421 = vunpack.c.l.b16 %v5377
    %v5422 = vunpack.c.l.b16 %v5378
    %v5423 = vunpack.c.l.b16 %v5379
    %v5424 = vunpack.c.l.b16 %v5380
    %v5425 = vunpack.c.l.b16 %v5381
    %v5426 = vunpack.c.l.b16 %v5382
    %v5427 = vpack.c.b16 %v5420, %v5419
    %v5428 = vpack.c.b16 %v5422, %v5421
    %v5429 = vpack.c.b16 %v5424, %v5423
    %v5430 = vpack.c.b16 %v5426, %v5425
    %v5436 = vsel %vm1713, %v5404, 0
    %v5439 = vsel %vm1713, %v5405, 0
    %v5442 = vsel %vm1713, %v5406, 0
    %v5445 = vsel %vm1713, %v5407, 0
    %5447 = vmatpush.bf16.msra.mxu0 0
    %5448 = vmatpush.bf16.msra.mxu0 0
    %5449 = vmatpush.bf16.msra.mxu0 0
    %5450 = vmatpush.bf16.msra.mxu0 0
    %5451 = vmatpush.bf16.msra.mxu0 %v5430
    %5452 = vmatpush.bf16.msra.mxu0 %v5429
    %5453 = vmatpush.bf16.msra.mxu0 %v5428
    %5454 = vmatpush.bf16.msra.mxu0 %v5427
    %5455 = vmatmul.bf16.gmra.mxu0 %v5436
    %v5456 = vpop.f32.mrf.mxu0
    %v5457 = vadd.f32 %v5409, %v5456
    %v5458 = vpop.f32.mrf.mxu0
    %v5459 = vadd.f32 %v5409, %v5458
    %5460 = vmatmul.bf16.gmra.mxu0 %v5439
    %v5461 = vpop.f32.mrf.mxu0
    %v5462 = vadd.f32 %v5409, %v5461
    %v5463 = vpop.f32.mrf.mxu0
    %v5464 = vadd.f32 %v5409, %v5463
    %5465 = vmatmul.bf16.gmra.mxu0 %v5442
    %v5466 = vpop.f32.mrf.mxu0
    %v5467 = vadd.f32 %v5409, %v5466
    %v5468 = vpop.f32.mrf.mxu0
    %v5469 = vadd.f32 %v5409, %v5468
    %5470 = vmatmul.bf16.gmra.mxu0 %v5445
    %v5471 = vpop.f32.mrf.mxu0
    %v5472 = vadd.f32 %v5409, %v5471
    %v5473 = vpop.f32.mrf.mxu0
    %v5474 = vadd.f32 %v5409, %v5473
    %5475 = vdwg.mxu0
    %v5476 = vmul.f32 %v5457, %v5457
    %v5477 = vmul.f32 %v5459, %v5459
    %v5478 = vmul.f32 %v5462, %v5462
    %v5479 = vmul.f32 %v5464, %v5464
    %v5480 = vmul.f32 %v5467, %v5467
    %v5481 = vmul.f32 %v5469, %v5469
    %v5482 = vmul.f32 %v5472, %v5472
    %v5483 = vmul.f32 %v5474, %v5474
    %v5484 = vmul.f32 %v5457, %v5476
    %v5485 = vmul.f32 %v5459, %v5477
    %v5486 = vmul.f32 %v5462, %v5478
    %v5487 = vmul.f32 %v5464, %v5479
    %v5488 = vmul.f32 %v5467, %v5480
    %v5489 = vmul.f32 %v5469, %v5481
    %v5490 = vmul.f32 %v5472, %v5482
    %v5491 = vmul.f32 %v5474, %v5483
    %v5492 = vmul.f32 %v5484, 0.044715
    %v5493 = vmul.f32 %v5485, 0.044715
    %v5494 = vmul.f32 %v5486, 0.044715
    %v5495 = vmul.f32 %v5487, 0.044715
    %v5496 = vmul.f32 %v5488, 0.044715
    %v5497 = vmul.f32 %v5489, 0.044715
    %v5498 = vmul.f32 %v5490, 0.044715
    %v5499 = vmul.f32 %v5491, 0.044715
    %v5500 = vadd.f32 %v5457, %v5492
    %v5501 = vadd.f32 %v5459, %v5493
    %v5502 = vadd.f32 %v5462, %v5494
    %v5503 = vadd.f32 %v5464, %v5495
    %v5504 = vadd.f32 %v5467, %v5496
    %v5505 = vadd.f32 %v5469, %v5497
    %v5506 = vadd.f32 %v5472, %v5498
    %v5507 = vadd.f32 %v5474, %v5499
    %v5508 = vmul.f32 %v5500, 0.7978846
    %v5509 = vmul.f32 %v5501, 0.7978846
    %v5510 = vmul.f32 %v5502, 0.7978846
    %v5511 = vmul.f32 %v5503, 0.7978846
    %v5512 = vmul.f32 %v5504, 0.7978846
    %v5513 = vmul.f32 %v5505, 0.7978846
    %v5514 = vmul.f32 %v5506, 0.7978846
    %v5515 = vmul.f32 %v5507, 0.7978846
    %v5516 = vtanh.pop %v5508
    %v5517 = vtanh.pop %v5509
    %v5518 = vtanh.pop %v5510
    %v5519 = vtanh.pop %v5511
    %v5520 = vtanh.pop %v5512
    %v5521 = vtanh.pop %v5513
    %v5522 = vtanh.pop %v5514
    %v5523 = vtanh.pop %v5515
    %v5524 = vadd.f32 %v5516, 1.0
    %v5525 = vadd.f32 %v5517, 1.0
    %v5526 = vadd.f32 %v5518, 1.0
    %v5527 = vadd.f32 %v5519, 1.0
    %v5528 = vadd.f32 %v5520, 1.0
    %v5529 = vadd.f32 %v5521, 1.0
    %v5530 = vadd.f32 %v5522, 1.0
    %v5531 = vadd.f32 %v5523, 1.0
    %v5532 = vmul.f32 %v5524, 0.5
    %v5533 = vmul.f32 %v5525, 0.5
    %v5534 = vmul.f32 %v5526, 0.5
    %v5535 = vmul.f32 %v5527, 0.5
    %v5536 = vmul.f32 %v5528, 0.5
    %v5537 = vmul.f32 %v5529, 0.5
    %v5538 = vmul.f32 %v5530, 0.5
    %v5539 = vmul.f32 %v5531, 0.5
    %v5540 = vmul.f32 %v5457, %v5532
    %v5541 = vmul.f32 %v5459, %v5533
    %v5542 = vmul.f32 %v5462, %v5534
    %v5543 = vmul.f32 %v5464, %v5535
    %v5544 = vmul.f32 %v5467, %v5536
    %v5545 = vmul.f32 %v5469, %v5537
    %v5546 = vmul.f32 %v5472, %v5538
    %v5547 = vmul.f32 %v5474, %v5539
    %v5548 = vpack.c.bf16 %v5541, %v5540
    %v5549 = vpack.c.bf16 %v5543, %v5542
    %v5550 = vpack.c.bf16 %v5545, %v5544
    %v5551 = vpack.c.bf16 %v5547, %v5546
    %v5553 = vperm.slane %v5403, 0
    %v5571 = vunpack.c.l.b16 %v5386
    %v5572 = vunpack.c.l.b16 %v5387
    %v5573 = vunpack.c.l.b16 %v5388
    %v5574 = vunpack.c.l.b16 %v5389
    %v5575 = vunpack.c.l.b16 %v5390
    %v5576 = vunpack.c.l.b16 %v5391
    %v5577 = vunpack.c.l.b16 %v5392
    %v5578 = vunpack.c.l.b16 %v5393
    %v5579 = vunpack.c.l.b16 %v5394
    %v5580 = vunpack.c.l.b16 %v5395
    %v5581 = vunpack.c.l.b16 %v5396
    %v5582 = vunpack.c.l.b16 %v5397
    %v5583 = vunpack.c.l.b16 %v5398
    %v5584 = vunpack.c.l.b16 %v5399
    %v5585 = vunpack.c.l.b16 %v5400
    %v5586 = vunpack.c.l.b16 %v5401
    %v5587 = vpack.c.b16 %v5572, %v5571
    %v5588 = vpack.c.b16 %v5574, %v5573
    %v5589 = vpack.c.b16 %v5576, %v5575
    %v5590 = vpack.c.b16 %v5578, %v5577
    %v5591 = vpack.c.b16 %v5580, %v5579
    %v5592 = vpack.c.b16 %v5582, %v5581
    %v5593 = vpack.c.b16 %v5584, %v5583
    %v5594 = vpack.c.b16 %v5586, %v5585
    %5603 = vmatpush.bf16.msra.mxu0 %v5594
    %5604 = vmatpush.bf16.msra.mxu0 %v5593
    %5605 = vmatpush.bf16.msra.mxu0 %v5592
    %5606 = vmatpush.bf16.msra.mxu0 %v5591
    %5607 = vmatpush.bf16.msra.mxu0 %v5590
    %5608 = vmatpush.bf16.msra.mxu0 %v5589
    %5609 = vmatpush.bf16.msra.mxu0 %v5588
    %5610 = vmatpush.bf16.msra.mxu0 %v5587
    %5611 = vmatmul.bf16.gmra.mxu0 %v5548
    %v5612 = vpop.f32.mrf.mxu0
    %v5613 = vadd.f32 %v5553, %v5612
    %v5614 = vpop.f32.mrf.mxu0
    %v5615 = vadd.f32 %v5553, %v5614
    %5616 = vmatmul.bf16.gmra.mxu0 %v5549
    %v5617 = vpop.f32.mrf.mxu0
    %v5618 = vadd.f32 %v5553, %v5617
    %v5619 = vpop.f32.mrf.mxu0
    %v5620 = vadd.f32 %v5553, %v5619
    %5621 = vmatmul.bf16.gmra.mxu0 %v5550
    %v5622 = vpop.f32.mrf.mxu0
    %v5623 = vadd.f32 %v5553, %v5622
    %v5624 = vpop.f32.mrf.mxu0
    %v5625 = vadd.f32 %v5553, %v5624
    %5626 = vmatmul.bf16.gmra.mxu0 %v5551
    %v5627 = vpop.f32.mrf.mxu0
    %v5628 = vadd.f32 %v5553, %v5627
    %v5629 = vpop.f32.mrf.mxu0
    %v5630 = vadd.f32 %v5553, %v5629
    %5631 = vdwg.mxu0
    %v5632 = vadd.f32 %v5172, %v5613
    %v5633 = vadd.f32 %v5173, %v5615
    %v5634 = vadd.f32 %v5174, %v5618
    %v5635 = vadd.f32 %v5175, %v5620
    %v5636 = vadd.f32 %v5176, %v5623
    %v5637 = vadd.f32 %v5177, %v5625
    %v5638 = vadd.f32 %v5178, %v5628
    %v5639 = vadd.f32 %v5179, %v5630
    %v5640 = vld [vmem:[%s35] sm:$0x3]
    %v5641 = vsel %vm1713, %v5632, 0.0
    %5642 = vadd.xlane.f32.xlu0 %v5641
    %v5643 = vpop.xlane.xlu0 %5642
    %v5644 = vsel %vm1713, %v5633, 0.0
    %5645 = vadd.xlane.f32.xlu0 %v5644
    %v5646 = vpop.xlane.xlu0 %5645
    %v5647 = vsel %vm1713, %v5634, 0.0
    %5648 = vadd.xlane.f32.xlu0 %v5647
    %v5649 = vpop.xlane.xlu0 %5648
    %v5650 = vsel %vm1713, %v5635, 0.0
    %5651 = vadd.xlane.f32.xlu0 %v5650
    %v5652 = vpop.xlane.xlu0 %5651
    %v5653 = vsel %vm1713, %v5636, 0.0
    %5654 = vadd.xlane.f32.xlu0 %v5653
    %v5655 = vpop.xlane.xlu0 %5654
    %v5656 = vsel %vm1713, %v5637, 0.0
    %5657 = vadd.xlane.f32.xlu0 %v5656
    %v5658 = vpop.xlane.xlu0 %5657
    %v5659 = vsel %vm1713, %v5638, 0.0
    %5660 = vadd.xlane.f32.xlu0 %v5659
    %v5661 = vpop.xlane.xlu0 %5660
    %v5662 = vsel %vm1713, %v5639, 0.0
    %5663 = vadd.xlane.f32.xlu0 %v5662
    %v5664 = vpop.xlane.xlu0 %5663
    %v5665 = vmul.f32 %v5643, %v1744
    %v5666 = vmul.f32 %v5646, %v1744
    %v5667 = vmul.f32 %v5649, %v1744
    %v5668 = vmul.f32 %v5652, %v1744
    %v5669 = vmul.f32 %v5655, %v1744
    %v5670 = vmul.f32 %v5658, %v1744
    %v5671 = vmul.f32 %v5661, %v1744
    %v5672 = vmul.f32 %v5664, %v1744
    %v5673 = vsub.f32 %v5632, %v5665
    %v5674 = vsub.f32 %v5633, %v5666
    %v5675 = vsub.f32 %v5634, %v5667
    %v5676 = vsub.f32 %v5635, %v5668
    %v5677 = vsub.f32 %v5636, %v5669
    %v5678 = vsub.f32 %v5637, %v5670
    %v5679 = vsub.f32 %v5638, %v5671
    %v5680 = vsub.f32 %v5639, %v5672
    %v5681 = vmul.f32 %v5673, %v5673
    %v5682 = vmul.f32 %v5674, %v5674
    %v5683 = vmul.f32 %v5675, %v5675
    %v5684 = vmul.f32 %v5676, %v5676
    %v5685 = vmul.f32 %v5677, %v5677
    %v5686 = vmul.f32 %v5678, %v5678
    %v5687 = vmul.f32 %v5679, %v5679
    %v5688 = vmul.f32 %v5680, %v5680
    %v5689 = vsel %vm1713, %v5681, 0.0
    %5690 = vadd.xlane.f32.xlu0 %v5689
    %v5691 = vpop.xlane.xlu0 %5690
    %v5692 = vsel %vm1713, %v5682, 0.0
    %5693 = vadd.xlane.f32.xlu0 %v5692
    %v5694 = vpop.xlane.xlu0 %5693
    %v5695 = vsel %vm1713, %v5683, 0.0
    %5696 = vadd.xlane.f32.xlu0 %v5695
    %v5697 = vpop.xlane.xlu0 %5696
    %v5698 = vsel %vm1713, %v5684, 0.0
    %5699 = vadd.xlane.f32.xlu0 %v5698
    %v5700 = vpop.xlane.xlu0 %5699
    %v5701 = vsel %vm1713, %v5685, 0.0
    %5702 = vadd.xlane.f32.xlu0 %v5701
    %v5703 = vpop.xlane.xlu0 %5702
    %v5704 = vsel %vm1713, %v5686, 0.0
    %5705 = vadd.xlane.f32.xlu0 %v5704
    %v5706 = vpop.xlane.xlu0 %5705
    %v5707 = vsel %vm1713, %v5687, 0.0
    %5708 = vadd.xlane.f32.xlu0 %v5707
    %v5709 = vpop.xlane.xlu0 %5708
    %v5710 = vsel %vm1713, %v5688, 0.0
    %5711 = vadd.xlane.f32.xlu0 %v5710
    %v5712 = vpop.xlane.xlu0 %5711
    %v5713 = vmul.f32 %v5691, %v1744
    %v5714 = vmul.f32 %v5694, %v1744
    %v5715 = vmul.f32 %v5697, %v1744
    %v5716 = vmul.f32 %v5700, %v1744
    %v5717 = vmul.f32 %v5703, %v1744
    %v5718 = vmul.f32 %v5706, %v1744
    %v5719 = vmul.f32 %v5709, %v1744
    %v5720 = vmul.f32 %v5712, %v1744
    %v5721 = vadd.f32 %v5713, 1e-05
    %v5722 = vadd.f32 %v5714, 1e-05
    %v5723 = vadd.f32 %v5715, 1e-05
    %v5724 = vadd.f32 %v5716, 1e-05
    %v5725 = vadd.f32 %v5717, 1e-05
    %v5726 = vadd.f32 %v5718, 1e-05
    %v5727 = vadd.f32 %v5719, 1e-05
    %v5728 = vadd.f32 %v5720, 1e-05
    %v5729 = vrsqrt.pop %v5721
    %v5730 = vmul.f32 %v5729, %v5721
    %v5731 = vmul.f32 %v5730, %v5729
    %v5732 = vmul.f32 0.5, %v5731
    %v5733 = vsub.f32 1.5, %v5732
    %v5734 = vmul.f32 %v5729, %v5733
    %vm5735 = vweird.f32 %v5721
    %vm5736 = vweird.f32 %v5729
    %vm5737 = vmor %vm5735, %vm5736
    %v5738 = vsel %vm5737, %v5729, %v5734
    %v5739 = vrsqrt.pop %v5722
    %v5740 = vmul.f32 %v5739, %v5722
    %v5741 = vmul.f32 %v5740, %v5739
    %v5742 = vmul.f32 0.5, %v5741
    %v5743 = vsub.f32 1.5, %v5742
    %v5744 = vmul.f32 %v5739, %v5743
    %vm5745 = vweird.f32 %v5722
    %vm5746 = vweird.f32 %v5739
    %vm5747 = vmor %vm5745, %vm5746
    %v5748 = vsel %vm5747, %v5739, %v5744
    %v5749 = vrsqrt.pop %v5723
    %v5750 = vmul.f32 %v5749, %v5723
    %v5751 = vmul.f32 %v5750, %v5749
    %v5752 = vmul.f32 0.5, %v5751
    %v5753 = vsub.f32 1.5, %v5752
    %v5754 = vmul.f32 %v5749, %v5753
    %vm5755 = vweird.f32 %v5723
    %vm5756 = vweird.f32 %v5749
    %vm5757 = vmor %vm5755, %vm5756
    %v5758 = vsel %vm5757, %v5749, %v5754
    %v5759 = vrsqrt.pop %v5724
    %v5760 = vmul.f32 %v5759, %v5724
    %v5761 = vmul.f32 %v5760, %v5759
    %v5762 = vmul.f32 0.5, %v5761
    %v5763 = vsub.f32 1.5, %v5762
    %v5764 = vmul.f32 %v5759, %v5763
    %vm5765 = vweird.f32 %v5724
    %vm5766 = vweird.f32 %v5759
    %vm5767 = vmor %vm5765, %vm5766
    %v5768 = vsel %vm5767, %v5759, %v5764
    %v5769 = vrsqrt.pop %v5725
    %v5770 = vmul.f32 %v5769, %v5725
    %v5771 = vmul.f32 %v5770, %v5769
    %v5772 = vmul.f32 0.5, %v5771
    %v5773 = vsub.f32 1.5, %v5772
    %v5774 = vmul.f32 %v5769, %v5773
    %vm5775 = vweird.f32 %v5725
    %vm5776 = vweird.f32 %v5769
    %vm5777 = vmor %vm5775, %vm5776
    %v5778 = vsel %vm5777, %v5769, %v5774
    %v5779 = vrsqrt.pop %v5726
    %v5780 = vmul.f32 %v5779, %v5726
    %v5781 = vmul.f32 %v5780, %v5779
    %v5782 = vmul.f32 0.5, %v5781
    %v5783 = vsub.f32 1.5, %v5782
    %v5784 = vmul.f32 %v5779, %v5783
    %vm5785 = vweird.f32 %v5726
    %vm5786 = vweird.f32 %v5779
    %vm5787 = vmor %vm5785, %vm5786
    %v5788 = vsel %vm5787, %v5779, %v5784
    %v5789 = vrsqrt.pop %v5727
    %v5790 = vmul.f32 %v5789, %v5727
    %v5791 = vmul.f32 %v5790, %v5789
    %v5792 = vmul.f32 0.5, %v5791
    %v5793 = vsub.f32 1.5, %v5792
    %v5794 = vmul.f32 %v5789, %v5793
    %vm5795 = vweird.f32 %v5727
    %vm5796 = vweird.f32 %v5789
    %vm5797 = vmor %vm5795, %vm5796
    %v5798 = vsel %vm5797, %v5789, %v5794
    %v5799 = vrsqrt.pop %v5728
    %v5800 = vmul.f32 %v5799, %v5728
    %v5801 = vmul.f32 %v5800, %v5799
    %v5802 = vmul.f32 0.5, %v5801
    %v5803 = vsub.f32 1.5, %v5802
    %v5804 = vmul.f32 %v5799, %v5803
    %vm5805 = vweird.f32 %v5728
    %vm5806 = vweird.f32 %v5799
    %vm5807 = vmor %vm5805, %vm5806
    %v5808 = vsel %vm5807, %v5799, %v5804
    %v5809 = vmul.f32 %v5673, %v5738
    %v5810 = vmul.f32 %v5674, %v5748
    %v5811 = vmul.f32 %v5675, %v5758
    %v5812 = vmul.f32 %v5676, %v5768
    %v5813 = vmul.f32 %v5677, %v5778
    %v5814 = vmul.f32 %v5678, %v5788
    %v5815 = vmul.f32 %v5679, %v5798
    %v5816 = vmul.f32 %v5680, %v5808
    %v5817 = vperm.slane %v5640, 0
    %v5818 = vmul.f32 %v5809, %v5817
    %v5819 = vmul.f32 %v5810, %v5817
    %v5820 = vmul.f32 %v5811, %v5817
    %v5821 = vmul.f32 %v5812, %v5817
    %v5822 = vmul.f32 %v5813, %v5817
    %v5823 = vmul.f32 %v5814, %v5817
    %v5824 = vmul.f32 %v5815, %v5817
    %v5825 = vmul.f32 %v5816, %v5817
    %v5826 = vperm.slane %v5640, 1
    %v5827 = vadd.f32 %v5818, %v5826
    %v5828 = vadd.f32 %v5819, %v5826
    %v5829 = vadd.f32 %v5820, %v5826
    %v5830 = vadd.f32 %v5821, %v5826
    %v5831 = vadd.f32 %v5822, %v5826
    %v5832 = vadd.f32 %v5823, %v5826
    %v5833 = vadd.f32 %v5824, %v5826
    %v5834 = vadd.f32 %v5825, %v5826
    %v5835 = vld [vmem:[%s37] sm:$0x1]
    %vm5836 = vcmask 516096
    %5837 = vst.msk [vmem:[#allocation2] sm:$0x1] %vm5836, %v5835
    %5838 = vst.msk [vmem:[#allocation2 + $0x8] sm:$0x1] %vm5836, %v5835
    %5839 = vst.msk [vmem:[#allocation3] sm:$0x1] %vm5836, %v5835
    %5840 = vst.msk [vmem:[#allocation3 + $0x8] sm:$0x1] %vm5836, %v5835
    %v5841 = vld [vmem:[%s39] sm:$0xff]
    %v5842 = vld [vmem:[%s39 + $0x8] sm:$0xff]
    %v5843 = vld [vmem:[%s39 + $0x10] sm:$0xff]
    %v5844 = vld [vmem:[%s39 + $0x18] sm:$0xff]
    %v5845 = vld [vmem:[%s39 + $0x20] sm:$0xff]
    %v5846 = vld [vmem:[%s39 + $0x28] sm:$0xff]
    %v5847 = vld [vmem:[%s39 + $0x30] sm:$0x77]
    %v5848 = vld [vmem:[%s5] sm:$0x1]
    %v5849 = vld [vmem:[%s5 + $0x1] sm:$0x1]
    %v5850 = vpack.c.bf16 %v5848, %v5848
    %v5851 = vpack.c.bf16 %v5849, %v5849
    %v5852 = vld [vmem:[%s41] sm:$0x3]
    %v5860 = vunpack.c.l.b16 %v5841
    %v5861 = vunpack.c.h.b16 %v5841
    %v5862 = vunpack.c.l.b16 %v5842
    %v5863 = vunpack.c.h.b16 %v5842
    %v5864 = vunpack.c.l.b16 %v5843
    %v5865 = vunpack.c.h.b16 %v5843
    %v5866 = vunpack.c.l.b16 %v5844
    %v5867 = vunpack.c.h.b16 %v5844
    %v5868 = vunpack.c.l.b16 %v5845
    %v5869 = vunpack.c.h.b16 %v5845
    %v5870 = vunpack.c.l.b16 %v5846
    %v5871 = vunpack.c.h.b16 %v5846
    %v5872 = vunpack.c.l.b16 %v5847
    %v5873 = vunpack.c.h.b16 %v5847
    %v5874 = vpack.c.b16 %v5862, %v5860
    %v5875 = vpack.c.b16 %v5863, %v5861
    %v5876 = vpack.c.b16 %v5866, %v5864
    %v5877 = vpack.c.b16 %v5867, %v5865
    %v5878 = vpack.c.b16 %v5870, %v5868
    %v5879 = vpack.c.b16 %v5871, %v5869
    %v5880 = vpack.c.b16 %v5872, %v5872
    %v5881 = vpack.c.b16 %v5873, %v5873
    %v5889 = vperm.slane %v5852, 0
    %v5890 = vperm.slane %v5852, 1
    %vm5893 = vcmask 441344
    %v5895 = vsel %vm5893, %v5850, 0
    %vm5897 = vcmask 1042432
    %v5899 = vsel %vm5897, %v5880, 0
    %v5902 = vsel %vm5897, %v5881, 0
    %5904 = vmatpush.bf16.msra.mxu0 0
    %5905 = vmatpush.bf16.msra.mxu0 0
    %5906 = vmatpush.bf16.msra.mxu0 0
    %5907 = vmatpush.bf16.msra.mxu0 0
    %5908 = vmatpush.bf16.msra.mxu0 %v5899
    %5909 = vmatpush.bf16.msra.mxu0 %v5878
    %5910 = vmatpush.bf16.msra.mxu0 %v5876
    %5911 = vmatpush.bf16.msra.mxu0 %v5874
    %5912 = vmatmul.bf16.gmra.mxu0 %v5895
    %v5913 = vpop.f32.mrf.mxu0
    %v5914 = vadd.f32 %v5889, %v5913
    %v5915 = vpop.f32.mrf.mxu0
    %5916 = vdwg.mxu0
    %5917 = vmatpush.bf16.msra.mxu0 0
    %5918 = vmatpush.bf16.msra.mxu0 0
    %5919 = vmatpush.bf16.msra.mxu0 0
    %5920 = vmatpush.bf16.msra.mxu0 0
    %5921 = vmatpush.bf16.msra.mxu0 %v5902
    %5922 = vmatpush.bf16.msra.mxu0 %v5879
    %5923 = vmatpush.bf16.msra.mxu0 %v5877
    %5924 = vmatpush.bf16.msra.mxu0 %v5875
    %5925 = vmatmul.bf16.gmra.mxu0 %v5895
    %v5926 = vpop.f32.mrf.mxu0
    %v5927 = vadd.f32 %v5890, %v5926
    %v5928 = vpop.f32.mrf.mxu0
    %5929 = vdwg.mxu0
    %v5931 = vsel %vm5893, %v5851, 0
    %5933 = vmatpush.bf16.msra.mxu0 0
    %5934 = vmatpush.bf16.msra.mxu0 0
    %5935 = vmatpush.bf16.msra.mxu0 0
    %5936 = vmatpush.bf16.msra.mxu0 0
    %5937 = vmatpush.bf16.msra.mxu0 %v5899
    %5938 = vmatpush.bf16.msra.mxu0 %v5878
    %5939 = vmatpush.bf16.msra.mxu0 %v5876
    %5940 = vmatpush.bf16.msra.mxu0 %v5874
    %5941 = vmatmul.bf16.gmra.mxu0 %v5931
    %v5942 = vpop.f32.mrf.mxu0
    %v5943 = vadd.f32 %v5889, %v5942
    %v5944 = vpop.f32.mrf.mxu0
    %5945 = vdwg.mxu0
    %5946 = vmatpush.bf16.msra.mxu0 0
    %5947 = vmatpush.bf16.msra.mxu0 0
    %5948 = vmatpush.bf16.msra.mxu0 0
    %5949 = vmatpush.bf16.msra.mxu0 0
    %5950 = vmatpush.bf16.msra.mxu0 %v5902
    %5951 = vmatpush.bf16.msra.mxu0 %v5879
    %5952 = vmatpush.bf16.msra.mxu0 %v5877
    %5953 = vmatpush.bf16.msra.mxu0 %v5875
    %5954 = vmatmul.bf16.gmra.mxu0 %v5931
    %v5955 = vpop.f32.mrf.mxu0
    %v5956 = vadd.f32 %v5890, %v5955
    %v5957 = vpop.f32.mrf.mxu0
    %5958 = vdwg.mxu0
    %5959 = vst.msk [vmem:[#allocation2 + $0x1] sm:$0x1] %vm5836, %v5827
    %5960 = vst.msk [vmem:[#allocation2 + $0x9] sm:$0x1] %vm5836, %v5831
    %5961 = vst.msk [vmem:[#allocation3 + $0x1] sm:$0x1] %vm5836, %v5914
    %5962 = vst.msk [vmem:[#allocation3 + $0x9] sm:$0x1] %vm5836, %v5943
    %5963 = vst.msk [vmem:[#allocation2 + $0x2] sm:$0x1] %vm5836, %v5828
    %5964 = vst.msk [vmem:[#allocation2 + $0xa] sm:$0x1] %vm5836, %v5832
    %5967 = vrot.lane.b32.xlu0 %v5914, 64
    %v5968 = vpop.permute.xlu0 %5967
    %5969 = vrot.lane.b32.xlu0 %v5943, 64
    %v5970 = vpop.permute.xlu0 %5969
    %5973 = vst.msk [vmem:[#allocation3 + $0x2] sm:$0x1] %vm5836, %v5968
    %5974 = vst.msk [vmem:[#allocation3 + $0xa] sm:$0x1] %vm5836, %v5970
    %5975 = vst.msk [vmem:[#allocation2 + $0x3] sm:$0x1] %vm5836, %v5829
    %5976 = vst.msk [vmem:[#allocation2 + $0xb] sm:$0x1] %vm5836, %v5833
    %5977 = vst.msk [vmem:[#allocation3 + $0x3] sm:$0x1] %vm5836, %v5927
    %5978 = vst.msk [vmem:[#allocation3 + $0xb] sm:$0x1] %vm5836, %v5956
    %5979 = vst.msk [vmem:[#allocation2 + $0x4] sm:$0x1] %vm5836, %v5830
    %5980 = vst.msk [vmem:[#allocation2 + $0xc] sm:$0x1] %vm5836, %v5834
    %5983 = vrot.lane.b32.xlu0 %v5927, 64
    %v5984 = vpop.permute.xlu0 %5983
    %5985 = vrot.lane.b32.xlu0 %v5956, 64
    %v5986 = vpop.permute.xlu0 %5985
    %5989 = vst.msk [vmem:[#allocation3 + $0x4] sm:$0x1] %vm5836, %v5984
    %5990 = vst.msk [vmem:[#allocation3 + $0xc] sm:$0x1] %vm5836, %v5986
    %v5991 = vld [vmem:[%s61] sm:$0xff]
    %v5992 = vld [vmem:[%s61 + $0x8] sm:$0x3]
    %v5993 = vld [vmem:[#allocation2] sm:$0x1f]
    %v5994 = vld [vmem:[#allocation2 + $0x8] sm:$0x1f]
    %v5995 = vld [vmem:[#allocation3] sm:$0x1f]
    %v5996 = vld [vmem:[#allocation3 + $0x8] sm:$0x1f]
    %vm5997 = vcmask 520192
    %v5998 = vsel %vm5997, %v5995, 0.0
    %5999 = vadd.xlane.f32.xlu0 %v5998
    %v6000 = vpop.xlane.xlu0 %5999
    %v6001 = vsel %vm5997, %v5996, 0.0
    %6002 = vadd.xlane.f32.xlu0 %v6001
    %v6003 = vpop.xlane.xlu0 %6002
    %v6004 = vmul.f32 %v6000, %v1744
    %v6005 = vmul.f32 %v6003, %v1744
    %v6006 = vsub.f32 %v5995, %v6004
    %v6007 = vsub.f32 %v5996, %v6005
    %v6008 = vmul.f32 %v6006, %v6006
    %v6009 = vmul.f32 %v6007, %v6007
    %v6010 = vsel %vm5997, %v6008, 0.0
    %6011 = vadd.xlane.f32.xlu0 %v6010
    %v6012 = vpop.xlane.xlu0 %6011
    %v6013 = vsel %vm5997, %v6009, 0.0
    %6014 = vadd.xlane.f32.xlu0 %v6013
    %v6015 = vpop.xlane.xlu0 %6014
    %v6016 = vmul.f32 %v6012, %v1744
    %v6017 = vmul.f32 %v6015, %v1744
    %v6018 = vadd.f32 %v6016, 1e-05
    %v6019 = vadd.f32 %v6017, 1e-05
    %v6020 = vrsqrt.pop %v6018
    %v6021 = vmul.f32 %v6020, %v6018
    %v6022 = vmul.f32 %v6021, %v6020
    %v6023 = vmul.f32 0.5, %v6022
    %v6024 = vsub.f32 1.5, %v6023
    %v6025 = vmul.f32 %v6020, %v6024
    %vm6026 = vweird.f32 %v6018
    %vm6027 = vweird.f32 %v6020
    %vm6028 = vmor %vm6026, %vm6027
    %v6029 = vsel %vm6028, %v6020, %v6025
    %v6030 = vrsqrt.pop %v6019
    %v6031 = vmul.f32 %v6030, %v6019
    %v6032 = vmul.f32 %v6031, %v6030
    %v6033 = vmul.f32 0.5, %v6032
    %v6034 = vsub.f32 1.5, %v6033
    %v6035 = vmul.f32 %v6030, %v6034
    %vm6036 = vweird.f32 %v6019
    %vm6037 = vweird.f32 %v6030
    %vm6038 = vmor %vm6036, %vm6037
    %v6039 = vsel %vm6038, %v6030, %v6035
    %v6040 = vmul.f32 %v6006, %v6029
    %v6041 = vmul.f32 %v6007, %v6039
    %v6042 = vperm.slane %v5991, 0
    %v6043 = vmul.f32 %v6040, %v6042
    %v6044 = vmul.f32 %v6041, %v6042
    %v6045 = vperm.slane %v5991, 1
    %v6046 = vadd.f32 %v6043, %v6045
    %v6047 = vadd.f32 %v6044, %v6045
    %v6048 = vsel %vm5997, %v6046, 0.0
    %6049 = vadd.xlane.f32.xlu0 %v6048
    %v6050 = vpop.xlane.xlu0 %6049
    %v6051 = vsel %vm5997, %v6047, 0.0
    %6052 = vadd.xlane.f32.xlu0 %v6051
    %v6053 = vpop.xlane.xlu0 %6052
    %v6054 = vmul.f32 %v6050, %v1744
    %v6055 = vmul.f32 %v6053, %v1744
    %v6056 = vsub.f32 %v6046, %v6054
    %v6057 = vsub.f32 %v6047, %v6055
    %v6058 = vmul.f32 %v6056, %v6056
    %v6059 = vmul.f32 %v6057, %v6057
    %v6060 = vsel %vm5997, %v6058, 0.0
    %6061 = vadd.xlane.f32.xlu0 %v6060
    %v6062 = vpop.xlane.xlu0 %6061
    %v6063 = vsel %vm5997, %v6059, 0.0
    %6064 = vadd.xlane.f32.xlu0 %v6063
    %v6065 = vpop.xlane.xlu0 %6064
    %v6066 = vmul.f32 %v6062, %v1744
    %v6067 = vmul.f32 %v6065, %v1744
    %v6068 = vadd.f32 %v6066, 1e-05
    %v6069 = vadd.f32 %v6067, 1e-05
    %v6070 = vrsqrt.pop %v6068
    %v6071 = vmul.f32 %v6070, %v6068
    %v6072 = vmul.f32 %v6071, %v6070
    %v6073 = vmul.f32 0.5, %v6072
    %v6074 = vsub.f32 1.5, %v6073
    %v6075 = vmul.f32 %v6070, %v6074
    %vm6076 = vweird.f32 %v6068
    %vm6077 = vweird.f32 %v6070
    %vm6078 = vmor %vm6076, %vm6077
    %v6079 = vsel %vm6078, %v6070, %v6075
    %v6080 = vrsqrt.pop %v6069
    %v6081 = vmul.f32 %v6080, %v6069
    %v6082 = vmul.f32 %v6081, %v6080
    %v6083 = vmul.f32 0.5, %v6082
    %v6084 = vsub.f32 1.5, %v6083
    %v6085 = vmul.f32 %v6080, %v6084
    %vm6086 = vweird.f32 %v6069
    %vm6087 = vweird.f32 %v6080
    %vm6088 = vmor %vm6086, %vm6087
    %v6089 = vsel %vm6088, %v6080, %v6085
    %v6090 = vmul.f32 %v6056, %v6079
    %v6091 = vmul.f32 %v6057, %v6089
    %v6092 = vperm.slane %v5991, 2
    %v6093 = vmul.f32 %v6090, %v6092
    %v6094 = vmul.f32 %v6091, %v6092
    %v6095 = vperm.slane %v5991, 3
    %v6096 = vadd.f32 %v6093, %v6095
    %v6097 = vadd.f32 %v6094, %v6095
    %v6098 = vld [vmem:[%s47] sm:$0xff]
    %v6099 = vld [vmem:[%s47 + $0x8] sm:$0xff]
    %v6100 = vld [vmem:[%s47 + $0x10] sm:$0xff]
    %v6101 = vld [vmem:[%s47 + $0x18] sm:$0xff]
    %v6102 = vld [vmem:[%s47 + $0x20] sm:$0xff]
    %v6103 = vld [vmem:[%s47 + $0x28] sm:$0xff]
    %v6104 = vld [vmem:[%s47 + $0x30] sm:$0xff]
    %v6105 = vld [vmem:[%s47 + $0x38] sm:$0xff]
    %v6106 = vpack.c.bf16 %v6096, %v6096
    %v6107 = vpack.c.bf16 %v6097, %v6097
    %v6116 = vunpack.c.l.b16 %v6098
    %v6117 = vunpack.c.h.b16 %v6098
    %v6118 = vunpack.c.l.b16 %v6099
    %v6119 = vunpack.c.h.b16 %v6099
    %v6120 = vunpack.c.l.b16 %v6100
    %v6121 = vunpack.c.h.b16 %v6100
    %v6122 = vunpack.c.l.b16 %v6101
    %v6123 = vunpack.c.h.b16 %v6101
    %v6124 = vunpack.c.l.b16 %v6102
    %v6125 = vunpack.c.h.b16 %v6102
    %v6126 = vunpack.c.l.b16 %v6103
    %v6127 = vunpack.c.h.b16 %v6103
    %v6128 = vunpack.c.l.b16 %v6104
    %v6129 = vunpack.c.h.b16 %v6104
    %v6130 = vunpack.c.l.b16 %v6105
    %v6131 = vunpack.c.h.b16 %v6105
    %v6132 = vpack.c.b16 %v6118, %v6116
    %v6133 = vpack.c.b16 %v6119, %v6117
    %v6134 = vpack.c.b16 %v6122, %v6120
    %v6135 = vpack.c.b16 %v6123, %v6121
    %v6136 = vpack.c.b16 %v6126, %v6124
    %v6137 = vpack.c.b16 %v6127, %v6125
    %v6138 = vpack.c.b16 %v6130, %v6128
    %v6139 = vpack.c.b16 %v6131, %v6129
    %v6149 = vsel %vm1713, %v6106, 0
    %6151 = vmatpush.bf16.msra.mxu0 0
    %6152 = vmatpush.bf16.msra.mxu0 0
    %6153 = vmatpush.bf16.msra.mxu0 0
    %6154 = vmatpush.bf16.msra.mxu0 0
    %6155 = vmatpush.bf16.msra.mxu0 %v6138
    %6156 = vmatpush.bf16.msra.mxu0 %v6136
    %6157 = vmatpush.bf16.msra.mxu0 %v6134
    %6158 = vmatpush.bf16.msra.mxu0 %v6132
    %6159 = vmatmul.bf16.gmra.mxu0 %v6149
    %v6160 = vpop.f32.mrf.mxu0
    %v6161 = vadd.f32 0.0, %v6160
    %v6162 = vpop.f32.mrf.mxu0
    %6163 = vdwg.mxu0
    %6164 = vmatpush.bf16.msra.mxu0 0
    %6165 = vmatpush.bf16.msra.mxu0 0
    %6166 = vmatpush.bf16.msra.mxu0 0
    %6167 = vmatpush.bf16.msra.mxu0 0
    %6168 = vmatpush.bf16.msra.mxu0 %v6139
    %6169 = vmatpush.bf16.msra.mxu0 %v6137
    %6170 = vmatpush.bf16.msra.mxu0 %v6135
    %6171 = vmatpush.bf16.msra.mxu0 %v6133
    %6172 = vmatmul.bf16.gmra.mxu0 %v6149
    %v6173 = vpop.f32.mrf.mxu0
    %v6174 = vadd.f32 0.0, %v6173
    %v6175 = vpop.f32.mrf.mxu0
    %6176 = vdwg.mxu0
    %v6178 = vsel %vm1713, %v6107, 0
    %6180 = vmatpush.bf16.msra.mxu0 0
    %6181 = vmatpush.bf16.msra.mxu0 0
    %6182 = vmatpush.bf16.msra.mxu0 0
    %6183 = vmatpush.bf16.msra.mxu0 0
    %6184 = vmatpush.bf16.msra.mxu0 %v6138
    %6185 = vmatpush.bf16.msra.mxu0 %v6136
    %6186 = vmatpush.bf16.msra.mxu0 %v6134
    %6187 = vmatpush.bf16.msra.mxu0 %v6132
    %6188 = vmatmul.bf16.gmra.mxu0 %v6178
    %v6189 = vpop.f32.mrf.mxu0
    %v6190 = vadd.f32 0.0, %v6189
    %v6191 = vpop.f32.mrf.mxu0
    %6192 = vdwg.mxu0
    %6193 = vmatpush.bf16.msra.mxu0 0
    %6194 = vmatpush.bf16.msra.mxu0 0
    %6195 = vmatpush.bf16.msra.mxu0 0
    %6196 = vmatpush.bf16.msra.mxu0 0
    %6197 = vmatpush.bf16.msra.mxu0 %v6139
    %6198 = vmatpush.bf16.msra.mxu0 %v6137
    %6199 = vmatpush.bf16.msra.mxu0 %v6135
    %6200 = vmatpush.bf16.msra.mxu0 %v6133
    %6201 = vmatmul.bf16.gmra.mxu0 %v6178
    %v6202 = vpop.f32.mrf.mxu0
    %v6203 = vadd.f32 0.0, %v6202
    %v6204 = vpop.f32.mrf.mxu0
    %6205 = vdwg.mxu0
    %v6206 = vld [vmem:[%s43] sm:$0xf]
    %v6207 = vsel %vm5997, %v5993, 0.0
    %6208 = vadd.xlane.f32.xlu0 %v6207
    %v6209 = vpop.xlane.xlu0 %6208
    %v6210 = vsel %vm5997, %v5994, 0.0
    %6211 = vadd.xlane.f32.xlu0 %v6210
    %v6212 = vpop.xlane.xlu0 %6211
    %v6213 = vmul.f32 %v6209, %v1744
    %v6214 = vmul.f32 %v6212, %v1744
    %v6215 = vsub.f32 %v5993, %v6213
    %v6216 = vsub.f32 %v5994, %v6214
    %v6217 = vmul.f32 %v6215, %v6215
    %v6218 = vmul.f32 %v6216, %v6216
    %v6219 = vsel %vm5997, %v6217, 0.0
    %6220 = vadd.xlane.f32.xlu0 %v6219
    %v6221 = vpop.xlane.xlu0 %6220
    %v6222 = vsel %vm5997, %v6218, 0.0
    %6223 = vadd.xlane.f32.xlu0 %v6222
    %v6224 = vpop.xlane.xlu0 %6223
    %v6225 = vmul.f32 %v6221, %v1744
    %v6226 = vmul.f32 %v6224, %v1744
    %v6227 = vadd.f32 %v6225, 1e-05
    %v6228 = vadd.f32 %v6226, 1e-05
    %v6229 = vrsqrt.pop %v6227
    %v6230 = vmul.f32 %v6229, %v6227
    %v6231 = vmul.f32 %v6230, %v6229
    %v6232 = vmul.f32 0.5, %v6231
    %v6233 = vsub.f32 1.5, %v6232
    %v6234 = vmul.f32 %v6229, %v6233
    %vm6235 = vweird.f32 %v6227
    %vm6236 = vweird.f32 %v6229
    %vm6237 = vmor %vm6235, %vm6236
    %v6238 = vsel %vm6237, %v6229, %v6234
    %v6239 = vrsqrt.pop %v6228
    %v6240 = vmul.f32 %v6239, %v6228
    %v6241 = vmul.f32 %v6240, %v6239
    %v6242 = vmul.f32 0.5, %v6241
    %v6243 = vsub.f32 1.5, %v6242
    %v6244 = vmul.f32 %v6239, %v6243
    %vm6245 = vweird.f32 %v6228
    %vm6246 = vweird.f32 %v6239
    %vm6247 = vmor %vm6245, %vm6246
    %v6248 = vsel %vm6247, %v6239, %v6244
    %v6249 = vmul.f32 %v6215, %v6238
    %v6250 = vmul.f32 %v6216, %v6248
    %v6251 = vperm.slane %v6206, 0
    %v6252 = vmul.f32 %v6249, %v6251
    %v6253 = vmul.f32 %v6250, %v6251
    %v6254 = vperm.slane %v6206, 1
    %v6255 = vadd.f32 %v6252, %v6254
    %v6256 = vadd.f32 %v6253, %v6254
    %v6257 = vld [vmem:[%s45] sm:$0xf]
    %v6258 = vld [vmem:[%s45 + $0x4] sm:$0xf]
    %v6259 = vld [vmem:[%s45 + $0x8] sm:$0xf]
    %v6260 = vld [vmem:[%s45 + $0xc] sm:$0xf]
    %v6261 = vld [vmem:[%s45 + $0x10] sm:$0xf]
    %v6262 = vld [vmem:[%s45 + $0x14] sm:$0xf]
    %v6263 = vld [vmem:[%s45 + $0x18] sm:$0xf]
    %v6264 = vld [vmem:[%s45 + $0x1c] sm:$0xf]
    %v6265 = vpack.c.bf16 %v6255, %v6255
    %v6266 = vpack.c.bf16 %v6256, %v6256
    %v6275 = vunpack.c.l.b16 %v6257
    %v6276 = vunpack.c.l.b16 %v6258
    %v6277 = vunpack.c.l.b16 %v6259
    %v6278 = vunpack.c.l.b16 %v6260
    %v6279 = vunpack.c.l.b16 %v6261
    %v6280 = vunpack.c.l.b16 %v6262
    %v6281 = vunpack.c.l.b16 %v6263
    %v6282 = vunpack.c.l.b16 %v6264
    %v6283 = vpack.c.b16 %v6276, %v6275
    %v6284 = vpack.c.b16 %v6278, %v6277
    %v6285 = vpack.c.b16 %v6280, %v6279
    %v6286 = vpack.c.b16 %v6282, %v6281
    %v6292 = vsel %vm1713, %v6265, 0
    %6294 = vmatpush.bf16.msra.mxu0 0
    %6295 = vmatpush.bf16.msra.mxu0 0
    %6296 = vmatpush.bf16.msra.mxu0 0
    %6297 = vmatpush.bf16.msra.mxu0 0
    %6298 = vmatpush.bf16.msra.mxu0 %v6286
    %6299 = vmatpush.bf16.msra.mxu0 %v6285
    %6300 = vmatpush.bf16.msra.mxu0 %v6284
    %6301 = vmatpush.bf16.msra.mxu0 %v6283
    %6302 = vmatmul.bf16.gmra.mxu0 %v6292
    %v6303 = vpop.f32.mrf.mxu0
    %v6304 = vadd.f32 0.0, %v6303
    %v6305 = vpop.f32.mrf.mxu0
    %6306 = vdwg.mxu0
    %v6308 = vsel %vm1713, %v6266, 0
    %6310 = vmatpush.bf16.msra.mxu0 0
    %6311 = vmatpush.bf16.msra.mxu0 0
    %6312 = vmatpush.bf16.msra.mxu0 0
    %6313 = vmatpush.bf16.msra.mxu0 0
    %6314 = vmatpush.bf16.msra.mxu0 %v6286
    %6315 = vmatpush.bf16.msra.mxu0 %v6285
    %6316 = vmatpush.bf16.msra.mxu0 %v6284
    %6317 = vmatpush.bf16.msra.mxu0 %v6283
    %6318 = vmatmul.bf16.gmra.mxu0 %v6308
    %v6319 = vpop.f32.mrf.mxu0
    %v6320 = vadd.f32 0.0, %v6319
    %v6321 = vpop.f32.mrf.mxu0
    %6322 = vdwg.mxu0
    %v6323 = vld [vmem:[%s49] sm:$0xf]
    %v6324 = vld [vmem:[%s49 + $0x4] sm:$0xf]
    %v6325 = vld [vmem:[%s49 + $0x8] sm:$0xf]
    %v6326 = vld [vmem:[%s49 + $0xc] sm:$0xf]
    %v6327 = vld [vmem:[%s49 + $0x10] sm:$0xf]
    %v6328 = vld [vmem:[%s49 + $0x14] sm:$0xf]
    %v6329 = vld [vmem:[%s49 + $0x18] sm:$0xf]
    %v6330 = vld [vmem:[%s49 + $0x1c] sm:$0xf]
    %v6331 = vld [vmem:[%s51] sm:$0x1]
    %v6333 = vsel %vm2049, %v6304, 0
    %v6336 = vsel %vm2049, %v6161, 0
    %6338 = vmatpush.xpose.msra.mxu0 0.0
    %6339 = vmatpush.xpose.msra.mxu0 0.0
    %6340 = vmatpush.xpose.msra.mxu0 0.0
    %6341 = vmatpush.xpose.msra.mxu0 0.0
    %6342 = vmatpush.xpose.msra.mxu0 0.0
    %6343 = vmatpush.xpose.msra.mxu0 0.0
    %6344 = vmatpush.xpose.msra.mxu0 0.0
    %6345 = vmatpush.xpose.msra.mxu0 0.0
    %6346 = vmatpush.xpose.msra.mxu0 0.0
    %6347 = vmatpush.xpose.msra.mxu0 0.0
    %6348 = vmatpush.xpose.msra.mxu0 0.0
    %6349 = vmatpush.xpose.msra.mxu0 0.0
    %6350 = vmatpush.xpose.msra.mxu0 0.0
    %6351 = vmatpush.xpose.msra.mxu0 0.0
    %6352 = vmatpush.xpose.msra.mxu0 0.0
    %6353 = vmatpush.xpose.msra.mxu0 %v6336
    %6354 = vmatmul.f32.gmra.mxu0 %v6333
    %v6355 = vpop.f32.mrf.mxu0
    %v6356 = vadd.f32 0.0, %v6355
    %6357 = vdwg.mxu0
    %v6359 = vsel %vm2049, %v6320, 0
    %v6362 = vsel %vm2049, %v6190, 0
    %6364 = vmatpush.xpose.msra.mxu0 0.0
    %6365 = vmatpush.xpose.msra.mxu0 0.0
    %6366 = vmatpush.xpose.msra.mxu0 0.0
    %6367 = vmatpush.xpose.msra.mxu0 0.0
    %6368 = vmatpush.xpose.msra.mxu0 0.0
    %6369 = vmatpush.xpose.msra.mxu0 0.0
    %6370 = vmatpush.xpose.msra.mxu0 0.0
    %6371 = vmatpush.xpose.msra.mxu0 0.0
    %6372 = vmatpush.xpose.msra.mxu0 0.0
    %6373 = vmatpush.xpose.msra.mxu0 0.0
    %6374 = vmatpush.xpose.msra.mxu0 0.0
    %6375 = vmatpush.xpose.msra.mxu0 0.0
    %6376 = vmatpush.xpose.msra.mxu0 0.0
    %6377 = vmatpush.xpose.msra.mxu0 0.0
    %6378 = vmatpush.xpose.msra.mxu0 0.0
    %6379 = vmatpush.xpose.msra.mxu0 %v6362
    %6380 = vmatmul.f32.gmra.mxu0 %v6359
    %v6381 = vpop.f32.mrf.mxu0
    %v6382 = vadd.f32 0.0, %v6381
    %6383 = vdwg.mxu0
    %v6384 = vmul.f32 %v6356, 0.17677669
    %v6385 = vmul.f32 %v6382, 0.17677669
    %vm6386 = vcmask 36864
    %v6387 = vsel %vm6386, %v6384, -inf
    %6388 = vmax.xlane.f32.xlu0 %v6387
    %v6389 = vpop.xlane.xlu0 %6388
    %v6390 = vsel %vm6386, %v6385, -inf
    %6391 = vmax.xlane.f32.xlu0 %v6390
    %v6392 = vpop.xlane.xlu0 %6391
    %v6393 = vsub.f32 %v6384, %v6389
    %v6394 = vsub.f32 %v6385, %v6392
    %v6395 = vmul.f32 %v6393, 1.442695
    %v6396 = vpow.pop %v6395
    %v6397 = vmul.f32 %v6394, 1.442695
    %v6398 = vpow.pop %v6397
    %v6399 = vsel %vm6386, %v6396, 0.0
    %6400 = vadd.xlane.f32.xlu0 %v6399
    %v6401 = vpop.xlane.xlu0 %6400
    %v6402 = vsel %vm6386, %v6398, 0.0
    %6403 = vadd.xlane.f32.xlu0 %v6402
    %v6404 = vpop.xlane.xlu0 %6403
    %v6405 = vrcp.pop %v6401
    %v6406 = vrcp.pop %v6404
    %v6407 = vmul.f32 %v6396, %v6405
    %v6408 = vmul.f32 %v6398, %v6406
    %6409 = vrot.lane.b32.xlu0 %v6161, 64
    %v6410 = vpop.permute.xlu0 %6409
    %vm6411 = vcmask 39936
    %v6413 = vsel %vm6411, %v6407, 0
    %v6415 = vsel %vm1642, %v6410, 0
    %6417 = vmatpush.msra.mxu0 0.0
    %6418 = vmatpush.msra.mxu0 0.0
    %6419 = vmatpush.msra.mxu0 0.0
    %6420 = vmatpush.msra.mxu0 0.0
    %6421 = vmatpush.msra.mxu0 0.0
    %6422 = vmatpush.msra.mxu0 0.0
    %6423 = vmatpush.msra.mxu0 0.0
    %6424 = vmatpush.msra.mxu0 0.0
    %6425 = vmatpush.msra.mxu0 0.0
    %6426 = vmatpush.msra.mxu0 0.0
    %6427 = vmatpush.msra.mxu0 0.0
    %6428 = vmatpush.msra.mxu0 0.0
    %6429 = vmatpush.msra.mxu0 0.0
    %6430 = vmatpush.msra.mxu0 0.0
    %6431 = vmatpush.msra.mxu0 0.0
    %6432 = vmatpush.msra.mxu0 %v6415
    %6433 = vmatmul.f32.gmra.mxu0 %v6413
    %v6434 = vpop.f32.mrf.mxu0
    %v6435 = vadd.f32 0.0, %v6434
    %6436 = vdwg.mxu0
    %6437 = vrot.lane.b32.xlu0 %v6190, 64
    %v6438 = vpop.permute.xlu0 %6437
    %v6440 = vsel %vm6411, %v6408, 0
    %v6442 = vsel %vm1642, %v6438, 0
    %6444 = vmatpush.msra.mxu0 0.0
    %6445 = vmatpush.msra.mxu0 0.0
    %6446 = vmatpush.msra.mxu0 0.0
    %6447 = vmatpush.msra.mxu0 0.0
    %6448 = vmatpush.msra.mxu0 0.0
    %6449 = vmatpush.msra.mxu0 0.0
    %6450 = vmatpush.msra.mxu0 0.0
    %6451 = vmatpush.msra.mxu0 0.0
    %6452 = vmatpush.msra.mxu0 0.0
    %6453 = vmatpush.msra.mxu0 0.0
    %6454 = vmatpush.msra.mxu0 0.0
    %6455 = vmatpush.msra.mxu0 0.0
    %6456 = vmatpush.msra.mxu0 0.0
    %6457 = vmatpush.msra.mxu0 0.0
    %6458 = vmatpush.msra.mxu0 0.0
    %6459 = vmatpush.msra.mxu0 %v6442
    %6460 = vmatmul.f32.gmra.mxu0 %v6440
    %v6461 = vpop.f32.mrf.mxu0
    %v6462 = vadd.f32 0.0, %v6461
    %6463 = vdwg.mxu0
    %v6464 = vpack.c.bf16 %v6435, %v6435
    %v6465 = vpack.c.bf16 %v6462, %v6462
    %6466 = vrot.lane.b32.xlu0 %v6304, 96
    %v6467 = vpop.permute.xlu0 %6466
    %6468 = vrot.lane.b32.xlu0 %v6161, 96
    %v6469 = vpop.permute.xlu0 %6468
    %v6470 = vsel %vm2049, %v6467, 0
    %v6472 = vsel %vm2049, %v6469, 0
    %6474 = vmatpush.xpose.msra.mxu0 0.0
    %6475 = vmatpush.xpose.msra.mxu0 0.0
    %6476 = vmatpush.xpose.msra.mxu0 0.0
    %6477 = vmatpush.xpose.msra.mxu0 0.0
    %6478 = vmatpush.xpose.msra.mxu0 0.0
    %6479 = vmatpush.xpose.msra.mxu0 0.0
    %6480 = vmatpush.xpose.msra.mxu0 0.0
    %6481 = vmatpush.xpose.msra.mxu0 0.0
    %6482 = vmatpush.xpose.msra.mxu0 0.0
    %6483 = vmatpush.xpose.msra.mxu0 0.0
    %6484 = vmatpush.xpose.msra.mxu0 0.0
    %6485 = vmatpush.xpose.msra.mxu0 0.0
    %6486 = vmatpush.xpose.msra.mxu0 0.0
    %6487 = vmatpush.xpose.msra.mxu0 0.0
    %6488 = vmatpush.xpose.msra.mxu0 0.0
    %6489 = vmatpush.xpose.msra.mxu0 %v6472
    %6490 = vmatmul.f32.gmra.mxu0 %v6470
    %v6491 = vpop.f32.mrf.mxu0
    %v6492 = vadd.f32 0.0, %v6491
    %6493 = vdwg.mxu0
    %6494 = vrot.lane.b32.xlu0 %v6320, 96
    %v6495 = vpop.permute.xlu0 %6494
    %6496 = vrot.lane.b32.xlu0 %v6190, 96
    %v6497 = vpop.permute.xlu0 %6496
    %v6498 = vsel %vm2049, %v6495, 0
    %v6500 = vsel %vm2049, %v6497, 0
    %6502 = vmatpush.xpose.msra.mxu0 0.0
    %6503 = vmatpush.xpose.msra.mxu0 0.0
    %6504 = vmatpush.xpose.msra.mxu0 0.0
    %6505 = vmatpush.xpose.msra.mxu0 0.0
    %6506 = vmatpush.xpose.msra.mxu0 0.0
    %6507 = vmatpush.xpose.msra.mxu0 0.0
    %6508 = vmatpush.xpose.msra.mxu0 0.0
    %6509 = vmatpush.xpose.msra.mxu0 0.0
    %6510 = vmatpush.xpose.msra.mxu0 0.0
    %6511 = vmatpush.xpose.msra.mxu0 0.0
    %6512 = vmatpush.xpose.msra.mxu0 0.0
    %6513 = vmatpush.xpose.msra.mxu0 0.0
    %6514 = vmatpush.xpose.msra.mxu0 0.0
    %6515 = vmatpush.xpose.msra.mxu0 0.0
    %6516 = vmatpush.xpose.msra.mxu0 0.0
    %6517 = vmatpush.xpose.msra.mxu0 %v6500
    %6518 = vmatmul.f32.gmra.mxu0 %v6498
    %v6519 = vpop.f32.mrf.mxu0
    %v6520 = vadd.f32 0.0, %v6519
    %6521 = vdwg.mxu0
    %v6522 = vmul.f32 %v6492, 0.17677669
    %v6523 = vmul.f32 %v6520, 0.17677669
    %v6524 = vsel %vm6386, %v6522, -inf
    %6525 = vmax.xlane.f32.xlu0 %v6524
    %v6526 = vpop.xlane.xlu0 %6525
    %v6527 = vsel %vm6386, %v6523, -inf
    %6528 = vmax.xlane.f32.xlu0 %v6527
    %v6529 = vpop.xlane.xlu0 %6528
    %v6530 = vsub.f32 %v6522, %v6526
    %v6531 = vsub.f32 %v6523, %v6529
    %v6532 = vmul.f32 %v6530, 1.442695
    %v6533 = vpow.pop %v6532
    %v6534 = vmul.f32 %v6531, 1.442695
    %v6535 = vpow.pop %v6534
    %v6536 = vsel %vm6386, %v6533, 0.0
    %6537 = vadd.xlane.f32.xlu0 %v6536
    %v6538 = vpop.xlane.xlu0 %6537
    %v6539 = vsel %vm6386, %v6535, 0.0
    %6540 = vadd.xlane.f32.xlu0 %v6539
    %v6541 = vpop.xlane.xlu0 %6540
    %v6542 = vrcp.pop %v6538
    %v6543 = vrcp.pop %v6541
    %v6544 = vmul.f32 %v6533, %v6542
    %v6545 = vmul.f32 %v6535, %v6543
    %6546 = vrot.lane.b32.xlu0 %v6161, 32
    %v6547 = vpop.permute.xlu0 %6546
    %v6549 = vsel %vm6411, %v6544, 0
    %v6551 = vsel %vm1642, %v6547, 0
    %6553 = vmatpush.msra.mxu0 0.0
    %6554 = vmatpush.msra.mxu0 0.0
    %6555 = vmatpush.msra.mxu0 0.0
    %6556 = vmatpush.msra.mxu0 0.0
    %6557 = vmatpush.msra.mxu0 0.0
    %6558 = vmatpush.msra.mxu0 0.0
    %6559 = vmatpush.msra.mxu0 0.0
    %6560 = vmatpush.msra.mxu0 0.0
    %6561 = vmatpush.msra.mxu0 0.0
    %6562 = vmatpush.msra.mxu0 0.0
    %6563 = vmatpush.msra.mxu0 0.0
    %6564 = vmatpush.msra.mxu0 0.0
    %6565 = vmatpush.msra.mxu0 0.0
    %6566 = vmatpush.msra.mxu0 0.0
    %6567 = vmatpush.msra.mxu0 0.0
    %6568 = vmatpush.msra.mxu0 %v6551
    %6569 = vmatmul.f32.gmra.mxu0 %v6549
    %v6570 = vpop.f32.mrf.mxu0
    %v6571 = vadd.f32 0.0, %v6570
    %6572 = vdwg.mxu0
    %6573 = vrot.lane.b32.xlu0 %v6190, 32
    %v6574 = vpop.permute.xlu0 %6573
    %v6576 = vsel %vm6411, %v6545, 0
    %v6578 = vsel %vm1642, %v6574, 0
    %6580 = vmatpush.msra.mxu0 0.0
    %6581 = vmatpush.msra.mxu0 0.0
    %6582 = vmatpush.msra.mxu0 0.0
    %6583 = vmatpush.msra.mxu0 0.0
    %6584 = vmatpush.msra.mxu0 0.0
    %6585 = vmatpush.msra.mxu0 0.0
    %6586 = vmatpush.msra.mxu0 0.0
    %6587 = vmatpush.msra.mxu0 0.0
    %6588 = vmatpush.msra.mxu0 0.0
    %6589 = vmatpush.msra.mxu0 0.0
    %6590 = vmatpush.msra.mxu0 0.0
    %6591 = vmatpush.msra.mxu0 0.0
    %6592 = vmatpush.msra.mxu0 0.0
    %6593 = vmatpush.msra.mxu0 0.0
    %6594 = vmatpush.msra.mxu0 0.0
    %6595 = vmatpush.msra.mxu0 %v6578
    %6596 = vmatmul.f32.gmra.mxu0 %v6576
    %v6597 = vpop.f32.mrf.mxu0
    %v6598 = vadd.f32 0.0, %v6597
    %6599 = vdwg.mxu0
    %v6600 = vpack.c.bf16 %v6571, %v6571
    %v6601 = vpack.c.bf16 %v6598, %v6598
    %v6606 = vunpack.c.l.b16 %v6327
    %v6607 = vunpack.c.l.b16 %v6328
    %v6608 = vunpack.c.l.b16 %v6329
    %v6609 = vunpack.c.l.b16 %v6330
    %v6610 = vpack.c.b16 %v6607, %v6606
    %v6611 = vpack.c.b16 %v6609, %v6608
    %v6615 = vsel %vm2049, %v6600, 0
    %6617 = vmatpush.bf16.msra.mxu0 0
    %6618 = vmatpush.bf16.msra.mxu0 0
    %6619 = vmatpush.bf16.msra.mxu0 0
    %6620 = vmatpush.bf16.msra.mxu0 0
    %6621 = vmatpush.bf16.msra.mxu0 0
    %6622 = vmatpush.bf16.msra.mxu0 0
    %6623 = vmatpush.bf16.msra.mxu0 %v6611
    %6624 = vmatpush.bf16.msra.mxu0 %v6610
    %6625 = vmatmul.bf16.gmra.mxu0 %v6615
    %v6626 = vpop.f32.mrf.mxu0
    %v6627 = vadd.f32 0.0, %v6626
    %v6628 = vpop.f32.mrf.mxu0
    %6629 = vdwg.mxu0
    %v6631 = vsel %vm2049, %v6601, 0
    %6633 = vmatpush.bf16.msra.mxu0 0
    %6634 = vmatpush.bf16.msra.mxu0 0
    %6635 = vmatpush.bf16.msra.mxu0 0
    %6636 = vmatpush.bf16.msra.mxu0 0
    %6637 = vmatpush.bf16.msra.mxu0 0
    %6638 = vmatpush.bf16.msra.mxu0 0
    %6639 = vmatpush.bf16.msra.mxu0 %v6611
    %6640 = vmatpush.bf16.msra.mxu0 %v6610
    %6641 = vmatmul.bf16.gmra.mxu0 %v6631
    %v6642 = vpop.f32.mrf.mxu0
    %v6643 = vadd.f32 0.0, %v6642
    %v6644 = vpop.f32.mrf.mxu0
    %6645 = vdwg.mxu0
    %v6650 = vunpack.c.l.b16 %v6323
    %v6651 = vunpack.c.l.b16 %v6324
    %v6652 = vunpack.c.l.b16 %v6325
    %v6653 = vunpack.c.l.b16 %v6326
    %v6654 = vpack.c.b16 %v6651, %v6650
    %v6655 = vpack.c.b16 %v6653, %v6652
    %v6659 = vsel %vm2049, %v6464, 0
    %6661 = vmatpush.bf16.msra.mxu0 0
    %6662 = vmatpush.bf16.msra.mxu0 0
    %6663 = vmatpush.bf16.msra.mxu0 0
    %6664 = vmatpush.bf16.msra.mxu0 0
    %6665 = vmatpush.bf16.msra.mxu0 0
    %6666 = vmatpush.bf16.msra.mxu0 0
    %6667 = vmatpush.bf16.msra.mxu0 %v6655
    %6668 = vmatpush.bf16.msra.mxu0 %v6654
    %6669 = vmatmul.bf16.gmra.mxu0 %v6659
    %v6670 = vpop.f32.mrf.mxu0
    %v6671 = vadd.f32 %v6627, %v6670
    %v6672 = vpop.f32.mrf.mxu0
    %6673 = vdwg.mxu0
    %v6675 = vsel %vm2049, %v6465, 0
    %6677 = vmatpush.bf16.msra.mxu0 0
    %6678 = vmatpush.bf16.msra.mxu0 0
    %6679 = vmatpush.bf16.msra.mxu0 0
    %6680 = vmatpush.bf16.msra.mxu0 0
    %6681 = vmatpush.bf16.msra.mxu0 0
    %6682 = vmatpush.bf16.msra.mxu0 0
    %6683 = vmatpush.bf16.msra.mxu0 %v6655
    %6684 = vmatpush.bf16.msra.mxu0 %v6654
    %6685 = vmatmul.bf16.gmra.mxu0 %v6675
    %v6686 = vpop.f32.mrf.mxu0
    %v6687 = vadd.f32 %v6643, %v6686
    %v6688 = vpop.f32.mrf.mxu0
    %6689 = vdwg.mxu0
    %v6691 = vperm.slane %v6331, 0
    %v6693 = vadd.f32 %v6671, %v6691
    %v6694 = vadd.f32 %v6687, %v6691
    %v6695 = vadd.f32 %v5993, %v6693
    %v6696 = vadd.f32 %v5994, %v6694
    %v6697 = vsel %vm5997, %v6695, 0.0
    %6698 = vadd.xlane.f32.xlu0 %v6697
    %v6699 = vpop.xlane.xlu0 %6698
    %v6700 = vsel %vm5997, %v6696, 0.0
    %6701 = vadd.xlane.f32.xlu0 %v6700
    %v6702 = vpop.xlane.xlu0 %6701
    %v6703 = vmul.f32 %v6699, %v1744
    %v6704 = vmul.f32 %v6702, %v1744
    %v6705 = vsub.f32 %v6695, %v6703
    %v6706 = vsub.f32 %v6696, %v6704
    %v6707 = vmul.f32 %v6705, %v6705
    %v6708 = vmul.f32 %v6706, %v6706
    %v6709 = vsel %vm5997, %v6707, 0.0
    %6710 = vadd.xlane.f32.xlu0 %v6709
    %v6711 = vpop.xlane.xlu0 %6710
    %v6712 = vsel %vm5997, %v6708, 0.0
    %6713 = vadd.xlane.f32.xlu0 %v6712
    %v6714 = vpop.xlane.xlu0 %6713
    %v6715 = vmul.f32 %v6711, %v1744
    %v6716 = vmul.f32 %v6714, %v1744
    %v6717 = vadd.f32 %v6715, 1e-05
    %v6718 = vadd.f32 %v6716, 1e-05
    %v6719 = vrsqrt.pop %v6717
    %v6720 = vmul.f32 %v6719, %v6717
    %v6721 = vmul.f32 %v6720, %v6719
    %v6722 = vmul.f32 0.5, %v6721
    %v6723 = vsub.f32 1.5, %v6722
    %v6724 = vmul.f32 %v6719, %v6723
    %vm6725 = vweird.f32 %v6717
    %vm6726 = vweird.f32 %v6719
    %vm6727 = vmor %vm6725, %vm6726
    %v6728 = vsel %vm6727, %v6719, %v6724
    %v6729 = vrsqrt.pop %v6718
    %v6730 = vmul.f32 %v6729, %v6718
    %v6731 = vmul.f32 %v6730, %v6729
    %v6732 = vmul.f32 0.5, %v6731
    %v6733 = vsub.f32 1.5, %v6732
    %v6734 = vmul.f32 %v6729, %v6733
    %vm6735 = vweird.f32 %v6718
    %vm6736 = vweird.f32 %v6729
    %vm6737 = vmor %vm6735, %vm6736
    %v6738 = vsel %vm6737, %v6729, %v6734
    %v6739 = vmul.f32 %v6705, %v6728
    %v6740 = vmul.f32 %v6706, %v6738
    %v6741 = vperm.slane %v6206, 2
    %v6742 = vmul.f32 %v6739, %v6741
    %v6743 = vmul.f32 %v6740, %v6741
    %v6744 = vperm.slane %v6206, 3
    %v6745 = vadd.f32 %v6742, %v6744
    %v6746 = vadd.f32 %v6743, %v6744
    %v6747 = vld [vmem:[%s53] sm:$0xf]
    %v6748 = vld [vmem:[%s53 + $0x4] sm:$0xf]
    %v6749 = vld [vmem:[%s53 + $0x8] sm:$0xf]
    %v6750 = vld [vmem:[%s53 + $0xc] sm:$0xf]
    %v6751 = vld [vmem:[%s53 + $0x10] sm:$0xf]
    %v6752 = vld [vmem:[%s53 + $0x14] sm:$0xf]
    %v6753 = vld [vmem:[%s53 + $0x18] sm:$0xf]
    %v6754 = vld [vmem:[%s53 + $0x1c] sm:$0xf]
    %v6755 = vld [vmem:[%s55] sm:$0x1]
    %v6756 = vld [vmem:[%s57] sm:$0xf]
    %v6757 = vld [vmem:[%s57 + $0x4] sm:$0xf]
    %v6758 = vld [vmem:[%s57 + $0x8] sm:$0xf]
    %v6759 = vld [vmem:[%s57 + $0xc] sm:$0xf]
    %v6760 = vld [vmem:[%s57 + $0x10] sm:$0xf]
    %v6761 = vld [vmem:[%s57 + $0x14] sm:$0xf]
    %v6762 = vld [vmem:[%s57 + $0x18] sm:$0xf]
    %v6763 = vld [vmem:[%s57 + $0x1c] sm:$0xf]
    %v6764 = vld [vmem:[%s57 + $0x20] sm:$0xf]
    %v6765 = vld [vmem:[%s57 + $0x24] sm:$0xf]
    %v6766 = vld [vmem:[%s57 + $0x28] sm:$0xf]
    %v6767 = vld [vmem:[%s57 + $0x2c] sm:$0xf]
    %v6768 = vld [vmem:[%s57 + $0x30] sm:$0xf]
    %v6769 = vld [vmem:[%s57 + $0x34] sm:$0xf]
    %v6770 = vld [vmem:[%s57 + $0x38] sm:$0xf]
    %v6771 = vld [vmem:[%s57 + $0x3c] sm:$0xf]
    %v6772 = vld [vmem:[%s59] sm:$0x1]
    %v6773 = vpack.c.bf16 %v6745, %v6745
    %v6774 = vpack.c.bf16 %v6746, %v6746
    %v6776 = vperm.slane %v6755, 0
    %v6786 = vunpack.c.l.b16 %v6747
    %v6787 = vunpack.c.l.b16 %v6748
    %v6788 = vunpack.c.l.b16 %v6749
    %v6789 = vunpack.c.l.b16 %v6750
    %v6790 = vunpack.c.l.b16 %v6751
    %v6791 = vunpack.c.l.b16 %v6752
    %v6792 = vunpack.c.l.b16 %v6753
    %v6793 = vunpack.c.l.b16 %v6754
    %v6794 = vpack.c.b16 %v6787, %v6786
    %v6795 = vpack.c.b16 %v6789, %v6788
    %v6796 = vpack.c.b16 %v6791, %v6790
    %v6797 = vpack.c.b16 %v6793, %v6792
    %v6803 = vsel %vm1713, %v6773, 0
    %6805 = vmatpush.bf16.msra.mxu0 0
    %6806 = vmatpush.bf16.msra.mxu0 0
    %6807 = vmatpush.bf16.msra.mxu0 0
    %6808 = vmatpush.bf16.msra.mxu0 0
    %6809 = vmatpush.bf16.msra.mxu0 %v6797
    %6810 = vmatpush.bf16.msra.mxu0 %v6796
    %6811 = vmatpush.bf16.msra.mxu0 %v6795
    %6812 = vmatpush.bf16.msra.mxu0 %v6794
    %6813 = vmatmul.bf16.gmra.mxu0 %v6803
    %v6814 = vpop.f32.mrf.mxu0
    %v6815 = vadd.f32 %v6776, %v6814
    %v6816 = vpop.f32.mrf.mxu0
    %6817 = vdwg.mxu0
    %v6819 = vsel %vm1713, %v6774, 0
    %6821 = vmatpush.bf16.msra.mxu0 0
    %6822 = vmatpush.bf16.msra.mxu0 0
    %6823 = vmatpush.bf16.msra.mxu0 0
    %6824 = vmatpush.bf16.msra.mxu0 0
    %6825 = vmatpush.bf16.msra.mxu0 %v6797
    %6826 = vmatpush.bf16.msra.mxu0 %v6796
    %6827 = vmatpush.bf16.msra.mxu0 %v6795
    %6828 = vmatpush.bf16.msra.mxu0 %v6794
    %6829 = vmatmul.bf16.gmra.mxu0 %v6819
    %v6830 = vpop.f32.mrf.mxu0
    %v6831 = vadd.f32 %v6776, %v6830
    %v6832 = vpop.f32.mrf.mxu0
    %6833 = vdwg.mxu0
    %v6834 = vmul.f32 %v6815, %v6815
    %v6835 = vmul.f32 %v6831, %v6831
    %v6836 = vmul.f32 %v6815, %v6834
    %v6837 = vmul.f32 %v6831, %v6835
    %v6838 = vmul.f32 %v6836, 0.044715
    %v6839 = vmul.f32 %v6837, 0.044715
    %v6840 = vadd.f32 %v6815, %v6838
    %v6841 = vadd.f32 %v6831, %v6839
    %v6842 = vmul.f32 %v6840, 0.7978846
    %v6843 = vmul.f32 %v6841, 0.7978846
    %v6844 = vtanh.pop %v6842
    %v6845 = vtanh.pop %v6843
    %v6846 = vadd.f32 %v6844, 1.0
    %v6847 = vadd.f32 %v6845, 1.0
    %v6848 = vmul.f32 %v6846, 0.5
    %v6849 = vmul.f32 %v6847, 0.5
    %v6850 = vmul.f32 %v6815, %v6848
    %v6851 = vmul.f32 %v6831, %v6849
    %v6852 = vpack.c.bf16 %v6850, %v6850
    %v6853 = vpack.c.bf16 %v6851, %v6851
    %v6855 = vperm.slane %v6772, 0
    %v6873 = vunpack.c.l.b16 %v6756
    %v6874 = vunpack.c.l.b16 %v6757
    %v6875 = vunpack.c.l.b16 %v6758
    %v6876 = vunpack.c.l.b16 %v6759
    %v6877 = vunpack.c.l.b16 %v6760
    %v6878 = vunpack.c.l.b16 %v6761
    %v6879 = vunpack.c.l.b16 %v6762
    %v6880 = vunpack.c.l.b16 %v6763
    %v6881 = vunpack.c.l.b16 %v6764
    %v6882 = vunpack.c.l.b16 %v6765
    %v6883 = vunpack.c.l.b16 %v6766
    %v6884 = vunpack.c.l.b16 %v6767
    %v6885 = vunpack.c.l.b16 %v6768
    %v6886 = vunpack.c.l.b16 %v6769
    %v6887 = vunpack.c.l.b16 %v6770
    %v6888 = vunpack.c.l.b16 %v6771
    %v6889 = vpack.c.b16 %v6874, %v6873
    %v6890 = vpack.c.b16 %v6876, %v6875
    %v6891 = vpack.c.b16 %v6878, %v6877
    %v6892 = vpack.c.b16 %v6880, %v6879
    %v6893 = vpack.c.b16 %v6882, %v6881
    %v6894 = vpack.c.b16 %v6884, %v6883
    %v6895 = vpack.c.b16 %v6886, %v6885
    %v6896 = vpack.c.b16 %v6888, %v6887
    %6905 = vmatpush.bf16.msra.mxu0 %v6896
    %6906 = vmatpush.bf16.msra.mxu0 %v6895
    %6907 = vmatpush.bf16.msra.mxu0 %v6894
    %6908 = vmatpush.bf16.msra.mxu0 %v6893
    %6909 = vmatpush.bf16.msra.mxu0 %v6892
    %6910 = vmatpush.bf16.msra.mxu0 %v6891
    %6911 = vmatpush.bf16.msra.mxu0 %v6890
    %6912 = vmatpush.bf16.msra.mxu0 %v6889
    %6913 = vmatmul.bf16.gmra.mxu0 %v6852
    %v6914 = vpop.f32.mrf.mxu0
    %v6915 = vadd.f32 %v6855, %v6914
    %v6916 = vpop.f32.mrf.mxu0
    %6917 = vdwg.mxu0
    %6918 = vmatpush.bf16.msra.mxu0 %v6896
    %6919 = vmatpush.bf16.msra.mxu0 %v6895
    %6920 = vmatpush.bf16.msra.mxu0 %v6894
    %6921 = vmatpush.bf16.msra.mxu0 %v6893
    %6922 = vmatpush.bf16.msra.mxu0 %v6892
    %6923 = vmatpush.bf16.msra.mxu0 %v6891
    %6924 = vmatpush.bf16.msra.mxu0 %v6890
    %6925 = vmatpush.bf16.msra.mxu0 %v6889
    %6926 = vmatmul.bf16.gmra.mxu0 %v6853
    %v6927 = vpop.f32.mrf.mxu0
    %v6928 = vadd.f32 %v6855, %v6927
    %v6929 = vpop.f32.mrf.mxu0
    %6930 = vdwg.mxu0
    %v6931 = vadd.f32 %v6695, %v6915
    %v6932 = vadd.f32 %v6696, %v6928
    %s6933 = scalar_lea.vmem %s43, 4
    %v6934 = vld [vmem:[%s6933] sm:$0xf]
    %v6935 = vsel %vm5997, %v6931, 0.0
    %6936 = vadd.xlane.f32.xlu0 %v6935
    %v6937 = vpop.xlane.xlu0 %6936
    %v6938 = vsel %vm5997, %v6932, 0.0
    %6939 = vadd.xlane.f32.xlu0 %v6938
    %v6940 = vpop.xlane.xlu0 %6939
    %v6941 = vmul.f32 %v6937, %v1744
    %v6942 = vmul.f32 %v6940, %v1744
    %v6943 = vsub.f32 %v6931, %v6941
    %v6944 = vsub.f32 %v6932, %v6942
    %v6945 = vmul.f32 %v6943, %v6943
    %v6946 = vmul.f32 %v6944, %v6944
    %v6947 = vsel %vm5997, %v6945, 0.0
    %6948 = vadd.xlane.f32.xlu0 %v6947
    %v6949 = vpop.xlane.xlu0 %6948
    %v6950 = vsel %vm5997, %v6946, 0.0
    %6951 = vadd.xlane.f32.xlu0 %v6950
    %v6952 = vpop.xlane.xlu0 %6951
    %v6953 = vmul.f32 %v6949, %v1744
    %v6954 = vmul.f32 %v6952, %v1744
    %v6955 = vadd.f32 %v6953, 1e-05
    %v6956 = vadd.f32 %v6954, 1e-05
    %v6957 = vrsqrt.pop %v6955
    %v6958 = vmul.f32 %v6957, %v6955
    %v6959 = vmul.f32 %v6958, %v6957
    %v6960 = vmul.f32 0.5, %v6959
    %v6961 = vsub.f32 1.5, %v6960
    %v6962 = vmul.f32 %v6957, %v6961
    %vm6963 = vweird.f32 %v6955
    %vm6964 = vweird.f32 %v6957
    %vm6965 = vmor %vm6963, %vm6964
    %v6966 = vsel %vm6965, %v6957, %v6962
    %v6967 = vrsqrt.pop %v6956
    %v6968 = vmul.f32 %v6967, %v6956
    %v6969 = vmul.f32 %v6968, %v6967
    %v6970 = vmul.f32 0.5, %v6969
    %v6971 = vsub.f32 1.5, %v6970
    %v6972 = vmul.f32 %v6967, %v6971
    %vm6973 = vweird.f32 %v6956
    %vm6974 = vweird.f32 %v6967
    %vm6975 = vmor %vm6973, %vm6974
    %v6976 = vsel %vm6975, %v6967, %v6972
    %v6977 = vmul.f32 %v6943, %v6966
    %v6978 = vmul.f32 %v6944, %v6976
    %v6979 = vperm.slane %v6934, 0
    %v6980 = vmul.f32 %v6977, %v6979
    %v6981 = vmul.f32 %v6978, %v6979
    %v6982 = vperm.slane %v6934, 1
    %v6983 = vadd.f32 %v6980, %v6982
    %v6984 = vadd.f32 %v6981, %v6982
    %s6985 = scalar_lea.vmem %s45, 32
    %v6986 = vld [vmem:[%s6985] sm:$0xf]
    %v6987 = vld [vmem:[%s6985 + $0x4] sm:$0xf]
    %v6988 = vld [vmem:[%s6985 + $0x8] sm:$0xf]
    %v6989 = vld [vmem:[%s6985 + $0xc] sm:$0xf]
    %v6990 = vld [vmem:[%s6985 + $0x10] sm:$0xf]
    %v6991 = vld [vmem:[%s6985 + $0x14] sm:$0xf]
    %v6992 = vld [vmem:[%s6985 + $0x18] sm:$0xf]
    %v6993 = vld [vmem:[%s6985 + $0x1c] sm:$0xf]
    %v6994 = vpack.c.bf16 %v6983, %v6983
    %v6995 = vpack.c.bf16 %v6984, %v6984
    %v7004 = vunpack.c.l.b16 %v6986
    %v7005 = vunpack.c.l.b16 %v6987
    %v7006 = vunpack.c.l.b16 %v6988
    %v7007 = vunpack.c.l.b16 %v6989
    %v7008 = vunpack.c.l.b16 %v6990
    %v7009 = vunpack.c.l.b16 %v6991
    %v7010 = vunpack.c.l.b16 %v6992
    %v7011 = vunpack.c.l.b16 %v6993
    %v7012 = vpack.c.b16 %v7005, %v7004
    %v7013 = vpack.c.b16 %v7007, %v7006
    %v7014 = vpack.c.b16 %v7009, %v7008
    %v7015 = vpack.c.b16 %v7011, %v7010
    %v7021 = vsel %vm1713, %v6994, 0
    %7023 = vmatpush.bf16.msra.mxu0 0
    %7024 = vmatpush.bf16.msra.mxu0 0
    %7025 = vmatpush.bf16.msra.mxu0 0
    %7026 = vmatpush.bf16.msra.mxu0 0
    %7027 = vmatpush.bf16.msra.mxu0 %v7015
    %7028 = vmatpush.bf16.msra.mxu0 %v7014
    %7029 = vmatpush.bf16.msra.mxu0 %v7013
    %7030 = vmatpush.bf16.msra.mxu0 %v7012
    %7031 = vmatmul.bf16.gmra.mxu0 %v7021
    %v7032 = vpop.f32.mrf.mxu0
    %v7033 = vadd.f32 0.0, %v7032
    %v7034 = vpop.f32.mrf.mxu0
    %7035 = vdwg.mxu0
    %v7037 = vsel %vm1713, %v6995, 0
    %7039 = vmatpush.bf16.msra.mxu0 0
    %7040 = vmatpush.bf16.msra.mxu0 0
    %7041 = vmatpush.bf16.msra.mxu0 0
    %7042 = vmatpush.bf16.msra.mxu0 0
    %7043 = vmatpush.bf16.msra.mxu0 %v7015
    %7044 = vmatpush.bf16.msra.mxu0 %v7014
    %7045 = vmatpush.bf16.msra.mxu0 %v7013
    %7046 = vmatpush.bf16.msra.mxu0 %v7012
    %7047 = vmatmul.bf16.gmra.mxu0 %v7037
    %v7048 = vpop.f32.mrf.mxu0
    %v7049 = vadd.f32 0.0, %v7048
    %v7050 = vpop.f32.mrf.mxu0
    %7051 = vdwg.mxu0
    %s7052 = scalar_lea.vmem %s49, 32
    %v7053 = vld [vmem:[%s7052] sm:$0xf]
    %v7054 = vld [vmem:[%s7052 + $0x4] sm:$0xf]
    %v7055 = vld [vmem:[%s7052 + $0x8] sm:$0xf]
    %v7056 = vld [vmem:[%s7052 + $0xc] sm:$0xf]
    %v7057 = vld [vmem:[%s7052 + $0x10] sm:$0xf]
    %v7058 = vld [vmem:[%s7052 + $0x14] sm:$0xf]
    %v7059 = vld [vmem:[%s7052 + $0x18] sm:$0xf]
    %v7060 = vld [vmem:[%s7052 + $0x1c] sm:$0xf]
    %s7061 = scalar_lea.vmem %s51, 1
    %v7062 = vld [vmem:[%s7061] sm:$0x1]
    %v7064 = vsel %vm2049, %v7033, 0
    %v7067 = vsel %vm2049, %v6174, 0
    %7069 = vmatpush.xpose.msra.mxu0 0.0
    %7070 = vmatpush.xpose.msra.mxu0 0.0
    %7071 = vmatpush.xpose.msra.mxu0 0.0
    %7072 = vmatpush.xpose.msra.mxu0 0.0
    %7073 = vmatpush.xpose.msra.mxu0 0.0
    %7074 = vmatpush.xpose.msra.mxu0 0.0
    %7075 = vmatpush.xpose.msra.mxu0 0.0
    %7076 = vmatpush.xpose.msra.mxu0 0.0
    %7077 = vmatpush.xpose.msra.mxu0 0.0
    %7078 = vmatpush.xpose.msra.mxu0 0.0
    %7079 = vmatpush.xpose.msra.mxu0 0.0
    %7080 = vmatpush.xpose.msra.mxu0 0.0
    %7081 = vmatpush.xpose.msra.mxu0 0.0
    %7082 = vmatpush.xpose.msra.mxu0 0.0
    %7083 = vmatpush.xpose.msra.mxu0 0.0
    %7084 = vmatpush.xpose.msra.mxu0 %v7067
    %7085 = vmatmul.f32.gmra.mxu0 %v7064
    %v7086 = vpop.f32.mrf.mxu0
    %v7087 = vadd.f32 0.0, %v7086
    %7088 = vdwg.mxu0
    %v7090 = vsel %vm2049, %v7049, 0
    %v7093 = vsel %vm2049, %v6203, 0
    %7095 = vmatpush.xpose.msra.mxu0 0.0
    %7096 = vmatpush.xpose.msra.mxu0 0.0
    %7097 = vmatpush.xpose.msra.mxu0 0.0
    %7098 = vmatpush.xpose.msra.mxu0 0.0
    %7099 = vmatpush.xpose.msra.mxu0 0.0
    %7100 = vmatpush.xpose.msra.mxu0 0.0
    %7101 = vmatpush.xpose.msra.mxu0 0.0
    %7102 = vmatpush.xpose.msra.mxu0 0.0
    %7103 = vmatpush.xpose.msra.mxu0 0.0
    %7104 = vmatpush.xpose.msra.mxu0 0.0
    %7105 = vmatpush.xpose.msra.mxu0 0.0
    %7106 = vmatpush.xpose.msra.mxu0 0.0
    %7107 = vmatpush.xpose.msra.mxu0 0.0
    %7108 = vmatpush.xpose.msra.mxu0 0.0
    %7109 = vmatpush.xpose.msra.mxu0 0.0
    %7110 = vmatpush.xpose.msra.mxu0 %v7093
    %7111 = vmatmul.f32.gmra.mxu0 %v7090
    %v7112 = vpop.f32.mrf.mxu0
    %v7113 = vadd.f32 0.0, %v7112
    %7114 = vdwg.mxu0
    %v7115 = vmul.f32 %v7087, 0.17677669
    %v7116 = vmul.f32 %v7113, 0.17677669
    %v7117 = vsel %vm6386, %v7115, -inf
    %7118 = vmax.xlane.f32.xlu0 %v7117
    %v7119 = vpop.xlane.xlu0 %7118
    %v7120 = vsel %vm6386, %v7116, -inf
    %7121 = vmax.xlane.f32.xlu0 %v7120
    %v7122 = vpop.xlane.xlu0 %7121
    %v7123 = vsub.f32 %v7115, %v7119
    %v7124 = vsub.f32 %v7116, %v7122
    %v7125 = vmul.f32 %v7123, 1.442695
    %v7126 = vpow.pop %v7125
    %v7127 = vmul.f32 %v7124, 1.442695
    %v7128 = vpow.pop %v7127
    %v7129 = vsel %vm6386, %v7126, 0.0
    %7130 = vadd.xlane.f32.xlu0 %v7129
    %v7131 = vpop.xlane.xlu0 %7130
    %v7132 = vsel %vm6386, %v7128, 0.0
    %7133 = vadd.xlane.f32.xlu0 %v7132
    %v7134 = vpop.xlane.xlu0 %7133
    %v7135 = vrcp.pop %v7131
    %v7136 = vrcp.pop %v7134
    %v7137 = vmul.f32 %v7126, %v7135
    %v7138 = vmul.f32 %v7128, %v7136
    %7139 = vrot.lane.b32.xlu0 %v6174, 64
    %v7140 = vpop.permute.xlu0 %7139
    %v7142 = vsel %vm6411, %v7137, 0
    %v7144 = vsel %vm1642, %v7140, 0
    %7146 = vmatpush.msra.mxu0 0.0
    %7147 = vmatpush.msra.mxu0 0.0
    %7148 = vmatpush.msra.mxu0 0.0
    %7149 = vmatpush.msra.mxu0 0.0
    %7150 = vmatpush.msra.mxu0 0.0
    %7151 = vmatpush.msra.mxu0 0.0
    %7152 = vmatpush.msra.mxu0 0.0
    %7153 = vmatpush.msra.mxu0 0.0
    %7154 = vmatpush.msra.mxu0 0.0
    %7155 = vmatpush.msra.mxu0 0.0
    %7156 = vmatpush.msra.mxu0 0.0
    %7157 = vmatpush.msra.mxu0 0.0
    %7158 = vmatpush.msra.mxu0 0.0
    %7159 = vmatpush.msra.mxu0 0.0
    %7160 = vmatpush.msra.mxu0 0.0
    %7161 = vmatpush.msra.mxu0 %v7144
    %7162 = vmatmul.f32.gmra.mxu0 %v7142
    %v7163 = vpop.f32.mrf.mxu0
    %v7164 = vadd.f32 0.0, %v7163
    %7165 = vdwg.mxu0
    %7166 = vrot.lane.b32.xlu0 %v6203, 64
    %v7167 = vpop.permute.xlu0 %7166
    %v7169 = vsel %vm6411, %v7138, 0
    %v7171 = vsel %vm1642, %v7167, 0
    %7173 = vmatpush.msra.mxu0 0.0
    %7174 = vmatpush.msra.mxu0 0.0
    %7175 = vmatpush.msra.mxu0 0.0
    %7176 = vmatpush.msra.mxu0 0.0
    %7177 = vmatpush.msra.mxu0 0.0
    %7178 = vmatpush.msra.mxu0 0.0
    %7179 = vmatpush.msra.mxu0 0.0
    %7180 = vmatpush.msra.mxu0 0.0
    %7181 = vmatpush.msra.mxu0 0.0
    %7182 = vmatpush.msra.mxu0 0.0
    %7183 = vmatpush.msra.mxu0 0.0
    %7184 = vmatpush.msra.mxu0 0.0
    %7185 = vmatpush.msra.mxu0 0.0
    %7186 = vmatpush.msra.mxu0 0.0
    %7187 = vmatpush.msra.mxu0 0.0
    %7188 = vmatpush.msra.mxu0 %v7171
    %7189 = vmatmul.f32.gmra.mxu0 %v7169
    %v7190 = vpop.f32.mrf.mxu0
    %v7191 = vadd.f32 0.0, %v7190
    %7192 = vdwg.mxu0
    %v7193 = vpack.c.bf16 %v7164, %v7164
    %v7194 = vpack.c.bf16 %v7191, %v7191
    %7195 = vrot.lane.b32.xlu0 %v7033, 96
    %v7196 = vpop.permute.xlu0 %7195
    %7197 = vrot.lane.b32.xlu0 %v6174, 96
    %v7198 = vpop.permute.xlu0 %7197
    %v7199 = vsel %vm2049, %v7196, 0
    %v7201 = vsel %vm2049, %v7198, 0
    %7203 = vmatpush.xpose.msra.mxu0 0.0
    %7204 = vmatpush.xpose.msra.mxu0 0.0
    %7205 = vmatpush.xpose.msra.mxu0 0.0
    %7206 = vmatpush.xpose.msra.mxu0 0.0
    %7207 = vmatpush.xpose.msra.mxu0 0.0
    %7208 = vmatpush.xpose.msra.mxu0 0.0
    %7209 = vmatpush.xpose.msra.mxu0 0.0
    %7210 = vmatpush.xpose.msra.mxu0 0.0
    %7211 = vmatpush.xpose.msra.mxu0 0.0
    %7212 = vmatpush.xpose.msra.mxu0 0.0
    %7213 = vmatpush.xpose.msra.mxu0 0.0
    %7214 = vmatpush.xpose.msra.mxu0 0.0
    %7215 = vmatpush.xpose.msra.mxu0 0.0
    %7216 = vmatpush.xpose.msra.mxu0 0.0
    %7217 = vmatpush.xpose.msra.mxu0 0.0
    %7218 = vmatpush.xpose.msra.mxu0 %v7201
    %7219 = vmatmul.f32.gmra.mxu0 %v7199
    %v7220 = vpop.f32.mrf.mxu0
    %v7221 = vadd.f32 0.0, %v7220
    %7222 = vdwg.mxu0
    %7223 = vrot.lane.b32.xlu0 %v7049, 96
    %v7224 = vpop.permute.xlu0 %7223
    %7225 = vrot.lane.b32.xlu0 %v6203, 96
    %v7226 = vpop.permute.xlu0 %7225
    %v7227 = vsel %vm2049, %v7224, 0
    %v7229 = vsel %vm2049, %v7226, 0
    %7231 = vmatpush.xpose.msra.mxu0 0.0
    %7232 = vmatpush.xpose.msra.mxu0 0.0
    %7233 = vmatpush.xpose.msra.mxu0 0.0
    %7234 = vmatpush.xpose.msra.mxu0 0.0
    %7235 = vmatpush.xpose.msra.mxu0 0.0
    %7236 = vmatpush.xpose.msra.mxu0 0.0
    %7237 = vmatpush.xpose.msra.mxu0 0.0
    %7238 = vmatpush.xpose.msra.mxu0 0.0
    %7239 = vmatpush.xpose.msra.mxu0 0.0
    %7240 = vmatpush.xpose.msra.mxu0 0.0
    %7241 = vmatpush.xpose.msra.mxu0 0.0
    %7242 = vmatpush.xpose.msra.mxu0 0.0
    %7243 = vmatpush.xpose.msra.mxu0 0.0
    %7244 = vmatpush.xpose.msra.mxu0 0.0
    %7245 = vmatpush.xpose.msra.mxu0 0.0
    %7246 = vmatpush.xpose.msra.mxu0 %v7229
    %7247 = vmatmul.f32.gmra.mxu0 %v7227
    %v7248 = vpop.f32.mrf.mxu0
    %v7249 = vadd.f32 0.0, %v7248
    %7250 = vdwg.mxu0
    %v7251 = vmul.f32 %v7221, 0.17677669
    %v7252 = vmul.f32 %v7249, 0.17677669
    %v7253 = vsel %vm6386, %v7251, -inf
    %7254 = vmax.xlane.f32.xlu0 %v7253
    %v7255 = vpop.xlane.xlu0 %7254
    %v7256 = vsel %vm6386, %v7252, -inf
    %7257 = vmax.xlane.f32.xlu0 %v7256
    %v7258 = vpop.xlane.xlu0 %7257
    %v7259 = vsub.f32 %v7251, %v7255
    %v7260 = vsub.f32 %v7252, %v7258
    %v7261 = vmul.f32 %v7259, 1.442695
    %v7262 = vpow.pop %v7261
    %v7263 = vmul.f32 %v7260, 1.442695
    %v7264 = vpow.pop %v7263
    %v7265 = vsel %vm6386, %v7262, 0.0
    %7266 = vadd.xlane.f32.xlu0 %v7265
    %v7267 = vpop.xlane.xlu0 %7266
    %v7268 = vsel %vm6386, %v7264, 0.0
    %7269 = vadd.xlane.f32.xlu0 %v7268
    %v7270 = vpop.xlane.xlu0 %7269
    %v7271 = vrcp.pop %v7267
    %v7272 = vrcp.pop %v7270
    %v7273 = vmul.f32 %v7262, %v7271
    %v7274 = vmul.f32 %v7264, %v7272
    %7275 = vrot.lane.b32.xlu0 %v6174, 32
    %v7276 = vpop.permute.xlu0 %7275
    %v7278 = vsel %vm6411, %v7273, 0
    %v7280 = vsel %vm1642, %v7276, 0
    %7282 = vmatpush.msra.mxu0 0.0
    %7283 = vmatpush.msra.mxu0 0.0
    %7284 = vmatpush.msra.mxu0 0.0
    %7285 = vmatpush.msra.mxu0 0.0
    %7286 = vmatpush.msra.mxu0 0.0
    %7287 = vmatpush.msra.mxu0 0.0
    %7288 = vmatpush.msra.mxu0 0.0
    %7289 = vmatpush.msra.mxu0 0.0
    %7290 = vmatpush.msra.mxu0 0.0
    %7291 = vmatpush.msra.mxu0 0.0
    %7292 = vmatpush.msra.mxu0 0.0
    %7293 = vmatpush.msra.mxu0 0.0
    %7294 = vmatpush.msra.mxu0 0.0
    %7295 = vmatpush.msra.mxu0 0.0
    %7296 = vmatpush.msra.mxu0 0.0
    %7297 = vmatpush.msra.mxu0 %v7280
    %7298 = vmatmul.f32.gmra.mxu0 %v7278
    %v7299 = vpop.f32.mrf.mxu0
    %v7300 = vadd.f32 0.0, %v7299
    %7301 = vdwg.mxu0
    %7302 = vrot.lane.b32.xlu0 %v6203, 32
    %v7303 = vpop.permute.xlu0 %7302
    %v7305 = vsel %vm6411, %v7274, 0
    %v7307 = vsel %vm1642, %v7303, 0
    %7309 = vmatpush.msra.mxu0 0.0
    %7310 = vmatpush.msra.mxu0 0.0
    %7311 = vmatpush.msra.mxu0 0.0
    %7312 = vmatpush.msra.mxu0 0.0
    %7313 = vmatpush.msra.mxu0 0.0
    %7314 = vmatpush.msra.mxu0 0.0
    %7315 = vmatpush.msra.mxu0 0.0
    %7316 = vmatpush.msra.mxu0 0.0
    %7317 = vmatpush.msra.mxu0 0.0
    %7318 = vmatpush.msra.mxu0 0.0
    %7319 = vmatpush.msra.mxu0 0.0
    %7320 = vmatpush.msra.mxu0 0.0
    %7321 = vmatpush.msra.mxu0 0.0
    %7322 = vmatpush.msra.mxu0 0.0
    %7323 = vmatpush.msra.mxu0 0.0
    %7324 = vmatpush.msra.mxu0 %v7307
    %7325 = vmatmul.f32.gmra.mxu0 %v7305
    %v7326 = vpop.f32.mrf.mxu0
    %v7327 = vadd.f32 0.0, %v7326
    %7328 = vdwg.mxu0
    %v7329 = vpack.c.bf16 %v7300, %v7300
    %v7330 = vpack.c.bf16 %v7327, %v7327
    %v7335 = vunpack.c.l.b16 %v7057
    %v7336 = vunpack.c.l.b16 %v7058
    %v7337 = vunpack.c.l.b16 %v7059
    %v7338 = vunpack.c.l.b16 %v7060
    %v7339 = vpack.c.b16 %v7336, %v7335
    %v7340 = vpack.c.b16 %v7338, %v7337
    %v7344 = vsel %vm2049, %v7329, 0
    %7346 = vmatpush.bf16.msra.mxu0 0
    %7347 = vmatpush.bf16.msra.mxu0 0
    %7348 = vmatpush.bf16.msra.mxu0 0
    %7349 = vmatpush.bf16.msra.mxu0 0
    %7350 = vmatpush.bf16.msra.mxu0 0
    %7351 = vmatpush.bf16.msra.mxu0 0
    %7352 = vmatpush.bf16.msra.mxu0 %v7340
    %7353 = vmatpush.bf16.msra.mxu0 %v7339
    %7354 = vmatmul.bf16.gmra.mxu0 %v7344
    %v7355 = vpop.f32.mrf.mxu0
    %v7356 = vadd.f32 0.0, %v7355
    %v7357 = vpop.f32.mrf.mxu0
    %7358 = vdwg.mxu0
    %v7360 = vsel %vm2049, %v7330, 0
    %7362 = vmatpush.bf16.msra.mxu0 0
    %7363 = vmatpush.bf16.msra.mxu0 0
    %7364 = vmatpush.bf16.msra.mxu0 0
    %7365 = vmatpush.bf16.msra.mxu0 0
    %7366 = vmatpush.bf16.msra.mxu0 0
    %7367 = vmatpush.bf16.msra.mxu0 0
    %7368 = vmatpush.bf16.msra.mxu0 %v7340
    %7369 = vmatpush.bf16.msra.mxu0 %v7339
    %7370 = vmatmul.bf16.gmra.mxu0 %v7360
    %v7371 = vpop.f32.mrf.mxu0
    %v7372 = vadd.f32 0.0, %v7371
    %v7373 = vpop.f32.mrf.mxu0
    %7374 = vdwg.mxu0
    %v7379 = vunpack.c.l.b16 %v7053
    %v7380 = vunpack.c.l.b16 %v7054
    %v7381 = vunpack.c.l.b16 %v7055
    %v7382 = vunpack.c.l.b16 %v7056
    %v7383 = vpack.c.b16 %v7380, %v7379
    %v7384 = vpack.c.b16 %v7382, %v7381
    %v7388 = vsel %vm2049, %v7193, 0
    %7390 = vmatpush.bf16.msra.mxu0 0
    %7391 = vmatpush.bf16.msra.mxu0 0
    %7392 = vmatpush.bf16.msra.mxu0 0
    %7393 = vmatpush.bf16.msra.mxu0 0
    %7394 = vmatpush.bf16.msra.mxu0 0
    %7395 = vmatpush.bf16.msra.mxu0 0
    %7396 = vmatpush.bf16.msra.mxu0 %v7384
    %7397 = vmatpush.bf16.msra.mxu0 %v7383
    %7398 = vmatmul.bf16.gmra.mxu0 %v7388
    %v7399 = vpop.f32.mrf.mxu0
    %v7400 = vadd.f32 %v7356, %v7399
    %v7401 = vpop.f32.mrf.mxu0
    %7402 = vdwg.mxu0
    %v7404 = vsel %vm2049, %v7194, 0
    %7406 = vmatpush.bf16.msra.mxu0 0
    %7407 = vmatpush.bf16.msra.mxu0 0
    %7408 = vmatpush.bf16.msra.mxu0 0
    %7409 = vmatpush.bf16.msra.mxu0 0
    %7410 = vmatpush.bf16.msra.mxu0 0
    %7411 = vmatpush.bf16.msra.mxu0 0
    %7412 = vmatpush.bf16.msra.mxu0 %v7384
    %7413 = vmatpush.bf16.msra.mxu0 %v7383
    %7414 = vmatmul.bf16.gmra.mxu0 %v7404
    %v7415 = vpop.f32.mrf.mxu0
    %v7416 = vadd.f32 %v7372, %v7415
    %v7417 = vpop.f32.mrf.mxu0
    %7418 = vdwg.mxu0
    %v7420 = vperm.slane %v7062, 0
    %v7422 = vadd.f32 %v7400, %v7420
    %v7423 = vadd.f32 %v7416, %v7420
    %v7424 = vadd.f32 %v6931, %v7422
    %v7425 = vadd.f32 %v6932, %v7423
    %v7426 = vsel %vm5997, %v7424, 0.0
    %7427 = vadd.xlane.f32.xlu0 %v7426
    %v7428 = vpop.xlane.xlu0 %7427
    %v7429 = vsel %vm5997, %v7425, 0.0
    %7430 = vadd.xlane.f32.xlu0 %v7429
    %v7431 = vpop.xlane.xlu0 %7430
    %v7432 = vmul.f32 %v7428, %v1744
    %v7433 = vmul.f32 %v7431, %v1744
    %v7434 = vsub.f32 %v7424, %v7432
    %v7435 = vsub.f32 %v7425, %v7433
    %v7436 = vmul.f32 %v7434, %v7434
    %v7437 = vmul.f32 %v7435, %v7435
    %v7438 = vsel %vm5997, %v7436, 0.0
    %7439 = vadd.xlane.f32.xlu0 %v7438
    %v7440 = vpop.xlane.xlu0 %7439
    %v7441 = vsel %vm5997, %v7437, 0.0
    %7442 = vadd.xlane.f32.xlu0 %v7441
    %v7443 = vpop.xlane.xlu0 %7442
    %v7444 = vmul.f32 %v7440, %v1744
    %v7445 = vmul.f32 %v7443, %v1744
    %v7446 = vadd.f32 %v7444, 1e-05
    %v7447 = vadd.f32 %v7445, 1e-05
    %v7448 = vrsqrt.pop %v7446
    %v7449 = vmul.f32 %v7448, %v7446
    %v7450 = vmul.f32 %v7449, %v7448
    %v7451 = vmul.f32 0.5, %v7450
    %v7452 = vsub.f32 1.5, %v7451
    %v7453 = vmul.f32 %v7448, %v7452
    %vm7454 = vweird.f32 %v7446
    %vm7455 = vweird.f32 %v7448
    %vm7456 = vmor %vm7454, %vm7455
    %v7457 = vsel %vm7456, %v7448, %v7453
    %v7458 = vrsqrt.pop %v7447
    %v7459 = vmul.f32 %v7458, %v7447
    %v7460 = vmul.f32 %v7459, %v7458
    %v7461 = vmul.f32 0.5, %v7460
    %v7462 = vsub.f32 1.5, %v7461
    %v7463 = vmul.f32 %v7458, %v7462
    %vm7464 = vweird.f32 %v7447
    %vm7465 = vweird.f32 %v7458
    %vm7466 = vmor %vm7464, %vm7465
    %v7467 = vsel %vm7466, %v7458, %v7463
    %v7468 = vmul.f32 %v7434, %v7457
    %v7469 = vmul.f32 %v7435, %v7467
    %v7470 = vperm.slane %v6934, 2
    %v7471 = vmul.f32 %v7468, %v7470
    %v7472 = vmul.f32 %v7469, %v7470
    %v7473 = vperm.slane %v6934, 3
    %v7474 = vadd.f32 %v7471, %v7473
    %v7475 = vadd.f32 %v7472, %v7473
    %s7476 = scalar_lea.vmem %s53, 32
    %v7477 = vld [vmem:[%s7476] sm:$0xf]
    %v7478 = vld [vmem:[%s7476 + $0x4] sm:$0xf]
    %v7479 = vld [vmem:[%s7476 + $0x8] sm:$0xf]
    %v7480 = vld [vmem:[%s7476 + $0xc] sm:$0xf]
    %v7481 = vld [vmem:[%s7476 + $0x10] sm:$0xf]
    %v7482 = vld [vmem:[%s7476 + $0x14] sm:$0xf]
    %v7483 = vld [vmem:[%s7476 + $0x18] sm:$0xf]
    %v7484 = vld [vmem:[%s7476 + $0x1c] sm:$0xf]
    %s7485 = scalar_lea.vmem %s55, 1
    %v7486 = vld [vmem:[%s7485] sm:$0x1]
    %s7487 = scalar_lea.vmem %s57, 64
    %v7488 = vld [vmem:[%s7487] sm:$0xf]
    %v7489 = vld [vmem:[%s7487 + $0x4] sm:$0xf]
    %v7490 = vld [vmem:[%s7487 + $0x8] sm:$0xf]
    %v7491 = vld [vmem:[%s7487 + $0xc] sm:$0xf]
    %v7492 = vld [vmem:[%s7487 + $0x10] sm:$0xf]
    %v7493 = vld [vmem:[%s7487 + $0x14] sm:$0xf]
    %v7494 = vld [vmem:[%s7487 + $0x18] sm:$0xf]
    %v7495 = vld [vmem:[%s7487 + $0x1c] sm:$0xf]
    %v7496 = vld [vmem:[%s7487 + $0x20] sm:$0xf]
    %v7497 = vld [vmem:[%s7487 + $0x24] sm:$0xf]
    %v7498 = vld [vmem:[%s7487 + $0x28] sm:$0xf]
    %v7499 = vld [vmem:[%s7487 + $0x2c] sm:$0xf]
    %v7500 = vld [vmem:[%s7487 + $0x30] sm:$0xf]
    %v7501 = vld [vmem:[%s7487 + $0x34] sm:$0xf]
    %v7502 = vld [vmem:[%s7487 + $0x38] sm:$0xf]
    %v7503 = vld [vmem:[%s7487 + $0x3c] sm:$0xf]
    %s7504 = scalar_lea.vmem %s59, 1
    %v7505 = vld [vmem:[%s7504] sm:$0x1]
    %v7506 = vpack.c.bf16 %v7474, %v7474
    %v7507 = vpack.c.bf16 %v7475, %v7475
    %v7509 = vperm.slane %v7486, 0
    %v7519 = vunpack.c.l.b16 %v7477
    %v7520 = vunpack.c.l.b16 %v7478
    %v7521 = vunpack.c.l.b16 %v7479
    %v7522 = vunpack.c.l.b16 %v7480
    %v7523 = vunpack.c.l.b16 %v7481
    %v7524 = vunpack.c.l.b16 %v7482
    %v7525 = vunpack.c.l.b16 %v7483
    %v7526 = vunpack.c.l.b16 %v7484
    %v7527 = vpack.c.b16 %v7520, %v7519
    %v7528 = vpack.c.b16 %v7522, %v7521
    %v7529 = vpack.c.b16 %v7524, %v7523
    %v7530 = vpack.c.b16 %v7526, %v7525
    %v7536 = vsel %vm1713, %v7506, 0
    %7538 = vmatpush.bf16.msra.mxu0 0
    %7539 = vmatpush.bf16.msra.mxu0 0
    %7540 = vmatpush.bf16.msra.mxu0 0
    %7541 = vmatpush.bf16.msra.mxu0 0
    %7542 = vmatpush.bf16.msra.mxu0 %v7530
    %7543 = vmatpush.bf16.msra.mxu0 %v7529
    %7544 = vmatpush.bf16.msra.mxu0 %v7528
    %7545 = vmatpush.bf16.msra.mxu0 %v7527
    %7546 = vmatmul.bf16.gmra.mxu0 %v7536
    %v7547 = vpop.f32.mrf.mxu0
    %v7548 = vadd.f32 %v7509, %v7547
    %v7549 = vpop.f32.mrf.mxu0
    %7550 = vdwg.mxu0
    %v7552 = vsel %vm1713, %v7507, 0
    %7554 = vmatpush.bf16.msra.mxu0 0
    %7555 = vmatpush.bf16.msra.mxu0 0
    %7556 = vmatpush.bf16.msra.mxu0 0
    %7557 = vmatpush.bf16.msra.mxu0 0
    %7558 = vmatpush.bf16.msra.mxu0 %v7530
    %7559 = vmatpush.bf16.msra.mxu0 %v7529
    %7560 = vmatpush.bf16.msra.mxu0 %v7528
    %7561 = vmatpush.bf16.msra.mxu0 %v7527
    %7562 = vmatmul.bf16.gmra.mxu0 %v7552
    %v7563 = vpop.f32.mrf.mxu0
    %v7564 = vadd.f32 %v7509, %v7563
    %v7565 = vpop.f32.mrf.mxu0
    %7566 = vdwg.mxu0
    %v7567 = vmul.f32 %v7548, %v7548
    %v7568 = vmul.f32 %v7564, %v7564
    %v7569 = vmul.f32 %v7548, %v7567
    %v7570 = vmul.f32 %v7564, %v7568
    %v7571 = vmul.f32 %v7569, 0.044715
    %v7572 = vmul.f32 %v7570, 0.044715
    %v7573 = vadd.f32 %v7548, %v7571
    %v7574 = vadd.f32 %v7564, %v7572
    %v7575 = vmul.f32 %v7573, 0.7978846
    %v7576 = vmul.f32 %v7574, 0.7978846
    %v7577 = vtanh.pop %v7575
    %v7578 = vtanh.pop %v7576
    %v7579 = vadd.f32 %v7577, 1.0
    %v7580 = vadd.f32 %v7578, 1.0
    %v7581 = vmul.f32 %v7579, 0.5
    %v7582 = vmul.f32 %v7580, 0.5
    %v7583 = vmul.f32 %v7548, %v7581
    %v7584 = vmul.f32 %v7564, %v7582
    %v7585 = vpack.c.bf16 %v7583, %v7583
    %v7586 = vpack.c.bf16 %v7584, %v7584
    %v7588 = vperm.slane %v7505, 0
    %v7606 = vunpack.c.l.b16 %v7488
    %v7607 = vunpack.c.l.b16 %v7489
    %v7608 = vunpack.c.l.b16 %v7490
    %v7609 = vunpack.c.l.b16 %v7491
    %v7610 = vunpack.c.l.b16 %v7492
    %v7611 = vunpack.c.l.b16 %v7493
    %v7612 = vunpack.c.l.b16 %v7494
    %v7613 = vunpack.c.l.b16 %v7495
    %v7614 = vunpack.c.l.b16 %v7496
    %v7615 = vunpack.c.l.b16 %v7497
    %v7616 = vunpack.c.l.b16 %v7498
    %v7617 = vunpack.c.l.b16 %v7499
    %v7618 = vunpack.c.l.b16 %v7500
    %v7619 = vunpack.c.l.b16 %v7501
    %v7620 = vunpack.c.l.b16 %v7502
    %v7621 = vunpack.c.l.b16 %v7503
    %v7622 = vpack.c.b16 %v7607, %v7606
    %v7623 = vpack.c.b16 %v7609, %v7608
    %v7624 = vpack.c.b16 %v7611, %v7610
    %v7625 = vpack.c.b16 %v7613, %v7612
    %v7626 = vpack.c.b16 %v7615, %v7614
    %v7627 = vpack.c.b16 %v7617, %v7616
    %v7628 = vpack.c.b16 %v7619, %v7618
    %v7629 = vpack.c.b16 %v7621, %v7620
    %7638 = vmatpush.bf16.msra.mxu0 %v7629
    %7639 = vmatpush.bf16.msra.mxu0 %v7628
    %7640 = vmatpush.bf16.msra.mxu0 %v7627
    %7641 = vmatpush.bf16.msra.mxu0 %v7626
    %7642 = vmatpush.bf16.msra.mxu0 %v7625
    %7643 = vmatpush.bf16.msra.mxu0 %v7624
    %7644 = vmatpush.bf16.msra.mxu0 %v7623
    %7645 = vmatpush.bf16.msra.mxu0 %v7622
    %7646 = vmatmul.bf16.gmra.mxu0 %v7585
    %v7647 = vpop.f32.mrf.mxu0
    %v7648 = vadd.f32 %v7588, %v7647
    %v7649 = vpop.f32.mrf.mxu0
    %7650 = vdwg.mxu0
    %7651 = vmatpush.bf16.msra.mxu0 %v7629
    %7652 = vmatpush.bf16.msra.mxu0 %v7628
    %7653 = vmatpush.bf16.msra.mxu0 %v7627
    %7654 = vmatpush.bf16.msra.mxu0 %v7626
    %7655 = vmatpush.bf16.msra.mxu0 %v7625
    %7656 = vmatpush.bf16.msra.mxu0 %v7624
    %7657 = vmatpush.bf16.msra.mxu0 %v7623
    %7658 = vmatpush.bf16.msra.mxu0 %v7622
    %7659 = vmatmul.bf16.gmra.mxu0 %v7586
    %v7660 = vpop.f32.mrf.mxu0
    %v7661 = vadd.f32 %v7588, %v7660
    %v7662 = vpop.f32.mrf.mxu0
    %7663 = vdwg.mxu0
    %v7664 = vadd.f32 %v7424, %v7648
    %v7665 = vadd.f32 %v7425, %v7661
    %v7666 = vsel %vm5997, %v7664, 0.0
    %7667 = vadd.xlane.f32.xlu0 %v7666
    %v7668 = vpop.xlane.xlu0 %7667
    %v7669 = vsel %vm5997, %v7665, 0.0
    %7670 = vadd.xlane.f32.xlu0 %v7669
    %v7671 = vpop.xlane.xlu0 %7670
    %v7672 = vmul.f32 %v7668, %v1744
    %v7673 = vmul.f32 %v7671, %v1744
    %v7674 = vsub.f32 %v7664, %v7672
    %v7675 = vsub.f32 %v7665, %v7673
    %v7676 = vmul.f32 %v7674, %v7674
    %v7677 = vmul.f32 %v7675, %v7675
    %v7678 = vsel %vm5997, %v7676, 0.0
    %7679 = vadd.xlane.f32.xlu0 %v7678
    %v7680 = vpop.xlane.xlu0 %7679
    %v7681 = vsel %vm5997, %v7677, 0.0
    %7682 = vadd.xlane.f32.xlu0 %v7681
    %v7683 = vpop.xlane.xlu0 %7682
    %v7684 = vmul.f32 %v7680, %v1744
    %v7685 = vmul.f32 %v7683, %v1744
    %v7686 = vadd.f32 %v7684, 1e-05
    %v7687 = vadd.f32 %v7685, 1e-05
    %v7688 = vrsqrt.pop %v7686
    %v7689 = vmul.f32 %v7688, %v7686
    %v7690 = vmul.f32 %v7689, %v7688
    %v7691 = vmul.f32 0.5, %v7690
    %v7692 = vsub.f32 1.5, %v7691
    %v7693 = vmul.f32 %v7688, %v7692
    %vm7694 = vweird.f32 %v7686
    %vm7695 = vweird.f32 %v7688
    %vm7696 = vmor %vm7694, %vm7695
    %v7697 = vsel %vm7696, %v7688, %v7693
    %v7698 = vrsqrt.pop %v7687
    %v7699 = vmul.f32 %v7698, %v7687
    %v7700 = vmul.f32 %v7699, %v7698
    %v7701 = vmul.f32 0.5, %v7700
    %v7702 = vsub.f32 1.5, %v7701
    %v7703 = vmul.f32 %v7698, %v7702
    %vm7704 = vweird.f32 %v7687
    %vm7705 = vweird.f32 %v7698
    %vm7706 = vmor %vm7704, %vm7705
    %v7707 = vsel %vm7706, %v7698, %v7703
    %v7708 = vmul.f32 %v7674, %v7697
    %v7709 = vmul.f32 %v7675, %v7707
    %v7710 = vperm.slane %v5991, 4
    %v7711 = vmul.f32 %v7708, %v7710
    %v7712 = vmul.f32 %v7709, %v7710
    %v7713 = vperm.slane %v5991, 5
    %v7714 = vadd.f32 %v7711, %v7713
    %v7715 = vadd.f32 %v7712, %v7713
    %v7716 = vsel %vm5997, %v7714, 0.0
    %7717 = vadd.xlane.f32.xlu0 %v7716
    %v7718 = vpop.xlane.xlu0 %7717
    %v7719 = vsel %vm5997, %v7715, 0.0
    %7720 = vadd.xlane.f32.xlu0 %v7719
    %v7721 = vpop.xlane.xlu0 %7720
    %v7722 = vmul.f32 %v7718, %v1744
    %v7723 = vmul.f32 %v7721, %v1744
    %v7724 = vsub.f32 %v7714, %v7722
    %v7725 = vsub.f32 %v7715, %v7723
    %v7726 = vmul.f32 %v7724, %v7724
    %v7727 = vmul.f32 %v7725, %v7725
    %v7728 = vsel %vm5997, %v7726, 0.0
    %7729 = vadd.xlane.f32.xlu0 %v7728
    %v7730 = vpop.xlane.xlu0 %7729
    %v7731 = vsel %vm5997, %v7727, 0.0
    %7732 = vadd.xlane.f32.xlu0 %v7731
    %v7733 = vpop.xlane.xlu0 %7732
    %v7734 = vmul.f32 %v7730, %v1744
    %v7735 = vmul.f32 %v7733, %v1744
    %v7736 = vadd.f32 %v7734, 1e-05
    %v7737 = vadd.f32 %v7735, 1e-05
    %v7738 = vrsqrt.pop %v7736
    %v7739 = vmul.f32 %v7738, %v7736
    %v7740 = vmul.f32 %v7739, %v7738
    %v7741 = vmul.f32 0.5, %v7740
    %v7742 = vsub.f32 1.5, %v7741
    %v7743 = vmul.f32 %v7738, %v7742
    %vm7744 = vweird.f32 %v7736
    %vm7745 = vweird.f32 %v7738
    %vm7746 = vmor %vm7744, %vm7745
    %v7747 = vsel %vm7746, %v7738, %v7743
    %v7748 = vrsqrt.pop %v7737
    %v7749 = vmul.f32 %v7748, %v7737
    %v7750 = vmul.f32 %v7749, %v7748
    %v7751 = vmul.f32 0.5, %v7750
    %v7752 = vsub.f32 1.5, %v7751
    %v7753 = vmul.f32 %v7748, %v7752
    %vm7754 = vweird.f32 %v7737
    %vm7755 = vweird.f32 %v7748
    %vm7756 = vmor %vm7754, %vm7755
    %v7757 = vsel %vm7756, %v7748, %v7753
    %v7758 = vmul.f32 %v7724, %v7747
    %v7759 = vmul.f32 %v7725, %v7757
    %v7760 = vperm.slane %v5991, 6
    %v7761 = vmul.f32 %v7758, %v7760
    %v7762 = vmul.f32 %v7759, %v7760
    %v7763 = vperm.slane %v5991, 7
    %v7764 = vadd.f32 %v7761, %v7763
    %v7765 = vadd.f32 %v7762, %v7763
    %v7766 = vsel %vm5997, %v7764, 0.0
    %7767 = vadd.xlane.f32.xlu0 %v7766
    %v7768 = vpop.xlane.xlu0 %7767
    %v7769 = vsel %vm5997, %v7765, 0.0
    %7770 = vadd.xlane.f32.xlu0 %v7769
    %v7771 = vpop.xlane.xlu0 %7770
    %v7772 = vmul.f32 %v7768, %v1744
    %v7773 = vmul.f32 %v7771, %v1744
    %v7774 = vsub.f32 %v7764, %v7772
    %v7775 = vsub.f32 %v7765, %v7773
    %v7776 = vmul.f32 %v7774, %v7774
    %v7777 = vmul.f32 %v7775, %v7775
    %v7778 = vsel %vm5997, %v7776, 0.0
    %7779 = vadd.xlane.f32.xlu0 %v7778
    %v7780 = vpop.xlane.xlu0 %7779
    %v7781 = vsel %vm5997, %v7777, 0.0
    %7782 = vadd.xlane.f32.xlu0 %v7781
    %v7783 = vpop.xlane.xlu0 %7782
    %v7784 = vmul.f32 %v7780, %v1744
    %v7785 = vmul.f32 %v7783, %v1744
    %v7786 = vadd.f32 %v7784, 1e-05
    %v7787 = vadd.f32 %v7785, 1e-05
    %v7788 = vrsqrt.pop %v7786
    %v7789 = vmul.f32 %v7788, %v7786
    %v7790 = vmul.f32 %v7789, %v7788
    %v7791 = vmul.f32 0.5, %v7790
    %v7792 = vsub.f32 1.5, %v7791
    %v7793 = vmul.f32 %v7788, %v7792
    %vm7794 = vweird.f32 %v7786
    %vm7795 = vweird.f32 %v7788
    %vm7796 = vmor %vm7794, %vm7795
    %v7797 = vsel %vm7796, %v7788, %v7793
    %v7798 = vrsqrt.pop %v7787
    %v7799 = vmul.f32 %v7798, %v7787
    %v7800 = vmul.f32 %v7799, %v7798
    %v7801 = vmul.f32 0.5, %v7800
    %v7802 = vsub.f32 1.5, %v7801
    %v7803 = vmul.f32 %v7798, %v7802
    %vm7804 = vweird.f32 %v7787
    %vm7805 = vweird.f32 %v7798
    %vm7806 = vmor %vm7804, %vm7805
    %v7807 = vsel %vm7806, %v7798, %v7803
    %v7808 = vmul.f32 %v7774, %v7797
    %v7809 = vmul.f32 %v7775, %v7807
    %v7810 = vperm.slane %v5992, 0
    %v7811 = vmul.f32 %v7808, %v7810
    %v7812 = vmul.f32 %v7809, %v7810
    %v7813 = vperm.slane %v5992, 1
    %v7814 = vadd.f32 %v7811, %v7813
    %v7815 = vadd.f32 %v7812, %v7813
    %v7816 = vld [vmem:[%s63] sm:$0xf]
    %v7817 = vld [vmem:[%s63 + $0x4] sm:$0xf]
    %v7818 = vld [vmem:[%s63 + $0x8] sm:$0xf]
    %v7819 = vld [vmem:[%s63 + $0xc] sm:$0xf]
    %v7820 = vld [vmem:[%s63 + $0x10] sm:$0xf]
    %v7821 = vld [vmem:[%s63 + $0x14] sm:$0xf]
    %v7822 = vld [vmem:[%s63 + $0x18] sm:$0xf]
    %v7823 = vld [vmem:[%s63 + $0x1c] sm:$0xf]
    %v7824 = vpack.c.bf16 %v7814, %v7814
    %v7825 = vpack.c.bf16 %v7815, %v7815
    %v7826 = vld [vmem:[%s65] sm:$0x1]
    %v7828 = vperm.slane %v7826, 0
    %v7838 = vunpack.c.l.b16 %v7816
    %v7839 = vunpack.c.l.b16 %v7817
    %v7840 = vunpack.c.l.b16 %v7818
    %v7841 = vunpack.c.l.b16 %v7819
    %v7842 = vunpack.c.l.b16 %v7820
    %v7843 = vunpack.c.l.b16 %v7821
    %v7844 = vunpack.c.l.b16 %v7822
    %v7845 = vunpack.c.l.b16 %v7823
    %v7846 = vpack.c.b16 %v7839, %v7838
    %v7847 = vpack.c.b16 %v7841, %v7840
    %v7848 = vpack.c.b16 %v7843, %v7842
    %v7849 = vpack.c.b16 %v7845, %v7844
    %v7855 = vsel %vm1713, %v7824, 0
    %7857 = vmatpush.bf16.msra.mxu0 0
    %7858 = vmatpush.bf16.msra.mxu0 0
    %7859 = vmatpush.bf16.msra.mxu0 0
    %7860 = vmatpush.bf16.msra.mxu0 0
    %7861 = vmatpush.bf16.msra.mxu0 %v7849
    %7862 = vmatpush.bf16.msra.mxu0 %v7848
    %7863 = vmatpush.bf16.msra.mxu0 %v7847
    %7864 = vmatpush.bf16.msra.mxu0 %v7846
    %7865 = vmatmul.bf16.gmra.mxu0 %v7855
    %v7866 = vpop.f32.mrf.mxu0
    %v7867 = vadd.f32 %v7828, %v7866
    %v7868 = vpop.f32.mrf.mxu0
    %7869 = vdwg.mxu0
    %v7871 = vsel %vm1713, %v7825, 0
    %7873 = vmatpush.bf16.msra.mxu0 0
    %7874 = vmatpush.bf16.msra.mxu0 0
    %7875 = vmatpush.bf16.msra.mxu0 0
    %7876 = vmatpush.bf16.msra.mxu0 0
    %7877 = vmatpush.bf16.msra.mxu0 %v7849
    %7878 = vmatpush.bf16.msra.mxu0 %v7848
    %7879 = vmatpush.bf16.msra.mxu0 %v7847
    %7880 = vmatpush.bf16.msra.mxu0 %v7846
    %7881 = vmatmul.bf16.gmra.mxu0 %v7871
    %v7882 = vpop.f32.mrf.mxu0
    %v7883 = vadd.f32 %v7828, %v7882
    %v7884 = vpop.f32.mrf.mxu0
    %7885 = vdwg.mxu0
    %7886 = vst [vmem:[#allocation4] sm:$0x1] %v7867
    %7887 = vst [vmem:[#allocation4 + $0x1] sm:$0x1] %v7883
    // Predicated region
    $region134: #{mmst_vit_forward.1} parent=1 // pred_check
      _
    $region135: #{mmst_vit_forward.1} parent=1 // pred_check_branch
      %7889 = sbr.rel (0) target = $region137
    $region136: #{mmst_vit_forward.1} parent=1 // pred_region
      %7891 = vsyncadd [#allocation5], 0
      %s7892 = sshll.u32 [#allocation4], 4
      %s7893 = int_to_ptr.vmem [resolvable:$true] %s7892
      %s7894 = sshll.u32 %s67, 4
      %s7895 = int_to_ptr.hbm [resolvable:$true] %s7894
      %7900 = dma.vmem_to_hbm [thread:$0]  %s7893, 32, %s7895, [#allocation5], 16, 16, 1
    $region137: #{mmst_vit_forward.1} parent=1 // pred_fallthru
      _
    // Predicated region
    $region138: #{mmst_vit_forward.1} parent=1 // pred_check
      _
    $region139: #{mmst_vit_forward.1} parent=1 // pred_check_branch
      %7902 = sbr.rel (0) target = $region141
    $region140: #{mmst_vit_forward.1} parent=1 // pred_region
      %7904 = dma.done [#allocation5], 32
    $region141: #{mmst_vit_forward.1} parent=1 // pred_fallthru
      _
    %7905 = vsyncpa [#allocation5], 1

</llo_original>
